<compile_context>
chip_gen: v7x
topology: tpu7x:2x2x1
jax: 0.10.0
libtpu: 0.0.40
codegen_flags: <defaults>
</compile_context>

<pallas_src>
import jax
import jax.numpy as jnp
from jax import lax
from jax.experimental import pallas as pl
from jax.experimental.pallas import tpu as pltpu


# Matrix-log iteration parameters (matmul-only, fixed trip counts).
# Inverse scaling & squaring: log(S) = log(c) I + 2^s log((S/c)^(1/2^s)).
_NUM_SQRT = 6                         # s: number of repeated square roots
_NS_SCHEDULE = (16, 12, 10, 8, 8, 8)  # coupled Newton-Schulz iters per sqrt
_SERIES_TERMS = 12                    # Mercator series degree for log(I + X)


def _fused_kernel(s_ref, w_ref, b_ref, out_ref, ls_ref):
    S = s_ref[...]                      # (B, N, N) SPD input
    bias = b_ref[...]                   # (1, J)
    Bsz, N, _ = S.shape
    J = bias.shape[-1]

    # Identity built with 2-D iota (1-D iota is not supported on TPU).
    rows = lax.broadcasted_iota(jnp.int32, (N, N), 0)
    cols = lax.broadcasted_iota(jnp.int32, (N, N), 1)
    eye = (rows == cols).astype(jnp.float32)                 # (N, N)
    eye_b = jnp.broadcast_to(eye, (Bsz, N, N))                # hoisted once

    def bmm(x, y):  # batched (B, N, N) matmul on the MXU, transpose-free
        return jnp.einsum("bij,bjk->bik", x, y,
                          preferred_element_type=jnp.float32)

    # ---- SPDLogMap (matmul-only, no eigh) -------------------------------
    # Normalize by the per-sample Frobenius norm so eigenvalues lie in (0, 1].
    fro = jnp.sqrt(jnp.sum(jnp.sum(S * S, axis=2, keepdims=True),
                           axis=1, keepdims=True))            # (B, 1, 1)
    T = S / fro

    # Repeated matrix square roots via the coupled (inverse-free)
    # Newton-Schulz iteration: Y -> sqrt(A), converges for eigenvalues in (0,1].
    def _sqrt_once(A, iters):
        def ns_body(_, carry):
            Y, Z = carry
            M = 3.0 * eye_b - bmm(Z, Y)
            return 0.5 * bmm(Y, M), 0.5 * bmm(M, Z)
        Y, _ = lax.fori_loop(0, iters, ns_body, (A, eye_b))
        return Y

    for iters in _NS_SCHEDULE:          # static unroll over _NUM_SQRT roots
        T = _sqrt_once(T, iters)

    # log(T) = log(I + X) via truncated Mercator series (Horner form).
    X = T - eye_b
    coeff = ((-1.0) ** (_SERIES_TERMS - 1)) / float(_SERIES_TERMS)
    Q = coeff * eye_b
    for k in range(_SERIES_TERMS - 2, -1, -1):
        ck = ((-1.0) ** k) / float(k + 1)
        Q = ck * eye_b + bmm(X, Q)
    log_spd = (2.0 ** _NUM_SQRT) * bmm(X, Q) + jnp.log(fro) * eye_b  # (B,N,N)

    # ---- SPDVectorize + Linear ------------------------------------------
    # logits[b, j] = sum_{p,q} log_spd[b,p,q] * W[j, p*N + q] + bias[j]
    # The row-major flatten is folded into w_ref (N, N, J); contract per row
    # from a VMEM scratch so only well-supported ref slicing is used.
    ls_ref[...] = log_spd
    acc = jnp.zeros((Bsz, J), jnp.float32)
    for p in range(N):                   # static unroll over the small N
        acc = acc + jnp.dot(ls_ref[:, p, :], w_ref[p],
                            preferred_element_type=jnp.float32)
    logits = acc + bias

    # ---- Softmax (numerically stable) -----------------------------------
    m = jnp.max(logits, axis=-1, keepdims=True)
    e = jnp.exp(logits - m)
    out_ref[...] = (e / jnp.sum(e, axis=-1, keepdims=True)).astype(out_ref.dtype)


def downstream_forward(hidden_state, weight, bias):
    """hidden_state: (B, N, N) SPD; weight: (J, N*N); bias: (J,) -> (B, J)."""
    B, N, _ = hidden_state.shape
    J = weight.shape[0]
    # Fold SPDVectorize's row-major flatten into the weight layout: (N, N, J),
    # w3[p, q, j] == weight[j, p*N + q].
    w3 = jnp.transpose(weight.reshape(J, N, N), (1, 2, 0)).astype(jnp.float32)
    bias_row = bias[None, :].astype(jnp.float32)
    return pl.pallas_call(
        _fused_kernel,
        out_shape=jax.ShapeDtypeStruct((B, J), jnp.float32),
        in_specs=[
            pl.BlockSpec((B, N, N), lambda: (0, 0, 0)),
            pl.BlockSpec((N, N, J), lambda: (0, 0, 0)),
            pl.BlockSpec((1, J), lambda: (0, 0)),
        ],
        out_specs=pl.BlockSpec((B, J), lambda: (0, 0)),
        scratch_shapes=[pltpu.VMEM((B, N, N), jnp.float32)],
    )(hidden_state.astype(jnp.float32), w3, bias_row)


# ----------------------------------------------------------------------------
# Reference in plain JAX (eigh-based, used only for the correctness check)
# ----------------------------------------------------------------------------
def reference_forward(hidden_state, weight, bias):
    lam, u = jnp.linalg.eigh(hidden_state)
    log_spd = jnp.einsum("bik,bk,bjk->bij", u, jnp.log(lam), u)
    vec = log_spd.reshape(hidden_state.shape[0], -1)
    logits = vec @ weight.T + bias
    return jax.nn.softmax(logits, axis=-1)


if __name__ == "__main__":
    # args.wavelets_num = 8, args.node_number = 16, batch = 4
    B, N, J = 4, 8, 16

    key = jax.random.PRNGKey(0)
    k_x, k_w, k_b = jax.random.split(key, 3)

    # Deterministic SPD input: A @ A^T + 0.5 * I  (eigenvalues >= 0.5)
    a = jax.random.normal(k_x, (B, N, N), dtype=jnp.float32)
    hidden_state = jnp.einsum("bik,bjk->bij", a, a) + 0.5 * jnp.eye(N)[None]

    # Linear params, PyTorch-style uniform init (deterministic).
    fan_in = N * N
    bound = 1.0 / jnp.sqrt(jnp.float32(fan_in))
    weight = jax.random.uniform(k_w, (J, fan_in), jnp.float32, -bound, bound)
    bias = jax.random.uniform(k_b, (J,), jnp.float32, -bound, bound)

    out = downstream_forward(hidden_state, weight, bias)
    out = jax.block_until_ready(out)

    ref = reference_forward(hidden_state, weight, bias)
    assert out.shape == (B, J)
    # The in-kernel matmul-only matrix log matches the eigh-based log map to
    # f32 iteration accuracy; tolerance reflects the 2^s error amplification.
    assert jnp.allclose(out, ref, atol=2e-3, rtol=2e-3), "mismatch vs reference"
    assert jnp.allclose(jnp.sum(out, axis=-1), 1.0, atol=1e-5), "softmax rows must sum to 1"

    print("KERNEL_OK")
</pallas_src>

<mosaic_0001>
module attributes {stable_mosaic.version = 11 : i64} {
  func.func @_fused_kernel(%arg0: memref<4x8x8xf32, #tpu.memory_space<vmem>>, %arg1: memref<8x8x16xf32, #tpu.memory_space<vmem>>, %arg2: memref<1x16xf32, #tpu.memory_space<vmem>>, %arg3: memref<4x16xf32, #tpu.memory_space<vmem>>, %arg4: memref<4x8x8xf32, #tpu.memory_space<vmem>>) attributes {dimension_semantics = [], scalar_prefetch = 0 : i64, scratch_operands = 1 : i64, tpu.core_type = #tpu.core_type<tc>} {
    %c0 = arith.constant 0 : index
    %c0_0 = arith.constant 0 : index
    %c0_1 = arith.constant 0 : index
    %0 = vector.load %arg0[%c0, %c0_0, %c0_1] : memref<4x8x8xf32, #tpu.memory_space<vmem>>, vector<4x8x8xf32>
    %c0_2 = arith.constant 0 : index
    %c0_3 = arith.constant 0 : index
    %1 = vector.load %arg2[%c0_2, %c0_3] : memref<1x16xf32, #tpu.memory_space<vmem>>, vector<1x16xf32>
    %2 = tpu.iota {dimensions = array<i32: 0>} : vector<8x8xi32>
    %3 = tpu.iota {dimensions = array<i32: 1>} : vector<8x8xi32>
    %4 = arith.cmpi eq, %2, %3 : vector<8x8xi32>
    %5 = arith.extui %4 : vector<8x8xi1> to vector<8x8xi32>
    %6 = arith.sitofp %5 : vector<8x8xi32> to vector<8x8xf32>
    %7 = vector.shape_cast %6 : vector<8x8xf32> to vector<1x8x8xf32>
    %8 = vector.broadcast %7 : vector<1x8x8xf32> to vector<4x8x8xf32>
    %9 = arith.mulf %0, %0 : vector<4x8x8xf32>
    %cst = arith.constant dense<0.000000e+00> : vector<4x8xf32>
    %10 = vector.multi_reduction <add>, %9, %cst [2] : vector<4x8x8xf32> to vector<4x8xf32>
    %11 = vector.shape_cast %10 : vector<4x8xf32> to vector<4x8x1xf32>
    %cst_4 = arith.constant dense<0.000000e+00> : vector<4x1xf32>
    %12 = vector.multi_reduction <add>, %11, %cst_4 [1] : vector<4x8x1xf32> to vector<4x1xf32>
    %13 = vector.shape_cast %12 : vector<4x1xf32> to vector<4x1x1xf32>
    %14 = math.sqrt %13 : vector<4x1x1xf32>
    %15 = vector.broadcast %14 : vector<4x1x1xf32> to vector<4x8x8xf32>
    %16 = arith.divf %0, %15 : vector<4x8x8xf32>
    %c0_i32 = arith.constant 0 : i32
    %c16_i32 = arith.constant 16 : i32
    %17 = arith.addi %c0_i32, %c16_i32 : i32
    %c1_i32 = arith.constant 1 : i32
    %18:2 = scf.for %arg5 = %c0_i32 to %17 step %c1_i32 iter_args(%arg6 = %16, %arg7 = %8) -> (vector<4x8x8xf32>, vector<4x8x8xf32>)  : i32 {
      %cst_99 = arith.constant 3.000000e+00 : f32
      %145 = vector.broadcast %cst_99 : f32 to vector<4x8x8xf32>
      %146 = arith.mulf %145, %8 : vector<4x8x8xf32>
      "tpu.trace_start"() <{level = 10 : i32, message = "bij,bjk->bik"}> : () -> ()
      %cst_100 = arith.constant dense<0.000000e+00> : vector<4x8x8xf32>
      %147 = tpu.matmul %arg7, %arg6, %cst_100 {dimension_numbers = #tpu.dot_dimension_numbers<[2], [1], [1], [2], [0, 0, 0, 1, 1, 2], [0], [0]>} : vector<4x8x8xf32>, vector<4x8x8xf32>, vector<4x8x8xf32> -> vector<4x8x8xf32>
      "tpu.trace_stop"() : () -> ()
      %148 = arith.subf %146, %147 : vector<4x8x8xf32>
      "tpu.trace_start"() <{level = 10 : i32, message = "bij,bjk->bik"}> : () -> ()
      %cst_101 = arith.constant dense<0.000000e+00> : vector<4x8x8xf32>
      %149 = tpu.matmul %arg6, %148, %cst_101 {dimension_numbers = #tpu.dot_dimension_numbers<[2], [1], [1], [2], [0, 0, 0, 1, 1, 2], [0], [0]>} : vector<4x8x8xf32>, vector<4x8x8xf32>, vector<4x8x8xf32> -> vector<4x8x8xf32>
      "tpu.trace_stop"() : () -> ()
      %cst_102 = arith.constant 5.000000e-01 : f32
      %150 = vector.broadcast %cst_102 : f32 to vector<4x8x8xf32>
      %151 = arith.mulf %150, %149 : vector<4x8x8xf32>
      "tpu.trace_start"() <{level = 10 : i32, message = "bij,bjk->bik"}> : () -> ()
      %cst_103 = arith.constant dense<0.000000e+00> : vector<4x8x8xf32>
      %152 = tpu.matmul %148, %arg7, %cst_103 {dimension_numbers = #tpu.dot_dimension_numbers<[2], [1], [1], [2], [0, 0, 0, 1, 1, 2], [0], [0]>} : vector<4x8x8xf32>, vector<4x8x8xf32>, vector<4x8x8xf32> -> vector<4x8x8xf32>
      "tpu.trace_stop"() : () -> ()
      %cst_104 = arith.constant 5.000000e-01 : f32
      %153 = vector.broadcast %cst_104 : f32 to vector<4x8x8xf32>
      %154 = arith.mulf %153, %152 : vector<4x8x8xf32>
      scf.yield %151, %154 : vector<4x8x8xf32>, vector<4x8x8xf32>
    }
    %c0_i32_5 = arith.constant 0 : i32
    %c12_i32 = arith.constant 12 : i32
    %19 = arith.addi %c0_i32_5, %c12_i32 : i32
    %c1_i32_6 = arith.constant 1 : i32
    %20:2 = scf.for %arg5 = %c0_i32_5 to %19 step %c1_i32_6 iter_args(%arg6 = %18#0, %arg7 = %8) -> (vector<4x8x8xf32>, vector<4x8x8xf32>)  : i32 {
      %cst_99 = arith.constant 3.000000e+00 : f32
      %145 = vector.broadcast %cst_99 : f32 to vector<4x8x8xf32>
      %146 = arith.mulf %145, %8 : vector<4x8x8xf32>
      "tpu.trace_start"() <{level = 10 : i32, message = "bij,bjk->bik"}> : () -> ()
      %cst_100 = arith.constant dense<0.000000e+00> : vector<4x8x8xf32>
      %147 = tpu.matmul %arg7, %arg6, %cst_100 {dimension_numbers = #tpu.dot_dimension_numbers<[2], [1], [1], [2], [0, 0, 0, 1, 1, 2], [0], [0]>} : vector<4x8x8xf32>, vector<4x8x8xf32>, vector<4x8x8xf32> -> vector<4x8x8xf32>
      "tpu.trace_stop"() : () -> ()
      %148 = arith.subf %146, %147 : vector<4x8x8xf32>
      "tpu.trace_start"() <{level = 10 : i32, message = "bij,bjk->bik"}> : () -> ()
      %cst_101 = arith.constant dense<0.000000e+00> : vector<4x8x8xf32>
      %149 = tpu.matmul %arg6, %148, %cst_101 {dimension_numbers = #tpu.dot_dimension_numbers<[2], [1], [1], [2], [0, 0, 0, 1, 1, 2], [0], [0]>} : vector<4x8x8xf32>, vector<4x8x8xf32>, vector<4x8x8xf32> -> vector<4x8x8xf32>
      "tpu.trace_stop"() : () -> ()
      %cst_102 = arith.constant 5.000000e-01 : f32
      %150 = vector.broadcast %cst_102 : f32 to vector<4x8x8xf32>
      %151 = arith.mulf %150, %149 : vector<4x8x8xf32>
      "tpu.trace_start"() <{level = 10 : i32, message = "bij,bjk->bik"}> : () -> ()
      %cst_103 = arith.constant dense<0.000000e+00> : vector<4x8x8xf32>
      %152 = tpu.matmul %148, %arg7, %cst_103 {dimension_numbers = #tpu.dot_dimension_numbers<[2], [1], [1], [2], [0, 0, 0, 1, 1, 2], [0], [0]>} : vector<4x8x8xf32>, vector<4x8x8xf32>, vector<4x8x8xf32> -> vector<4x8x8xf32>
      "tpu.trace_stop"() : () -> ()
      %cst_104 = arith.constant 5.000000e-01 : f32
      %153 = vector.broadcast %cst_104 : f32 to vector<4x8x8xf32>
      %154 = arith.mulf %153, %152 : vector<4x8x8xf32>
      scf.yield %151, %154 : vector<4x8x8xf32>, vector<4x8x8xf32>
    }
    %c0_i32_7 = arith.constant 0 : i32
    %c10_i32 = arith.constant 10 : i32
    %21 = arith.addi %c0_i32_7, %c10_i32 : i32
    %c1_i32_8 = arith.constant 1 : i32
    %22:2 = scf.for %arg5 = %c0_i32_7 to %21 step %c1_i32_8 iter_args(%arg6 = %20#0, %arg7 = %8) -> (vector<4x8x8xf32>, vector<4x8x8xf32>)  : i32 {
      %cst_99 = arith.constant 3.000000e+00 : f32
      %145 = vector.broadcast %cst_99 : f32 to vector<4x8x8xf32>
      %146 = arith.mulf %145, %8 : vector<4x8x8xf32>
      "tpu.trace_start"() <{level = 10 : i32, message = "bij,bjk->bik"}> : () -> ()
      %cst_100 = arith.constant dense<0.000000e+00> : vector<4x8x8xf32>
      %147 = tpu.matmul %arg7, %arg6, %cst_100 {dimension_numbers = #tpu.dot_dimension_numbers<[2], [1], [1], [2], [0, 0, 0, 1, 1, 2], [0], [0]>} : vector<4x8x8xf32>, vector<4x8x8xf32>, vector<4x8x8xf32> -> vector<4x8x8xf32>
      "tpu.trace_stop"() : () -> ()
      %148 = arith.subf %146, %147 : vector<4x8x8xf32>
      "tpu.trace_start"() <{level = 10 : i32, message = "bij,bjk->bik"}> : () -> ()
      %cst_101 = arith.constant dense<0.000000e+00> : vector<4x8x8xf32>
      %149 = tpu.matmul %arg6, %148, %cst_101 {dimension_numbers = #tpu.dot_dimension_numbers<[2], [1], [1], [2], [0, 0, 0, 1, 1, 2], [0], [0]>} : vector<4x8x8xf32>, vector<4x8x8xf32>, vector<4x8x8xf32> -> vector<4x8x8xf32>
      "tpu.trace_stop"() : () -> ()
      %cst_102 = arith.constant 5.000000e-01 : f32
      %150 = vector.broadcast %cst_102 : f32 to vector<4x8x8xf32>
      %151 = arith.mulf %150, %149 : vector<4x8x8xf32>
      "tpu.trace_start"() <{level = 10 : i32, message = "bij,bjk->bik"}> : () -> ()
      %cst_103 = arith.constant dense<0.000000e+00> : vector<4x8x8xf32>
      %152 = tpu.matmul %148, %arg7, %cst_103 {dimension_numbers = #tpu.dot_dimension_numbers<[2], [1], [1], [2], [0, 0, 0, 1, 1, 2], [0], [0]>} : vector<4x8x8xf32>, vector<4x8x8xf32>, vector<4x8x8xf32> -> vector<4x8x8xf32>
      "tpu.trace_stop"() : () -> ()
      %cst_104 = arith.constant 5.000000e-01 : f32
      %153 = vector.broadcast %cst_104 : f32 to vector<4x8x8xf32>
      %154 = arith.mulf %153, %152 : vector<4x8x8xf32>
      scf.yield %151, %154 : vector<4x8x8xf32>, vector<4x8x8xf32>
    }
    %c0_i32_9 = arith.constant 0 : i32
    %c8_i32 = arith.constant 8 : i32
    %23 = arith.addi %c0_i32_9, %c8_i32 : i32
    %c1_i32_10 = arith.constant 1 : i32
    %24:2 = scf.for %arg5 = %c0_i32_9 to %23 step %c1_i32_10 iter_args(%arg6 = %22#0, %arg7 = %8) -> (vector<4x8x8xf32>, vector<4x8x8xf32>)  : i32 {
      %cst_99 = arith.constant 3.000000e+00 : f32
      %145 = vector.broadcast %cst_99 : f32 to vector<4x8x8xf32>
      %146 = arith.mulf %145, %8 : vector<4x8x8xf32>
      "tpu.trace_start"() <{level = 10 : i32, message = "bij,bjk->bik"}> : () -> ()
      %cst_100 = arith.constant dense<0.000000e+00> : vector<4x8x8xf32>
      %147 = tpu.matmul %arg7, %arg6, %cst_100 {dimension_numbers = #tpu.dot_dimension_numbers<[2], [1], [1], [2], [0, 0, 0, 1, 1, 2], [0], [0]>} : vector<4x8x8xf32>, vector<4x8x8xf32>, vector<4x8x8xf32> -> vector<4x8x8xf32>
      "tpu.trace_stop"() : () -> ()
      %148 = arith.subf %146, %147 : vector<4x8x8xf32>
      "tpu.trace_start"() <{level = 10 : i32, message = "bij,bjk->bik"}> : () -> ()
      %cst_101 = arith.constant dense<0.000000e+00> : vector<4x8x8xf32>
      %149 = tpu.matmul %arg6, %148, %cst_101 {dimension_numbers = #tpu.dot_dimension_numbers<[2], [1], [1], [2], [0, 0, 0, 1, 1, 2], [0], [0]>} : vector<4x8x8xf32>, vector<4x8x8xf32>, vector<4x8x8xf32> -> vector<4x8x8xf32>
      "tpu.trace_stop"() : () -> ()
      %cst_102 = arith.constant 5.000000e-01 : f32
      %150 = vector.broadcast %cst_102 : f32 to vector<4x8x8xf32>
      %151 = arith.mulf %150, %149 : vector<4x8x8xf32>
      "tpu.trace_start"() <{level = 10 : i32, message = "bij,bjk->bik"}> : () -> ()
      %cst_103 = arith.constant dense<0.000000e+00> : vector<4x8x8xf32>
      %152 = tpu.matmul %148, %arg7, %cst_103 {dimension_numbers = #tpu.dot_dimension_numbers<[2], [1], [1], [2], [0, 0, 0, 1, 1, 2], [0], [0]>} : vector<4x8x8xf32>, vector<4x8x8xf32>, vector<4x8x8xf32> -> vector<4x8x8xf32>
      "tpu.trace_stop"() : () -> ()
      %cst_104 = arith.constant 5.000000e-01 : f32
      %153 = vector.broadcast %cst_104 : f32 to vector<4x8x8xf32>
      %154 = arith.mulf %153, %152 : vector<4x8x8xf32>
      scf.yield %151, %154 : vector<4x8x8xf32>, vector<4x8x8xf32>
    }
    %c0_i32_11 = arith.constant 0 : i32
    %c8_i32_12 = arith.constant 8 : i32
    %25 = arith.addi %c0_i32_11, %c8_i32_12 : i32
    %c1_i32_13 = arith.constant 1 : i32
    %26:2 = scf.for %arg5 = %c0_i32_11 to %25 step %c1_i32_13 iter_args(%arg6 = %24#0, %arg7 = %8) -> (vector<4x8x8xf32>, vector<4x8x8xf32>)  : i32 {
      %cst_99 = arith.constant 3.000000e+00 : f32
      %145 = vector.broadcast %cst_99 : f32 to vector<4x8x8xf32>
      %146 = arith.mulf %145, %8 : vector<4x8x8xf32>
      "tpu.trace_start"() <{level = 10 : i32, message = "bij,bjk->bik"}> : () -> ()
      %cst_100 = arith.constant dense<0.000000e+00> : vector<4x8x8xf32>
      %147 = tpu.matmul %arg7, %arg6, %cst_100 {dimension_numbers = #tpu.dot_dimension_numbers<[2], [1], [1], [2], [0, 0, 0, 1, 1, 2], [0], [0]>} : vector<4x8x8xf32>, vector<4x8x8xf32>, vector<4x8x8xf32> -> vector<4x8x8xf32>
      "tpu.trace_stop"() : () -> ()
      %148 = arith.subf %146, %147 : vector<4x8x8xf32>
      "tpu.trace_start"() <{level = 10 : i32, message = "bij,bjk->bik"}> : () -> ()
      %cst_101 = arith.constant dense<0.000000e+00> : vector<4x8x8xf32>
      %149 = tpu.matmul %arg6, %148, %cst_101 {dimension_numbers = #tpu.dot_dimension_numbers<[2], [1], [1], [2], [0, 0, 0, 1, 1, 2], [0], [0]>} : vector<4x8x8xf32>, vector<4x8x8xf32>, vector<4x8x8xf32> -> vector<4x8x8xf32>
      "tpu.trace_stop"() : () -> ()
      %cst_102 = arith.constant 5.000000e-01 : f32
      %150 = vector.broadcast %cst_102 : f32 to vector<4x8x8xf32>
      %151 = arith.mulf %150, %149 : vector<4x8x8xf32>
      "tpu.trace_start"() <{level = 10 : i32, message = "bij,bjk->bik"}> : () -> ()
      %cst_103 = arith.constant dense<0.000000e+00> : vector<4x8x8xf32>
      %152 = tpu.matmul %148, %arg7, %cst_103 {dimension_numbers = #tpu.dot_dimension_numbers<[2], [1], [1], [2], [0, 0, 0, 1, 1, 2], [0], [0]>} : vector<4x8x8xf32>, vector<4x8x8xf32>, vector<4x8x8xf32> -> vector<4x8x8xf32>
      "tpu.trace_stop"() : () -> ()
      %cst_104 = arith.constant 5.000000e-01 : f32
      %153 = vector.broadcast %cst_104 : f32 to vector<4x8x8xf32>
      %154 = arith.mulf %153, %152 : vector<4x8x8xf32>
      scf.yield %151, %154 : vector<4x8x8xf32>, vector<4x8x8xf32>
    }
    %c0_i32_14 = arith.constant 0 : i32
    %c8_i32_15 = arith.constant 8 : i32
    %27 = arith.addi %c0_i32_14, %c8_i32_15 : i32
    %c1_i32_16 = arith.constant 1 : i32
    %28:2 = scf.for %arg5 = %c0_i32_14 to %27 step %c1_i32_16 iter_args(%arg6 = %26#0, %arg7 = %8) -> (vector<4x8x8xf32>, vector<4x8x8xf32>)  : i32 {
      %cst_99 = arith.constant 3.000000e+00 : f32
      %145 = vector.broadcast %cst_99 : f32 to vector<4x8x8xf32>
      %146 = arith.mulf %145, %8 : vector<4x8x8xf32>
      "tpu.trace_start"() <{level = 10 : i32, message = "bij,bjk->bik"}> : () -> ()
      %cst_100 = arith.constant dense<0.000000e+00> : vector<4x8x8xf32>
      %147 = tpu.matmul %arg7, %arg6, %cst_100 {dimension_numbers = #tpu.dot_dimension_numbers<[2], [1], [1], [2], [0, 0, 0, 1, 1, 2], [0], [0]>} : vector<4x8x8xf32>, vector<4x8x8xf32>, vector<4x8x8xf32> -> vector<4x8x8xf32>
      "tpu.trace_stop"() : () -> ()
      %148 = arith.subf %146, %147 : vector<4x8x8xf32>
      "tpu.trace_start"() <{level = 10 : i32, message = "bij,bjk->bik"}> : () -> ()
      %cst_101 = arith.constant dense<0.000000e+00> : vector<4x8x8xf32>
      %149 = tpu.matmul %arg6, %148, %cst_101 {dimension_numbers = #tpu.dot_dimension_numbers<[2], [1], [1], [2], [0, 0, 0, 1, 1, 2], [0], [0]>} : vector<4x8x8xf32>, vector<4x8x8xf32>, vector<4x8x8xf32> -> vector<4x8x8xf32>
      "tpu.trace_stop"() : () -> ()
      %cst_102 = arith.constant 5.000000e-01 : f32
      %150 = vector.broadcast %cst_102 : f32 to vector<4x8x8xf32>
      %151 = arith.mulf %150, %149 : vector<4x8x8xf32>
      "tpu.trace_start"() <{level = 10 : i32, message = "bij,bjk->bik"}> : () -> ()
      %cst_103 = arith.constant dense<0.000000e+00> : vector<4x8x8xf32>
      %152 = tpu.matmul %148, %arg7, %cst_103 {dimension_numbers = #tpu.dot_dimension_numbers<[2], [1], [1], [2], [0, 0, 0, 1, 1, 2], [0], [0]>} : vector<4x8x8xf32>, vector<4x8x8xf32>, vector<4x8x8xf32> -> vector<4x8x8xf32>
      "tpu.trace_stop"() : () -> ()
      %cst_104 = arith.constant 5.000000e-01 : f32
      %153 = vector.broadcast %cst_104 : f32 to vector<4x8x8xf32>
      %154 = arith.mulf %153, %152 : vector<4x8x8xf32>
      scf.yield %151, %154 : vector<4x8x8xf32>, vector<4x8x8xf32>
    }
    %29 = arith.subf %28#0, %8 : vector<4x8x8xf32>
    %cst_17 = arith.constant -0.0833333358 : f32
    %30 = vector.broadcast %cst_17 : f32 to vector<4x8x8xf32>
    %31 = arith.mulf %30, %8 : vector<4x8x8xf32>
    %cst_18 = arith.constant 0.0909090936 : f32
    %32 = vector.broadcast %cst_18 : f32 to vector<4x8x8xf32>
    %33 = arith.mulf %32, %8 : vector<4x8x8xf32>
    "tpu.trace_start"() <{level = 10 : i32, message = "bij,bjk->bik"}> : () -> ()
    %cst_19 = arith.constant dense<0.000000e+00> : vector<4x8x8xf32>
    %34 = tpu.matmul %29, %31, %cst_19 {dimension_numbers = #tpu.dot_dimension_numbers<[2], [1], [1], [2], [0, 0, 0, 1, 1, 2], [0], [0]>} : vector<4x8x8xf32>, vector<4x8x8xf32>, vector<4x8x8xf32> -> vector<4x8x8xf32>
    "tpu.trace_stop"() : () -> ()
    %35 = arith.addf %33, %34 : vector<4x8x8xf32>
    %cst_20 = arith.constant -1.000000e-01 : f32
    %36 = vector.broadcast %cst_20 : f32 to vector<4x8x8xf32>
    %37 = arith.mulf %36, %8 : vector<4x8x8xf32>
    "tpu.trace_start"() <{level = 10 : i32, message = "bij,bjk->bik"}> : () -> ()
    %cst_21 = arith.constant dense<0.000000e+00> : vector<4x8x8xf32>
    %38 = tpu.matmul %29, %35, %cst_21 {dimension_numbers = #tpu.dot_dimension_numbers<[2], [1], [1], [2], [0, 0, 0, 1, 1, 2], [0], [0]>} : vector<4x8x8xf32>, vector<4x8x8xf32>, vector<4x8x8xf32> -> vector<4x8x8xf32>
    "tpu.trace_stop"() : () -> ()
    %39 = arith.addf %37, %38 : vector<4x8x8xf32>
    %cst_22 = arith.constant 0.111111112 : f32
    %40 = vector.broadcast %cst_22 : f32 to vector<4x8x8xf32>
    %41 = arith.mulf %40, %8 : vector<4x8x8xf32>
    "tpu.trace_start"() <{level = 10 : i32, message = "bij,bjk->bik"}> : () -> ()
    %cst_23 = arith.constant dense<0.000000e+00> : vector<4x8x8xf32>
    %42 = tpu.matmul %29, %39, %cst_23 {dimension_numbers = #tpu.dot_dimension_numbers<[2], [1], [1], [2], [0, 0, 0, 1, 1, 2], [0], [0]>} : vector<4x8x8xf32>, vector<4x8x8xf32>, vector<4x8x8xf32> -> vector<4x8x8xf32>
    "tpu.trace_stop"() : () -> ()
    %43 = arith.addf %41, %42 : vector<4x8x8xf32>
    %cst_24 = arith.constant -1.250000e-01 : f32
    %44 = vector.broadcast %cst_24 : f32 to vector<4x8x8xf32>
    %45 = arith.mulf %44, %8 : vector<4x8x8xf32>
    "tpu.trace_start"() <{level = 10 : i32, message = "bij,bjk->bik"}> : () -> ()
    %cst_25 = arith.constant dense<0.000000e+00> : vector<4x8x8xf32>
    %46 = tpu.matmul %29, %43, %cst_25 {dimension_numbers = #tpu.dot_dimension_numbers<[2], [1], [1], [2], [0, 0, 0, 1, 1, 2], [0], [0]>} : vector<4x8x8xf32>, vector<4x8x8xf32>, vector<4x8x8xf32> -> vector<4x8x8xf32>
    "tpu.trace_stop"() : () -> ()
    %47 = arith.addf %45, %46 : vector<4x8x8xf32>
    %cst_26 = arith.constant 0.142857149 : f32
    %48 = vector.broadcast %cst_26 : f32 to vector<4x8x8xf32>
    %49 = arith.mulf %48, %8 : vector<4x8x8xf32>
    "tpu.trace_start"() <{level = 10 : i32, message = "bij,bjk->bik"}> : () -> ()
    %cst_27 = arith.constant dense<0.000000e+00> : vector<4x8x8xf32>
    %50 = tpu.matmul %29, %47, %cst_27 {dimension_numbers = #tpu.dot_dimension_numbers<[2], [1], [1], [2], [0, 0, 0, 1, 1, 2], [0], [0]>} : vector<4x8x8xf32>, vector<4x8x8xf32>, vector<4x8x8xf32> -> vector<4x8x8xf32>
    "tpu.trace_stop"() : () -> ()
    %51 = arith.addf %49, %50 : vector<4x8x8xf32>
    %cst_28 = arith.constant -0.166666672 : f32
    %52 = vector.broadcast %cst_28 : f32 to vector<4x8x8xf32>
    %53 = arith.mulf %52, %8 : vector<4x8x8xf32>
    "tpu.trace_start"() <{level = 10 : i32, message = "bij,bjk->bik"}> : () -> ()
    %cst_29 = arith.constant dense<0.000000e+00> : vector<4x8x8xf32>
    %54 = tpu.matmul %29, %51, %cst_29 {dimension_numbers = #tpu.dot_dimension_numbers<[2], [1], [1], [2], [0, 0, 0, 1, 1, 2], [0], [0]>} : vector<4x8x8xf32>, vector<4x8x8xf32>, vector<4x8x8xf32> -> vector<4x8x8xf32>
    "tpu.trace_stop"() : () -> ()
    %55 = arith.addf %53, %54 : vector<4x8x8xf32>
    %cst_30 = arith.constant 2.000000e-01 : f32
    %56 = vector.broadcast %cst_30 : f32 to vector<4x8x8xf32>
    %57 = arith.mulf %56, %8 : vector<4x8x8xf32>
    "tpu.trace_start"() <{level = 10 : i32, message = "bij,bjk->bik"}> : () -> ()
    %cst_31 = arith.constant dense<0.000000e+00> : vector<4x8x8xf32>
    %58 = tpu.matmul %29, %55, %cst_31 {dimension_numbers = #tpu.dot_dimension_numbers<[2], [1], [1], [2], [0, 0, 0, 1, 1, 2], [0], [0]>} : vector<4x8x8xf32>, vector<4x8x8xf32>, vector<4x8x8xf32> -> vector<4x8x8xf32>
    "tpu.trace_stop"() : () -> ()
    %59 = arith.addf %57, %58 : vector<4x8x8xf32>
    %cst_32 = arith.constant -2.500000e-01 : f32
    %60 = vector.broadcast %cst_32 : f32 to vector<4x8x8xf32>
    %61 = arith.mulf %60, %8 : vector<4x8x8xf32>
    "tpu.trace_start"() <{level = 10 : i32, message = "bij,bjk->bik"}> : () -> ()
    %cst_33 = arith.constant dense<0.000000e+00> : vector<4x8x8xf32>
    %62 = tpu.matmul %29, %59, %cst_33 {dimension_numbers = #tpu.dot_dimension_numbers<[2], [1], [1], [2], [0, 0, 0, 1, 1, 2], [0], [0]>} : vector<4x8x8xf32>, vector<4x8x8xf32>, vector<4x8x8xf32> -> vector<4x8x8xf32>
    "tpu.trace_stop"() : () -> ()
    %63 = arith.addf %61, %62 : vector<4x8x8xf32>
    %cst_34 = arith.constant 0.333333343 : f32
    %64 = vector.broadcast %cst_34 : f32 to vector<4x8x8xf32>
    %65 = arith.mulf %64, %8 : vector<4x8x8xf32>
    "tpu.trace_start"() <{level = 10 : i32, message = "bij,bjk->bik"}> : () -> ()
    %cst_35 = arith.constant dense<0.000000e+00> : vector<4x8x8xf32>
    %66 = tpu.matmul %29, %63, %cst_35 {dimension_numbers = #tpu.dot_dimension_numbers<[2], [1], [1], [2], [0, 0, 0, 1, 1, 2], [0], [0]>} : vector<4x8x8xf32>, vector<4x8x8xf32>, vector<4x8x8xf32> -> vector<4x8x8xf32>
    "tpu.trace_stop"() : () -> ()
    %67 = arith.addf %65, %66 : vector<4x8x8xf32>
    %cst_36 = arith.constant -5.000000e-01 : f32
    %68 = vector.broadcast %cst_36 : f32 to vector<4x8x8xf32>
    %69 = arith.mulf %68, %8 : vector<4x8x8xf32>
    "tpu.trace_start"() <{level = 10 : i32, message = "bij,bjk->bik"}> : () -> ()
    %cst_37 = arith.constant dense<0.000000e+00> : vector<4x8x8xf32>
    %70 = tpu.matmul %29, %67, %cst_37 {dimension_numbers = #tpu.dot_dimension_numbers<[2], [1], [1], [2], [0, 0, 0, 1, 1, 2], [0], [0]>} : vector<4x8x8xf32>, vector<4x8x8xf32>, vector<4x8x8xf32> -> vector<4x8x8xf32>
    "tpu.trace_stop"() : () -> ()
    %71 = arith.addf %69, %70 : vector<4x8x8xf32>
    %cst_38 = arith.constant 1.000000e+00 : f32
    %72 = vector.broadcast %cst_38 : f32 to vector<4x8x8xf32>
    %73 = arith.mulf %72, %8 : vector<4x8x8xf32>
    "tpu.trace_start"() <{level = 10 : i32, message = "bij,bjk->bik"}> : () -> ()
    %cst_39 = arith.constant dense<0.000000e+00> : vector<4x8x8xf32>
    %74 = tpu.matmul %29, %71, %cst_39 {dimension_numbers = #tpu.dot_dimension_numbers<[2], [1], [1], [2], [0, 0, 0, 1, 1, 2], [0], [0]>} : vector<4x8x8xf32>, vector<4x8x8xf32>, vector<4x8x8xf32> -> vector<4x8x8xf32>
    "tpu.trace_stop"() : () -> ()
    %75 = arith.addf %73, %74 : vector<4x8x8xf32>
    "tpu.trace_start"() <{level = 10 : i32, message = "bij,bjk->bik"}> : () -> ()
    %cst_40 = arith.constant dense<0.000000e+00> : vector<4x8x8xf32>
    %76 = tpu.matmul %29, %75, %cst_40 {dimension_numbers = #tpu.dot_dimension_numbers<[2], [1], [1], [2], [0, 0, 0, 1, 1, 2], [0], [0]>} : vector<4x8x8xf32>, vector<4x8x8xf32>, vector<4x8x8xf32> -> vector<4x8x8xf32>
    "tpu.trace_stop"() : () -> ()
    %cst_41 = arith.constant 6.400000e+01 : f32
    %77 = vector.broadcast %cst_41 : f32 to vector<4x8x8xf32>
    %78 = arith.mulf %77, %76 : vector<4x8x8xf32>
    %79 = math.log %14 : vector<4x1x1xf32>
    %80 = vector.broadcast %79 : vector<4x1x1xf32> to vector<4x8x8xf32>
    %81 = arith.mulf %80, %8 : vector<4x8x8xf32>
    %82 = arith.addf %78, %81 : vector<4x8x8xf32>
    %c0_42 = arith.constant 0 : index
    %c0_43 = arith.constant 0 : index
    %c0_44 = arith.constant 0 : index
    %83 = vector.load %arg4[%c0_42, %c0_43, %c0_44] : memref<4x8x8xf32, #tpu.memory_space<vmem>>, vector<4x8x8xf32>
    tpu.vector_store %arg4[%c0_42, %c0_43, %c0_44], %82 {strides = array<i32>} : memref<4x8x8xf32, #tpu.memory_space<vmem>>, vector<4x8x8xf32>,
    %cst_45 = arith.constant 0.000000e+00 : f32
    %84 = vector.broadcast %cst_45 : f32 to vector<4x16xf32>
    %c0_46 = arith.constant 0 : index
    %c0_47 = arith.constant 0 : index
    %c0_48 = arith.constant 0 : index
    %85 = vector.load %arg4[%c0_46, %c0_47, %c0_48] : memref<4x8x8xf32, #tpu.memory_space<vmem>>, vector<4x1x8xf32>
    %86 = vector.shape_cast %85 : vector<4x1x8xf32> to vector<4x8xf32>
    %c0_49 = arith.constant 0 : index
    %c0_50 = arith.constant 0 : index
    %c0_51 = arith.constant 0 : index
    %87 = vector.load %arg1[%c0_49, %c0_50, %c0_51] : memref<8x8x16xf32, #tpu.memory_space<vmem>>, vector<1x8x16xf32>
    %88 = vector.shape_cast %87 : vector<1x8x16xf32> to vector<8x16xf32>
    %cst_52 = arith.constant dense<0.000000e+00> : vector<4x16xf32>
    %89 = tpu.matmul %86, %88, %cst_52 {dimension_numbers = #tpu.dot_dimension_numbers<[1], [0], [0], [1], [0, 0, 1, 1], [], []>} : vector<4x8xf32>, vector<8x16xf32>, vector<4x16xf32> -> vector<4x16xf32>
    %90 = arith.addf %84, %89 : vector<4x16xf32>
    %c0_53 = arith.constant 0 : index
    %c1 = arith.constant 1 : index
    %c0_54 = arith.constant 0 : index
    %91 = vector.load %arg4[%c0_53, %c1, %c0_54] : memref<4x8x8xf32, #tpu.memory_space<vmem>>, vector<4x1x8xf32>
    %92 = vector.shape_cast %91 : vector<4x1x8xf32> to vector<4x8xf32>
    %c1_55 = arith.constant 1 : index
    %c0_56 = arith.constant 0 : index
    %c0_57 = arith.constant 0 : index
    %93 = vector.load %arg1[%c1_55, %c0_56, %c0_57] : memref<8x8x16xf32, #tpu.memory_space<vmem>>, vector<1x8x16xf32>
    %94 = vector.shape_cast %93 : vector<1x8x16xf32> to vector<8x16xf32>
    %cst_58 = arith.constant dense<0.000000e+00> : vector<4x16xf32>
    %95 = tpu.matmul %92, %94, %cst_58 {dimension_numbers = #tpu.dot_dimension_numbers<[1], [0], [0], [1], [0, 0, 1, 1], [], []>} : vector<4x8xf32>, vector<8x16xf32>, vector<4x16xf32> -> vector<4x16xf32>
    %96 = arith.addf %90, %95 : vector<4x16xf32>
    %c0_59 = arith.constant 0 : index
    %c2 = arith.constant 2 : index
    %c0_60 = arith.constant 0 : index
    %97 = vector.load %arg4[%c0_59, %c2, %c0_60] : memref<4x8x8xf32, #tpu.memory_space<vmem>>, vector<4x1x8xf32>
    %98 = vector.shape_cast %97 : vector<4x1x8xf32> to vector<4x8xf32>
    %c2_61 = arith.constant 2 : index
    %c0_62 = arith.constant 0 : index
    %c0_63 = arith.constant 0 : index
    %99 = vector.load %arg1[%c2_61, %c0_62, %c0_63] : memref<8x8x16xf32, #tpu.memory_space<vmem>>, vector<1x8x16xf32>
    %100 = vector.shape_cast %99 : vector<1x8x16xf32> to vector<8x16xf32>
    %cst_64 = arith.constant dense<0.000000e+00> : vector<4x16xf32>
    %101 = tpu.matmul %98, %100, %cst_64 {dimension_numbers = #tpu.dot_dimension_numbers<[1], [0], [0], [1], [0, 0, 1, 1], [], []>} : vector<4x8xf32>, vector<8x16xf32>, vector<4x16xf32> -> vector<4x16xf32>
    %102 = arith.addf %96, %101 : vector<4x16xf32>
    %c0_65 = arith.constant 0 : index
    %c3 = arith.constant 3 : index
    %c0_66 = arith.constant 0 : index
    %103 = vector.load %arg4[%c0_65, %c3, %c0_66] : memref<4x8x8xf32, #tpu.memory_space<vmem>>, vector<4x1x8xf32>
    %104 = vector.shape_cast %103 : vector<4x1x8xf32> to vector<4x8xf32>
    %c3_67 = arith.constant 3 : index
    %c0_68 = arith.constant 0 : index
    %c0_69 = arith.constant 0 : index
    %105 = vector.load %arg1[%c3_67, %c0_68, %c0_69] : memref<8x8x16xf32, #tpu.memory_space<vmem>>, vector<1x8x16xf32>
    %106 = vector.shape_cast %105 : vector<1x8x16xf32> to vector<8x16xf32>
    %cst_70 = arith.constant dense<0.000000e+00> : vector<4x16xf32>
    %107 = tpu.matmul %104, %106, %cst_70 {dimension_numbers = #tpu.dot_dimension_numbers<[1], [0], [0], [1], [0, 0, 1, 1], [], []>} : vector<4x8xf32>, vector<8x16xf32>, vector<4x16xf32> -> vector<4x16xf32>
    %108 = arith.addf %102, %107 : vector<4x16xf32>
    %c0_71 = arith.constant 0 : index
    %c4 = arith.constant 4 : index
    %c0_72 = arith.constant 0 : index
    %109 = vector.load %arg4[%c0_71, %c4, %c0_72] : memref<4x8x8xf32, #tpu.memory_space<vmem>>, vector<4x1x8xf32>
    %110 = vector.shape_cast %109 : vector<4x1x8xf32> to vector<4x8xf32>
    %c4_73 = arith.constant 4 : index
    %c0_74 = arith.constant 0 : index
    %c0_75 = arith.constant 0 : index
    %111 = vector.load %arg1[%c4_73, %c0_74, %c0_75] : memref<8x8x16xf32, #tpu.memory_space<vmem>>, vector<1x8x16xf32>
    %112 = vector.shape_cast %111 : vector<1x8x16xf32> to vector<8x16xf32>
    %cst_76 = arith.constant dense<0.000000e+00> : vector<4x16xf32>
    %113 = tpu.matmul %110, %112, %cst_76 {dimension_numbers = #tpu.dot_dimension_numbers<[1], [0], [0], [1], [0, 0, 1, 1], [], []>} : vector<4x8xf32>, vector<8x16xf32>, vector<4x16xf32> -> vector<4x16xf32>
    %114 = arith.addf %108, %113 : vector<4x16xf32>
    %c0_77 = arith.constant 0 : index
    %c5 = arith.constant 5 : index
    %c0_78 = arith.constant 0 : index
    %115 = vector.load %arg4[%c0_77, %c5, %c0_78] : memref<4x8x8xf32, #tpu.memory_space<vmem>>, vector<4x1x8xf32>
    %116 = vector.shape_cast %115 : vector<4x1x8xf32> to vector<4x8xf32>
    %c5_79 = arith.constant 5 : index
    %c0_80 = arith.constant 0 : index
    %c0_81 = arith.constant 0 : index
    %117 = vector.load %arg1[%c5_79, %c0_80, %c0_81] : memref<8x8x16xf32, #tpu.memory_space<vmem>>, vector<1x8x16xf32>
    %118 = vector.shape_cast %117 : vector<1x8x16xf32> to vector<8x16xf32>
    %cst_82 = arith.constant dense<0.000000e+00> : vector<4x16xf32>
    %119 = tpu.matmul %116, %118, %cst_82 {dimension_numbers = #tpu.dot_dimension_numbers<[1], [0], [0], [1], [0, 0, 1, 1], [], []>} : vector<4x8xf32>, vector<8x16xf32>, vector<4x16xf32> -> vector<4x16xf32>
    %120 = arith.addf %114, %119 : vector<4x16xf32>
    %c0_83 = arith.constant 0 : index
    %c6 = arith.constant 6 : index
    %c0_84 = arith.constant 0 : index
    %121 = vector.load %arg4[%c0_83, %c6, %c0_84] : memref<4x8x8xf32, #tpu.memory_space<vmem>>, vector<4x1x8xf32>
    %122 = vector.shape_cast %121 : vector<4x1x8xf32> to vector<4x8xf32>
    %c6_85 = arith.constant 6 : index
    %c0_86 = arith.constant 0 : index
    %c0_87 = arith.constant 0 : index
    %123 = vector.load %arg1[%c6_85, %c0_86, %c0_87] : memref<8x8x16xf32, #tpu.memory_space<vmem>>, vector<1x8x16xf32>
    %124 = vector.shape_cast %123 : vector<1x8x16xf32> to vector<8x16xf32>
    %cst_88 = arith.constant dense<0.000000e+00> : vector<4x16xf32>
    %125 = tpu.matmul %122, %124, %cst_88 {dimension_numbers = #tpu.dot_dimension_numbers<[1], [0], [0], [1], [0, 0, 1, 1], [], []>} : vector<4x8xf32>, vector<8x16xf32>, vector<4x16xf32> -> vector<4x16xf32>
    %126 = arith.addf %120, %125 : vector<4x16xf32>
    %c0_89 = arith.constant 0 : index
    %c7 = arith.constant 7 : index
    %c0_90 = arith.constant 0 : index
    %127 = vector.load %arg4[%c0_89, %c7, %c0_90] : memref<4x8x8xf32, #tpu.memory_space<vmem>>, vector<4x1x8xf32>
    %128 = vector.shape_cast %127 : vector<4x1x8xf32> to vector<4x8xf32>
    %c7_91 = arith.constant 7 : index
    %c0_92 = arith.constant 0 : index
    %c0_93 = arith.constant 0 : index
    %129 = vector.load %arg1[%c7_91, %c0_92, %c0_93] : memref<8x8x16xf32, #tpu.memory_space<vmem>>, vector<1x8x16xf32>
    %130 = vector.shape_cast %129 : vector<1x8x16xf32> to vector<8x16xf32>
    %cst_94 = arith.constant dense<0.000000e+00> : vector<4x16xf32>
    %131 = tpu.matmul %128, %130, %cst_94 {dimension_numbers = #tpu.dot_dimension_numbers<[1], [0], [0], [1], [0, 0, 1, 1], [], []>} : vector<4x8xf32>, vector<8x16xf32>, vector<4x16xf32> -> vector<4x16xf32>
    %132 = arith.addf %126, %131 : vector<4x16xf32>
    %133 = vector.broadcast %1 : vector<1x16xf32> to vector<4x16xf32>
    %134 = arith.addf %132, %133 : vector<4x16xf32>
    %cst_95 = arith.constant dense<0xFF800000> : vector<4xf32>
    %135 = vector.multi_reduction <maximumf>, %134, %cst_95 [1] : vector<4x16xf32> to vector<4xf32>
    %136 = vector.shape_cast %135 : vector<4xf32> to vector<4x1xf32>
    %137 = vector.broadcast %136 : vector<4x1xf32> to vector<4x16xf32>
    %138 = arith.subf %134, %137 : vector<4x16xf32>
    %139 = math.exp %138 : vector<4x16xf32>
    %cst_96 = arith.constant dense<0.000000e+00> : vector<4xf32>
    %140 = vector.multi_reduction <add>, %139, %cst_96 [1] : vector<4x16xf32> to vector<4xf32>
    %141 = vector.shape_cast %140 : vector<4xf32> to vector<4x1xf32>
    %142 = vector.broadcast %141 : vector<4x1xf32> to vector<4x16xf32>
    %143 = arith.divf %139, %142 : vector<4x16xf32>
    %c0_97 = arith.constant 0 : index
    %c0_98 = arith.constant 0 : index
    %144 = vector.load %arg3[%c0_97, %c0_98] : memref<4x16xf32, #tpu.memory_space<vmem>>, vector<4x16xf32>
    tpu.vector_store %arg3[%c0_97, %c0_98], %143 {strides = array<i32>} : memref<4x16xf32, #tpu.memory_space<vmem>>, vector<4x16xf32>,
    return
  }
}

</mosaic_0001>

<llo_original>
// kernel: tpu_custom_call.1
$region0: #{tpu_custom_call.1}
  #allocation0 [shape = 'u32[]', space=smem, size = 0x4, offset = 0x4, fixed_abs, tag = 'smem constant byte address 0x4 - core index']
  #allocation1 [shape = 'u32[144,128]{1,0:T(1,128)}', space=vmem, size = 0x12000, scoped, tag = 'internal scratch']
  #allocation2 [shape = 'f32[4,8,8]{2,1,0:T(8,128)}', space=vmem, size = 0x4000, scoped, tag = 'scratch operand']
  %s0 = inlined_call_operand.hbm [shape: f32[4,8,8], index: 0, kind: input, shape index: {}]
  %s1 = inlined_call_operand.hbm [shape: f32[8,8,16], index: 1, kind: input, shape index: {}]
  %s2 = inlined_call_operand.vmem [shape: f32[1,16], index: 2, kind: input, shape index: {}]
  %s3 = inlined_call_operand.hbm [shape: f32[4,16], index: 3, kind: output, shape index: {}]
  %s4 = sld [smem:[#allocation0]]
  $region72: #{tpu_custom_call.1} parent=0
    _
  %s6 = ssub.s32 1, %s4
  %s7 = scalar_select 0, %s6, %s4
  $region1: #{tpu_custom_call.1} parent=0
    #allocation3 [shape = 'u8[16384]{0}', space=vmem, size = 0x4000, scoped, tag = 'input window, operand 0, single buffered']
    #allocation4 [shape = 's32[1]{0}', space=sflag, size = 0x4, scoped, tag = 'scoped memory for tpu_custom_call.1']
    #allocation5 [shape = 's32[1]{0}', space=sflag, size = 0x4, scoped, tag = 'scoped memory for tpu_custom_call.1']
    #allocation6 [shape = 'u8[32768]{0}', space=vmem, size = 0x8000, scoped, tag = 'input window, operand 1, single buffered']
    #allocation7 [shape = 's32[1]{0}', space=sflag, size = 0x4, scoped, tag = 'scoped memory for tpu_custom_call.1']
    #allocation8 [shape = 'u8[2048]{0}', space=vmem, size = 0x800, scoped, tag = 'output window, operand 0, single buffered']
    %8 = vsyncpa [#allocation4], 0
    %9 = vsyncpa [#allocation7], 0
    %10 = vsyncpa [#allocation5], 0
    // Predicated region
    $region2: #{tpu_custom_call.1} parent=1 // pred_check
      _
    $region3: #{tpu_custom_call.1} parent=1 // pred_check_branch
      %12 = sbr.rel (0) target = $region5
    $region4: #{tpu_custom_call.1} parent=1 // pred_region
      %s14 = ssub.s32 512, 512
      %15 = vsyncadd [#allocation4], %s14
      %s16 = sshll.u32 [#allocation3], 4
      %s17 = int_to_ptr.vmem [resolvable:$true] %s16
      %22 = dma.hbm_to_vmem [thread:$0]  %s0, 512, %s17, [#allocation4], 128, 128, 8
    $region5: #{tpu_custom_call.1} parent=1 // pred_fallthru
      _
    // Predicated region
    $region6: #{tpu_custom_call.1} parent=1 // pred_check
      _
    $region7: #{tpu_custom_call.1} parent=1 // pred_check_branch
      %24 = sbr.rel (0) target = $region9
    $region8: #{tpu_custom_call.1} parent=1 // pred_region
      %s26 = ssub.s32 1024, 1024
      %27 = vsyncadd [#allocation7], %s26
      %s28 = sshll.u32 [#allocation6], 4
      %s29 = int_to_ptr.vmem [resolvable:$true] %s28
      %34 = dma.hbm_to_vmem [thread:$0]  %s1, 1024, %s29, [#allocation7], 128, 128, 8
    $region9: #{tpu_custom_call.1} parent=1 // pred_fallthru
      _
    // Predicated region
    $region10: #{tpu_custom_call.1} parent=1 // pred_check
      _
    $region11: #{tpu_custom_call.1} parent=1 // pred_check_branch
      %36 = sbr.rel (0) target = $region13
    $region12: #{tpu_custom_call.1} parent=1 // pred_region
      _
    $region13: #{tpu_custom_call.1} parent=1 // pred_fallthru
      _
    // Predicated region
    $region14: #{tpu_custom_call.1} parent=1 // pred_check
      _
    $region15: #{tpu_custom_call.1} parent=1 // pred_check_branch
      %38 = sbr.rel (0) target = $region17
    $region16: #{tpu_custom_call.1} parent=1 // pred_region
      %39 = dma.done [#allocation4], 512
    $region17: #{tpu_custom_call.1} parent=1 // pred_fallthru
      _
    // Predicated region
    $region18: #{tpu_custom_call.1} parent=1 // pred_check
      _
    $region19: #{tpu_custom_call.1} parent=1 // pred_check_branch
      %41 = sbr.rel (0) target = $region21
    $region20: #{tpu_custom_call.1} parent=1 // pred_region
      %42 = dma.done [#allocation7], 1024
    $region21: #{tpu_custom_call.1} parent=1 // pred_fallthru
      _
    %v43 = vld [vmem:[#allocation3] sm:$0xff]
    %v44 = vld [vmem:[#allocation3 + $0x8] sm:$0xff]
    %v45 = vld [vmem:[#allocation3 + $0x10] sm:$0xff]
    %v46 = vld [vmem:[#allocation3 + $0x18] sm:$0xff]
    %v47 = vld [vmem:[%s2] sm:$0x1]
    %v48 = vlaneseq
    %v49 = vshrl.u32 %v48, 7
    %v50 = vlaneseq
    %v51 = vand.u32 %v50, 127
    %vm52 = vcmp.eq.s32.totalorder %v49, %v51
    %v53 = vsel %vm52, 1, 0
    %v54 = vcvt.s32.f32 %v53
    %v55 = vmul.f32 %v43, %v43
    %v56 = vmul.f32 %v44, %v44
    %v57 = vmul.f32 %v45, %v45
    %v58 = vmul.f32 %v46, %v46
    %vm59 = vcmask 64512
    %v60 = vsel %vm59, %v55, 0.0
    %61 = vadd.xlane.f32.xlu0 %v60
    %v62 = vpop.xlane.xlu0 %61
    %v63 = vsel %vm59, %v56, 0.0
    %64 = vadd.xlane.f32.xlu0 %v63
    %v65 = vpop.xlane.xlu0 %64
    %v66 = vsel %vm59, %v57, 0.0
    %67 = vadd.xlane.f32.xlu0 %v66
    %v68 = vpop.xlane.xlu0 %67
    %v69 = vsel %vm59, %v58, 0.0
    %70 = vadd.xlane.f32.xlu0 %v69
    %v71 = vpop.xlane.xlu0 %70
    %v72 = vrot.slane %v62, 4
    %v73 = vadd.f32 %v62, %v72
    %v74 = vrot.slane %v73, 2
    %v75 = vadd.f32 %v73, %v74
    %v76 = vrot.slane %v75, 1
    %v77 = vadd.f32 %v75, %v76
    %v78 = vrot.slane %v65, 4
    %v79 = vadd.f32 %v65, %v78
    %v80 = vrot.slane %v79, 2
    %v81 = vadd.f32 %v79, %v80
    %v82 = vrot.slane %v81, 1
    %v83 = vadd.f32 %v81, %v82
    %v84 = vrot.slane %v68, 4
    %v85 = vadd.f32 %v68, %v84
    %v86 = vrot.slane %v85, 2
    %v87 = vadd.f32 %v85, %v86
    %v88 = vrot.slane %v87, 1
    %v89 = vadd.f32 %v87, %v88
    %v90 = vrot.slane %v71, 4
    %v91 = vadd.f32 %v71, %v90
    %v92 = vrot.slane %v91, 2
    %v93 = vadd.f32 %v91, %v92
    %v94 = vrot.slane %v93, 1
    %v95 = vadd.f32 %v93, %v94
    %v96 = vrsqrt.pop %v77
    %v97 = vmul.f32 %v77, %v96
    %vm98 = vcmp.eq.f32.partialorder %v77, inf
    %v99 = vsel %vm98, %v77, %v97
    %vm100 = vcmp.eq.f32.partialorder %v77, 0.0
    %v101 = vand.u32 %v77, 2147483648
    %v102 = vsel %vm100, %v101, %v99
    %v103 = vrsqrt.pop %v83
    %v104 = vmul.f32 %v83, %v103
    %vm105 = vcmp.eq.f32.partialorder %v83, inf
    %v106 = vsel %vm105, %v83, %v104
    %vm107 = vcmp.eq.f32.partialorder %v83, 0.0
    %v108 = vand.u32 %v83, 2147483648
    %v109 = vsel %vm107, %v108, %v106
    %v110 = vrsqrt.pop %v89
    %v111 = vmul.f32 %v89, %v110
    %vm112 = vcmp.eq.f32.partialorder %v89, inf
    %v113 = vsel %vm112, %v89, %v111
    %vm114 = vcmp.eq.f32.partialorder %v89, 0.0
    %v115 = vand.u32 %v89, 2147483648
    %v116 = vsel %vm114, %v115, %v113
    %v117 = vrsqrt.pop %v95
    %v118 = vmul.f32 %v95, %v117
    %vm119 = vcmp.eq.f32.partialorder %v95, inf
    %v120 = vsel %vm119, %v95, %v118
    %vm121 = vcmp.eq.f32.partialorder %v95, 0.0
    %v122 = vand.u32 %v95, 2147483648
    %v123 = vsel %vm121, %v122, %v120
    %v124 = vrcp.pop %v102
    %v125 = vmul.f32 %v43, %v124
    %v126 = vrcp.pop %v109
    %v127 = vmul.f32 %v44, %v126
    %v128 = vrcp.pop %v116
    %v129 = vmul.f32 %v45, %v128
    %v130 = vrcp.pop %v123
    %v131 = vmul.f32 %v46, %v130
    loop: start=0, step=1, limit=16
    $region22: #{tpu_custom_call.1} parent=1 // loop_pre_header
      _
    $region23: #{tpu_custom_call.1} parent=1 // loop_header
      %s133 = sphi 0, %s137
      %p134 = scmp.ge.s32.totalorder %s133, 16
      %v138 = vphi %v125, %v735
      %v139 = vphi %v127, %v736
      %v140 = vphi %v129, %v737
      %v141 = vphi %v131, %v738
      %v142 = vphi %v54, %v1031
      %v143 = vphi %v54, %v1032
      %v144 = vphi %v54, %v1033
      %v145 = vphi %v54, %v1034
    $region24: #{tpu_custom_call.1} parent=1 // loop_header_branch
      %136 = sbr.rel (%p134) target = $region28
    $region25: #{tpu_custom_call.1} parent=1 // loop_body
      %v146 = vmul.f32 %v54, 3.0
      %v148 = vsel %vm59, %v142, 0
      %150 = vmatprep.subr.mxu0 0.0
      %151 = vmatpush1.msra.mxu0 %v138
      %152 = vmatprep.subr.mxu0 0.0
      %153 = vmatpush1.msra.mxu0 0.0
      %154 = vmatprep.subr.mxu0 0.0
      %155 = vmatpush1.msra.mxu0 0.0
      %156 = vmatprep.subr.mxu0 0.0
      %157 = vmatpush1.msra.mxu0 0.0
      %158 = vmatprep.subr.mxu0 0.0
      %159 = vmatpush1.msra.mxu0 0.0
      %160 = vmatprep.subr.mxu0 0.0
      %161 = vmatpush1.msra.mxu0 0.0
      %162 = vmatprep.subr.mxu0 0.0
      %163 = vmatpush1.msra.mxu0 0.0
      %164 = vmatprep.subr.mxu0 0.0
      %165 = vmatpush1.msra.mxu0 0.0
      %166 = vmatprep.subr.mxu0 0.0
      %167 = vmatpush1.msra.mxu0 0.0
      %168 = vmatprep.subr.mxu0 0.0
      %169 = vmatpush1.msra.mxu0 0.0
      %170 = vmatprep.subr.mxu0 0.0
      %171 = vmatpush1.msra.mxu0 0.0
      %172 = vmatprep.subr.mxu0 0.0
      %173 = vmatpush1.msra.mxu0 0.0
      %174 = vmatprep.subr.mxu0 0.0
      %175 = vmatpush1.msra.mxu0 0.0
      %176 = vmatprep.subr.mxu0 0.0
      %177 = vmatpush1.msra.mxu0 0.0
      %178 = vmatprep.subr.mxu0 0.0
      %179 = vmatpush1.msra.mxu0 0.0
      %180 = vmatprep.subr.mxu0 0.0
      %181 = vmatpush1.msra.mxu0 0.0
      %182 = vmatprep.subr.mxu0 0.0
      %183 = vmatpush1.msra.mxu0 0.0
      %184 = vmatprep.subr.mxu0 0.0
      %185 = vmatpush1.msra.mxu0 0.0
      %186 = vmatprep.subr.mxu0 0.0
      %187 = vmatpush1.msra.mxu0 0.0
      %188 = vmatprep.subr.mxu0 0.0
      %189 = vmatpush1.msra.mxu0 0.0
      %190 = vmatprep.subr.mxu0 0.0
      %191 = vmatpush1.msra.mxu0 0.0
      %192 = vmatprep.subr.mxu0 0.0
      %193 = vmatpush1.msra.mxu0 0.0
      %194 = vmatprep.subr.mxu0 0.0
      %195 = vmatpush1.msra.mxu0 0.0
      %196 = vmatprep.subr.mxu0 0.0
      %197 = vmatpush1.msra.mxu0 0.0
      %198 = vmatprep.subr.mxu0 0.0
      %199 = vmatpush1.msra.mxu0 0.0
      %200 = vmatprep.subr.mxu0 0.0
      %201 = vmatpush1.msra.mxu0 0.0
      %202 = vmatprep.subr.mxu0 0.0
      %203 = vmatpush1.msra.mxu0 0.0
      %204 = vmatprep.subr.mxu0 0.0
      %205 = vmatpush1.msra.mxu0 0.0
      %206 = vmatprep.subr.mxu0 0.0
      %207 = vmatpush1.msra.mxu0 0.0
      %208 = vmatprep.subr.mxu0 0.0
      %209 = vmatpush1.msra.mxu0 0.0
      %210 = vmatprep.subr.mxu0 0.0
      %211 = vmatpush1.msra.mxu0 0.0
      %212 = vmatprep.subr.mxu0 0.0
      %213 = vmatpush1.msra.mxu0 0.0
      %214 = vmatprep.mubr.f32.mxu0 0.0
      %215 = vmatmul.mubr.f32.gmra.mrb[0].mxu0 %v148
      %v216 = vpop.f32.mrb[0].mxu0
      %v217 = vadd.f32 0.0, %v216
      %v218 = vpop.f32.mrb[0].mxu0
      %219 = vdwg.mxu0
      %v221 = vsel %vm59, %v143, 0
      %223 = vmatprep.subr.mxu0 0.0
      %224 = vmatpush1.msra.mxu0 %v139
      %225 = vmatprep.subr.mxu0 0.0
      %226 = vmatpush1.msra.mxu0 0.0
      %227 = vmatprep.subr.mxu0 0.0
      %228 = vmatpush1.msra.mxu0 0.0
      %229 = vmatprep.subr.mxu0 0.0
      %230 = vmatpush1.msra.mxu0 0.0
      %231 = vmatprep.subr.mxu0 0.0
      %232 = vmatpush1.msra.mxu0 0.0
      %233 = vmatprep.subr.mxu0 0.0
      %234 = vmatpush1.msra.mxu0 0.0
      %235 = vmatprep.subr.mxu0 0.0
      %236 = vmatpush1.msra.mxu0 0.0
      %237 = vmatprep.subr.mxu0 0.0
      %238 = vmatpush1.msra.mxu0 0.0
      %239 = vmatprep.subr.mxu0 0.0
      %240 = vmatpush1.msra.mxu0 0.0
      %241 = vmatprep.subr.mxu0 0.0
      %242 = vmatpush1.msra.mxu0 0.0
      %243 = vmatprep.subr.mxu0 0.0
      %244 = vmatpush1.msra.mxu0 0.0
      %245 = vmatprep.subr.mxu0 0.0
      %246 = vmatpush1.msra.mxu0 0.0
      %247 = vmatprep.subr.mxu0 0.0
      %248 = vmatpush1.msra.mxu0 0.0
      %249 = vmatprep.subr.mxu0 0.0
      %250 = vmatpush1.msra.mxu0 0.0
      %251 = vmatprep.subr.mxu0 0.0
      %252 = vmatpush1.msra.mxu0 0.0
      %253 = vmatprep.subr.mxu0 0.0
      %254 = vmatpush1.msra.mxu0 0.0
      %255 = vmatprep.subr.mxu0 0.0
      %256 = vmatpush1.msra.mxu0 0.0
      %257 = vmatprep.subr.mxu0 0.0
      %258 = vmatpush1.msra.mxu0 0.0
      %259 = vmatprep.subr.mxu0 0.0
      %260 = vmatpush1.msra.mxu0 0.0
      %261 = vmatprep.subr.mxu0 0.0
      %262 = vmatpush1.msra.mxu0 0.0
      %263 = vmatprep.subr.mxu0 0.0
      %264 = vmatpush1.msra.mxu0 0.0
      %265 = vmatprep.subr.mxu0 0.0
      %266 = vmatpush1.msra.mxu0 0.0
      %267 = vmatprep.subr.mxu0 0.0
      %268 = vmatpush1.msra.mxu0 0.0
      %269 = vmatprep.subr.mxu0 0.0
      %270 = vmatpush1.msra.mxu0 0.0
      %271 = vmatprep.subr.mxu0 0.0
      %272 = vmatpush1.msra.mxu0 0.0
      %273 = vmatprep.subr.mxu0 0.0
      %274 = vmatpush1.msra.mxu0 0.0
      %275 = vmatprep.subr.mxu0 0.0
      %276 = vmatpush1.msra.mxu0 0.0
      %277 = vmatprep.subr.mxu0 0.0
      %278 = vmatpush1.msra.mxu0 0.0
      %279 = vmatprep.subr.mxu0 0.0
      %280 = vmatpush1.msra.mxu0 0.0
      %281 = vmatprep.subr.mxu0 0.0
      %282 = vmatpush1.msra.mxu0 0.0
      %283 = vmatprep.subr.mxu0 0.0
      %284 = vmatpush1.msra.mxu0 0.0
      %285 = vmatprep.subr.mxu0 0.0
      %286 = vmatpush1.msra.mxu0 0.0
      %287 = vmatprep.mubr.f32.mxu0 0.0
      %288 = vmatmul.mubr.f32.gmra.mrb[0].mxu0 %v221
      %v289 = vpop.f32.mrb[0].mxu0
      %v290 = vadd.f32 0.0, %v289
      %v291 = vpop.f32.mrb[0].mxu0
      %292 = vdwg.mxu0
      %v294 = vsel %vm59, %v144, 0
      %296 = vmatprep.subr.mxu0 0.0
      %297 = vmatpush1.msra.mxu0 %v140
      %298 = vmatprep.subr.mxu0 0.0
      %299 = vmatpush1.msra.mxu0 0.0
      %300 = vmatprep.subr.mxu0 0.0
      %301 = vmatpush1.msra.mxu0 0.0
      %302 = vmatprep.subr.mxu0 0.0
      %303 = vmatpush1.msra.mxu0 0.0
      %304 = vmatprep.subr.mxu0 0.0
      %305 = vmatpush1.msra.mxu0 0.0
      %306 = vmatprep.subr.mxu0 0.0
      %307 = vmatpush1.msra.mxu0 0.0
      %308 = vmatprep.subr.mxu0 0.0
      %309 = vmatpush1.msra.mxu0 0.0
      %310 = vmatprep.subr.mxu0 0.0
      %311 = vmatpush1.msra.mxu0 0.0
      %312 = vmatprep.subr.mxu0 0.0
      %313 = vmatpush1.msra.mxu0 0.0
      %314 = vmatprep.subr.mxu0 0.0
      %315 = vmatpush1.msra.mxu0 0.0
      %316 = vmatprep.subr.mxu0 0.0
      %317 = vmatpush1.msra.mxu0 0.0
      %318 = vmatprep.subr.mxu0 0.0
      %319 = vmatpush1.msra.mxu0 0.0
      %320 = vmatprep.subr.mxu0 0.0
      %321 = vmatpush1.msra.mxu0 0.0
      %322 = vmatprep.subr.mxu0 0.0
      %323 = vmatpush1.msra.mxu0 0.0
      %324 = vmatprep.subr.mxu0 0.0
      %325 = vmatpush1.msra.mxu0 0.0
      %326 = vmatprep.subr.mxu0 0.0
      %327 = vmatpush1.msra.mxu0 0.0
      %328 = vmatprep.subr.mxu0 0.0
      %329 = vmatpush1.msra.mxu0 0.0
      %330 = vmatprep.subr.mxu0 0.0
      %331 = vmatpush1.msra.mxu0 0.0
      %332 = vmatprep.subr.mxu0 0.0
      %333 = vmatpush1.msra.mxu0 0.0
      %334 = vmatprep.subr.mxu0 0.0
      %335 = vmatpush1.msra.mxu0 0.0
      %336 = vmatprep.subr.mxu0 0.0
      %337 = vmatpush1.msra.mxu0 0.0
      %338 = vmatprep.subr.mxu0 0.0
      %339 = vmatpush1.msra.mxu0 0.0
      %340 = vmatprep.subr.mxu0 0.0
      %341 = vmatpush1.msra.mxu0 0.0
      %342 = vmatprep.subr.mxu0 0.0
      %343 = vmatpush1.msra.mxu0 0.0
      %344 = vmatprep.subr.mxu0 0.0
      %345 = vmatpush1.msra.mxu0 0.0
      %346 = vmatprep.subr.mxu0 0.0
      %347 = vmatpush1.msra.mxu0 0.0
      %348 = vmatprep.subr.mxu0 0.0
      %349 = vmatpush1.msra.mxu0 0.0
      %350 = vmatprep.subr.mxu0 0.0
      %351 = vmatpush1.msra.mxu0 0.0
      %352 = vmatprep.subr.mxu0 0.0
      %353 = vmatpush1.msra.mxu0 0.0
      %354 = vmatprep.subr.mxu0 0.0
      %355 = vmatpush1.msra.mxu0 0.0
      %356 = vmatprep.subr.mxu0 0.0
      %357 = vmatpush1.msra.mxu0 0.0
      %358 = vmatprep.subr.mxu0 0.0
      %359 = vmatpush1.msra.mxu0 0.0
      %360 = vmatprep.mubr.f32.mxu0 0.0
      %361 = vmatmul.mubr.f32.gmra.mrb[0].mxu0 %v294
      %v362 = vpop.f32.mrb[0].mxu0
      %v363 = vadd.f32 0.0, %v362
      %v364 = vpop.f32.mrb[0].mxu0
      %365 = vdwg.mxu0
      %v367 = vsel %vm59, %v145, 0
      %369 = vmatprep.subr.mxu0 0.0
      %370 = vmatpush1.msra.mxu0 %v141
      %371 = vmatprep.subr.mxu0 0.0
      %372 = vmatpush1.msra.mxu0 0.0
      %373 = vmatprep.subr.mxu0 0.0
      %374 = vmatpush1.msra.mxu0 0.0
      %375 = vmatprep.subr.mxu0 0.0
      %376 = vmatpush1.msra.mxu0 0.0
      %377 = vmatprep.subr.mxu0 0.0
      %378 = vmatpush1.msra.mxu0 0.0
      %379 = vmatprep.subr.mxu0 0.0
      %380 = vmatpush1.msra.mxu0 0.0
      %381 = vmatprep.subr.mxu0 0.0
      %382 = vmatpush1.msra.mxu0 0.0
      %383 = vmatprep.subr.mxu0 0.0
      %384 = vmatpush1.msra.mxu0 0.0
      %385 = vmatprep.subr.mxu0 0.0
      %386 = vmatpush1.msra.mxu0 0.0
      %387 = vmatprep.subr.mxu0 0.0
      %388 = vmatpush1.msra.mxu0 0.0
      %389 = vmatprep.subr.mxu0 0.0
      %390 = vmatpush1.msra.mxu0 0.0
      %391 = vmatprep.subr.mxu0 0.0
      %392 = vmatpush1.msra.mxu0 0.0
      %393 = vmatprep.subr.mxu0 0.0
      %394 = vmatpush1.msra.mxu0 0.0
      %395 = vmatprep.subr.mxu0 0.0
      %396 = vmatpush1.msra.mxu0 0.0
      %397 = vmatprep.subr.mxu0 0.0
      %398 = vmatpush1.msra.mxu0 0.0
      %399 = vmatprep.subr.mxu0 0.0
      %400 = vmatpush1.msra.mxu0 0.0
      %401 = vmatprep.subr.mxu0 0.0
      %402 = vmatpush1.msra.mxu0 0.0
      %403 = vmatprep.subr.mxu0 0.0
      %404 = vmatpush1.msra.mxu0 0.0
      %405 = vmatprep.subr.mxu0 0.0
      %406 = vmatpush1.msra.mxu0 0.0
      %407 = vmatprep.subr.mxu0 0.0
      %408 = vmatpush1.msra.mxu0 0.0
      %409 = vmatprep.subr.mxu0 0.0
      %410 = vmatpush1.msra.mxu0 0.0
      %411 = vmatprep.subr.mxu0 0.0
      %412 = vmatpush1.msra.mxu0 0.0
      %413 = vmatprep.subr.mxu0 0.0
      %414 = vmatpush1.msra.mxu0 0.0
      %415 = vmatprep.subr.mxu0 0.0
      %416 = vmatpush1.msra.mxu0 0.0
      %417 = vmatprep.subr.mxu0 0.0
      %418 = vmatpush1.msra.mxu0 0.0
      %419 = vmatprep.subr.mxu0 0.0
      %420 = vmatpush1.msra.mxu0 0.0
      %421 = vmatprep.subr.mxu0 0.0
      %422 = vmatpush1.msra.mxu0 0.0
      %423 = vmatprep.subr.mxu0 0.0
      %424 = vmatpush1.msra.mxu0 0.0
      %425 = vmatprep.subr.mxu0 0.0
      %426 = vmatpush1.msra.mxu0 0.0
      %427 = vmatprep.subr.mxu0 0.0
      %428 = vmatpush1.msra.mxu0 0.0
      %429 = vmatprep.subr.mxu0 0.0
      %430 = vmatpush1.msra.mxu0 0.0
      %431 = vmatprep.subr.mxu0 0.0
      %432 = vmatpush1.msra.mxu0 0.0
      %433 = vmatprep.mubr.f32.mxu0 0.0
      %434 = vmatmul.mubr.f32.gmra.mrb[0].mxu0 %v367
      %v435 = vpop.f32.mrb[0].mxu0
      %v436 = vadd.f32 0.0, %v435
      %v437 = vpop.f32.mrb[0].mxu0
      %438 = vdwg.mxu0
      %v439 = vsub.f32 %v146, %v217
      %v440 = vsub.f32 %v146, %v290
      %v441 = vsub.f32 %v146, %v363
      %v442 = vsub.f32 %v146, %v436
      %v444 = vsel %vm59, %v138, 0
      %446 = vmatprep.subr.mxu0 0.0
      %447 = vmatpush1.msra.mxu0 %v439
      %448 = vmatprep.subr.mxu0 0.0
      %449 = vmatpush1.msra.mxu0 0.0
      %450 = vmatprep.subr.mxu0 0.0
      %451 = vmatpush1.msra.mxu0 0.0
      %452 = vmatprep.subr.mxu0 0.0
      %453 = vmatpush1.msra.mxu0 0.0
      %454 = vmatprep.subr.mxu0 0.0
      %455 = vmatpush1.msra.mxu0 0.0
      %456 = vmatprep.subr.mxu0 0.0
      %457 = vmatpush1.msra.mxu0 0.0
      %458 = vmatprep.subr.mxu0 0.0
      %459 = vmatpush1.msra.mxu0 0.0
      %460 = vmatprep.subr.mxu0 0.0
      %461 = vmatpush1.msra.mxu0 0.0
      %462 = vmatprep.subr.mxu0 0.0
      %463 = vmatpush1.msra.mxu0 0.0
      %464 = vmatprep.subr.mxu0 0.0
      %465 = vmatpush1.msra.mxu0 0.0
      %466 = vmatprep.subr.mxu0 0.0
      %467 = vmatpush1.msra.mxu0 0.0
      %468 = vmatprep.subr.mxu0 0.0
      %469 = vmatpush1.msra.mxu0 0.0
      %470 = vmatprep.subr.mxu0 0.0
      %471 = vmatpush1.msra.mxu0 0.0
      %472 = vmatprep.subr.mxu0 0.0
      %473 = vmatpush1.msra.mxu0 0.0
      %474 = vmatprep.subr.mxu0 0.0
      %475 = vmatpush1.msra.mxu0 0.0
      %476 = vmatprep.subr.mxu0 0.0
      %477 = vmatpush1.msra.mxu0 0.0
      %478 = vmatprep.subr.mxu0 0.0
      %479 = vmatpush1.msra.mxu0 0.0
      %480 = vmatprep.subr.mxu0 0.0
      %481 = vmatpush1.msra.mxu0 0.0
      %482 = vmatprep.subr.mxu0 0.0
      %483 = vmatpush1.msra.mxu0 0.0
      %484 = vmatprep.subr.mxu0 0.0
      %485 = vmatpush1.msra.mxu0 0.0
      %486 = vmatprep.subr.mxu0 0.0
      %487 = vmatpush1.msra.mxu0 0.0
      %488 = vmatprep.subr.mxu0 0.0
      %489 = vmatpush1.msra.mxu0 0.0
      %490 = vmatprep.subr.mxu0 0.0
      %491 = vmatpush1.msra.mxu0 0.0
      %492 = vmatprep.subr.mxu0 0.0
      %493 = vmatpush1.msra.mxu0 0.0
      %494 = vmatprep.subr.mxu0 0.0
      %495 = vmatpush1.msra.mxu0 0.0
      %496 = vmatprep.subr.mxu0 0.0
      %497 = vmatpush1.msra.mxu0 0.0
      %498 = vmatprep.subr.mxu0 0.0
      %499 = vmatpush1.msra.mxu0 0.0
      %500 = vmatprep.subr.mxu0 0.0
      %501 = vmatpush1.msra.mxu0 0.0
      %502 = vmatprep.subr.mxu0 0.0
      %503 = vmatpush1.msra.mxu0 0.0
      %504 = vmatprep.subr.mxu0 0.0
      %505 = vmatpush1.msra.mxu0 0.0
      %506 = vmatprep.subr.mxu0 0.0
      %507 = vmatpush1.msra.mxu0 0.0
      %508 = vmatprep.subr.mxu0 0.0
      %509 = vmatpush1.msra.mxu0 0.0
      %510 = vmatprep.mubr.f32.mxu0 0.0
      %511 = vmatmul.mubr.f32.gmra.mrb[0].mxu0 %v444
      %v512 = vpop.f32.mrb[0].mxu0
      %v513 = vadd.f32 0.0, %v512
      %v514 = vpop.f32.mrb[0].mxu0
      %515 = vdwg.mxu0
      %v517 = vsel %vm59, %v139, 0
      %519 = vmatprep.subr.mxu0 0.0
      %520 = vmatpush1.msra.mxu0 %v440
      %521 = vmatprep.subr.mxu0 0.0
      %522 = vmatpush1.msra.mxu0 0.0
      %523 = vmatprep.subr.mxu0 0.0
      %524 = vmatpush1.msra.mxu0 0.0
      %525 = vmatprep.subr.mxu0 0.0
      %526 = vmatpush1.msra.mxu0 0.0
      %527 = vmatprep.subr.mxu0 0.0
      %528 = vmatpush1.msra.mxu0 0.0
      %529 = vmatprep.subr.mxu0 0.0
      %530 = vmatpush1.msra.mxu0 0.0
      %531 = vmatprep.subr.mxu0 0.0
      %532 = vmatpush1.msra.mxu0 0.0
      %533 = vmatprep.subr.mxu0 0.0
      %534 = vmatpush1.msra.mxu0 0.0
      %535 = vmatprep.subr.mxu0 0.0
      %536 = vmatpush1.msra.mxu0 0.0
      %537 = vmatprep.subr.mxu0 0.0
      %538 = vmatpush1.msra.mxu0 0.0
      %539 = vmatprep.subr.mxu0 0.0
      %540 = vmatpush1.msra.mxu0 0.0
      %541 = vmatprep.subr.mxu0 0.0
      %542 = vmatpush1.msra.mxu0 0.0
      %543 = vmatprep.subr.mxu0 0.0
      %544 = vmatpush1.msra.mxu0 0.0
      %545 = vmatprep.subr.mxu0 0.0
      %546 = vmatpush1.msra.mxu0 0.0
      %547 = vmatprep.subr.mxu0 0.0
      %548 = vmatpush1.msra.mxu0 0.0
      %549 = vmatprep.subr.mxu0 0.0
      %550 = vmatpush1.msra.mxu0 0.0
      %551 = vmatprep.subr.mxu0 0.0
      %552 = vmatpush1.msra.mxu0 0.0
      %553 = vmatprep.subr.mxu0 0.0
      %554 = vmatpush1.msra.mxu0 0.0
      %555 = vmatprep.subr.mxu0 0.0
      %556 = vmatpush1.msra.mxu0 0.0
      %557 = vmatprep.subr.mxu0 0.0
      %558 = vmatpush1.msra.mxu0 0.0
      %559 = vmatprep.subr.mxu0 0.0
      %560 = vmatpush1.msra.mxu0 0.0
      %561 = vmatprep.subr.mxu0 0.0
      %562 = vmatpush1.msra.mxu0 0.0
      %563 = vmatprep.subr.mxu0 0.0
      %564 = vmatpush1.msra.mxu0 0.0
      %565 = vmatprep.subr.mxu0 0.0
      %566 = vmatpush1.msra.mxu0 0.0
      %567 = vmatprep.subr.mxu0 0.0
      %568 = vmatpush1.msra.mxu0 0.0
      %569 = vmatprep.subr.mxu0 0.0
      %570 = vmatpush1.msra.mxu0 0.0
      %571 = vmatprep.subr.mxu0 0.0
      %572 = vmatpush1.msra.mxu0 0.0
      %573 = vmatprep.subr.mxu0 0.0
      %574 = vmatpush1.msra.mxu0 0.0
      %575 = vmatprep.subr.mxu0 0.0
      %576 = vmatpush1.msra.mxu0 0.0
      %577 = vmatprep.subr.mxu0 0.0
      %578 = vmatpush1.msra.mxu0 0.0
      %579 = vmatprep.subr.mxu0 0.0
      %580 = vmatpush1.msra.mxu0 0.0
      %581 = vmatprep.subr.mxu0 0.0
      %582 = vmatpush1.msra.mxu0 0.0
      %583 = vmatprep.mubr.f32.mxu0 0.0
      %584 = vmatmul.mubr.f32.gmra.mrb[0].mxu0 %v517
      %v585 = vpop.f32.mrb[0].mxu0
      %v586 = vadd.f32 0.0, %v585
      %v587 = vpop.f32.mrb[0].mxu0
      %588 = vdwg.mxu0
      %v590 = vsel %vm59, %v140, 0
      %592 = vmatprep.subr.mxu0 0.0
      %593 = vmatpush1.msra.mxu0 %v441
      %594 = vmatprep.subr.mxu0 0.0
      %595 = vmatpush1.msra.mxu0 0.0
      %596 = vmatprep.subr.mxu0 0.0
      %597 = vmatpush1.msra.mxu0 0.0
      %598 = vmatprep.subr.mxu0 0.0
      %599 = vmatpush1.msra.mxu0 0.0
      %600 = vmatprep.subr.mxu0 0.0
      %601 = vmatpush1.msra.mxu0 0.0
      %602 = vmatprep.subr.mxu0 0.0
      %603 = vmatpush1.msra.mxu0 0.0
      %604 = vmatprep.subr.mxu0 0.0
      %605 = vmatpush1.msra.mxu0 0.0
      %606 = vmatprep.subr.mxu0 0.0
      %607 = vmatpush1.msra.mxu0 0.0
      %608 = vmatprep.subr.mxu0 0.0
      %609 = vmatpush1.msra.mxu0 0.0
      %610 = vmatprep.subr.mxu0 0.0
      %611 = vmatpush1.msra.mxu0 0.0
      %612 = vmatprep.subr.mxu0 0.0
      %613 = vmatpush1.msra.mxu0 0.0
      %614 = vmatprep.subr.mxu0 0.0
      %615 = vmatpush1.msra.mxu0 0.0
      %616 = vmatprep.subr.mxu0 0.0
      %617 = vmatpush1.msra.mxu0 0.0
      %618 = vmatprep.subr.mxu0 0.0
      %619 = vmatpush1.msra.mxu0 0.0
      %620 = vmatprep.subr.mxu0 0.0
      %621 = vmatpush1.msra.mxu0 0.0
      %622 = vmatprep.subr.mxu0 0.0
      %623 = vmatpush1.msra.mxu0 0.0
      %624 = vmatprep.subr.mxu0 0.0
      %625 = vmatpush1.msra.mxu0 0.0
      %626 = vmatprep.subr.mxu0 0.0
      %627 = vmatpush1.msra.mxu0 0.0
      %628 = vmatprep.subr.mxu0 0.0
      %629 = vmatpush1.msra.mxu0 0.0
      %630 = vmatprep.subr.mxu0 0.0
      %631 = vmatpush1.msra.mxu0 0.0
      %632 = vmatprep.subr.mxu0 0.0
      %633 = vmatpush1.msra.mxu0 0.0
      %634 = vmatprep.subr.mxu0 0.0
      %635 = vmatpush1.msra.mxu0 0.0
      %636 = vmatprep.subr.mxu0 0.0
      %637 = vmatpush1.msra.mxu0 0.0
      %638 = vmatprep.subr.mxu0 0.0
      %639 = vmatpush1.msra.mxu0 0.0
      %640 = vmatprep.subr.mxu0 0.0
      %641 = vmatpush1.msra.mxu0 0.0
      %642 = vmatprep.subr.mxu0 0.0
      %643 = vmatpush1.msra.mxu0 0.0
      %644 = vmatprep.subr.mxu0 0.0
      %645 = vmatpush1.msra.mxu0 0.0
      %646 = vmatprep.subr.mxu0 0.0
      %647 = vmatpush1.msra.mxu0 0.0
      %648 = vmatprep.subr.mxu0 0.0
      %649 = vmatpush1.msra.mxu0 0.0
      %650 = vmatprep.subr.mxu0 0.0
      %651 = vmatpush1.msra.mxu0 0.0
      %652 = vmatprep.subr.mxu0 0.0
      %653 = vmatpush1.msra.mxu0 0.0
      %654 = vmatprep.subr.mxu0 0.0
      %655 = vmatpush1.msra.mxu0 0.0
      %656 = vmatprep.mubr.f32.mxu0 0.0
      %657 = vmatmul.mubr.f32.gmra.mrb[0].mxu0 %v590
      %v658 = vpop.f32.mrb[0].mxu0
      %v659 = vadd.f32 0.0, %v658
      %v660 = vpop.f32.mrb[0].mxu0
      %661 = vdwg.mxu0
      %v663 = vsel %vm59, %v141, 0
      %665 = vmatprep.subr.mxu0 0.0
      %666 = vmatpush1.msra.mxu0 %v442
      %667 = vmatprep.subr.mxu0 0.0
      %668 = vmatpush1.msra.mxu0 0.0
      %669 = vmatprep.subr.mxu0 0.0
      %670 = vmatpush1.msra.mxu0 0.0
      %671 = vmatprep.subr.mxu0 0.0
      %672 = vmatpush1.msra.mxu0 0.0
      %673 = vmatprep.subr.mxu0 0.0
      %674 = vmatpush1.msra.mxu0 0.0
      %675 = vmatprep.subr.mxu0 0.0
      %676 = vmatpush1.msra.mxu0 0.0
      %677 = vmatprep.subr.mxu0 0.0
      %678 = vmatpush1.msra.mxu0 0.0
      %679 = vmatprep.subr.mxu0 0.0
      %680 = vmatpush1.msra.mxu0 0.0
      %681 = vmatprep.subr.mxu0 0.0
      %682 = vmatpush1.msra.mxu0 0.0
      %683 = vmatprep.subr.mxu0 0.0
      %684 = vmatpush1.msra.mxu0 0.0
      %685 = vmatprep.subr.mxu0 0.0
      %686 = vmatpush1.msra.mxu0 0.0
      %687 = vmatprep.subr.mxu0 0.0
      %688 = vmatpush1.msra.mxu0 0.0
      %689 = vmatprep.subr.mxu0 0.0
      %690 = vmatpush1.msra.mxu0 0.0
      %691 = vmatprep.subr.mxu0 0.0
      %692 = vmatpush1.msra.mxu0 0.0
      %693 = vmatprep.subr.mxu0 0.0
      %694 = vmatpush1.msra.mxu0 0.0
      %695 = vmatprep.subr.mxu0 0.0
      %696 = vmatpush1.msra.mxu0 0.0
      %697 = vmatprep.subr.mxu0 0.0
      %698 = vmatpush1.msra.mxu0 0.0
      %699 = vmatprep.subr.mxu0 0.0
      %700 = vmatpush1.msra.mxu0 0.0
      %701 = vmatprep.subr.mxu0 0.0
      %702 = vmatpush1.msra.mxu0 0.0
      %703 = vmatprep.subr.mxu0 0.0
      %704 = vmatpush1.msra.mxu0 0.0
      %705 = vmatprep.subr.mxu0 0.0
      %706 = vmatpush1.msra.mxu0 0.0
      %707 = vmatprep.subr.mxu0 0.0
      %708 = vmatpush1.msra.mxu0 0.0
      %709 = vmatprep.subr.mxu0 0.0
      %710 = vmatpush1.msra.mxu0 0.0
      %711 = vmatprep.subr.mxu0 0.0
      %712 = vmatpush1.msra.mxu0 0.0
      %713 = vmatprep.subr.mxu0 0.0
      %714 = vmatpush1.msra.mxu0 0.0
      %715 = vmatprep.subr.mxu0 0.0
      %716 = vmatpush1.msra.mxu0 0.0
      %717 = vmatprep.subr.mxu0 0.0
      %718 = vmatpush1.msra.mxu0 0.0
      %719 = vmatprep.subr.mxu0 0.0
      %720 = vmatpush1.msra.mxu0 0.0
      %721 = vmatprep.subr.mxu0 0.0
      %722 = vmatpush1.msra.mxu0 0.0
      %723 = vmatprep.subr.mxu0 0.0
      %724 = vmatpush1.msra.mxu0 0.0
      %725 = vmatprep.subr.mxu0 0.0
      %726 = vmatpush1.msra.mxu0 0.0
      %727 = vmatprep.subr.mxu0 0.0
      %728 = vmatpush1.msra.mxu0 0.0
      %729 = vmatprep.mubr.f32.mxu0 0.0
      %730 = vmatmul.mubr.f32.gmra.mrb[0].mxu0 %v663
      %v731 = vpop.f32.mrb[0].mxu0
      %v732 = vadd.f32 0.0, %v731
      %v733 = vpop.f32.mrb[0].mxu0
      %734 = vdwg.mxu0
      %v735 = vmul.f32 %v513, 0.5
      %v736 = vmul.f32 %v586, 0.5
      %v737 = vmul.f32 %v659, 0.5
      %v738 = vmul.f32 %v732, 0.5
      %v740 = vsel %vm59, %v439, 0
      %742 = vmatprep.subr.mxu0 0.0
      %743 = vmatpush1.msra.mxu0 %v142
      %744 = vmatprep.subr.mxu0 0.0
      %745 = vmatpush1.msra.mxu0 0.0
      %746 = vmatprep.subr.mxu0 0.0
      %747 = vmatpush1.msra.mxu0 0.0
      %748 = vmatprep.subr.mxu0 0.0
      %749 = vmatpush1.msra.mxu0 0.0
      %750 = vmatprep.subr.mxu0 0.0
      %751 = vmatpush1.msra.mxu0 0.0
      %752 = vmatprep.subr.mxu0 0.0
      %753 = vmatpush1.msra.mxu0 0.0
      %754 = vmatprep.subr.mxu0 0.0
      %755 = vmatpush1.msra.mxu0 0.0
      %756 = vmatprep.subr.mxu0 0.0
      %757 = vmatpush1.msra.mxu0 0.0
      %758 = vmatprep.subr.mxu0 0.0
      %759 = vmatpush1.msra.mxu0 0.0
      %760 = vmatprep.subr.mxu0 0.0
      %761 = vmatpush1.msra.mxu0 0.0
      %762 = vmatprep.subr.mxu0 0.0
      %763 = vmatpush1.msra.mxu0 0.0
      %764 = vmatprep.subr.mxu0 0.0
      %765 = vmatpush1.msra.mxu0 0.0
      %766 = vmatprep.subr.mxu0 0.0
      %767 = vmatpush1.msra.mxu0 0.0
      %768 = vmatprep.subr.mxu0 0.0
      %769 = vmatpush1.msra.mxu0 0.0
      %770 = vmatprep.subr.mxu0 0.0
      %771 = vmatpush1.msra.mxu0 0.0
      %772 = vmatprep.subr.mxu0 0.0
      %773 = vmatpush1.msra.mxu0 0.0
      %774 = vmatprep.subr.mxu0 0.0
      %775 = vmatpush1.msra.mxu0 0.0
      %776 = vmatprep.subr.mxu0 0.0
      %777 = vmatpush1.msra.mxu0 0.0
      %778 = vmatprep.subr.mxu0 0.0
      %779 = vmatpush1.msra.mxu0 0.0
      %780 = vmatprep.subr.mxu0 0.0
      %781 = vmatpush1.msra.mxu0 0.0
      %782 = vmatprep.subr.mxu0 0.0
      %783 = vmatpush1.msra.mxu0 0.0
      %784 = vmatprep.subr.mxu0 0.0
      %785 = vmatpush1.msra.mxu0 0.0
      %786 = vmatprep.subr.mxu0 0.0
      %787 = vmatpush1.msra.mxu0 0.0
      %788 = vmatprep.subr.mxu0 0.0
      %789 = vmatpush1.msra.mxu0 0.0
      %790 = vmatprep.subr.mxu0 0.0
      %791 = vmatpush1.msra.mxu0 0.0
      %792 = vmatprep.subr.mxu0 0.0
      %793 = vmatpush1.msra.mxu0 0.0
      %794 = vmatprep.subr.mxu0 0.0
      %795 = vmatpush1.msra.mxu0 0.0
      %796 = vmatprep.subr.mxu0 0.0
      %797 = vmatpush1.msra.mxu0 0.0
      %798 = vmatprep.subr.mxu0 0.0
      %799 = vmatpush1.msra.mxu0 0.0
      %800 = vmatprep.subr.mxu0 0.0
      %801 = vmatpush1.msra.mxu0 0.0
      %802 = vmatprep.subr.mxu0 0.0
      %803 = vmatpush1.msra.mxu0 0.0
      %804 = vmatprep.subr.mxu0 0.0
      %805 = vmatpush1.msra.mxu0 0.0
      %806 = vmatprep.mubr.f32.mxu0 0.0
      %807 = vmatmul.mubr.f32.gmra.mrb[0].mxu0 %v740
      %v808 = vpop.f32.mrb[0].mxu0
      %v809 = vadd.f32 0.0, %v808
      %v810 = vpop.f32.mrb[0].mxu0
      %811 = vdwg.mxu0
      %v813 = vsel %vm59, %v440, 0
      %815 = vmatprep.subr.mxu0 0.0
      %816 = vmatpush1.msra.mxu0 %v143
      %817 = vmatprep.subr.mxu0 0.0
      %818 = vmatpush1.msra.mxu0 0.0
      %819 = vmatprep.subr.mxu0 0.0
      %820 = vmatpush1.msra.mxu0 0.0
      %821 = vmatprep.subr.mxu0 0.0
      %822 = vmatpush1.msra.mxu0 0.0
      %823 = vmatprep.subr.mxu0 0.0
      %824 = vmatpush1.msra.mxu0 0.0
      %825 = vmatprep.subr.mxu0 0.0
      %826 = vmatpush1.msra.mxu0 0.0
      %827 = vmatprep.subr.mxu0 0.0
      %828 = vmatpush1.msra.mxu0 0.0
      %829 = vmatprep.subr.mxu0 0.0
      %830 = vmatpush1.msra.mxu0 0.0
      %831 = vmatprep.subr.mxu0 0.0
      %832 = vmatpush1.msra.mxu0 0.0
      %833 = vmatprep.subr.mxu0 0.0
      %834 = vmatpush1.msra.mxu0 0.0
      %835 = vmatprep.subr.mxu0 0.0
      %836 = vmatpush1.msra.mxu0 0.0
      %837 = vmatprep.subr.mxu0 0.0
      %838 = vmatpush1.msra.mxu0 0.0
      %839 = vmatprep.subr.mxu0 0.0
      %840 = vmatpush1.msra.mxu0 0.0
      %841 = vmatprep.subr.mxu0 0.0
      %842 = vmatpush1.msra.mxu0 0.0
      %843 = vmatprep.subr.mxu0 0.0
      %844 = vmatpush1.msra.mxu0 0.0
      %845 = vmatprep.subr.mxu0 0.0
      %846 = vmatpush1.msra.mxu0 0.0
      %847 = vmatprep.subr.mxu0 0.0
      %848 = vmatpush1.msra.mxu0 0.0
      %849 = vmatprep.subr.mxu0 0.0
      %850 = vmatpush1.msra.mxu0 0.0
      %851 = vmatprep.subr.mxu0 0.0
      %852 = vmatpush1.msra.mxu0 0.0
      %853 = vmatprep.subr.mxu0 0.0
      %854 = vmatpush1.msra.mxu0 0.0
      %855 = vmatprep.subr.mxu0 0.0
      %856 = vmatpush1.msra.mxu0 0.0
      %857 = vmatprep.subr.mxu0 0.0
      %858 = vmatpush1.msra.mxu0 0.0
      %859 = vmatprep.subr.mxu0 0.0
      %860 = vmatpush1.msra.mxu0 0.0
      %861 = vmatprep.subr.mxu0 0.0
      %862 = vmatpush1.msra.mxu0 0.0
      %863 = vmatprep.subr.mxu0 0.0
      %864 = vmatpush1.msra.mxu0 0.0
      %865 = vmatprep.subr.mxu0 0.0
      %866 = vmatpush1.msra.mxu0 0.0
      %867 = vmatprep.subr.mxu0 0.0
      %868 = vmatpush1.msra.mxu0 0.0
      %869 = vmatprep.subr.mxu0 0.0
      %870 = vmatpush1.msra.mxu0 0.0
      %871 = vmatprep.subr.mxu0 0.0
      %872 = vmatpush1.msra.mxu0 0.0
      %873 = vmatprep.subr.mxu0 0.0
      %874 = vmatpush1.msra.mxu0 0.0
      %875 = vmatprep.subr.mxu0 0.0
      %876 = vmatpush1.msra.mxu0 0.0
      %877 = vmatprep.subr.mxu0 0.0
      %878 = vmatpush1.msra.mxu0 0.0
      %879 = vmatprep.mubr.f32.mxu0 0.0
      %880 = vmatmul.mubr.f32.gmra.mrb[0].mxu0 %v813
      %v881 = vpop.f32.mrb[0].mxu0
      %v882 = vadd.f32 0.0, %v881
      %v883 = vpop.f32.mrb[0].mxu0
      %884 = vdwg.mxu0
      %v886 = vsel %vm59, %v441, 0
      %888 = vmatprep.subr.mxu0 0.0
      %889 = vmatpush1.msra.mxu0 %v144
      %890 = vmatprep.subr.mxu0 0.0
      %891 = vmatpush1.msra.mxu0 0.0
      %892 = vmatprep.subr.mxu0 0.0
      %893 = vmatpush1.msra.mxu0 0.0
      %894 = vmatprep.subr.mxu0 0.0
      %895 = vmatpush1.msra.mxu0 0.0
      %896 = vmatprep.subr.mxu0 0.0
      %897 = vmatpush1.msra.mxu0 0.0
      %898 = vmatprep.subr.mxu0 0.0
      %899 = vmatpush1.msra.mxu0 0.0
      %900 = vmatprep.subr.mxu0 0.0
      %901 = vmatpush1.msra.mxu0 0.0
      %902 = vmatprep.subr.mxu0 0.0
      %903 = vmatpush1.msra.mxu0 0.0
      %904 = vmatprep.subr.mxu0 0.0
      %905 = vmatpush1.msra.mxu0 0.0
      %906 = vmatprep.subr.mxu0 0.0
      %907 = vmatpush1.msra.mxu0 0.0
      %908 = vmatprep.subr.mxu0 0.0
      %909 = vmatpush1.msra.mxu0 0.0
      %910 = vmatprep.subr.mxu0 0.0
      %911 = vmatpush1.msra.mxu0 0.0
      %912 = vmatprep.subr.mxu0 0.0
      %913 = vmatpush1.msra.mxu0 0.0
      %914 = vmatprep.subr.mxu0 0.0
      %915 = vmatpush1.msra.mxu0 0.0
      %916 = vmatprep.subr.mxu0 0.0
      %917 = vmatpush1.msra.mxu0 0.0
      %918 = vmatprep.subr.mxu0 0.0
      %919 = vmatpush1.msra.mxu0 0.0
      %920 = vmatprep.subr.mxu0 0.0
      %921 = vmatpush1.msra.mxu0 0.0
      %922 = vmatprep.subr.mxu0 0.0
      %923 = vmatpush1.msra.mxu0 0.0
      %924 = vmatprep.subr.mxu0 0.0
      %925 = vmatpush1.msra.mxu0 0.0
      %926 = vmatprep.subr.mxu0 0.0
      %927 = vmatpush1.msra.mxu0 0.0
      %928 = vmatprep.subr.mxu0 0.0
      %929 = vmatpush1.msra.mxu0 0.0
      %930 = vmatprep.subr.mxu0 0.0
      %931 = vmatpush1.msra.mxu0 0.0
      %932 = vmatprep.subr.mxu0 0.0
      %933 = vmatpush1.msra.mxu0 0.0
      %934 = vmatprep.subr.mxu0 0.0
      %935 = vmatpush1.msra.mxu0 0.0
      %936 = vmatprep.subr.mxu0 0.0
      %937 = vmatpush1.msra.mxu0 0.0
      %938 = vmatprep.subr.mxu0 0.0
      %939 = vmatpush1.msra.mxu0 0.0
      %940 = vmatprep.subr.mxu0 0.0
      %941 = vmatpush1.msra.mxu0 0.0
      %942 = vmatprep.subr.mxu0 0.0
      %943 = vmatpush1.msra.mxu0 0.0
      %944 = vmatprep.subr.mxu0 0.0
      %945 = vmatpush1.msra.mxu0 0.0
      %946 = vmatprep.subr.mxu0 0.0
      %947 = vmatpush1.msra.mxu0 0.0
      %948 = vmatprep.subr.mxu0 0.0
      %949 = vmatpush1.msra.mxu0 0.0
      %950 = vmatprep.subr.mxu0 0.0
      %951 = vmatpush1.msra.mxu0 0.0
      %952 = vmatprep.mubr.f32.mxu0 0.0
      %953 = vmatmul.mubr.f32.gmra.mrb[0].mxu0 %v886
      %v954 = vpop.f32.mrb[0].mxu0
      %v955 = vadd.f32 0.0, %v954
      %v956 = vpop.f32.mrb[0].mxu0
      %957 = vdwg.mxu0
      %v959 = vsel %vm59, %v442, 0
      %961 = vmatprep.subr.mxu0 0.0
      %962 = vmatpush1.msra.mxu0 %v145
      %963 = vmatprep.subr.mxu0 0.0
      %964 = vmatpush1.msra.mxu0 0.0
      %965 = vmatprep.subr.mxu0 0.0
      %966 = vmatpush1.msra.mxu0 0.0
      %967 = vmatprep.subr.mxu0 0.0
      %968 = vmatpush1.msra.mxu0 0.0
      %969 = vmatprep.subr.mxu0 0.0
      %970 = vmatpush1.msra.mxu0 0.0
      %971 = vmatprep.subr.mxu0 0.0
      %972 = vmatpush1.msra.mxu0 0.0
      %973 = vmatprep.subr.mxu0 0.0
      %974 = vmatpush1.msra.mxu0 0.0
      %975 = vmatprep.subr.mxu0 0.0
      %976 = vmatpush1.msra.mxu0 0.0
      %977 = vmatprep.subr.mxu0 0.0
      %978 = vmatpush1.msra.mxu0 0.0
      %979 = vmatprep.subr.mxu0 0.0
      %980 = vmatpush1.msra.mxu0 0.0
      %981 = vmatprep.subr.mxu0 0.0
      %982 = vmatpush1.msra.mxu0 0.0
      %983 = vmatprep.subr.mxu0 0.0
      %984 = vmatpush1.msra.mxu0 0.0
      %985 = vmatprep.subr.mxu0 0.0
      %986 = vmatpush1.msra.mxu0 0.0
      %987 = vmatprep.subr.mxu0 0.0
      %988 = vmatpush1.msra.mxu0 0.0
      %989 = vmatprep.subr.mxu0 0.0
      %990 = vmatpush1.msra.mxu0 0.0
      %991 = vmatprep.subr.mxu0 0.0
      %992 = vmatpush1.msra.mxu0 0.0
      %993 = vmatprep.subr.mxu0 0.0
      %994 = vmatpush1.msra.mxu0 0.0
      %995 = vmatprep.subr.mxu0 0.0
      %996 = vmatpush1.msra.mxu0 0.0
      %997 = vmatprep.subr.mxu0 0.0
      %998 = vmatpush1.msra.mxu0 0.0
      %999 = vmatprep.subr.mxu0 0.0
      %1000 = vmatpush1.msra.mxu0 0.0
      %1001 = vmatprep.subr.mxu0 0.0
      %1002 = vmatpush1.msra.mxu0 0.0
      %1003 = vmatprep.subr.mxu0 0.0
      %1004 = vmatpush1.msra.mxu0 0.0
      %1005 = vmatprep.subr.mxu0 0.0
      %1006 = vmatpush1.msra.mxu0 0.0
      %1007 = vmatprep.subr.mxu0 0.0
      %1008 = vmatpush1.msra.mxu0 0.0
      %1009 = vmatprep.subr.mxu0 0.0
      %1010 = vmatpush1.msra.mxu0 0.0
      %1011 = vmatprep.subr.mxu0 0.0
      %1012 = vmatpush1.msra.mxu0 0.0
      %1013 = vmatprep.subr.mxu0 0.0
      %1014 = vmatpush1.msra.mxu0 0.0
      %1015 = vmatprep.subr.mxu0 0.0
      %1016 = vmatpush1.msra.mxu0 0.0
      %1017 = vmatprep.subr.mxu0 0.0
      %1018 = vmatpush1.msra.mxu0 0.0
      %1019 = vmatprep.subr.mxu0 0.0
      %1020 = vmatpush1.msra.mxu0 0.0
      %1021 = vmatprep.subr.mxu0 0.0
      %1022 = vmatpush1.msra.mxu0 0.0
      %1023 = vmatprep.subr.mxu0 0.0
      %1024 = vmatpush1.msra.mxu0 0.0
      %1025 = vmatprep.mubr.f32.mxu0 0.0
      %1026 = vmatmul.mubr.f32.gmra.mrb[0].mxu0 %v959
      %v1027 = vpop.f32.mrb[0].mxu0
      %v1028 = vadd.f32 0.0, %v1027
      %v1029 = vpop.f32.mrb[0].mxu0
      %1030 = vdwg.mxu0
      %v1031 = vmul.f32 %v809, 0.5
      %v1032 = vmul.f32 %v882, 0.5
      %v1033 = vmul.f32 %v955, 0.5
      %v1034 = vmul.f32 %v1028, 0.5
    $region26: #{tpu_custom_call.1} parent=1 // loop_footer
      %s137 = sadd.s32 1, %s133
    $region27: #{tpu_custom_call.1} parent=1 // loop_footer_branch
      %132 = sbr.rel target = $region23
    $region28: #{tpu_custom_call.1} parent=1 // loop_exit
      _
    loop: start=0, step=1, limit=12
    $region29: #{tpu_custom_call.1} parent=1 // loop_pre_header
      _
    $region30: #{tpu_custom_call.1} parent=1 // loop_header
      %s1036 = sphi 0, %s1040
      %p1037 = scmp.ge.s32.totalorder %s1036, 12
      %v1041 = vphi %v138, %v1638
      %v1042 = vphi %v139, %v1639
      %v1043 = vphi %v140, %v1640
      %v1044 = vphi %v141, %v1641
      %v1045 = vphi %v54, %v1934
      %v1046 = vphi %v54, %v1935
      %v1047 = vphi %v54, %v1936
      %v1048 = vphi %v54, %v1937
    $region31: #{tpu_custom_call.1} parent=1 // loop_header_branch
      %1039 = sbr.rel (%p1037) target = $region35
    $region32: #{tpu_custom_call.1} parent=1 // loop_body
      %v1049 = vmul.f32 %v54, 3.0
      %v1051 = vsel %vm59, %v1045, 0
      %1053 = vmatprep.subr.mxu0 0.0
      %1054 = vmatpush1.msra.mxu0 %v1041
      %1055 = vmatprep.subr.mxu0 0.0
      %1056 = vmatpush1.msra.mxu0 0.0
      %1057 = vmatprep.subr.mxu0 0.0
      %1058 = vmatpush1.msra.mxu0 0.0
      %1059 = vmatprep.subr.mxu0 0.0
      %1060 = vmatpush1.msra.mxu0 0.0
      %1061 = vmatprep.subr.mxu0 0.0
      %1062 = vmatpush1.msra.mxu0 0.0
      %1063 = vmatprep.subr.mxu0 0.0
      %1064 = vmatpush1.msra.mxu0 0.0
      %1065 = vmatprep.subr.mxu0 0.0
      %1066 = vmatpush1.msra.mxu0 0.0
      %1067 = vmatprep.subr.mxu0 0.0
      %1068 = vmatpush1.msra.mxu0 0.0
      %1069 = vmatprep.subr.mxu0 0.0
      %1070 = vmatpush1.msra.mxu0 0.0
      %1071 = vmatprep.subr.mxu0 0.0
      %1072 = vmatpush1.msra.mxu0 0.0
      %1073 = vmatprep.subr.mxu0 0.0
      %1074 = vmatpush1.msra.mxu0 0.0
      %1075 = vmatprep.subr.mxu0 0.0
      %1076 = vmatpush1.msra.mxu0 0.0
      %1077 = vmatprep.subr.mxu0 0.0
      %1078 = vmatpush1.msra.mxu0 0.0
      %1079 = vmatprep.subr.mxu0 0.0
      %1080 = vmatpush1.msra.mxu0 0.0
      %1081 = vmatprep.subr.mxu0 0.0
      %1082 = vmatpush1.msra.mxu0 0.0
      %1083 = vmatprep.subr.mxu0 0.0
      %1084 = vmatpush1.msra.mxu0 0.0
      %1085 = vmatprep.subr.mxu0 0.0
      %1086 = vmatpush1.msra.mxu0 0.0
      %1087 = vmatprep.subr.mxu0 0.0
      %1088 = vmatpush1.msra.mxu0 0.0
      %1089 = vmatprep.subr.mxu0 0.0
      %1090 = vmatpush1.msra.mxu0 0.0
      %1091 = vmatprep.subr.mxu0 0.0
      %1092 = vmatpush1.msra.mxu0 0.0
      %1093 = vmatprep.subr.mxu0 0.0
      %1094 = vmatpush1.msra.mxu0 0.0
      %1095 = vmatprep.subr.mxu0 0.0
      %1096 = vmatpush1.msra.mxu0 0.0
      %1097 = vmatprep.subr.mxu0 0.0
      %1098 = vmatpush1.msra.mxu0 0.0
      %1099 = vmatprep.subr.mxu0 0.0
      %1100 = vmatpush1.msra.mxu0 0.0
      %1101 = vmatprep.subr.mxu0 0.0
      %1102 = vmatpush1.msra.mxu0 0.0
      %1103 = vmatprep.subr.mxu0 0.0
      %1104 = vmatpush1.msra.mxu0 0.0
      %1105 = vmatprep.subr.mxu0 0.0
      %1106 = vmatpush1.msra.mxu0 0.0
      %1107 = vmatprep.subr.mxu0 0.0
      %1108 = vmatpush1.msra.mxu0 0.0
      %1109 = vmatprep.subr.mxu0 0.0
      %1110 = vmatpush1.msra.mxu0 0.0
      %1111 = vmatprep.subr.mxu0 0.0
      %1112 = vmatpush1.msra.mxu0 0.0
      %1113 = vmatprep.subr.mxu0 0.0
      %1114 = vmatpush1.msra.mxu0 0.0
      %1115 = vmatprep.subr.mxu0 0.0
      %1116 = vmatpush1.msra.mxu0 0.0
      %1117 = vmatprep.mubr.f32.mxu0 0.0
      %1118 = vmatmul.mubr.f32.gmra.mrb[0].mxu0 %v1051
      %v1119 = vpop.f32.mrb[0].mxu0
      %v1120 = vadd.f32 0.0, %v1119
      %v1121 = vpop.f32.mrb[0].mxu0
      %1122 = vdwg.mxu0
      %v1124 = vsel %vm59, %v1046, 0
      %1126 = vmatprep.subr.mxu0 0.0
      %1127 = vmatpush1.msra.mxu0 %v1042
      %1128 = vmatprep.subr.mxu0 0.0
      %1129 = vmatpush1.msra.mxu0 0.0
      %1130 = vmatprep.subr.mxu0 0.0
      %1131 = vmatpush1.msra.mxu0 0.0
      %1132 = vmatprep.subr.mxu0 0.0
      %1133 = vmatpush1.msra.mxu0 0.0
      %1134 = vmatprep.subr.mxu0 0.0
      %1135 = vmatpush1.msra.mxu0 0.0
      %1136 = vmatprep.subr.mxu0 0.0
      %1137 = vmatpush1.msra.mxu0 0.0
      %1138 = vmatprep.subr.mxu0 0.0
      %1139 = vmatpush1.msra.mxu0 0.0
      %1140 = vmatprep.subr.mxu0 0.0
      %1141 = vmatpush1.msra.mxu0 0.0
      %1142 = vmatprep.subr.mxu0 0.0
      %1143 = vmatpush1.msra.mxu0 0.0
      %1144 = vmatprep.subr.mxu0 0.0
      %1145 = vmatpush1.msra.mxu0 0.0
      %1146 = vmatprep.subr.mxu0 0.0
      %1147 = vmatpush1.msra.mxu0 0.0
      %1148 = vmatprep.subr.mxu0 0.0
      %1149 = vmatpush1.msra.mxu0 0.0
      %1150 = vmatprep.subr.mxu0 0.0
      %1151 = vmatpush1.msra.mxu0 0.0
      %1152 = vmatprep.subr.mxu0 0.0
      %1153 = vmatpush1.msra.mxu0 0.0
      %1154 = vmatprep.subr.mxu0 0.0
      %1155 = vmatpush1.msra.mxu0 0.0
      %1156 = vmatprep.subr.mxu0 0.0
      %1157 = vmatpush1.msra.mxu0 0.0
      %1158 = vmatprep.subr.mxu0 0.0
      %1159 = vmatpush1.msra.mxu0 0.0
      %1160 = vmatprep.subr.mxu0 0.0
      %1161 = vmatpush1.msra.mxu0 0.0
      %1162 = vmatprep.subr.mxu0 0.0
      %1163 = vmatpush1.msra.mxu0 0.0
      %1164 = vmatprep.subr.mxu0 0.0
      %1165 = vmatpush1.msra.mxu0 0.0
      %1166 = vmatprep.subr.mxu0 0.0
      %1167 = vmatpush1.msra.mxu0 0.0
      %1168 = vmatprep.subr.mxu0 0.0
      %1169 = vmatpush1.msra.mxu0 0.0
      %1170 = vmatprep.subr.mxu0 0.0
      %1171 = vmatpush1.msra.mxu0 0.0
      %1172 = vmatprep.subr.mxu0 0.0
      %1173 = vmatpush1.msra.mxu0 0.0
      %1174 = vmatprep.subr.mxu0 0.0
      %1175 = vmatpush1.msra.mxu0 0.0
      %1176 = vmatprep.subr.mxu0 0.0
      %1177 = vmatpush1.msra.mxu0 0.0
      %1178 = vmatprep.subr.mxu0 0.0
      %1179 = vmatpush1.msra.mxu0 0.0
      %1180 = vmatprep.subr.mxu0 0.0
      %1181 = vmatpush1.msra.mxu0 0.0
      %1182 = vmatprep.subr.mxu0 0.0
      %1183 = vmatpush1.msra.mxu0 0.0
      %1184 = vmatprep.subr.mxu0 0.0
      %1185 = vmatpush1.msra.mxu0 0.0
      %1186 = vmatprep.subr.mxu0 0.0
      %1187 = vmatpush1.msra.mxu0 0.0
      %1188 = vmatprep.subr.mxu0 0.0
      %1189 = vmatpush1.msra.mxu0 0.0
      %1190 = vmatprep.mubr.f32.mxu0 0.0
      %1191 = vmatmul.mubr.f32.gmra.mrb[0].mxu0 %v1124
      %v1192 = vpop.f32.mrb[0].mxu0
      %v1193 = vadd.f32 0.0, %v1192
      %v1194 = vpop.f32.mrb[0].mxu0
      %1195 = vdwg.mxu0
      %v1197 = vsel %vm59, %v1047, 0
      %1199 = vmatprep.subr.mxu0 0.0
      %1200 = vmatpush1.msra.mxu0 %v1043
      %1201 = vmatprep.subr.mxu0 0.0
      %1202 = vmatpush1.msra.mxu0 0.0
      %1203 = vmatprep.subr.mxu0 0.0
      %1204 = vmatpush1.msra.mxu0 0.0
      %1205 = vmatprep.subr.mxu0 0.0
      %1206 = vmatpush1.msra.mxu0 0.0
      %1207 = vmatprep.subr.mxu0 0.0
      %1208 = vmatpush1.msra.mxu0 0.0
      %1209 = vmatprep.subr.mxu0 0.0
      %1210 = vmatpush1.msra.mxu0 0.0
      %1211 = vmatprep.subr.mxu0 0.0
      %1212 = vmatpush1.msra.mxu0 0.0
      %1213 = vmatprep.subr.mxu0 0.0
      %1214 = vmatpush1.msra.mxu0 0.0
      %1215 = vmatprep.subr.mxu0 0.0
      %1216 = vmatpush1.msra.mxu0 0.0
      %1217 = vmatprep.subr.mxu0 0.0
      %1218 = vmatpush1.msra.mxu0 0.0
      %1219 = vmatprep.subr.mxu0 0.0
      %1220 = vmatpush1.msra.mxu0 0.0
      %1221 = vmatprep.subr.mxu0 0.0
      %1222 = vmatpush1.msra.mxu0 0.0
      %1223 = vmatprep.subr.mxu0 0.0
      %1224 = vmatpush1.msra.mxu0 0.0
      %1225 = vmatprep.subr.mxu0 0.0
      %1226 = vmatpush1.msra.mxu0 0.0
      %1227 = vmatprep.subr.mxu0 0.0
      %1228 = vmatpush1.msra.mxu0 0.0
      %1229 = vmatprep.subr.mxu0 0.0
      %1230 = vmatpush1.msra.mxu0 0.0
      %1231 = vmatprep.subr.mxu0 0.0
      %1232 = vmatpush1.msra.mxu0 0.0
      %1233 = vmatprep.subr.mxu0 0.0
      %1234 = vmatpush1.msra.mxu0 0.0
      %1235 = vmatprep.subr.mxu0 0.0
      %1236 = vmatpush1.msra.mxu0 0.0
      %1237 = vmatprep.subr.mxu0 0.0
      %1238 = vmatpush1.msra.mxu0 0.0
      %1239 = vmatprep.subr.mxu0 0.0
      %1240 = vmatpush1.msra.mxu0 0.0
      %1241 = vmatprep.subr.mxu0 0.0
      %1242 = vmatpush1.msra.mxu0 0.0
      %1243 = vmatprep.subr.mxu0 0.0
      %1244 = vmatpush1.msra.mxu0 0.0
      %1245 = vmatprep.subr.mxu0 0.0
      %1246 = vmatpush1.msra.mxu0 0.0
      %1247 = vmatprep.subr.mxu0 0.0
      %1248 = vmatpush1.msra.mxu0 0.0
      %1249 = vmatprep.subr.mxu0 0.0
      %1250 = vmatpush1.msra.mxu0 0.0
      %1251 = vmatprep.subr.mxu0 0.0
      %1252 = vmatpush1.msra.mxu0 0.0
      %1253 = vmatprep.subr.mxu0 0.0
      %1254 = vmatpush1.msra.mxu0 0.0
      %1255 = vmatprep.subr.mxu0 0.0
      %1256 = vmatpush1.msra.mxu0 0.0
      %1257 = vmatprep.subr.mxu0 0.0
      %1258 = vmatpush1.msra.mxu0 0.0
      %1259 = vmatprep.subr.mxu0 0.0
      %1260 = vmatpush1.msra.mxu0 0.0
      %1261 = vmatprep.subr.mxu0 0.0
      %1262 = vmatpush1.msra.mxu0 0.0
      %1263 = vmatprep.mubr.f32.mxu0 0.0
      %1264 = vmatmul.mubr.f32.gmra.mrb[0].mxu0 %v1197
      %v1265 = vpop.f32.mrb[0].mxu0
      %v1266 = vadd.f32 0.0, %v1265
      %v1267 = vpop.f32.mrb[0].mxu0
      %1268 = vdwg.mxu0
      %v1270 = vsel %vm59, %v1048, 0
      %1272 = vmatprep.subr.mxu0 0.0
      %1273 = vmatpush1.msra.mxu0 %v1044
      %1274 = vmatprep.subr.mxu0 0.0
      %1275 = vmatpush1.msra.mxu0 0.0
      %1276 = vmatprep.subr.mxu0 0.0
      %1277 = vmatpush1.msra.mxu0 0.0
      %1278 = vmatprep.subr.mxu0 0.0
      %1279 = vmatpush1.msra.mxu0 0.0
      %1280 = vmatprep.subr.mxu0 0.0
      %1281 = vmatpush1.msra.mxu0 0.0
      %1282 = vmatprep.subr.mxu0 0.0
      %1283 = vmatpush1.msra.mxu0 0.0
      %1284 = vmatprep.subr.mxu0 0.0
      %1285 = vmatpush1.msra.mxu0 0.0
      %1286 = vmatprep.subr.mxu0 0.0
      %1287 = vmatpush1.msra.mxu0 0.0
      %1288 = vmatprep.subr.mxu0 0.0
      %1289 = vmatpush1.msra.mxu0 0.0
      %1290 = vmatprep.subr.mxu0 0.0
      %1291 = vmatpush1.msra.mxu0 0.0
      %1292 = vmatprep.subr.mxu0 0.0
      %1293 = vmatpush1.msra.mxu0 0.0
      %1294 = vmatprep.subr.mxu0 0.0
      %1295 = vmatpush1.msra.mxu0 0.0
      %1296 = vmatprep.subr.mxu0 0.0
      %1297 = vmatpush1.msra.mxu0 0.0
      %1298 = vmatprep.subr.mxu0 0.0
      %1299 = vmatpush1.msra.mxu0 0.0
      %1300 = vmatprep.subr.mxu0 0.0
      %1301 = vmatpush1.msra.mxu0 0.0
      %1302 = vmatprep.subr.mxu0 0.0
      %1303 = vmatpush1.msra.mxu0 0.0
      %1304 = vmatprep.subr.mxu0 0.0
      %1305 = vmatpush1.msra.mxu0 0.0
      %1306 = vmatprep.subr.mxu0 0.0
      %1307 = vmatpush1.msra.mxu0 0.0
      %1308 = vmatprep.subr.mxu0 0.0
      %1309 = vmatpush1.msra.mxu0 0.0
      %1310 = vmatprep.subr.mxu0 0.0
      %1311 = vmatpush1.msra.mxu0 0.0
      %1312 = vmatprep.subr.mxu0 0.0
      %1313 = vmatpush1.msra.mxu0 0.0
      %1314 = vmatprep.subr.mxu0 0.0
      %1315 = vmatpush1.msra.mxu0 0.0
      %1316 = vmatprep.subr.mxu0 0.0
      %1317 = vmatpush1.msra.mxu0 0.0
      %1318 = vmatprep.subr.mxu0 0.0
      %1319 = vmatpush1.msra.mxu0 0.0
      %1320 = vmatprep.subr.mxu0 0.0
      %1321 = vmatpush1.msra.mxu0 0.0
      %1322 = vmatprep.subr.mxu0 0.0
      %1323 = vmatpush1.msra.mxu0 0.0
      %1324 = vmatprep.subr.mxu0 0.0
      %1325 = vmatpush1.msra.mxu0 0.0
      %1326 = vmatprep.subr.mxu0 0.0
      %1327 = vmatpush1.msra.mxu0 0.0
      %1328 = vmatprep.subr.mxu0 0.0
      %1329 = vmatpush1.msra.mxu0 0.0
      %1330 = vmatprep.subr.mxu0 0.0
      %1331 = vmatpush1.msra.mxu0 0.0
      %1332 = vmatprep.subr.mxu0 0.0
      %1333 = vmatpush1.msra.mxu0 0.0
      %1334 = vmatprep.subr.mxu0 0.0
      %1335 = vmatpush1.msra.mxu0 0.0
      %1336 = vmatprep.mubr.f32.mxu0 0.0
      %1337 = vmatmul.mubr.f32.gmra.mrb[0].mxu0 %v1270
      %v1338 = vpop.f32.mrb[0].mxu0
      %v1339 = vadd.f32 0.0, %v1338
      %v1340 = vpop.f32.mrb[0].mxu0
      %1341 = vdwg.mxu0
      %v1342 = vsub.f32 %v1049, %v1120
      %v1343 = vsub.f32 %v1049, %v1193
      %v1344 = vsub.f32 %v1049, %v1266
      %v1345 = vsub.f32 %v1049, %v1339
      %v1347 = vsel %vm59, %v1041, 0
      %1349 = vmatprep.subr.mxu0 0.0
      %1350 = vmatpush1.msra.mxu0 %v1342
      %1351 = vmatprep.subr.mxu0 0.0
      %1352 = vmatpush1.msra.mxu0 0.0
      %1353 = vmatprep.subr.mxu0 0.0
      %1354 = vmatpush1.msra.mxu0 0.0
      %1355 = vmatprep.subr.mxu0 0.0
      %1356 = vmatpush1.msra.mxu0 0.0
      %1357 = vmatprep.subr.mxu0 0.0
      %1358 = vmatpush1.msra.mxu0 0.0
      %1359 = vmatprep.subr.mxu0 0.0
      %1360 = vmatpush1.msra.mxu0 0.0
      %1361 = vmatprep.subr.mxu0 0.0
      %1362 = vmatpush1.msra.mxu0 0.0
      %1363 = vmatprep.subr.mxu0 0.0
      %1364 = vmatpush1.msra.mxu0 0.0
      %1365 = vmatprep.subr.mxu0 0.0
      %1366 = vmatpush1.msra.mxu0 0.0
      %1367 = vmatprep.subr.mxu0 0.0
      %1368 = vmatpush1.msra.mxu0 0.0
      %1369 = vmatprep.subr.mxu0 0.0
      %1370 = vmatpush1.msra.mxu0 0.0
      %1371 = vmatprep.subr.mxu0 0.0
      %1372 = vmatpush1.msra.mxu0 0.0
      %1373 = vmatprep.subr.mxu0 0.0
      %1374 = vmatpush1.msra.mxu0 0.0
      %1375 = vmatprep.subr.mxu0 0.0
      %1376 = vmatpush1.msra.mxu0 0.0
      %1377 = vmatprep.subr.mxu0 0.0
      %1378 = vmatpush1.msra.mxu0 0.0
      %1379 = vmatprep.subr.mxu0 0.0
      %1380 = vmatpush1.msra.mxu0 0.0
      %1381 = vmatprep.subr.mxu0 0.0
      %1382 = vmatpush1.msra.mxu0 0.0
      %1383 = vmatprep.subr.mxu0 0.0
      %1384 = vmatpush1.msra.mxu0 0.0
      %1385 = vmatprep.subr.mxu0 0.0
      %1386 = vmatpush1.msra.mxu0 0.0
      %1387 = vmatprep.subr.mxu0 0.0
      %1388 = vmatpush1.msra.mxu0 0.0
      %1389 = vmatprep.subr.mxu0 0.0
      %1390 = vmatpush1.msra.mxu0 0.0
      %1391 = vmatprep.subr.mxu0 0.0
      %1392 = vmatpush1.msra.mxu0 0.0
      %1393 = vmatprep.subr.mxu0 0.0
      %1394 = vmatpush1.msra.mxu0 0.0
      %1395 = vmatprep.subr.mxu0 0.0
      %1396 = vmatpush1.msra.mxu0 0.0
      %1397 = vmatprep.subr.mxu0 0.0
      %1398 = vmatpush1.msra.mxu0 0.0
      %1399 = vmatprep.subr.mxu0 0.0
      %1400 = vmatpush1.msra.mxu0 0.0
      %1401 = vmatprep.subr.mxu0 0.0
      %1402 = vmatpush1.msra.mxu0 0.0
      %1403 = vmatprep.subr.mxu0 0.0
      %1404 = vmatpush1.msra.mxu0 0.0
      %1405 = vmatprep.subr.mxu0 0.0
      %1406 = vmatpush1.msra.mxu0 0.0
      %1407 = vmatprep.subr.mxu0 0.0
      %1408 = vmatpush1.msra.mxu0 0.0
      %1409 = vmatprep.subr.mxu0 0.0
      %1410 = vmatpush1.msra.mxu0 0.0
      %1411 = vmatprep.subr.mxu0 0.0
      %1412 = vmatpush1.msra.mxu0 0.0
      %1413 = vmatprep.mubr.f32.mxu0 0.0
      %1414 = vmatmul.mubr.f32.gmra.mrb[0].mxu0 %v1347
      %v1415 = vpop.f32.mrb[0].mxu0
      %v1416 = vadd.f32 0.0, %v1415
      %v1417 = vpop.f32.mrb[0].mxu0
      %1418 = vdwg.mxu0
      %v1420 = vsel %vm59, %v1042, 0
      %1422 = vmatprep.subr.mxu0 0.0
      %1423 = vmatpush1.msra.mxu0 %v1343
      %1424 = vmatprep.subr.mxu0 0.0
      %1425 = vmatpush1.msra.mxu0 0.0
      %1426 = vmatprep.subr.mxu0 0.0
      %1427 = vmatpush1.msra.mxu0 0.0
      %1428 = vmatprep.subr.mxu0 0.0
      %1429 = vmatpush1.msra.mxu0 0.0
      %1430 = vmatprep.subr.mxu0 0.0
      %1431 = vmatpush1.msra.mxu0 0.0
      %1432 = vmatprep.subr.mxu0 0.0
      %1433 = vmatpush1.msra.mxu0 0.0
      %1434 = vmatprep.subr.mxu0 0.0
      %1435 = vmatpush1.msra.mxu0 0.0
      %1436 = vmatprep.subr.mxu0 0.0
      %1437 = vmatpush1.msra.mxu0 0.0
      %1438 = vmatprep.subr.mxu0 0.0
      %1439 = vmatpush1.msra.mxu0 0.0
      %1440 = vmatprep.subr.mxu0 0.0
      %1441 = vmatpush1.msra.mxu0 0.0
      %1442 = vmatprep.subr.mxu0 0.0
      %1443 = vmatpush1.msra.mxu0 0.0
      %1444 = vmatprep.subr.mxu0 0.0
      %1445 = vmatpush1.msra.mxu0 0.0
      %1446 = vmatprep.subr.mxu0 0.0
      %1447 = vmatpush1.msra.mxu0 0.0
      %1448 = vmatprep.subr.mxu0 0.0
      %1449 = vmatpush1.msra.mxu0 0.0
      %1450 = vmatprep.subr.mxu0 0.0
      %1451 = vmatpush1.msra.mxu0 0.0
      %1452 = vmatprep.subr.mxu0 0.0
      %1453 = vmatpush1.msra.mxu0 0.0
      %1454 = vmatprep.subr.mxu0 0.0
      %1455 = vmatpush1.msra.mxu0 0.0
      %1456 = vmatprep.subr.mxu0 0.0
      %1457 = vmatpush1.msra.mxu0 0.0
      %1458 = vmatprep.subr.mxu0 0.0
      %1459 = vmatpush1.msra.mxu0 0.0
      %1460 = vmatprep.subr.mxu0 0.0
      %1461 = vmatpush1.msra.mxu0 0.0
      %1462 = vmatprep.subr.mxu0 0.0
      %1463 = vmatpush1.msra.mxu0 0.0
      %1464 = vmatprep.subr.mxu0 0.0
      %1465 = vmatpush1.msra.mxu0 0.0
      %1466 = vmatprep.subr.mxu0 0.0
      %1467 = vmatpush1.msra.mxu0 0.0
      %1468 = vmatprep.subr.mxu0 0.0
      %1469 = vmatpush1.msra.mxu0 0.0
      %1470 = vmatprep.subr.mxu0 0.0
      %1471 = vmatpush1.msra.mxu0 0.0
      %1472 = vmatprep.subr.mxu0 0.0
      %1473 = vmatpush1.msra.mxu0 0.0
      %1474 = vmatprep.subr.mxu0 0.0
      %1475 = vmatpush1.msra.mxu0 0.0
      %1476 = vmatprep.subr.mxu0 0.0
      %1477 = vmatpush1.msra.mxu0 0.0
      %1478 = vmatprep.subr.mxu0 0.0
      %1479 = vmatpush1.msra.mxu0 0.0
      %1480 = vmatprep.subr.mxu0 0.0
      %1481 = vmatpush1.msra.mxu0 0.0
      %1482 = vmatprep.subr.mxu0 0.0
      %1483 = vmatpush1.msra.mxu0 0.0
      %1484 = vmatprep.subr.mxu0 0.0
      %1485 = vmatpush1.msra.mxu0 0.0
      %1486 = vmatprep.mubr.f32.mxu0 0.0
      %1487 = vmatmul.mubr.f32.gmra.mrb[0].mxu0 %v1420
      %v1488 = vpop.f32.mrb[0].mxu0
      %v1489 = vadd.f32 0.0, %v1488
      %v1490 = vpop.f32.mrb[0].mxu0
      %1491 = vdwg.mxu0
      %v1493 = vsel %vm59, %v1043, 0
      %1495 = vmatprep.subr.mxu0 0.0
      %1496 = vmatpush1.msra.mxu0 %v1344
      %1497 = vmatprep.subr.mxu0 0.0
      %1498 = vmatpush1.msra.mxu0 0.0
      %1499 = vmatprep.subr.mxu0 0.0
      %1500 = vmatpush1.msra.mxu0 0.0
      %1501 = vmatprep.subr.mxu0 0.0
      %1502 = vmatpush1.msra.mxu0 0.0
      %1503 = vmatprep.subr.mxu0 0.0
      %1504 = vmatpush1.msra.mxu0 0.0
      %1505 = vmatprep.subr.mxu0 0.0
      %1506 = vmatpush1.msra.mxu0 0.0
      %1507 = vmatprep.subr.mxu0 0.0
      %1508 = vmatpush1.msra.mxu0 0.0
      %1509 = vmatprep.subr.mxu0 0.0
      %1510 = vmatpush1.msra.mxu0 0.0
      %1511 = vmatprep.subr.mxu0 0.0
      %1512 = vmatpush1.msra.mxu0 0.0
      %1513 = vmatprep.subr.mxu0 0.0
      %1514 = vmatpush1.msra.mxu0 0.0
      %1515 = vmatprep.subr.mxu0 0.0
      %1516 = vmatpush1.msra.mxu0 0.0
      %1517 = vmatprep.subr.mxu0 0.0
      %1518 = vmatpush1.msra.mxu0 0.0
      %1519 = vmatprep.subr.mxu0 0.0
      %1520 = vmatpush1.msra.mxu0 0.0
      %1521 = vmatprep.subr.mxu0 0.0
      %1522 = vmatpush1.msra.mxu0 0.0
      %1523 = vmatprep.subr.mxu0 0.0
      %1524 = vmatpush1.msra.mxu0 0.0
      %1525 = vmatprep.subr.mxu0 0.0
      %1526 = vmatpush1.msra.mxu0 0.0
      %1527 = vmatprep.subr.mxu0 0.0
      %1528 = vmatpush1.msra.mxu0 0.0
      %1529 = vmatprep.subr.mxu0 0.0
      %1530 = vmatpush1.msra.mxu0 0.0
      %1531 = vmatprep.subr.mxu0 0.0
      %1532 = vmatpush1.msra.mxu0 0.0
      %1533 = vmatprep.subr.mxu0 0.0
      %1534 = vmatpush1.msra.mxu0 0.0
      %1535 = vmatprep.subr.mxu0 0.0
      %1536 = vmatpush1.msra.mxu0 0.0
      %1537 = vmatprep.subr.mxu0 0.0
      %1538 = vmatpush1.msra.mxu0 0.0
      %1539 = vmatprep.subr.mxu0 0.0
      %1540 = vmatpush1.msra.mxu0 0.0
      %1541 = vmatprep.subr.mxu0 0.0
      %1542 = vmatpush1.msra.mxu0 0.0
      %1543 = vmatprep.subr.mxu0 0.0
      %1544 = vmatpush1.msra.mxu0 0.0
      %1545 = vmatprep.subr.mxu0 0.0
      %1546 = vmatpush1.msra.mxu0 0.0
      %1547 = vmatprep.subr.mxu0 0.0
      %1548 = vmatpush1.msra.mxu0 0.0
      %1549 = vmatprep.subr.mxu0 0.0
      %1550 = vmatpush1.msra.mxu0 0.0
      %1551 = vmatprep.subr.mxu0 0.0
      %1552 = vmatpush1.msra.mxu0 0.0
      %1553 = vmatprep.subr.mxu0 0.0
      %1554 = vmatpush1.msra.mxu0 0.0
      %1555 = vmatprep.subr.mxu0 0.0
      %1556 = vmatpush1.msra.mxu0 0.0
      %1557 = vmatprep.subr.mxu0 0.0
      %1558 = vmatpush1.msra.mxu0 0.0
      %1559 = vmatprep.mubr.f32.mxu0 0.0
      %1560 = vmatmul.mubr.f32.gmra.mrb[0].mxu0 %v1493
      %v1561 = vpop.f32.mrb[0].mxu0
      %v1562 = vadd.f32 0.0, %v1561
      %v1563 = vpop.f32.mrb[0].mxu0
      %1564 = vdwg.mxu0
      %v1566 = vsel %vm59, %v1044, 0
      %1568 = vmatprep.subr.mxu0 0.0
      %1569 = vmatpush1.msra.mxu0 %v1345
      %1570 = vmatprep.subr.mxu0 0.0
      %1571 = vmatpush1.msra.mxu0 0.0
      %1572 = vmatprep.subr.mxu0 0.0
      %1573 = vmatpush1.msra.mxu0 0.0
      %1574 = vmatprep.subr.mxu0 0.0
      %1575 = vmatpush1.msra.mxu0 0.0
      %1576 = vmatprep.subr.mxu0 0.0
      %1577 = vmatpush1.msra.mxu0 0.0
      %1578 = vmatprep.subr.mxu0 0.0
      %1579 = vmatpush1.msra.mxu0 0.0
      %1580 = vmatprep.subr.mxu0 0.0
      %1581 = vmatpush1.msra.mxu0 0.0
      %1582 = vmatprep.subr.mxu0 0.0
      %1583 = vmatpush1.msra.mxu0 0.0
      %1584 = vmatprep.subr.mxu0 0.0
      %1585 = vmatpush1.msra.mxu0 0.0
      %1586 = vmatprep.subr.mxu0 0.0
      %1587 = vmatpush1.msra.mxu0 0.0
      %1588 = vmatprep.subr.mxu0 0.0
      %1589 = vmatpush1.msra.mxu0 0.0
      %1590 = vmatprep.subr.mxu0 0.0
      %1591 = vmatpush1.msra.mxu0 0.0
      %1592 = vmatprep.subr.mxu0 0.0
      %1593 = vmatpush1.msra.mxu0 0.0
      %1594 = vmatprep.subr.mxu0 0.0
      %1595 = vmatpush1.msra.mxu0 0.0
      %1596 = vmatprep.subr.mxu0 0.0
      %1597 = vmatpush1.msra.mxu0 0.0
      %1598 = vmatprep.subr.mxu0 0.0
      %1599 = vmatpush1.msra.mxu0 0.0
      %1600 = vmatprep.subr.mxu0 0.0
      %1601 = vmatpush1.msra.mxu0 0.0
      %1602 = vmatprep.subr.mxu0 0.0
      %1603 = vmatpush1.msra.mxu0 0.0
      %1604 = vmatprep.subr.mxu0 0.0
      %1605 = vmatpush1.msra.mxu0 0.0
      %1606 = vmatprep.subr.mxu0 0.0
      %1607 = vmatpush1.msra.mxu0 0.0
      %1608 = vmatprep.subr.mxu0 0.0
      %1609 = vmatpush1.msra.mxu0 0.0
      %1610 = vmatprep.subr.mxu0 0.0
      %1611 = vmatpush1.msra.mxu0 0.0
      %1612 = vmatprep.subr.mxu0 0.0
      %1613 = vmatpush1.msra.mxu0 0.0
      %1614 = vmatprep.subr.mxu0 0.0
      %1615 = vmatpush1.msra.mxu0 0.0
      %1616 = vmatprep.subr.mxu0 0.0
      %1617 = vmatpush1.msra.mxu0 0.0
      %1618 = vmatprep.subr.mxu0 0.0
      %1619 = vmatpush1.msra.mxu0 0.0
      %1620 = vmatprep.subr.mxu0 0.0
      %1621 = vmatpush1.msra.mxu0 0.0
      %1622 = vmatprep.subr.mxu0 0.0
      %1623 = vmatpush1.msra.mxu0 0.0
      %1624 = vmatprep.subr.mxu0 0.0
      %1625 = vmatpush1.msra.mxu0 0.0
      %1626 = vmatprep.subr.mxu0 0.0
      %1627 = vmatpush1.msra.mxu0 0.0
      %1628 = vmatprep.subr.mxu0 0.0
      %1629 = vmatpush1.msra.mxu0 0.0
      %1630 = vmatprep.subr.mxu0 0.0
      %1631 = vmatpush1.msra.mxu0 0.0
      %1632 = vmatprep.mubr.f32.mxu0 0.0
      %1633 = vmatmul.mubr.f32.gmra.mrb[0].mxu0 %v1566
      %v1634 = vpop.f32.mrb[0].mxu0
      %v1635 = vadd.f32 0.0, %v1634
      %v1636 = vpop.f32.mrb[0].mxu0
      %1637 = vdwg.mxu0
      %v1638 = vmul.f32 %v1416, 0.5
      %v1639 = vmul.f32 %v1489, 0.5
      %v1640 = vmul.f32 %v1562, 0.5
      %v1641 = vmul.f32 %v1635, 0.5
      %v1643 = vsel %vm59, %v1342, 0
      %1645 = vmatprep.subr.mxu0 0.0
      %1646 = vmatpush1.msra.mxu0 %v1045
      %1647 = vmatprep.subr.mxu0 0.0
      %1648 = vmatpush1.msra.mxu0 0.0
      %1649 = vmatprep.subr.mxu0 0.0
      %1650 = vmatpush1.msra.mxu0 0.0
      %1651 = vmatprep.subr.mxu0 0.0
      %1652 = vmatpush1.msra.mxu0 0.0
      %1653 = vmatprep.subr.mxu0 0.0
      %1654 = vmatpush1.msra.mxu0 0.0
      %1655 = vmatprep.subr.mxu0 0.0
      %1656 = vmatpush1.msra.mxu0 0.0
      %1657 = vmatprep.subr.mxu0 0.0
      %1658 = vmatpush1.msra.mxu0 0.0
      %1659 = vmatprep.subr.mxu0 0.0
      %1660 = vmatpush1.msra.mxu0 0.0
      %1661 = vmatprep.subr.mxu0 0.0
      %1662 = vmatpush1.msra.mxu0 0.0
      %1663 = vmatprep.subr.mxu0 0.0
      %1664 = vmatpush1.msra.mxu0 0.0
      %1665 = vmatprep.subr.mxu0 0.0
      %1666 = vmatpush1.msra.mxu0 0.0
      %1667 = vmatprep.subr.mxu0 0.0
      %1668 = vmatpush1.msra.mxu0 0.0
      %1669 = vmatprep.subr.mxu0 0.0
      %1670 = vmatpush1.msra.mxu0 0.0
      %1671 = vmatprep.subr.mxu0 0.0
      %1672 = vmatpush1.msra.mxu0 0.0
      %1673 = vmatprep.subr.mxu0 0.0
      %1674 = vmatpush1.msra.mxu0 0.0
      %1675 = vmatprep.subr.mxu0 0.0
      %1676 = vmatpush1.msra.mxu0 0.0
      %1677 = vmatprep.subr.mxu0 0.0
      %1678 = vmatpush1.msra.mxu0 0.0
      %1679 = vmatprep.subr.mxu0 0.0
      %1680 = vmatpush1.msra.mxu0 0.0
      %1681 = vmatprep.subr.mxu0 0.0
      %1682 = vmatpush1.msra.mxu0 0.0
      %1683 = vmatprep.subr.mxu0 0.0
      %1684 = vmatpush1.msra.mxu0 0.0
      %1685 = vmatprep.subr.mxu0 0.0
      %1686 = vmatpush1.msra.mxu0 0.0
      %1687 = vmatprep.subr.mxu0 0.0
      %1688 = vmatpush1.msra.mxu0 0.0
      %1689 = vmatprep.subr.mxu0 0.0
      %1690 = vmatpush1.msra.mxu0 0.0
      %1691 = vmatprep.subr.mxu0 0.0
      %1692 = vmatpush1.msra.mxu0 0.0
      %1693 = vmatprep.subr.mxu0 0.0
      %1694 = vmatpush1.msra.mxu0 0.0
      %1695 = vmatprep.subr.mxu0 0.0
      %1696 = vmatpush1.msra.mxu0 0.0
      %1697 = vmatprep.subr.mxu0 0.0
      %1698 = vmatpush1.msra.mxu0 0.0
      %1699 = vmatprep.subr.mxu0 0.0
      %1700 = vmatpush1.msra.mxu0 0.0
      %1701 = vmatprep.subr.mxu0 0.0
      %1702 = vmatpush1.msra.mxu0 0.0
      %1703 = vmatprep.subr.mxu0 0.0
      %1704 = vmatpush1.msra.mxu0 0.0
      %1705 = vmatprep.subr.mxu0 0.0
      %1706 = vmatpush1.msra.mxu0 0.0
      %1707 = vmatprep.subr.mxu0 0.0
      %1708 = vmatpush1.msra.mxu0 0.0
      %1709 = vmatprep.mubr.f32.mxu0 0.0
      %1710 = vmatmul.mubr.f32.gmra.mrb[0].mxu0 %v1643
      %v1711 = vpop.f32.mrb[0].mxu0
      %v1712 = vadd.f32 0.0, %v1711
      %v1713 = vpop.f32.mrb[0].mxu0
      %1714 = vdwg.mxu0
      %v1716 = vsel %vm59, %v1343, 0
      %1718 = vmatprep.subr.mxu0 0.0
      %1719 = vmatpush1.msra.mxu0 %v1046
      %1720 = vmatprep.subr.mxu0 0.0
      %1721 = vmatpush1.msra.mxu0 0.0
      %1722 = vmatprep.subr.mxu0 0.0
      %1723 = vmatpush1.msra.mxu0 0.0
      %1724 = vmatprep.subr.mxu0 0.0
      %1725 = vmatpush1.msra.mxu0 0.0
      %1726 = vmatprep.subr.mxu0 0.0
      %1727 = vmatpush1.msra.mxu0 0.0
      %1728 = vmatprep.subr.mxu0 0.0
      %1729 = vmatpush1.msra.mxu0 0.0
      %1730 = vmatprep.subr.mxu0 0.0
      %1731 = vmatpush1.msra.mxu0 0.0
      %1732 = vmatprep.subr.mxu0 0.0
      %1733 = vmatpush1.msra.mxu0 0.0
      %1734 = vmatprep.subr.mxu0 0.0
      %1735 = vmatpush1.msra.mxu0 0.0
      %1736 = vmatprep.subr.mxu0 0.0
      %1737 = vmatpush1.msra.mxu0 0.0
      %1738 = vmatprep.subr.mxu0 0.0
      %1739 = vmatpush1.msra.mxu0 0.0
      %1740 = vmatprep.subr.mxu0 0.0
      %1741 = vmatpush1.msra.mxu0 0.0
      %1742 = vmatprep.subr.mxu0 0.0
      %1743 = vmatpush1.msra.mxu0 0.0
      %1744 = vmatprep.subr.mxu0 0.0
      %1745 = vmatpush1.msra.mxu0 0.0
      %1746 = vmatprep.subr.mxu0 0.0
      %1747 = vmatpush1.msra.mxu0 0.0
      %1748 = vmatprep.subr.mxu0 0.0
      %1749 = vmatpush1.msra.mxu0 0.0
      %1750 = vmatprep.subr.mxu0 0.0
      %1751 = vmatpush1.msra.mxu0 0.0
      %1752 = vmatprep.subr.mxu0 0.0
      %1753 = vmatpush1.msra.mxu0 0.0
      %1754 = vmatprep.subr.mxu0 0.0
      %1755 = vmatpush1.msra.mxu0 0.0
      %1756 = vmatprep.subr.mxu0 0.0
      %1757 = vmatpush1.msra.mxu0 0.0
      %1758 = vmatprep.subr.mxu0 0.0
      %1759 = vmatpush1.msra.mxu0 0.0
      %1760 = vmatprep.subr.mxu0 0.0
      %1761 = vmatpush1.msra.mxu0 0.0
      %1762 = vmatprep.subr.mxu0 0.0
      %1763 = vmatpush1.msra.mxu0 0.0
      %1764 = vmatprep.subr.mxu0 0.0
      %1765 = vmatpush1.msra.mxu0 0.0
      %1766 = vmatprep.subr.mxu0 0.0
      %1767 = vmatpush1.msra.mxu0 0.0
      %1768 = vmatprep.subr.mxu0 0.0
      %1769 = vmatpush1.msra.mxu0 0.0
      %1770 = vmatprep.subr.mxu0 0.0
      %1771 = vmatpush1.msra.mxu0 0.0
      %1772 = vmatprep.subr.mxu0 0.0
      %1773 = vmatpush1.msra.mxu0 0.0
      %1774 = vmatprep.subr.mxu0 0.0
      %1775 = vmatpush1.msra.mxu0 0.0
      %1776 = vmatprep.subr.mxu0 0.0
      %1777 = vmatpush1.msra.mxu0 0.0
      %1778 = vmatprep.subr.mxu0 0.0
      %1779 = vmatpush1.msra.mxu0 0.0
      %1780 = vmatprep.subr.mxu0 0.0
      %1781 = vmatpush1.msra.mxu0 0.0
      %1782 = vmatprep.mubr.f32.mxu0 0.0
      %1783 = vmatmul.mubr.f32.gmra.mrb[0].mxu0 %v1716
      %v1784 = vpop.f32.mrb[0].mxu0
      %v1785 = vadd.f32 0.0, %v1784
      %v1786 = vpop.f32.mrb[0].mxu0
      %1787 = vdwg.mxu0
      %v1789 = vsel %vm59, %v1344, 0
      %1791 = vmatprep.subr.mxu0 0.0
      %1792 = vmatpush1.msra.mxu0 %v1047
      %1793 = vmatprep.subr.mxu0 0.0
      %1794 = vmatpush1.msra.mxu0 0.0
      %1795 = vmatprep.subr.mxu0 0.0
      %1796 = vmatpush1.msra.mxu0 0.0
      %1797 = vmatprep.subr.mxu0 0.0
      %1798 = vmatpush1.msra.mxu0 0.0
      %1799 = vmatprep.subr.mxu0 0.0
      %1800 = vmatpush1.msra.mxu0 0.0
      %1801 = vmatprep.subr.mxu0 0.0
      %1802 = vmatpush1.msra.mxu0 0.0
      %1803 = vmatprep.subr.mxu0 0.0
      %1804 = vmatpush1.msra.mxu0 0.0
      %1805 = vmatprep.subr.mxu0 0.0
      %1806 = vmatpush1.msra.mxu0 0.0
      %1807 = vmatprep.subr.mxu0 0.0
      %1808 = vmatpush1.msra.mxu0 0.0
      %1809 = vmatprep.subr.mxu0 0.0
      %1810 = vmatpush1.msra.mxu0 0.0
      %1811 = vmatprep.subr.mxu0 0.0
      %1812 = vmatpush1.msra.mxu0 0.0
      %1813 = vmatprep.subr.mxu0 0.0
      %1814 = vmatpush1.msra.mxu0 0.0
      %1815 = vmatprep.subr.mxu0 0.0
      %1816 = vmatpush1.msra.mxu0 0.0
      %1817 = vmatprep.subr.mxu0 0.0
      %1818 = vmatpush1.msra.mxu0 0.0
      %1819 = vmatprep.subr.mxu0 0.0
      %1820 = vmatpush1.msra.mxu0 0.0
      %1821 = vmatprep.subr.mxu0 0.0
      %1822 = vmatpush1.msra.mxu0 0.0
      %1823 = vmatprep.subr.mxu0 0.0
      %1824 = vmatpush1.msra.mxu0 0.0
      %1825 = vmatprep.subr.mxu0 0.0
      %1826 = vmatpush1.msra.mxu0 0.0
      %1827 = vmatprep.subr.mxu0 0.0
      %1828 = vmatpush1.msra.mxu0 0.0
      %1829 = vmatprep.subr.mxu0 0.0
      %1830 = vmatpush1.msra.mxu0 0.0
      %1831 = vmatprep.subr.mxu0 0.0
      %1832 = vmatpush1.msra.mxu0 0.0
      %1833 = vmatprep.subr.mxu0 0.0
      %1834 = vmatpush1.msra.mxu0 0.0
      %1835 = vmatprep.subr.mxu0 0.0
      %1836 = vmatpush1.msra.mxu0 0.0
      %1837 = vmatprep.subr.mxu0 0.0
      %1838 = vmatpush1.msra.mxu0 0.0
      %1839 = vmatprep.subr.mxu0 0.0
      %1840 = vmatpush1.msra.mxu0 0.0
      %1841 = vmatprep.subr.mxu0 0.0
      %1842 = vmatpush1.msra.mxu0 0.0
      %1843 = vmatprep.subr.mxu0 0.0
      %1844 = vmatpush1.msra.mxu0 0.0
      %1845 = vmatprep.subr.mxu0 0.0
      %1846 = vmatpush1.msra.mxu0 0.0
      %1847 = vmatprep.subr.mxu0 0.0
      %1848 = vmatpush1.msra.mxu0 0.0
      %1849 = vmatprep.subr.mxu0 0.0
      %1850 = vmatpush1.msra.mxu0 0.0
      %1851 = vmatprep.subr.mxu0 0.0
      %1852 = vmatpush1.msra.mxu0 0.0
      %1853 = vmatprep.subr.mxu0 0.0
      %1854 = vmatpush1.msra.mxu0 0.0
      %1855 = vmatprep.mubr.f32.mxu0 0.0
      %1856 = vmatmul.mubr.f32.gmra.mrb[0].mxu0 %v1789
      %v1857 = vpop.f32.mrb[0].mxu0
      %v1858 = vadd.f32 0.0, %v1857
      %v1859 = vpop.f32.mrb[0].mxu0
      %1860 = vdwg.mxu0
      %v1862 = vsel %vm59, %v1345, 0
      %1864 = vmatprep.subr.mxu0 0.0
      %1865 = vmatpush1.msra.mxu0 %v1048
      %1866 = vmatprep.subr.mxu0 0.0
      %1867 = vmatpush1.msra.mxu0 0.0
      %1868 = vmatprep.subr.mxu0 0.0
      %1869 = vmatpush1.msra.mxu0 0.0
      %1870 = vmatprep.subr.mxu0 0.0
      %1871 = vmatpush1.msra.mxu0 0.0
      %1872 = vmatprep.subr.mxu0 0.0
      %1873 = vmatpush1.msra.mxu0 0.0
      %1874 = vmatprep.subr.mxu0 0.0
      %1875 = vmatpush1.msra.mxu0 0.0
      %1876 = vmatprep.subr.mxu0 0.0
      %1877 = vmatpush1.msra.mxu0 0.0
      %1878 = vmatprep.subr.mxu0 0.0
      %1879 = vmatpush1.msra.mxu0 0.0
      %1880 = vmatprep.subr.mxu0 0.0
      %1881 = vmatpush1.msra.mxu0 0.0
      %1882 = vmatprep.subr.mxu0 0.0
      %1883 = vmatpush1.msra.mxu0 0.0
      %1884 = vmatprep.subr.mxu0 0.0
      %1885 = vmatpush1.msra.mxu0 0.0
      %1886 = vmatprep.subr.mxu0 0.0
      %1887 = vmatpush1.msra.mxu0 0.0
      %1888 = vmatprep.subr.mxu0 0.0
      %1889 = vmatpush1.msra.mxu0 0.0
      %1890 = vmatprep.subr.mxu0 0.0
      %1891 = vmatpush1.msra.mxu0 0.0
      %1892 = vmatprep.subr.mxu0 0.0
      %1893 = vmatpush1.msra.mxu0 0.0
      %1894 = vmatprep.subr.mxu0 0.0
      %1895 = vmatpush1.msra.mxu0 0.0
      %1896 = vmatprep.subr.mxu0 0.0
      %1897 = vmatpush1.msra.mxu0 0.0
      %1898 = vmatprep.subr.mxu0 0.0
      %1899 = vmatpush1.msra.mxu0 0.0
      %1900 = vmatprep.subr.mxu0 0.0
      %1901 = vmatpush1.msra.mxu0 0.0
      %1902 = vmatprep.subr.mxu0 0.0
      %1903 = vmatpush1.msra.mxu0 0.0
      %1904 = vmatprep.subr.mxu0 0.0
      %1905 = vmatpush1.msra.mxu0 0.0
      %1906 = vmatprep.subr.mxu0 0.0
      %1907 = vmatpush1.msra.mxu0 0.0
      %1908 = vmatprep.subr.mxu0 0.0
      %1909 = vmatpush1.msra.mxu0 0.0
      %1910 = vmatprep.subr.mxu0 0.0
      %1911 = vmatpush1.msra.mxu0 0.0
      %1912 = vmatprep.subr.mxu0 0.0
      %1913 = vmatpush1.msra.mxu0 0.0
      %1914 = vmatprep.subr.mxu0 0.0
      %1915 = vmatpush1.msra.mxu0 0.0
      %1916 = vmatprep.subr.mxu0 0.0
      %1917 = vmatpush1.msra.mxu0 0.0
      %1918 = vmatprep.subr.mxu0 0.0
      %1919 = vmatpush1.msra.mxu0 0.0
      %1920 = vmatprep.subr.mxu0 0.0
      %1921 = vmatpush1.msra.mxu0 0.0
      %1922 = vmatprep.subr.mxu0 0.0
      %1923 = vmatpush1.msra.mxu0 0.0
      %1924 = vmatprep.subr.mxu0 0.0
      %1925 = vmatpush1.msra.mxu0 0.0
      %1926 = vmatprep.subr.mxu0 0.0
      %1927 = vmatpush1.msra.mxu0 0.0
      %1928 = vmatprep.mubr.f32.mxu0 0.0
      %1929 = vmatmul.mubr.f32.gmra.mrb[0].mxu0 %v1862
      %v1930 = vpop.f32.mrb[0].mxu0
      %v1931 = vadd.f32 0.0, %v1930
      %v1932 = vpop.f32.mrb[0].mxu0
      %1933 = vdwg.mxu0
      %v1934 = vmul.f32 %v1712, 0.5
      %v1935 = vmul.f32 %v1785, 0.5
      %v1936 = vmul.f32 %v1858, 0.5
      %v1937 = vmul.f32 %v1931, 0.5
    $region33: #{tpu_custom_call.1} parent=1 // loop_footer
      %s1040 = sadd.s32 1, %s1036
    $region34: #{tpu_custom_call.1} parent=1 // loop_footer_branch
      %1035 = sbr.rel target = $region30
    $region35: #{tpu_custom_call.1} parent=1 // loop_exit
      _
    loop: start=0, step=1, limit=10
    $region36: #{tpu_custom_call.1} parent=1 // loop_pre_header
      _
    $region37: #{tpu_custom_call.1} parent=1 // loop_header
      %s1939 = sphi 0, %s1943
      %p1940 = scmp.ge.s32.totalorder %s1939, 10
      %v1944 = vphi %v1041, %v2541
      %v1945 = vphi %v1042, %v2542
      %v1946 = vphi %v1043, %v2543
      %v1947 = vphi %v1044, %v2544
      %v1948 = vphi %v54, %v2837
      %v1949 = vphi %v54, %v2838
      %v1950 = vphi %v54, %v2839
      %v1951 = vphi %v54, %v2840
    $region38: #{tpu_custom_call.1} parent=1 // loop_header_branch
      %1942 = sbr.rel (%p1940) target = $region42
    $region39: #{tpu_custom_call.1} parent=1 // loop_body
      %v1952 = vmul.f32 %v54, 3.0
      %v1954 = vsel %vm59, %v1948, 0
      %1956 = vmatprep.subr.mxu0 0.0
      %1957 = vmatpush1.msra.mxu0 %v1944
      %1958 = vmatprep.subr.mxu0 0.0
      %1959 = vmatpush1.msra.mxu0 0.0
      %1960 = vmatprep.subr.mxu0 0.0
      %1961 = vmatpush1.msra.mxu0 0.0
      %1962 = vmatprep.subr.mxu0 0.0
      %1963 = vmatpush1.msra.mxu0 0.0
      %1964 = vmatprep.subr.mxu0 0.0
      %1965 = vmatpush1.msra.mxu0 0.0
      %1966 = vmatprep.subr.mxu0 0.0
      %1967 = vmatpush1.msra.mxu0 0.0
      %1968 = vmatprep.subr.mxu0 0.0
      %1969 = vmatpush1.msra.mxu0 0.0
      %1970 = vmatprep.subr.mxu0 0.0
      %1971 = vmatpush1.msra.mxu0 0.0
      %1972 = vmatprep.subr.mxu0 0.0
      %1973 = vmatpush1.msra.mxu0 0.0
      %1974 = vmatprep.subr.mxu0 0.0
      %1975 = vmatpush1.msra.mxu0 0.0
      %1976 = vmatprep.subr.mxu0 0.0
      %1977 = vmatpush1.msra.mxu0 0.0
      %1978 = vmatprep.subr.mxu0 0.0
      %1979 = vmatpush1.msra.mxu0 0.0
      %1980 = vmatprep.subr.mxu0 0.0
      %1981 = vmatpush1.msra.mxu0 0.0
      %1982 = vmatprep.subr.mxu0 0.0
      %1983 = vmatpush1.msra.mxu0 0.0
      %1984 = vmatprep.subr.mxu0 0.0
      %1985 = vmatpush1.msra.mxu0 0.0
      %1986 = vmatprep.subr.mxu0 0.0
      %1987 = vmatpush1.msra.mxu0 0.0
      %1988 = vmatprep.subr.mxu0 0.0
      %1989 = vmatpush1.msra.mxu0 0.0
      %1990 = vmatprep.subr.mxu0 0.0
      %1991 = vmatpush1.msra.mxu0 0.0
      %1992 = vmatprep.subr.mxu0 0.0
      %1993 = vmatpush1.msra.mxu0 0.0
      %1994 = vmatprep.subr.mxu0 0.0
      %1995 = vmatpush1.msra.mxu0 0.0
      %1996 = vmatprep.subr.mxu0 0.0
      %1997 = vmatpush1.msra.mxu0 0.0
      %1998 = vmatprep.subr.mxu0 0.0
      %1999 = vmatpush1.msra.mxu0 0.0
      %2000 = vmatprep.subr.mxu0 0.0
      %2001 = vmatpush1.msra.mxu0 0.0
      %2002 = vmatprep.subr.mxu0 0.0
      %2003 = vmatpush1.msra.mxu0 0.0
      %2004 = vmatprep.subr.mxu0 0.0
      %2005 = vmatpush1.msra.mxu0 0.0
      %2006 = vmatprep.subr.mxu0 0.0
      %2007 = vmatpush1.msra.mxu0 0.0
      %2008 = vmatprep.subr.mxu0 0.0
      %2009 = vmatpush1.msra.mxu0 0.0
      %2010 = vmatprep.subr.mxu0 0.0
      %2011 = vmatpush1.msra.mxu0 0.0
      %2012 = vmatprep.subr.mxu0 0.0
      %2013 = vmatpush1.msra.mxu0 0.0
      %2014 = vmatprep.subr.mxu0 0.0
      %2015 = vmatpush1.msra.mxu0 0.0
      %2016 = vmatprep.subr.mxu0 0.0
      %2017 = vmatpush1.msra.mxu0 0.0
      %2018 = vmatprep.subr.mxu0 0.0
      %2019 = vmatpush1.msra.mxu0 0.0
      %2020 = vmatprep.mubr.f32.mxu0 0.0
      %2021 = vmatmul.mubr.f32.gmra.mrb[0].mxu0 %v1954
      %v2022 = vpop.f32.mrb[0].mxu0
      %v2023 = vadd.f32 0.0, %v2022
      %v2024 = vpop.f32.mrb[0].mxu0
      %2025 = vdwg.mxu0
      %v2027 = vsel %vm59, %v1949, 0
      %2029 = vmatprep.subr.mxu0 0.0
      %2030 = vmatpush1.msra.mxu0 %v1945
      %2031 = vmatprep.subr.mxu0 0.0
      %2032 = vmatpush1.msra.mxu0 0.0
      %2033 = vmatprep.subr.mxu0 0.0
      %2034 = vmatpush1.msra.mxu0 0.0
      %2035 = vmatprep.subr.mxu0 0.0
      %2036 = vmatpush1.msra.mxu0 0.0
      %2037 = vmatprep.subr.mxu0 0.0
      %2038 = vmatpush1.msra.mxu0 0.0
      %2039 = vmatprep.subr.mxu0 0.0
      %2040 = vmatpush1.msra.mxu0 0.0
      %2041 = vmatprep.subr.mxu0 0.0
      %2042 = vmatpush1.msra.mxu0 0.0
      %2043 = vmatprep.subr.mxu0 0.0
      %2044 = vmatpush1.msra.mxu0 0.0
      %2045 = vmatprep.subr.mxu0 0.0
      %2046 = vmatpush1.msra.mxu0 0.0
      %2047 = vmatprep.subr.mxu0 0.0
      %2048 = vmatpush1.msra.mxu0 0.0
      %2049 = vmatprep.subr.mxu0 0.0
      %2050 = vmatpush1.msra.mxu0 0.0
      %2051 = vmatprep.subr.mxu0 0.0
      %2052 = vmatpush1.msra.mxu0 0.0
      %2053 = vmatprep.subr.mxu0 0.0
      %2054 = vmatpush1.msra.mxu0 0.0
      %2055 = vmatprep.subr.mxu0 0.0
      %2056 = vmatpush1.msra.mxu0 0.0
      %2057 = vmatprep.subr.mxu0 0.0
      %2058 = vmatpush1.msra.mxu0 0.0
      %2059 = vmatprep.subr.mxu0 0.0
      %2060 = vmatpush1.msra.mxu0 0.0
      %2061 = vmatprep.subr.mxu0 0.0
      %2062 = vmatpush1.msra.mxu0 0.0
      %2063 = vmatprep.subr.mxu0 0.0
      %2064 = vmatpush1.msra.mxu0 0.0
      %2065 = vmatprep.subr.mxu0 0.0
      %2066 = vmatpush1.msra.mxu0 0.0
      %2067 = vmatprep.subr.mxu0 0.0
      %2068 = vmatpush1.msra.mxu0 0.0
      %2069 = vmatprep.subr.mxu0 0.0
      %2070 = vmatpush1.msra.mxu0 0.0
      %2071 = vmatprep.subr.mxu0 0.0
      %2072 = vmatpush1.msra.mxu0 0.0
      %2073 = vmatprep.subr.mxu0 0.0
      %2074 = vmatpush1.msra.mxu0 0.0
      %2075 = vmatprep.subr.mxu0 0.0
      %2076 = vmatpush1.msra.mxu0 0.0
      %2077 = vmatprep.subr.mxu0 0.0
      %2078 = vmatpush1.msra.mxu0 0.0
      %2079 = vmatprep.subr.mxu0 0.0
      %2080 = vmatpush1.msra.mxu0 0.0
      %2081 = vmatprep.subr.mxu0 0.0
      %2082 = vmatpush1.msra.mxu0 0.0
      %2083 = vmatprep.subr.mxu0 0.0
      %2084 = vmatpush1.msra.mxu0 0.0
      %2085 = vmatprep.subr.mxu0 0.0
      %2086 = vmatpush1.msra.mxu0 0.0
      %2087 = vmatprep.subr.mxu0 0.0
      %2088 = vmatpush1.msra.mxu0 0.0
      %2089 = vmatprep.subr.mxu0 0.0
      %2090 = vmatpush1.msra.mxu0 0.0
      %2091 = vmatprep.subr.mxu0 0.0
      %2092 = vmatpush1.msra.mxu0 0.0
      %2093 = vmatprep.mubr.f32.mxu0 0.0
      %2094 = vmatmul.mubr.f32.gmra.mrb[0].mxu0 %v2027
      %v2095 = vpop.f32.mrb[0].mxu0
      %v2096 = vadd.f32 0.0, %v2095
      %v2097 = vpop.f32.mrb[0].mxu0
      %2098 = vdwg.mxu0
      %v2100 = vsel %vm59, %v1950, 0
      %2102 = vmatprep.subr.mxu0 0.0
      %2103 = vmatpush1.msra.mxu0 %v1946
      %2104 = vmatprep.subr.mxu0 0.0
      %2105 = vmatpush1.msra.mxu0 0.0
      %2106 = vmatprep.subr.mxu0 0.0
      %2107 = vmatpush1.msra.mxu0 0.0
      %2108 = vmatprep.subr.mxu0 0.0
      %2109 = vmatpush1.msra.mxu0 0.0
      %2110 = vmatprep.subr.mxu0 0.0
      %2111 = vmatpush1.msra.mxu0 0.0
      %2112 = vmatprep.subr.mxu0 0.0
      %2113 = vmatpush1.msra.mxu0 0.0
      %2114 = vmatprep.subr.mxu0 0.0
      %2115 = vmatpush1.msra.mxu0 0.0
      %2116 = vmatprep.subr.mxu0 0.0
      %2117 = vmatpush1.msra.mxu0 0.0
      %2118 = vmatprep.subr.mxu0 0.0
      %2119 = vmatpush1.msra.mxu0 0.0
      %2120 = vmatprep.subr.mxu0 0.0
      %2121 = vmatpush1.msra.mxu0 0.0
      %2122 = vmatprep.subr.mxu0 0.0
      %2123 = vmatpush1.msra.mxu0 0.0
      %2124 = vmatprep.subr.mxu0 0.0
      %2125 = vmatpush1.msra.mxu0 0.0
      %2126 = vmatprep.subr.mxu0 0.0
      %2127 = vmatpush1.msra.mxu0 0.0
      %2128 = vmatprep.subr.mxu0 0.0
      %2129 = vmatpush1.msra.mxu0 0.0
      %2130 = vmatprep.subr.mxu0 0.0
      %2131 = vmatpush1.msra.mxu0 0.0
      %2132 = vmatprep.subr.mxu0 0.0
      %2133 = vmatpush1.msra.mxu0 0.0
      %2134 = vmatprep.subr.mxu0 0.0
      %2135 = vmatpush1.msra.mxu0 0.0
      %2136 = vmatprep.subr.mxu0 0.0
      %2137 = vmatpush1.msra.mxu0 0.0
      %2138 = vmatprep.subr.mxu0 0.0
      %2139 = vmatpush1.msra.mxu0 0.0
      %2140 = vmatprep.subr.mxu0 0.0
      %2141 = vmatpush1.msra.mxu0 0.0
      %2142 = vmatprep.subr.mxu0 0.0
      %2143 = vmatpush1.msra.mxu0 0.0
      %2144 = vmatprep.subr.mxu0 0.0
      %2145 = vmatpush1.msra.mxu0 0.0
      %2146 = vmatprep.subr.mxu0 0.0
      %2147 = vmatpush1.msra.mxu0 0.0
      %2148 = vmatprep.subr.mxu0 0.0
      %2149 = vmatpush1.msra.mxu0 0.0
      %2150 = vmatprep.subr.mxu0 0.0
      %2151 = vmatpush1.msra.mxu0 0.0
      %2152 = vmatprep.subr.mxu0 0.0
      %2153 = vmatpush1.msra.mxu0 0.0
      %2154 = vmatprep.subr.mxu0 0.0
      %2155 = vmatpush1.msra.mxu0 0.0
      %2156 = vmatprep.subr.mxu0 0.0
      %2157 = vmatpush1.msra.mxu0 0.0
      %2158 = vmatprep.subr.mxu0 0.0
      %2159 = vmatpush1.msra.mxu0 0.0
      %2160 = vmatprep.subr.mxu0 0.0
      %2161 = vmatpush1.msra.mxu0 0.0
      %2162 = vmatprep.subr.mxu0 0.0
      %2163 = vmatpush1.msra.mxu0 0.0
      %2164 = vmatprep.subr.mxu0 0.0
      %2165 = vmatpush1.msra.mxu0 0.0
      %2166 = vmatprep.mubr.f32.mxu0 0.0
      %2167 = vmatmul.mubr.f32.gmra.mrb[0].mxu0 %v2100
      %v2168 = vpop.f32.mrb[0].mxu0
      %v2169 = vadd.f32 0.0, %v2168
      %v2170 = vpop.f32.mrb[0].mxu0
      %2171 = vdwg.mxu0
      %v2173 = vsel %vm59, %v1951, 0
      %2175 = vmatprep.subr.mxu0 0.0
      %2176 = vmatpush1.msra.mxu0 %v1947
      %2177 = vmatprep.subr.mxu0 0.0
      %2178 = vmatpush1.msra.mxu0 0.0
      %2179 = vmatprep.subr.mxu0 0.0
      %2180 = vmatpush1.msra.mxu0 0.0
      %2181 = vmatprep.subr.mxu0 0.0
      %2182 = vmatpush1.msra.mxu0 0.0
      %2183 = vmatprep.subr.mxu0 0.0
      %2184 = vmatpush1.msra.mxu0 0.0
      %2185 = vmatprep.subr.mxu0 0.0
      %2186 = vmatpush1.msra.mxu0 0.0
      %2187 = vmatprep.subr.mxu0 0.0
      %2188 = vmatpush1.msra.mxu0 0.0
      %2189 = vmatprep.subr.mxu0 0.0
      %2190 = vmatpush1.msra.mxu0 0.0
      %2191 = vmatprep.subr.mxu0 0.0
      %2192 = vmatpush1.msra.mxu0 0.0
      %2193 = vmatprep.subr.mxu0 0.0
      %2194 = vmatpush1.msra.mxu0 0.0
      %2195 = vmatprep.subr.mxu0 0.0
      %2196 = vmatpush1.msra.mxu0 0.0
      %2197 = vmatprep.subr.mxu0 0.0
      %2198 = vmatpush1.msra.mxu0 0.0
      %2199 = vmatprep.subr.mxu0 0.0
      %2200 = vmatpush1.msra.mxu0 0.0
      %2201 = vmatprep.subr.mxu0 0.0
      %2202 = vmatpush1.msra.mxu0 0.0
      %2203 = vmatprep.subr.mxu0 0.0
      %2204 = vmatpush1.msra.mxu0 0.0
      %2205 = vmatprep.subr.mxu0 0.0
      %2206 = vmatpush1.msra.mxu0 0.0
      %2207 = vmatprep.subr.mxu0 0.0
      %2208 = vmatpush1.msra.mxu0 0.0
      %2209 = vmatprep.subr.mxu0 0.0
      %2210 = vmatpush1.msra.mxu0 0.0
      %2211 = vmatprep.subr.mxu0 0.0
      %2212 = vmatpush1.msra.mxu0 0.0
      %2213 = vmatprep.subr.mxu0 0.0
      %2214 = vmatpush1.msra.mxu0 0.0
      %2215 = vmatprep.subr.mxu0 0.0
      %2216 = vmatpush1.msra.mxu0 0.0
      %2217 = vmatprep.subr.mxu0 0.0
      %2218 = vmatpush1.msra.mxu0 0.0
      %2219 = vmatprep.subr.mxu0 0.0
      %2220 = vmatpush1.msra.mxu0 0.0
      %2221 = vmatprep.subr.mxu0 0.0
      %2222 = vmatpush1.msra.mxu0 0.0
      %2223 = vmatprep.subr.mxu0 0.0
      %2224 = vmatpush1.msra.mxu0 0.0
      %2225 = vmatprep.subr.mxu0 0.0
      %2226 = vmatpush1.msra.mxu0 0.0
      %2227 = vmatprep.subr.mxu0 0.0
      %2228 = vmatpush1.msra.mxu0 0.0
      %2229 = vmatprep.subr.mxu0 0.0
      %2230 = vmatpush1.msra.mxu0 0.0
      %2231 = vmatprep.subr.mxu0 0.0
      %2232 = vmatpush1.msra.mxu0 0.0
      %2233 = vmatprep.subr.mxu0 0.0
      %2234 = vmatpush1.msra.mxu0 0.0
      %2235 = vmatprep.subr.mxu0 0.0
      %2236 = vmatpush1.msra.mxu0 0.0
      %2237 = vmatprep.subr.mxu0 0.0
      %2238 = vmatpush1.msra.mxu0 0.0
      %2239 = vmatprep.mubr.f32.mxu0 0.0
      %2240 = vmatmul.mubr.f32.gmra.mrb[0].mxu0 %v2173
      %v2241 = vpop.f32.mrb[0].mxu0
      %v2242 = vadd.f32 0.0, %v2241
      %v2243 = vpop.f32.mrb[0].mxu0
      %2244 = vdwg.mxu0
      %v2245 = vsub.f32 %v1952, %v2023
      %v2246 = vsub.f32 %v1952, %v2096
      %v2247 = vsub.f32 %v1952, %v2169
      %v2248 = vsub.f32 %v1952, %v2242
      %v2250 = vsel %vm59, %v1944, 0
      %2252 = vmatprep.subr.mxu0 0.0
      %2253 = vmatpush1.msra.mxu0 %v2245
      %2254 = vmatprep.subr.mxu0 0.0
      %2255 = vmatpush1.msra.mxu0 0.0
      %2256 = vmatprep.subr.mxu0 0.0
      %2257 = vmatpush1.msra.mxu0 0.0
      %2258 = vmatprep.subr.mxu0 0.0
      %2259 = vmatpush1.msra.mxu0 0.0
      %2260 = vmatprep.subr.mxu0 0.0
      %2261 = vmatpush1.msra.mxu0 0.0
      %2262 = vmatprep.subr.mxu0 0.0
      %2263 = vmatpush1.msra.mxu0 0.0
      %2264 = vmatprep.subr.mxu0 0.0
      %2265 = vmatpush1.msra.mxu0 0.0
      %2266 = vmatprep.subr.mxu0 0.0
      %2267 = vmatpush1.msra.mxu0 0.0
      %2268 = vmatprep.subr.mxu0 0.0
      %2269 = vmatpush1.msra.mxu0 0.0
      %2270 = vmatprep.subr.mxu0 0.0
      %2271 = vmatpush1.msra.mxu0 0.0
      %2272 = vmatprep.subr.mxu0 0.0
      %2273 = vmatpush1.msra.mxu0 0.0
      %2274 = vmatprep.subr.mxu0 0.0
      %2275 = vmatpush1.msra.mxu0 0.0
      %2276 = vmatprep.subr.mxu0 0.0
      %2277 = vmatpush1.msra.mxu0 0.0
      %2278 = vmatprep.subr.mxu0 0.0
      %2279 = vmatpush1.msra.mxu0 0.0
      %2280 = vmatprep.subr.mxu0 0.0
      %2281 = vmatpush1.msra.mxu0 0.0
      %2282 = vmatprep.subr.mxu0 0.0
      %2283 = vmatpush1.msra.mxu0 0.0
      %2284 = vmatprep.subr.mxu0 0.0
      %2285 = vmatpush1.msra.mxu0 0.0
      %2286 = vmatprep.subr.mxu0 0.0
      %2287 = vmatpush1.msra.mxu0 0.0
      %2288 = vmatprep.subr.mxu0 0.0
      %2289 = vmatpush1.msra.mxu0 0.0
      %2290 = vmatprep.subr.mxu0 0.0
      %2291 = vmatpush1.msra.mxu0 0.0
      %2292 = vmatprep.subr.mxu0 0.0
      %2293 = vmatpush1.msra.mxu0 0.0
      %2294 = vmatprep.subr.mxu0 0.0
      %2295 = vmatpush1.msra.mxu0 0.0
      %2296 = vmatprep.subr.mxu0 0.0
      %2297 = vmatpush1.msra.mxu0 0.0
      %2298 = vmatprep.subr.mxu0 0.0
      %2299 = vmatpush1.msra.mxu0 0.0
      %2300 = vmatprep.subr.mxu0 0.0
      %2301 = vmatpush1.msra.mxu0 0.0
      %2302 = vmatprep.subr.mxu0 0.0
      %2303 = vmatpush1.msra.mxu0 0.0
      %2304 = vmatprep.subr.mxu0 0.0
      %2305 = vmatpush1.msra.mxu0 0.0
      %2306 = vmatprep.subr.mxu0 0.0
      %2307 = vmatpush1.msra.mxu0 0.0
      %2308 = vmatprep.subr.mxu0 0.0
      %2309 = vmatpush1.msra.mxu0 0.0
      %2310 = vmatprep.subr.mxu0 0.0
      %2311 = vmatpush1.msra.mxu0 0.0
      %2312 = vmatprep.subr.mxu0 0.0
      %2313 = vmatpush1.msra.mxu0 0.0
      %2314 = vmatprep.subr.mxu0 0.0
      %2315 = vmatpush1.msra.mxu0 0.0
      %2316 = vmatprep.mubr.f32.mxu0 0.0
      %2317 = vmatmul.mubr.f32.gmra.mrb[0].mxu0 %v2250
      %v2318 = vpop.f32.mrb[0].mxu0
      %v2319 = vadd.f32 0.0, %v2318
      %v2320 = vpop.f32.mrb[0].mxu0
      %2321 = vdwg.mxu0
      %v2323 = vsel %vm59, %v1945, 0
      %2325 = vmatprep.subr.mxu0 0.0
      %2326 = vmatpush1.msra.mxu0 %v2246
      %2327 = vmatprep.subr.mxu0 0.0
      %2328 = vmatpush1.msra.mxu0 0.0
      %2329 = vmatprep.subr.mxu0 0.0
      %2330 = vmatpush1.msra.mxu0 0.0
      %2331 = vmatprep.subr.mxu0 0.0
      %2332 = vmatpush1.msra.mxu0 0.0
      %2333 = vmatprep.subr.mxu0 0.0
      %2334 = vmatpush1.msra.mxu0 0.0
      %2335 = vmatprep.subr.mxu0 0.0
      %2336 = vmatpush1.msra.mxu0 0.0
      %2337 = vmatprep.subr.mxu0 0.0
      %2338 = vmatpush1.msra.mxu0 0.0
      %2339 = vmatprep.subr.mxu0 0.0
      %2340 = vmatpush1.msra.mxu0 0.0
      %2341 = vmatprep.subr.mxu0 0.0
      %2342 = vmatpush1.msra.mxu0 0.0
      %2343 = vmatprep.subr.mxu0 0.0
      %2344 = vmatpush1.msra.mxu0 0.0
      %2345 = vmatprep.subr.mxu0 0.0
      %2346 = vmatpush1.msra.mxu0 0.0
      %2347 = vmatprep.subr.mxu0 0.0
      %2348 = vmatpush1.msra.mxu0 0.0
      %2349 = vmatprep.subr.mxu0 0.0
      %2350 = vmatpush1.msra.mxu0 0.0
      %2351 = vmatprep.subr.mxu0 0.0
      %2352 = vmatpush1.msra.mxu0 0.0
      %2353 = vmatprep.subr.mxu0 0.0
      %2354 = vmatpush1.msra.mxu0 0.0
      %2355 = vmatprep.subr.mxu0 0.0
      %2356 = vmatpush1.msra.mxu0 0.0
      %2357 = vmatprep.subr.mxu0 0.0
      %2358 = vmatpush1.msra.mxu0 0.0
      %2359 = vmatprep.subr.mxu0 0.0
      %2360 = vmatpush1.msra.mxu0 0.0
      %2361 = vmatprep.subr.mxu0 0.0
      %2362 = vmatpush1.msra.mxu0 0.0
      %2363 = vmatprep.subr.mxu0 0.0
      %2364 = vmatpush1.msra.mxu0 0.0
      %2365 = vmatprep.subr.mxu0 0.0
      %2366 = vmatpush1.msra.mxu0 0.0
      %2367 = vmatprep.subr.mxu0 0.0
      %2368 = vmatpush1.msra.mxu0 0.0
      %2369 = vmatprep.subr.mxu0 0.0
      %2370 = vmatpush1.msra.mxu0 0.0
      %2371 = vmatprep.subr.mxu0 0.0
      %2372 = vmatpush1.msra.mxu0 0.0
      %2373 = vmatprep.subr.mxu0 0.0
      %2374 = vmatpush1.msra.mxu0 0.0
      %2375 = vmatprep.subr.mxu0 0.0
      %2376 = vmatpush1.msra.mxu0 0.0
      %2377 = vmatprep.subr.mxu0 0.0
      %2378 = vmatpush1.msra.mxu0 0.0
      %2379 = vmatprep.subr.mxu0 0.0
      %2380 = vmatpush1.msra.mxu0 0.0
      %2381 = vmatprep.subr.mxu0 0.0
      %2382 = vmatpush1.msra.mxu0 0.0
      %2383 = vmatprep.subr.mxu0 0.0
      %2384 = vmatpush1.msra.mxu0 0.0
      %2385 = vmatprep.subr.mxu0 0.0
      %2386 = vmatpush1.msra.mxu0 0.0
      %2387 = vmatprep.subr.mxu0 0.0
      %2388 = vmatpush1.msra.mxu0 0.0
      %2389 = vmatprep.mubr.f32.mxu0 0.0
      %2390 = vmatmul.mubr.f32.gmra.mrb[0].mxu0 %v2323
      %v2391 = vpop.f32.mrb[0].mxu0
      %v2392 = vadd.f32 0.0, %v2391
      %v2393 = vpop.f32.mrb[0].mxu0
      %2394 = vdwg.mxu0
      %v2396 = vsel %vm59, %v1946, 0
      %2398 = vmatprep.subr.mxu0 0.0
      %2399 = vmatpush1.msra.mxu0 %v2247
      %2400 = vmatprep.subr.mxu0 0.0
      %2401 = vmatpush1.msra.mxu0 0.0
      %2402 = vmatprep.subr.mxu0 0.0
      %2403 = vmatpush1.msra.mxu0 0.0
      %2404 = vmatprep.subr.mxu0 0.0
      %2405 = vmatpush1.msra.mxu0 0.0
      %2406 = vmatprep.subr.mxu0 0.0
      %2407 = vmatpush1.msra.mxu0 0.0
      %2408 = vmatprep.subr.mxu0 0.0
      %2409 = vmatpush1.msra.mxu0 0.0
      %2410 = vmatprep.subr.mxu0 0.0
      %2411 = vmatpush1.msra.mxu0 0.0
      %2412 = vmatprep.subr.mxu0 0.0
      %2413 = vmatpush1.msra.mxu0 0.0
      %2414 = vmatprep.subr.mxu0 0.0
      %2415 = vmatpush1.msra.mxu0 0.0
      %2416 = vmatprep.subr.mxu0 0.0
      %2417 = vmatpush1.msra.mxu0 0.0
      %2418 = vmatprep.subr.mxu0 0.0
      %2419 = vmatpush1.msra.mxu0 0.0
      %2420 = vmatprep.subr.mxu0 0.0
      %2421 = vmatpush1.msra.mxu0 0.0
      %2422 = vmatprep.subr.mxu0 0.0
      %2423 = vmatpush1.msra.mxu0 0.0
      %2424 = vmatprep.subr.mxu0 0.0
      %2425 = vmatpush1.msra.mxu0 0.0
      %2426 = vmatprep.subr.mxu0 0.0
      %2427 = vmatpush1.msra.mxu0 0.0
      %2428 = vmatprep.subr.mxu0 0.0
      %2429 = vmatpush1.msra.mxu0 0.0
      %2430 = vmatprep.subr.mxu0 0.0
      %2431 = vmatpush1.msra.mxu0 0.0
      %2432 = vmatprep.subr.mxu0 0.0
      %2433 = vmatpush1.msra.mxu0 0.0
      %2434 = vmatprep.subr.mxu0 0.0
      %2435 = vmatpush1.msra.mxu0 0.0
      %2436 = vmatprep.subr.mxu0 0.0
      %2437 = vmatpush1.msra.mxu0 0.0
      %2438 = vmatprep.subr.mxu0 0.0
      %2439 = vmatpush1.msra.mxu0 0.0
      %2440 = vmatprep.subr.mxu0 0.0
      %2441 = vmatpush1.msra.mxu0 0.0
      %2442 = vmatprep.subr.mxu0 0.0
      %2443 = vmatpush1.msra.mxu0 0.0
      %2444 = vmatprep.subr.mxu0 0.0
      %2445 = vmatpush1.msra.mxu0 0.0
      %2446 = vmatprep.subr.mxu0 0.0
      %2447 = vmatpush1.msra.mxu0 0.0
      %2448 = vmatprep.subr.mxu0 0.0
      %2449 = vmatpush1.msra.mxu0 0.0
      %2450 = vmatprep.subr.mxu0 0.0
      %2451 = vmatpush1.msra.mxu0 0.0
      %2452 = vmatprep.subr.mxu0 0.0
      %2453 = vmatpush1.msra.mxu0 0.0
      %2454 = vmatprep.subr.mxu0 0.0
      %2455 = vmatpush1.msra.mxu0 0.0
      %2456 = vmatprep.subr.mxu0 0.0
      %2457 = vmatpush1.msra.mxu0 0.0
      %2458 = vmatprep.subr.mxu0 0.0
      %2459 = vmatpush1.msra.mxu0 0.0
      %2460 = vmatprep.subr.mxu0 0.0
      %2461 = vmatpush1.msra.mxu0 0.0
      %2462 = vmatprep.mubr.f32.mxu0 0.0
      %2463 = vmatmul.mubr.f32.gmra.mrb[0].mxu0 %v2396
      %v2464 = vpop.f32.mrb[0].mxu0
      %v2465 = vadd.f32 0.0, %v2464
      %v2466 = vpop.f32.mrb[0].mxu0
      %2467 = vdwg.mxu0
      %v2469 = vsel %vm59, %v1947, 0
      %2471 = vmatprep.subr.mxu0 0.0
      %2472 = vmatpush1.msra.mxu0 %v2248
      %2473 = vmatprep.subr.mxu0 0.0
      %2474 = vmatpush1.msra.mxu0 0.0
      %2475 = vmatprep.subr.mxu0 0.0
      %2476 = vmatpush1.msra.mxu0 0.0
      %2477 = vmatprep.subr.mxu0 0.0
      %2478 = vmatpush1.msra.mxu0 0.0
      %2479 = vmatprep.subr.mxu0 0.0
      %2480 = vmatpush1.msra.mxu0 0.0
      %2481 = vmatprep.subr.mxu0 0.0
      %2482 = vmatpush1.msra.mxu0 0.0
      %2483 = vmatprep.subr.mxu0 0.0
      %2484 = vmatpush1.msra.mxu0 0.0
      %2485 = vmatprep.subr.mxu0 0.0
      %2486 = vmatpush1.msra.mxu0 0.0
      %2487 = vmatprep.subr.mxu0 0.0
      %2488 = vmatpush1.msra.mxu0 0.0
      %2489 = vmatprep.subr.mxu0 0.0
      %2490 = vmatpush1.msra.mxu0 0.0
      %2491 = vmatprep.subr.mxu0 0.0
      %2492 = vmatpush1.msra.mxu0 0.0
      %2493 = vmatprep.subr.mxu0 0.0
      %2494 = vmatpush1.msra.mxu0 0.0
      %2495 = vmatprep.subr.mxu0 0.0
      %2496 = vmatpush1.msra.mxu0 0.0
      %2497 = vmatprep.subr.mxu0 0.0
      %2498 = vmatpush1.msra.mxu0 0.0
      %2499 = vmatprep.subr.mxu0 0.0
      %2500 = vmatpush1.msra.mxu0 0.0
      %2501 = vmatprep.subr.mxu0 0.0
      %2502 = vmatpush1.msra.mxu0 0.0
      %2503 = vmatprep.subr.mxu0 0.0
      %2504 = vmatpush1.msra.mxu0 0.0
      %2505 = vmatprep.subr.mxu0 0.0
      %2506 = vmatpush1.msra.mxu0 0.0
      %2507 = vmatprep.subr.mxu0 0.0
      %2508 = vmatpush1.msra.mxu0 0.0
      %2509 = vmatprep.subr.mxu0 0.0
      %2510 = vmatpush1.msra.mxu0 0.0
      %2511 = vmatprep.subr.mxu0 0.0
      %2512 = vmatpush1.msra.mxu0 0.0
      %2513 = vmatprep.subr.mxu0 0.0
      %2514 = vmatpush1.msra.mxu0 0.0
      %2515 = vmatprep.subr.mxu0 0.0
      %2516 = vmatpush1.msra.mxu0 0.0
      %2517 = vmatprep.subr.mxu0 0.0
      %2518 = vmatpush1.msra.mxu0 0.0
      %2519 = vmatprep.subr.mxu0 0.0
      %2520 = vmatpush1.msra.mxu0 0.0
      %2521 = vmatprep.subr.mxu0 0.0
      %2522 = vmatpush1.msra.mxu0 0.0
      %2523 = vmatprep.subr.mxu0 0.0
      %2524 = vmatpush1.msra.mxu0 0.0
      %2525 = vmatprep.subr.mxu0 0.0
      %2526 = vmatpush1.msra.mxu0 0.0
      %2527 = vmatprep.subr.mxu0 0.0
      %2528 = vmatpush1.msra.mxu0 0.0
      %2529 = vmatprep.subr.mxu0 0.0
      %2530 = vmatpush1.msra.mxu0 0.0
      %2531 = vmatprep.subr.mxu0 0.0
      %2532 = vmatpush1.msra.mxu0 0.0
      %2533 = vmatprep.subr.mxu0 0.0
      %2534 = vmatpush1.msra.mxu0 0.0
      %2535 = vmatprep.mubr.f32.mxu0 0.0
      %2536 = vmatmul.mubr.f32.gmra.mrb[0].mxu0 %v2469
      %v2537 = vpop.f32.mrb[0].mxu0
      %v2538 = vadd.f32 0.0, %v2537
      %v2539 = vpop.f32.mrb[0].mxu0
      %2540 = vdwg.mxu0
      %v2541 = vmul.f32 %v2319, 0.5
      %v2542 = vmul.f32 %v2392, 0.5
      %v2543 = vmul.f32 %v2465, 0.5
      %v2544 = vmul.f32 %v2538, 0.5
      %v2546 = vsel %vm59, %v2245, 0
      %2548 = vmatprep.subr.mxu0 0.0
      %2549 = vmatpush1.msra.mxu0 %v1948
      %2550 = vmatprep.subr.mxu0 0.0
      %2551 = vmatpush1.msra.mxu0 0.0
      %2552 = vmatprep.subr.mxu0 0.0
      %2553 = vmatpush1.msra.mxu0 0.0
      %2554 = vmatprep.subr.mxu0 0.0
      %2555 = vmatpush1.msra.mxu0 0.0
      %2556 = vmatprep.subr.mxu0 0.0
      %2557 = vmatpush1.msra.mxu0 0.0
      %2558 = vmatprep.subr.mxu0 0.0
      %2559 = vmatpush1.msra.mxu0 0.0
      %2560 = vmatprep.subr.mxu0 0.0
      %2561 = vmatpush1.msra.mxu0 0.0
      %2562 = vmatprep.subr.mxu0 0.0
      %2563 = vmatpush1.msra.mxu0 0.0
      %2564 = vmatprep.subr.mxu0 0.0
      %2565 = vmatpush1.msra.mxu0 0.0
      %2566 = vmatprep.subr.mxu0 0.0
      %2567 = vmatpush1.msra.mxu0 0.0
      %2568 = vmatprep.subr.mxu0 0.0
      %2569 = vmatpush1.msra.mxu0 0.0
      %2570 = vmatprep.subr.mxu0 0.0
      %2571 = vmatpush1.msra.mxu0 0.0
      %2572 = vmatprep.subr.mxu0 0.0
      %2573 = vmatpush1.msra.mxu0 0.0
      %2574 = vmatprep.subr.mxu0 0.0
      %2575 = vmatpush1.msra.mxu0 0.0
      %2576 = vmatprep.subr.mxu0 0.0
      %2577 = vmatpush1.msra.mxu0 0.0
      %2578 = vmatprep.subr.mxu0 0.0
      %2579 = vmatpush1.msra.mxu0 0.0
      %2580 = vmatprep.subr.mxu0 0.0
      %2581 = vmatpush1.msra.mxu0 0.0
      %2582 = vmatprep.subr.mxu0 0.0
      %2583 = vmatpush1.msra.mxu0 0.0
      %2584 = vmatprep.subr.mxu0 0.0
      %2585 = vmatpush1.msra.mxu0 0.0
      %2586 = vmatprep.subr.mxu0 0.0
      %2587 = vmatpush1.msra.mxu0 0.0
      %2588 = vmatprep.subr.mxu0 0.0
      %2589 = vmatpush1.msra.mxu0 0.0
      %2590 = vmatprep.subr.mxu0 0.0
      %2591 = vmatpush1.msra.mxu0 0.0
      %2592 = vmatprep.subr.mxu0 0.0
      %2593 = vmatpush1.msra.mxu0 0.0
      %2594 = vmatprep.subr.mxu0 0.0
      %2595 = vmatpush1.msra.mxu0 0.0
      %2596 = vmatprep.subr.mxu0 0.0
      %2597 = vmatpush1.msra.mxu0 0.0
      %2598 = vmatprep.subr.mxu0 0.0
      %2599 = vmatpush1.msra.mxu0 0.0
      %2600 = vmatprep.subr.mxu0 0.0
      %2601 = vmatpush1.msra.mxu0 0.0
      %2602 = vmatprep.subr.mxu0 0.0
      %2603 = vmatpush1.msra.mxu0 0.0
      %2604 = vmatprep.subr.mxu0 0.0
      %2605 = vmatpush1.msra.mxu0 0.0
      %2606 = vmatprep.subr.mxu0 0.0
      %2607 = vmatpush1.msra.mxu0 0.0
      %2608 = vmatprep.subr.mxu0 0.0
      %2609 = vmatpush1.msra.mxu0 0.0
      %2610 = vmatprep.subr.mxu0 0.0
      %2611 = vmatpush1.msra.mxu0 0.0
      %2612 = vmatprep.mubr.f32.mxu0 0.0
      %2613 = vmatmul.mubr.f32.gmra.mrb[0].mxu0 %v2546
      %v2614 = vpop.f32.mrb[0].mxu0
      %v2615 = vadd.f32 0.0, %v2614
      %v2616 = vpop.f32.mrb[0].mxu0
      %2617 = vdwg.mxu0
      %v2619 = vsel %vm59, %v2246, 0
      %2621 = vmatprep.subr.mxu0 0.0
      %2622 = vmatpush1.msra.mxu0 %v1949
      %2623 = vmatprep.subr.mxu0 0.0
      %2624 = vmatpush1.msra.mxu0 0.0
      %2625 = vmatprep.subr.mxu0 0.0
      %2626 = vmatpush1.msra.mxu0 0.0
      %2627 = vmatprep.subr.mxu0 0.0
      %2628 = vmatpush1.msra.mxu0 0.0
      %2629 = vmatprep.subr.mxu0 0.0
      %2630 = vmatpush1.msra.mxu0 0.0
      %2631 = vmatprep.subr.mxu0 0.0
      %2632 = vmatpush1.msra.mxu0 0.0
      %2633 = vmatprep.subr.mxu0 0.0
      %2634 = vmatpush1.msra.mxu0 0.0
      %2635 = vmatprep.subr.mxu0 0.0
      %2636 = vmatpush1.msra.mxu0 0.0
      %2637 = vmatprep.subr.mxu0 0.0
      %2638 = vmatpush1.msra.mxu0 0.0
      %2639 = vmatprep.subr.mxu0 0.0
      %2640 = vmatpush1.msra.mxu0 0.0
      %2641 = vmatprep.subr.mxu0 0.0
      %2642 = vmatpush1.msra.mxu0 0.0
      %2643 = vmatprep.subr.mxu0 0.0
      %2644 = vmatpush1.msra.mxu0 0.0
      %2645 = vmatprep.subr.mxu0 0.0
      %2646 = vmatpush1.msra.mxu0 0.0
      %2647 = vmatprep.subr.mxu0 0.0
      %2648 = vmatpush1.msra.mxu0 0.0
      %2649 = vmatprep.subr.mxu0 0.0
      %2650 = vmatpush1.msra.mxu0 0.0
      %2651 = vmatprep.subr.mxu0 0.0
      %2652 = vmatpush1.msra.mxu0 0.0
      %2653 = vmatprep.subr.mxu0 0.0
      %2654 = vmatpush1.msra.mxu0 0.0
      %2655 = vmatprep.subr.mxu0 0.0
      %2656 = vmatpush1.msra.mxu0 0.0
      %2657 = vmatprep.subr.mxu0 0.0
      %2658 = vmatpush1.msra.mxu0 0.0
      %2659 = vmatprep.subr.mxu0 0.0
      %2660 = vmatpush1.msra.mxu0 0.0
      %2661 = vmatprep.subr.mxu0 0.0
      %2662 = vmatpush1.msra.mxu0 0.0
      %2663 = vmatprep.subr.mxu0 0.0
      %2664 = vmatpush1.msra.mxu0 0.0
      %2665 = vmatprep.subr.mxu0 0.0
      %2666 = vmatpush1.msra.mxu0 0.0
      %2667 = vmatprep.subr.mxu0 0.0
      %2668 = vmatpush1.msra.mxu0 0.0
      %2669 = vmatprep.subr.mxu0 0.0
      %2670 = vmatpush1.msra.mxu0 0.0
      %2671 = vmatprep.subr.mxu0 0.0
      %2672 = vmatpush1.msra.mxu0 0.0
      %2673 = vmatprep.subr.mxu0 0.0
      %2674 = vmatpush1.msra.mxu0 0.0
      %2675 = vmatprep.subr.mxu0 0.0
      %2676 = vmatpush1.msra.mxu0 0.0
      %2677 = vmatprep.subr.mxu0 0.0
      %2678 = vmatpush1.msra.mxu0 0.0
      %2679 = vmatprep.subr.mxu0 0.0
      %2680 = vmatpush1.msra.mxu0 0.0
      %2681 = vmatprep.subr.mxu0 0.0
      %2682 = vmatpush1.msra.mxu0 0.0
      %2683 = vmatprep.subr.mxu0 0.0
      %2684 = vmatpush1.msra.mxu0 0.0
      %2685 = vmatprep.mubr.f32.mxu0 0.0
      %2686 = vmatmul.mubr.f32.gmra.mrb[0].mxu0 %v2619
      %v2687 = vpop.f32.mrb[0].mxu0
      %v2688 = vadd.f32 0.0, %v2687
      %v2689 = vpop.f32.mrb[0].mxu0
      %2690 = vdwg.mxu0
      %v2692 = vsel %vm59, %v2247, 0
      %2694 = vmatprep.subr.mxu0 0.0
      %2695 = vmatpush1.msra.mxu0 %v1950
      %2696 = vmatprep.subr.mxu0 0.0
      %2697 = vmatpush1.msra.mxu0 0.0
      %2698 = vmatprep.subr.mxu0 0.0
      %2699 = vmatpush1.msra.mxu0 0.0
      %2700 = vmatprep.subr.mxu0 0.0
      %2701 = vmatpush1.msra.mxu0 0.0
      %2702 = vmatprep.subr.mxu0 0.0
      %2703 = vmatpush1.msra.mxu0 0.0
      %2704 = vmatprep.subr.mxu0 0.0
      %2705 = vmatpush1.msra.mxu0 0.0
      %2706 = vmatprep.subr.mxu0 0.0
      %2707 = vmatpush1.msra.mxu0 0.0
      %2708 = vmatprep.subr.mxu0 0.0
      %2709 = vmatpush1.msra.mxu0 0.0
      %2710 = vmatprep.subr.mxu0 0.0
      %2711 = vmatpush1.msra.mxu0 0.0
      %2712 = vmatprep.subr.mxu0 0.0
      %2713 = vmatpush1.msra.mxu0 0.0
      %2714 = vmatprep.subr.mxu0 0.0
      %2715 = vmatpush1.msra.mxu0 0.0
      %2716 = vmatprep.subr.mxu0 0.0
      %2717 = vmatpush1.msra.mxu0 0.0
      %2718 = vmatprep.subr.mxu0 0.0
      %2719 = vmatpush1.msra.mxu0 0.0
      %2720 = vmatprep.subr.mxu0 0.0
      %2721 = vmatpush1.msra.mxu0 0.0
      %2722 = vmatprep.subr.mxu0 0.0
      %2723 = vmatpush1.msra.mxu0 0.0
      %2724 = vmatprep.subr.mxu0 0.0
      %2725 = vmatpush1.msra.mxu0 0.0
      %2726 = vmatprep.subr.mxu0 0.0
      %2727 = vmatpush1.msra.mxu0 0.0
      %2728 = vmatprep.subr.mxu0 0.0
      %2729 = vmatpush1.msra.mxu0 0.0
      %2730 = vmatprep.subr.mxu0 0.0
      %2731 = vmatpush1.msra.mxu0 0.0
      %2732 = vmatprep.subr.mxu0 0.0
      %2733 = vmatpush1.msra.mxu0 0.0
      %2734 = vmatprep.subr.mxu0 0.0
      %2735 = vmatpush1.msra.mxu0 0.0
      %2736 = vmatprep.subr.mxu0 0.0
      %2737 = vmatpush1.msra.mxu0 0.0
      %2738 = vmatprep.subr.mxu0 0.0
      %2739 = vmatpush1.msra.mxu0 0.0
      %2740 = vmatprep.subr.mxu0 0.0
      %2741 = vmatpush1.msra.mxu0 0.0
      %2742 = vmatprep.subr.mxu0 0.0
      %2743 = vmatpush1.msra.mxu0 0.0
      %2744 = vmatprep.subr.mxu0 0.0
      %2745 = vmatpush1.msra.mxu0 0.0
      %2746 = vmatprep.subr.mxu0 0.0
      %2747 = vmatpush1.msra.mxu0 0.0
      %2748 = vmatprep.subr.mxu0 0.0
      %2749 = vmatpush1.msra.mxu0 0.0
      %2750 = vmatprep.subr.mxu0 0.0
      %2751 = vmatpush1.msra.mxu0 0.0
      %2752 = vmatprep.subr.mxu0 0.0
      %2753 = vmatpush1.msra.mxu0 0.0
      %2754 = vmatprep.subr.mxu0 0.0
      %2755 = vmatpush1.msra.mxu0 0.0
      %2756 = vmatprep.subr.mxu0 0.0
      %2757 = vmatpush1.msra.mxu0 0.0
      %2758 = vmatprep.mubr.f32.mxu0 0.0
      %2759 = vmatmul.mubr.f32.gmra.mrb[0].mxu0 %v2692
      %v2760 = vpop.f32.mrb[0].mxu0
      %v2761 = vadd.f32 0.0, %v2760
      %v2762 = vpop.f32.mrb[0].mxu0
      %2763 = vdwg.mxu0
      %v2765 = vsel %vm59, %v2248, 0
      %2767 = vmatprep.subr.mxu0 0.0
      %2768 = vmatpush1.msra.mxu0 %v1951
      %2769 = vmatprep.subr.mxu0 0.0
      %2770 = vmatpush1.msra.mxu0 0.0
      %2771 = vmatprep.subr.mxu0 0.0
      %2772 = vmatpush1.msra.mxu0 0.0
      %2773 = vmatprep.subr.mxu0 0.0
      %2774 = vmatpush1.msra.mxu0 0.0
      %2775 = vmatprep.subr.mxu0 0.0
      %2776 = vmatpush1.msra.mxu0 0.0
      %2777 = vmatprep.subr.mxu0 0.0
      %2778 = vmatpush1.msra.mxu0 0.0
      %2779 = vmatprep.subr.mxu0 0.0
      %2780 = vmatpush1.msra.mxu0 0.0
      %2781 = vmatprep.subr.mxu0 0.0
      %2782 = vmatpush1.msra.mxu0 0.0
      %2783 = vmatprep.subr.mxu0 0.0
      %2784 = vmatpush1.msra.mxu0 0.0
      %2785 = vmatprep.subr.mxu0 0.0
      %2786 = vmatpush1.msra.mxu0 0.0
      %2787 = vmatprep.subr.mxu0 0.0
      %2788 = vmatpush1.msra.mxu0 0.0
      %2789 = vmatprep.subr.mxu0 0.0
      %2790 = vmatpush1.msra.mxu0 0.0
      %2791 = vmatprep.subr.mxu0 0.0
      %2792 = vmatpush1.msra.mxu0 0.0
      %2793 = vmatprep.subr.mxu0 0.0
      %2794 = vmatpush1.msra.mxu0 0.0
      %2795 = vmatprep.subr.mxu0 0.0
      %2796 = vmatpush1.msra.mxu0 0.0
      %2797 = vmatprep.subr.mxu0 0.0
      %2798 = vmatpush1.msra.mxu0 0.0
      %2799 = vmatprep.subr.mxu0 0.0
      %2800 = vmatpush1.msra.mxu0 0.0
      %2801 = vmatprep.subr.mxu0 0.0
      %2802 = vmatpush1.msra.mxu0 0.0
      %2803 = vmatprep.subr.mxu0 0.0
      %2804 = vmatpush1.msra.mxu0 0.0
      %2805 = vmatprep.subr.mxu0 0.0
      %2806 = vmatpush1.msra.mxu0 0.0
      %2807 = vmatprep.subr.mxu0 0.0
      %2808 = vmatpush1.msra.mxu0 0.0
      %2809 = vmatprep.subr.mxu0 0.0
      %2810 = vmatpush1.msra.mxu0 0.0
      %2811 = vmatprep.subr.mxu0 0.0
      %2812 = vmatpush1.msra.mxu0 0.0
      %2813 = vmatprep.subr.mxu0 0.0
      %2814 = vmatpush1.msra.mxu0 0.0
      %2815 = vmatprep.subr.mxu0 0.0
      %2816 = vmatpush1.msra.mxu0 0.0
      %2817 = vmatprep.subr.mxu0 0.0
      %2818 = vmatpush1.msra.mxu0 0.0
      %2819 = vmatprep.subr.mxu0 0.0
      %2820 = vmatpush1.msra.mxu0 0.0
      %2821 = vmatprep.subr.mxu0 0.0
      %2822 = vmatpush1.msra.mxu0 0.0
      %2823 = vmatprep.subr.mxu0 0.0
      %2824 = vmatpush1.msra.mxu0 0.0
      %2825 = vmatprep.subr.mxu0 0.0
      %2826 = vmatpush1.msra.mxu0 0.0
      %2827 = vmatprep.subr.mxu0 0.0
      %2828 = vmatpush1.msra.mxu0 0.0
      %2829 = vmatprep.subr.mxu0 0.0
      %2830 = vmatpush1.msra.mxu0 0.0
      %2831 = vmatprep.mubr.f32.mxu0 0.0
      %2832 = vmatmul.mubr.f32.gmra.mrb[0].mxu0 %v2765
      %v2833 = vpop.f32.mrb[0].mxu0
      %v2834 = vadd.f32 0.0, %v2833
      %v2835 = vpop.f32.mrb[0].mxu0
      %2836 = vdwg.mxu0
      %v2837 = vmul.f32 %v2615, 0.5
      %v2838 = vmul.f32 %v2688, 0.5
      %v2839 = vmul.f32 %v2761, 0.5
      %v2840 = vmul.f32 %v2834, 0.5
    $region40: #{tpu_custom_call.1} parent=1 // loop_footer
      %s1943 = sadd.s32 1, %s1939
    $region41: #{tpu_custom_call.1} parent=1 // loop_footer_branch
      %1938 = sbr.rel target = $region37
    $region42: #{tpu_custom_call.1} parent=1 // loop_exit
      _
    loop: start=0, step=1, limit=8
    $region43: #{tpu_custom_call.1} parent=1 // loop_pre_header
      _
    $region44: #{tpu_custom_call.1} parent=1 // loop_header
      %s2842 = sphi 0, %s2846
      %p2843 = scmp.ge.s32.totalorder %s2842, 8
      %v2847 = vphi %v1944, %v3444
      %v2848 = vphi %v1945, %v3445
      %v2849 = vphi %v1946, %v3446
      %v2850 = vphi %v1947, %v3447
      %v2851 = vphi %v54, %v3740
      %v2852 = vphi %v54, %v3741
      %v2853 = vphi %v54, %v3742
      %v2854 = vphi %v54, %v3743
    $region45: #{tpu_custom_call.1} parent=1 // loop_header_branch
      %2845 = sbr.rel (%p2843) target = $region49
    $region46: #{tpu_custom_call.1} parent=1 // loop_body
      %v2855 = vmul.f32 %v54, 3.0
      %v2857 = vsel %vm59, %v2851, 0
      %2859 = vmatprep.subr.mxu0 0.0
      %2860 = vmatpush1.msra.mxu0 %v2847
      %2861 = vmatprep.subr.mxu0 0.0
      %2862 = vmatpush1.msra.mxu0 0.0
      %2863 = vmatprep.subr.mxu0 0.0
      %2864 = vmatpush1.msra.mxu0 0.0
      %2865 = vmatprep.subr.mxu0 0.0
      %2866 = vmatpush1.msra.mxu0 0.0
      %2867 = vmatprep.subr.mxu0 0.0
      %2868 = vmatpush1.msra.mxu0 0.0
      %2869 = vmatprep.subr.mxu0 0.0
      %2870 = vmatpush1.msra.mxu0 0.0
      %2871 = vmatprep.subr.mxu0 0.0
      %2872 = vmatpush1.msra.mxu0 0.0
      %2873 = vmatprep.subr.mxu0 0.0
      %2874 = vmatpush1.msra.mxu0 0.0
      %2875 = vmatprep.subr.mxu0 0.0
      %2876 = vmatpush1.msra.mxu0 0.0
      %2877 = vmatprep.subr.mxu0 0.0
      %2878 = vmatpush1.msra.mxu0 0.0
      %2879 = vmatprep.subr.mxu0 0.0
      %2880 = vmatpush1.msra.mxu0 0.0
      %2881 = vmatprep.subr.mxu0 0.0
      %2882 = vmatpush1.msra.mxu0 0.0
      %2883 = vmatprep.subr.mxu0 0.0
      %2884 = vmatpush1.msra.mxu0 0.0
      %2885 = vmatprep.subr.mxu0 0.0
      %2886 = vmatpush1.msra.mxu0 0.0
      %2887 = vmatprep.subr.mxu0 0.0
      %2888 = vmatpush1.msra.mxu0 0.0
      %2889 = vmatprep.subr.mxu0 0.0
      %2890 = vmatpush1.msra.mxu0 0.0
      %2891 = vmatprep.subr.mxu0 0.0
      %2892 = vmatpush1.msra.mxu0 0.0
      %2893 = vmatprep.subr.mxu0 0.0
      %2894 = vmatpush1.msra.mxu0 0.0
      %2895 = vmatprep.subr.mxu0 0.0
      %2896 = vmatpush1.msra.mxu0 0.0
      %2897 = vmatprep.subr.mxu0 0.0
      %2898 = vmatpush1.msra.mxu0 0.0
      %2899 = vmatprep.subr.mxu0 0.0
      %2900 = vmatpush1.msra.mxu0 0.0
      %2901 = vmatprep.subr.mxu0 0.0
      %2902 = vmatpush1.msra.mxu0 0.0
      %2903 = vmatprep.subr.mxu0 0.0
      %2904 = vmatpush1.msra.mxu0 0.0
      %2905 = vmatprep.subr.mxu0 0.0
      %2906 = vmatpush1.msra.mxu0 0.0
      %2907 = vmatprep.subr.mxu0 0.0
      %2908 = vmatpush1.msra.mxu0 0.0
      %2909 = vmatprep.subr.mxu0 0.0
      %2910 = vmatpush1.msra.mxu0 0.0
      %2911 = vmatprep.subr.mxu0 0.0
      %2912 = vmatpush1.msra.mxu0 0.0
      %2913 = vmatprep.subr.mxu0 0.0
      %2914 = vmatpush1.msra.mxu0 0.0
      %2915 = vmatprep.subr.mxu0 0.0
      %2916 = vmatpush1.msra.mxu0 0.0
      %2917 = vmatprep.subr.mxu0 0.0
      %2918 = vmatpush1.msra.mxu0 0.0
      %2919 = vmatprep.subr.mxu0 0.0
      %2920 = vmatpush1.msra.mxu0 0.0
      %2921 = vmatprep.subr.mxu0 0.0
      %2922 = vmatpush1.msra.mxu0 0.0
      %2923 = vmatprep.mubr.f32.mxu0 0.0
      %2924 = vmatmul.mubr.f32.gmra.mrb[0].mxu0 %v2857
      %v2925 = vpop.f32.mrb[0].mxu0
      %v2926 = vadd.f32 0.0, %v2925
      %v2927 = vpop.f32.mrb[0].mxu0
      %2928 = vdwg.mxu0
      %v2930 = vsel %vm59, %v2852, 0
      %2932 = vmatprep.subr.mxu0 0.0
      %2933 = vmatpush1.msra.mxu0 %v2848
      %2934 = vmatprep.subr.mxu0 0.0
      %2935 = vmatpush1.msra.mxu0 0.0
      %2936 = vmatprep.subr.mxu0 0.0
      %2937 = vmatpush1.msra.mxu0 0.0
      %2938 = vmatprep.subr.mxu0 0.0
      %2939 = vmatpush1.msra.mxu0 0.0
      %2940 = vmatprep.subr.mxu0 0.0
      %2941 = vmatpush1.msra.mxu0 0.0
      %2942 = vmatprep.subr.mxu0 0.0
      %2943 = vmatpush1.msra.mxu0 0.0
      %2944 = vmatprep.subr.mxu0 0.0
      %2945 = vmatpush1.msra.mxu0 0.0
      %2946 = vmatprep.subr.mxu0 0.0
      %2947 = vmatpush1.msra.mxu0 0.0
      %2948 = vmatprep.subr.mxu0 0.0
      %2949 = vmatpush1.msra.mxu0 0.0
      %2950 = vmatprep.subr.mxu0 0.0
      %2951 = vmatpush1.msra.mxu0 0.0
      %2952 = vmatprep.subr.mxu0 0.0
      %2953 = vmatpush1.msra.mxu0 0.0
      %2954 = vmatprep.subr.mxu0 0.0
      %2955 = vmatpush1.msra.mxu0 0.0
      %2956 = vmatprep.subr.mxu0 0.0
      %2957 = vmatpush1.msra.mxu0 0.0
      %2958 = vmatprep.subr.mxu0 0.0
      %2959 = vmatpush1.msra.mxu0 0.0
      %2960 = vmatprep.subr.mxu0 0.0
      %2961 = vmatpush1.msra.mxu0 0.0
      %2962 = vmatprep.subr.mxu0 0.0
      %2963 = vmatpush1.msra.mxu0 0.0
      %2964 = vmatprep.subr.mxu0 0.0
      %2965 = vmatpush1.msra.mxu0 0.0
      %2966 = vmatprep.subr.mxu0 0.0
      %2967 = vmatpush1.msra.mxu0 0.0
      %2968 = vmatprep.subr.mxu0 0.0
      %2969 = vmatpush1.msra.mxu0 0.0
      %2970 = vmatprep.subr.mxu0 0.0
      %2971 = vmatpush1.msra.mxu0 0.0
      %2972 = vmatprep.subr.mxu0 0.0
      %2973 = vmatpush1.msra.mxu0 0.0
      %2974 = vmatprep.subr.mxu0 0.0
      %2975 = vmatpush1.msra.mxu0 0.0
      %2976 = vmatprep.subr.mxu0 0.0
      %2977 = vmatpush1.msra.mxu0 0.0
      %2978 = vmatprep.subr.mxu0 0.0
      %2979 = vmatpush1.msra.mxu0 0.0
      %2980 = vmatprep.subr.mxu0 0.0
      %2981 = vmatpush1.msra.mxu0 0.0
      %2982 = vmatprep.subr.mxu0 0.0
      %2983 = vmatpush1.msra.mxu0 0.0
      %2984 = vmatprep.subr.mxu0 0.0
      %2985 = vmatpush1.msra.mxu0 0.0
      %2986 = vmatprep.subr.mxu0 0.0
      %2987 = vmatpush1.msra.mxu0 0.0
      %2988 = vmatprep.subr.mxu0 0.0
      %2989 = vmatpush1.msra.mxu0 0.0
      %2990 = vmatprep.subr.mxu0 0.0
      %2991 = vmatpush1.msra.mxu0 0.0
      %2992 = vmatprep.subr.mxu0 0.0
      %2993 = vmatpush1.msra.mxu0 0.0
      %2994 = vmatprep.subr.mxu0 0.0
      %2995 = vmatpush1.msra.mxu0 0.0
      %2996 = vmatprep.mubr.f32.mxu0 0.0
      %2997 = vmatmul.mubr.f32.gmra.mrb[0].mxu0 %v2930
      %v2998 = vpop.f32.mrb[0].mxu0
      %v2999 = vadd.f32 0.0, %v2998
      %v3000 = vpop.f32.mrb[0].mxu0
      %3001 = vdwg.mxu0
      %v3003 = vsel %vm59, %v2853, 0
      %3005 = vmatprep.subr.mxu0 0.0
      %3006 = vmatpush1.msra.mxu0 %v2849
      %3007 = vmatprep.subr.mxu0 0.0
      %3008 = vmatpush1.msra.mxu0 0.0
      %3009 = vmatprep.subr.mxu0 0.0
      %3010 = vmatpush1.msra.mxu0 0.0
      %3011 = vmatprep.subr.mxu0 0.0
      %3012 = vmatpush1.msra.mxu0 0.0
      %3013 = vmatprep.subr.mxu0 0.0
      %3014 = vmatpush1.msra.mxu0 0.0
      %3015 = vmatprep.subr.mxu0 0.0
      %3016 = vmatpush1.msra.mxu0 0.0
      %3017 = vmatprep.subr.mxu0 0.0
      %3018 = vmatpush1.msra.mxu0 0.0
      %3019 = vmatprep.subr.mxu0 0.0
      %3020 = vmatpush1.msra.mxu0 0.0
      %3021 = vmatprep.subr.mxu0 0.0
      %3022 = vmatpush1.msra.mxu0 0.0
      %3023 = vmatprep.subr.mxu0 0.0
      %3024 = vmatpush1.msra.mxu0 0.0
      %3025 = vmatprep.subr.mxu0 0.0
      %3026 = vmatpush1.msra.mxu0 0.0
      %3027 = vmatprep.subr.mxu0 0.0
      %3028 = vmatpush1.msra.mxu0 0.0
      %3029 = vmatprep.subr.mxu0 0.0
      %3030 = vmatpush1.msra.mxu0 0.0
      %3031 = vmatprep.subr.mxu0 0.0
      %3032 = vmatpush1.msra.mxu0 0.0
      %3033 = vmatprep.subr.mxu0 0.0
      %3034 = vmatpush1.msra.mxu0 0.0
      %3035 = vmatprep.subr.mxu0 0.0
      %3036 = vmatpush1.msra.mxu0 0.0
      %3037 = vmatprep.subr.mxu0 0.0
      %3038 = vmatpush1.msra.mxu0 0.0
      %3039 = vmatprep.subr.mxu0 0.0
      %3040 = vmatpush1.msra.mxu0 0.0
      %3041 = vmatprep.subr.mxu0 0.0
      %3042 = vmatpush1.msra.mxu0 0.0
      %3043 = vmatprep.subr.mxu0 0.0
      %3044 = vmatpush1.msra.mxu0 0.0
      %3045 = vmatprep.subr.mxu0 0.0
      %3046 = vmatpush1.msra.mxu0 0.0
      %3047 = vmatprep.subr.mxu0 0.0
      %3048 = vmatpush1.msra.mxu0 0.0
      %3049 = vmatprep.subr.mxu0 0.0
      %3050 = vmatpush1.msra.mxu0 0.0
      %3051 = vmatprep.subr.mxu0 0.0
      %3052 = vmatpush1.msra.mxu0 0.0
      %3053 = vmatprep.subr.mxu0 0.0
      %3054 = vmatpush1.msra.mxu0 0.0
      %3055 = vmatprep.subr.mxu0 0.0
      %3056 = vmatpush1.msra.mxu0 0.0
      %3057 = vmatprep.subr.mxu0 0.0
      %3058 = vmatpush1.msra.mxu0 0.0
      %3059 = vmatprep.subr.mxu0 0.0
      %3060 = vmatpush1.msra.mxu0 0.0
      %3061 = vmatprep.subr.mxu0 0.0
      %3062 = vmatpush1.msra.mxu0 0.0
      %3063 = vmatprep.subr.mxu0 0.0
      %3064 = vmatpush1.msra.mxu0 0.0
      %3065 = vmatprep.subr.mxu0 0.0
      %3066 = vmatpush1.msra.mxu0 0.0
      %3067 = vmatprep.subr.mxu0 0.0
      %3068 = vmatpush1.msra.mxu0 0.0
      %3069 = vmatprep.mubr.f32.mxu0 0.0
      %3070 = vmatmul.mubr.f32.gmra.mrb[0].mxu0 %v3003
      %v3071 = vpop.f32.mrb[0].mxu0
      %v3072 = vadd.f32 0.0, %v3071
      %v3073 = vpop.f32.mrb[0].mxu0
      %3074 = vdwg.mxu0
      %v3076 = vsel %vm59, %v2854, 0
      %3078 = vmatprep.subr.mxu0 0.0
      %3079 = vmatpush1.msra.mxu0 %v2850
      %3080 = vmatprep.subr.mxu0 0.0
      %3081 = vmatpush1.msra.mxu0 0.0
      %3082 = vmatprep.subr.mxu0 0.0
      %3083 = vmatpush1.msra.mxu0 0.0
      %3084 = vmatprep.subr.mxu0 0.0
      %3085 = vmatpush1.msra.mxu0 0.0
      %3086 = vmatprep.subr.mxu0 0.0
      %3087 = vmatpush1.msra.mxu0 0.0
      %3088 = vmatprep.subr.mxu0 0.0
      %3089 = vmatpush1.msra.mxu0 0.0
      %3090 = vmatprep.subr.mxu0 0.0
      %3091 = vmatpush1.msra.mxu0 0.0
      %3092 = vmatprep.subr.mxu0 0.0
      %3093 = vmatpush1.msra.mxu0 0.0
      %3094 = vmatprep.subr.mxu0 0.0
      %3095 = vmatpush1.msra.mxu0 0.0
      %3096 = vmatprep.subr.mxu0 0.0
      %3097 = vmatpush1.msra.mxu0 0.0
      %3098 = vmatprep.subr.mxu0 0.0
      %3099 = vmatpush1.msra.mxu0 0.0
      %3100 = vmatprep.subr.mxu0 0.0
      %3101 = vmatpush1.msra.mxu0 0.0
      %3102 = vmatprep.subr.mxu0 0.0
      %3103 = vmatpush1.msra.mxu0 0.0
      %3104 = vmatprep.subr.mxu0 0.0
      %3105 = vmatpush1.msra.mxu0 0.0
      %3106 = vmatprep.subr.mxu0 0.0
      %3107 = vmatpush1.msra.mxu0 0.0
      %3108 = vmatprep.subr.mxu0 0.0
      %3109 = vmatpush1.msra.mxu0 0.0
      %3110 = vmatprep.subr.mxu0 0.0
      %3111 = vmatpush1.msra.mxu0 0.0
      %3112 = vmatprep.subr.mxu0 0.0
      %3113 = vmatpush1.msra.mxu0 0.0
      %3114 = vmatprep.subr.mxu0 0.0
      %3115 = vmatpush1.msra.mxu0 0.0
      %3116 = vmatprep.subr.mxu0 0.0
      %3117 = vmatpush1.msra.mxu0 0.0
      %3118 = vmatprep.subr.mxu0 0.0
      %3119 = vmatpush1.msra.mxu0 0.0
      %3120 = vmatprep.subr.mxu0 0.0
      %3121 = vmatpush1.msra.mxu0 0.0
      %3122 = vmatprep.subr.mxu0 0.0
      %3123 = vmatpush1.msra.mxu0 0.0
      %3124 = vmatprep.subr.mxu0 0.0
      %3125 = vmatpush1.msra.mxu0 0.0
      %3126 = vmatprep.subr.mxu0 0.0
      %3127 = vmatpush1.msra.mxu0 0.0
      %3128 = vmatprep.subr.mxu0 0.0
      %3129 = vmatpush1.msra.mxu0 0.0
      %3130 = vmatprep.subr.mxu0 0.0
      %3131 = vmatpush1.msra.mxu0 0.0
      %3132 = vmatprep.subr.mxu0 0.0
      %3133 = vmatpush1.msra.mxu0 0.0
      %3134 = vmatprep.subr.mxu0 0.0
      %3135 = vmatpush1.msra.mxu0 0.0
      %3136 = vmatprep.subr.mxu0 0.0
      %3137 = vmatpush1.msra.mxu0 0.0
      %3138 = vmatprep.subr.mxu0 0.0
      %3139 = vmatpush1.msra.mxu0 0.0
      %3140 = vmatprep.subr.mxu0 0.0
      %3141 = vmatpush1.msra.mxu0 0.0
      %3142 = vmatprep.mubr.f32.mxu0 0.0
      %3143 = vmatmul.mubr.f32.gmra.mrb[0].mxu0 %v3076
      %v3144 = vpop.f32.mrb[0].mxu0
      %v3145 = vadd.f32 0.0, %v3144
      %v3146 = vpop.f32.mrb[0].mxu0
      %3147 = vdwg.mxu0
      %v3148 = vsub.f32 %v2855, %v2926
      %v3149 = vsub.f32 %v2855, %v2999
      %v3150 = vsub.f32 %v2855, %v3072
      %v3151 = vsub.f32 %v2855, %v3145
      %v3153 = vsel %vm59, %v2847, 0
      %3155 = vmatprep.subr.mxu0 0.0
      %3156 = vmatpush1.msra.mxu0 %v3148
      %3157 = vmatprep.subr.mxu0 0.0
      %3158 = vmatpush1.msra.mxu0 0.0
      %3159 = vmatprep.subr.mxu0 0.0
      %3160 = vmatpush1.msra.mxu0 0.0
      %3161 = vmatprep.subr.mxu0 0.0
      %3162 = vmatpush1.msra.mxu0 0.0
      %3163 = vmatprep.subr.mxu0 0.0
      %3164 = vmatpush1.msra.mxu0 0.0
      %3165 = vmatprep.subr.mxu0 0.0
      %3166 = vmatpush1.msra.mxu0 0.0
      %3167 = vmatprep.subr.mxu0 0.0
      %3168 = vmatpush1.msra.mxu0 0.0
      %3169 = vmatprep.subr.mxu0 0.0
      %3170 = vmatpush1.msra.mxu0 0.0
      %3171 = vmatprep.subr.mxu0 0.0
      %3172 = vmatpush1.msra.mxu0 0.0
      %3173 = vmatprep.subr.mxu0 0.0
      %3174 = vmatpush1.msra.mxu0 0.0
      %3175 = vmatprep.subr.mxu0 0.0
      %3176 = vmatpush1.msra.mxu0 0.0
      %3177 = vmatprep.subr.mxu0 0.0
      %3178 = vmatpush1.msra.mxu0 0.0
      %3179 = vmatprep.subr.mxu0 0.0
      %3180 = vmatpush1.msra.mxu0 0.0
      %3181 = vmatprep.subr.mxu0 0.0
      %3182 = vmatpush1.msra.mxu0 0.0
      %3183 = vmatprep.subr.mxu0 0.0
      %3184 = vmatpush1.msra.mxu0 0.0
      %3185 = vmatprep.subr.mxu0 0.0
      %3186 = vmatpush1.msra.mxu0 0.0
      %3187 = vmatprep.subr.mxu0 0.0
      %3188 = vmatpush1.msra.mxu0 0.0
      %3189 = vmatprep.subr.mxu0 0.0
      %3190 = vmatpush1.msra.mxu0 0.0
      %3191 = vmatprep.subr.mxu0 0.0
      %3192 = vmatpush1.msra.mxu0 0.0
      %3193 = vmatprep.subr.mxu0 0.0
      %3194 = vmatpush1.msra.mxu0 0.0
      %3195 = vmatprep.subr.mxu0 0.0
      %3196 = vmatpush1.msra.mxu0 0.0
      %3197 = vmatprep.subr.mxu0 0.0
      %3198 = vmatpush1.msra.mxu0 0.0
      %3199 = vmatprep.subr.mxu0 0.0
      %3200 = vmatpush1.msra.mxu0 0.0
      %3201 = vmatprep.subr.mxu0 0.0
      %3202 = vmatpush1.msra.mxu0 0.0
      %3203 = vmatprep.subr.mxu0 0.0
      %3204 = vmatpush1.msra.mxu0 0.0
      %3205 = vmatprep.subr.mxu0 0.0
      %3206 = vmatpush1.msra.mxu0 0.0
      %3207 = vmatprep.subr.mxu0 0.0
      %3208 = vmatpush1.msra.mxu0 0.0
      %3209 = vmatprep.subr.mxu0 0.0
      %3210 = vmatpush1.msra.mxu0 0.0
      %3211 = vmatprep.subr.mxu0 0.0
      %3212 = vmatpush1.msra.mxu0 0.0
      %3213 = vmatprep.subr.mxu0 0.0
      %3214 = vmatpush1.msra.mxu0 0.0
      %3215 = vmatprep.subr.mxu0 0.0
      %3216 = vmatpush1.msra.mxu0 0.0
      %3217 = vmatprep.subr.mxu0 0.0
      %3218 = vmatpush1.msra.mxu0 0.0
      %3219 = vmatprep.mubr.f32.mxu0 0.0
      %3220 = vmatmul.mubr.f32.gmra.mrb[0].mxu0 %v3153
      %v3221 = vpop.f32.mrb[0].mxu0
      %v3222 = vadd.f32 0.0, %v3221
      %v3223 = vpop.f32.mrb[0].mxu0
      %3224 = vdwg.mxu0
      %v3226 = vsel %vm59, %v2848, 0
      %3228 = vmatprep.subr.mxu0 0.0
      %3229 = vmatpush1.msra.mxu0 %v3149
      %3230 = vmatprep.subr.mxu0 0.0
      %3231 = vmatpush1.msra.mxu0 0.0
      %3232 = vmatprep.subr.mxu0 0.0
      %3233 = vmatpush1.msra.mxu0 0.0
      %3234 = vmatprep.subr.mxu0 0.0
      %3235 = vmatpush1.msra.mxu0 0.0
      %3236 = vmatprep.subr.mxu0 0.0
      %3237 = vmatpush1.msra.mxu0 0.0
      %3238 = vmatprep.subr.mxu0 0.0
      %3239 = vmatpush1.msra.mxu0 0.0
      %3240 = vmatprep.subr.mxu0 0.0
      %3241 = vmatpush1.msra.mxu0 0.0
      %3242 = vmatprep.subr.mxu0 0.0
      %3243 = vmatpush1.msra.mxu0 0.0
      %3244 = vmatprep.subr.mxu0 0.0
      %3245 = vmatpush1.msra.mxu0 0.0
      %3246 = vmatprep.subr.mxu0 0.0
      %3247 = vmatpush1.msra.mxu0 0.0
      %3248 = vmatprep.subr.mxu0 0.0
      %3249 = vmatpush1.msra.mxu0 0.0
      %3250 = vmatprep.subr.mxu0 0.0
      %3251 = vmatpush1.msra.mxu0 0.0
      %3252 = vmatprep.subr.mxu0 0.0
      %3253 = vmatpush1.msra.mxu0 0.0
      %3254 = vmatprep.subr.mxu0 0.0
      %3255 = vmatpush1.msra.mxu0 0.0
      %3256 = vmatprep.subr.mxu0 0.0
      %3257 = vmatpush1.msra.mxu0 0.0
      %3258 = vmatprep.subr.mxu0 0.0
      %3259 = vmatpush1.msra.mxu0 0.0
      %3260 = vmatprep.subr.mxu0 0.0
      %3261 = vmatpush1.msra.mxu0 0.0
      %3262 = vmatprep.subr.mxu0 0.0
      %3263 = vmatpush1.msra.mxu0 0.0
      %3264 = vmatprep.subr.mxu0 0.0
      %3265 = vmatpush1.msra.mxu0 0.0
      %3266 = vmatprep.subr.mxu0 0.0
      %3267 = vmatpush1.msra.mxu0 0.0
      %3268 = vmatprep.subr.mxu0 0.0
      %3269 = vmatpush1.msra.mxu0 0.0
      %3270 = vmatprep.subr.mxu0 0.0
      %3271 = vmatpush1.msra.mxu0 0.0
      %3272 = vmatprep.subr.mxu0 0.0
      %3273 = vmatpush1.msra.mxu0 0.0
      %3274 = vmatprep.subr.mxu0 0.0
      %3275 = vmatpush1.msra.mxu0 0.0
      %3276 = vmatprep.subr.mxu0 0.0
      %3277 = vmatpush1.msra.mxu0 0.0
      %3278 = vmatprep.subr.mxu0 0.0
      %3279 = vmatpush1.msra.mxu0 0.0
      %3280 = vmatprep.subr.mxu0 0.0
      %3281 = vmatpush1.msra.mxu0 0.0
      %3282 = vmatprep.subr.mxu0 0.0
      %3283 = vmatpush1.msra.mxu0 0.0
      %3284 = vmatprep.subr.mxu0 0.0
      %3285 = vmatpush1.msra.mxu0 0.0
      %3286 = vmatprep.subr.mxu0 0.0
      %3287 = vmatpush1.msra.mxu0 0.0
      %3288 = vmatprep.subr.mxu0 0.0
      %3289 = vmatpush1.msra.mxu0 0.0
      %3290 = vmatprep.subr.mxu0 0.0
      %3291 = vmatpush1.msra.mxu0 0.0
      %3292 = vmatprep.mubr.f32.mxu0 0.0
      %3293 = vmatmul.mubr.f32.gmra.mrb[0].mxu0 %v3226
      %v3294 = vpop.f32.mrb[0].mxu0
      %v3295 = vadd.f32 0.0, %v3294
      %v3296 = vpop.f32.mrb[0].mxu0
      %3297 = vdwg.mxu0
      %v3299 = vsel %vm59, %v2849, 0
      %3301 = vmatprep.subr.mxu0 0.0
      %3302 = vmatpush1.msra.mxu0 %v3150
      %3303 = vmatprep.subr.mxu0 0.0
      %3304 = vmatpush1.msra.mxu0 0.0
      %3305 = vmatprep.subr.mxu0 0.0
      %3306 = vmatpush1.msra.mxu0 0.0
      %3307 = vmatprep.subr.mxu0 0.0
      %3308 = vmatpush1.msra.mxu0 0.0
      %3309 = vmatprep.subr.mxu0 0.0
      %3310 = vmatpush1.msra.mxu0 0.0
      %3311 = vmatprep.subr.mxu0 0.0
      %3312 = vmatpush1.msra.mxu0 0.0
      %3313 = vmatprep.subr.mxu0 0.0
      %3314 = vmatpush1.msra.mxu0 0.0
      %3315 = vmatprep.subr.mxu0 0.0
      %3316 = vmatpush1.msra.mxu0 0.0
      %3317 = vmatprep.subr.mxu0 0.0
      %3318 = vmatpush1.msra.mxu0 0.0
      %3319 = vmatprep.subr.mxu0 0.0
      %3320 = vmatpush1.msra.mxu0 0.0
      %3321 = vmatprep.subr.mxu0 0.0
      %3322 = vmatpush1.msra.mxu0 0.0
      %3323 = vmatprep.subr.mxu0 0.0
      %3324 = vmatpush1.msra.mxu0 0.0
      %3325 = vmatprep.subr.mxu0 0.0
      %3326 = vmatpush1.msra.mxu0 0.0
      %3327 = vmatprep.subr.mxu0 0.0
      %3328 = vmatpush1.msra.mxu0 0.0
      %3329 = vmatprep.subr.mxu0 0.0
      %3330 = vmatpush1.msra.mxu0 0.0
      %3331 = vmatprep.subr.mxu0 0.0
      %3332 = vmatpush1.msra.mxu0 0.0
      %3333 = vmatprep.subr.mxu0 0.0
      %3334 = vmatpush1.msra.mxu0 0.0
      %3335 = vmatprep.subr.mxu0 0.0
      %3336 = vmatpush1.msra.mxu0 0.0
      %3337 = vmatprep.subr.mxu0 0.0
      %3338 = vmatpush1.msra.mxu0 0.0
      %3339 = vmatprep.subr.mxu0 0.0
      %3340 = vmatpush1.msra.mxu0 0.0
      %3341 = vmatprep.subr.mxu0 0.0
      %3342 = vmatpush1.msra.mxu0 0.0
      %3343 = vmatprep.subr.mxu0 0.0
      %3344 = vmatpush1.msra.mxu0 0.0
      %3345 = vmatprep.subr.mxu0 0.0
      %3346 = vmatpush1.msra.mxu0 0.0
      %3347 = vmatprep.subr.mxu0 0.0
      %3348 = vmatpush1.msra.mxu0 0.0
      %3349 = vmatprep.subr.mxu0 0.0
      %3350 = vmatpush1.msra.mxu0 0.0
      %3351 = vmatprep.subr.mxu0 0.0
      %3352 = vmatpush1.msra.mxu0 0.0
      %3353 = vmatprep.subr.mxu0 0.0
      %3354 = vmatpush1.msra.mxu0 0.0
      %3355 = vmatprep.subr.mxu0 0.0
      %3356 = vmatpush1.msra.mxu0 0.0
      %3357 = vmatprep.subr.mxu0 0.0
      %3358 = vmatpush1.msra.mxu0 0.0
      %3359 = vmatprep.subr.mxu0 0.0
      %3360 = vmatpush1.msra.mxu0 0.0
      %3361 = vmatprep.subr.mxu0 0.0
      %3362 = vmatpush1.msra.mxu0 0.0
      %3363 = vmatprep.subr.mxu0 0.0
      %3364 = vmatpush1.msra.mxu0 0.0
      %3365 = vmatprep.mubr.f32.mxu0 0.0
      %3366 = vmatmul.mubr.f32.gmra.mrb[0].mxu0 %v3299
      %v3367 = vpop.f32.mrb[0].mxu0
      %v3368 = vadd.f32 0.0, %v3367
      %v3369 = vpop.f32.mrb[0].mxu0
      %3370 = vdwg.mxu0
      %v3372 = vsel %vm59, %v2850, 0
      %3374 = vmatprep.subr.mxu0 0.0
      %3375 = vmatpush1.msra.mxu0 %v3151
      %3376 = vmatprep.subr.mxu0 0.0
      %3377 = vmatpush1.msra.mxu0 0.0
      %3378 = vmatprep.subr.mxu0 0.0
      %3379 = vmatpush1.msra.mxu0 0.0
      %3380 = vmatprep.subr.mxu0 0.0
      %3381 = vmatpush1.msra.mxu0 0.0
      %3382 = vmatprep.subr.mxu0 0.0
      %3383 = vmatpush1.msra.mxu0 0.0
      %3384 = vmatprep.subr.mxu0 0.0
      %3385 = vmatpush1.msra.mxu0 0.0
      %3386 = vmatprep.subr.mxu0 0.0
      %3387 = vmatpush1.msra.mxu0 0.0
      %3388 = vmatprep.subr.mxu0 0.0
      %3389 = vmatpush1.msra.mxu0 0.0
      %3390 = vmatprep.subr.mxu0 0.0
      %3391 = vmatpush1.msra.mxu0 0.0
      %3392 = vmatprep.subr.mxu0 0.0
      %3393 = vmatpush1.msra.mxu0 0.0
      %3394 = vmatprep.subr.mxu0 0.0
      %3395 = vmatpush1.msra.mxu0 0.0
      %3396 = vmatprep.subr.mxu0 0.0
      %3397 = vmatpush1.msra.mxu0 0.0
      %3398 = vmatprep.subr.mxu0 0.0
      %3399 = vmatpush1.msra.mxu0 0.0
      %3400 = vmatprep.subr.mxu0 0.0
      %3401 = vmatpush1.msra.mxu0 0.0
      %3402 = vmatprep.subr.mxu0 0.0
      %3403 = vmatpush1.msra.mxu0 0.0
      %3404 = vmatprep.subr.mxu0 0.0
      %3405 = vmatpush1.msra.mxu0 0.0
      %3406 = vmatprep.subr.mxu0 0.0
      %3407 = vmatpush1.msra.mxu0 0.0
      %3408 = vmatprep.subr.mxu0 0.0
      %3409 = vmatpush1.msra.mxu0 0.0
      %3410 = vmatprep.subr.mxu0 0.0
      %3411 = vmatpush1.msra.mxu0 0.0
      %3412 = vmatprep.subr.mxu0 0.0
      %3413 = vmatpush1.msra.mxu0 0.0
      %3414 = vmatprep.subr.mxu0 0.0
      %3415 = vmatpush1.msra.mxu0 0.0
      %3416 = vmatprep.subr.mxu0 0.0
      %3417 = vmatpush1.msra.mxu0 0.0
      %3418 = vmatprep.subr.mxu0 0.0
      %3419 = vmatpush1.msra.mxu0 0.0
      %3420 = vmatprep.subr.mxu0 0.0
      %3421 = vmatpush1.msra.mxu0 0.0
      %3422 = vmatprep.subr.mxu0 0.0
      %3423 = vmatpush1.msra.mxu0 0.0
      %3424 = vmatprep.subr.mxu0 0.0
      %3425 = vmatpush1.msra.mxu0 0.0
      %3426 = vmatprep.subr.mxu0 0.0
      %3427 = vmatpush1.msra.mxu0 0.0
      %3428 = vmatprep.subr.mxu0 0.0
      %3429 = vmatpush1.msra.mxu0 0.0
      %3430 = vmatprep.subr.mxu0 0.0
      %3431 = vmatpush1.msra.mxu0 0.0
      %3432 = vmatprep.subr.mxu0 0.0
      %3433 = vmatpush1.msra.mxu0 0.0
      %3434 = vmatprep.subr.mxu0 0.0
      %3435 = vmatpush1.msra.mxu0 0.0
      %3436 = vmatprep.subr.mxu0 0.0
      %3437 = vmatpush1.msra.mxu0 0.0
      %3438 = vmatprep.mubr.f32.mxu0 0.0
      %3439 = vmatmul.mubr.f32.gmra.mrb[0].mxu0 %v3372
      %v3440 = vpop.f32.mrb[0].mxu0
      %v3441 = vadd.f32 0.0, %v3440
      %v3442 = vpop.f32.mrb[0].mxu0
      %3443 = vdwg.mxu0
      %v3444 = vmul.f32 %v3222, 0.5
      %v3445 = vmul.f32 %v3295, 0.5
      %v3446 = vmul.f32 %v3368, 0.5
      %v3447 = vmul.f32 %v3441, 0.5
      %v3449 = vsel %vm59, %v3148, 0
      %3451 = vmatprep.subr.mxu0 0.0
      %3452 = vmatpush1.msra.mxu0 %v2851
      %3453 = vmatprep.subr.mxu0 0.0
      %3454 = vmatpush1.msra.mxu0 0.0
      %3455 = vmatprep.subr.mxu0 0.0
      %3456 = vmatpush1.msra.mxu0 0.0
      %3457 = vmatprep.subr.mxu0 0.0
      %3458 = vmatpush1.msra.mxu0 0.0
      %3459 = vmatprep.subr.mxu0 0.0
      %3460 = vmatpush1.msra.mxu0 0.0
      %3461 = vmatprep.subr.mxu0 0.0
      %3462 = vmatpush1.msra.mxu0 0.0
      %3463 = vmatprep.subr.mxu0 0.0
      %3464 = vmatpush1.msra.mxu0 0.0
      %3465 = vmatprep.subr.mxu0 0.0
      %3466 = vmatpush1.msra.mxu0 0.0
      %3467 = vmatprep.subr.mxu0 0.0
      %3468 = vmatpush1.msra.mxu0 0.0
      %3469 = vmatprep.subr.mxu0 0.0
      %3470 = vmatpush1.msra.mxu0 0.0
      %3471 = vmatprep.subr.mxu0 0.0
      %3472 = vmatpush1.msra.mxu0 0.0
      %3473 = vmatprep.subr.mxu0 0.0
      %3474 = vmatpush1.msra.mxu0 0.0
      %3475 = vmatprep.subr.mxu0 0.0
      %3476 = vmatpush1.msra.mxu0 0.0
      %3477 = vmatprep.subr.mxu0 0.0
      %3478 = vmatpush1.msra.mxu0 0.0
      %3479 = vmatprep.subr.mxu0 0.0
      %3480 = vmatpush1.msra.mxu0 0.0
      %3481 = vmatprep.subr.mxu0 0.0
      %3482 = vmatpush1.msra.mxu0 0.0
      %3483 = vmatprep.subr.mxu0 0.0
      %3484 = vmatpush1.msra.mxu0 0.0
      %3485 = vmatprep.subr.mxu0 0.0
      %3486 = vmatpush1.msra.mxu0 0.0
      %3487 = vmatprep.subr.mxu0 0.0
      %3488 = vmatpush1.msra.mxu0 0.0
      %3489 = vmatprep.subr.mxu0 0.0
      %3490 = vmatpush1.msra.mxu0 0.0
      %3491 = vmatprep.subr.mxu0 0.0
      %3492 = vmatpush1.msra.mxu0 0.0
      %3493 = vmatprep.subr.mxu0 0.0
      %3494 = vmatpush1.msra.mxu0 0.0
      %3495 = vmatprep.subr.mxu0 0.0
      %3496 = vmatpush1.msra.mxu0 0.0
      %3497 = vmatprep.subr.mxu0 0.0
      %3498 = vmatpush1.msra.mxu0 0.0
      %3499 = vmatprep.subr.mxu0 0.0
      %3500 = vmatpush1.msra.mxu0 0.0
      %3501 = vmatprep.subr.mxu0 0.0
      %3502 = vmatpush1.msra.mxu0 0.0
      %3503 = vmatprep.subr.mxu0 0.0
      %3504 = vmatpush1.msra.mxu0 0.0
      %3505 = vmatprep.subr.mxu0 0.0
      %3506 = vmatpush1.msra.mxu0 0.0
      %3507 = vmatprep.subr.mxu0 0.0
      %3508 = vmatpush1.msra.mxu0 0.0
      %3509 = vmatprep.subr.mxu0 0.0
      %3510 = vmatpush1.msra.mxu0 0.0
      %3511 = vmatprep.subr.mxu0 0.0
      %3512 = vmatpush1.msra.mxu0 0.0
      %3513 = vmatprep.subr.mxu0 0.0
      %3514 = vmatpush1.msra.mxu0 0.0
      %3515 = vmatprep.mubr.f32.mxu0 0.0
      %3516 = vmatmul.mubr.f32.gmra.mrb[0].mxu0 %v3449
      %v3517 = vpop.f32.mrb[0].mxu0
      %v3518 = vadd.f32 0.0, %v3517
      %v3519 = vpop.f32.mrb[0].mxu0
      %3520 = vdwg.mxu0
      %v3522 = vsel %vm59, %v3149, 0
      %3524 = vmatprep.subr.mxu0 0.0
      %3525 = vmatpush1.msra.mxu0 %v2852
      %3526 = vmatprep.subr.mxu0 0.0
      %3527 = vmatpush1.msra.mxu0 0.0
      %3528 = vmatprep.subr.mxu0 0.0
      %3529 = vmatpush1.msra.mxu0 0.0
      %3530 = vmatprep.subr.mxu0 0.0
      %3531 = vmatpush1.msra.mxu0 0.0
      %3532 = vmatprep.subr.mxu0 0.0
      %3533 = vmatpush1.msra.mxu0 0.0
      %3534 = vmatprep.subr.mxu0 0.0
      %3535 = vmatpush1.msra.mxu0 0.0
      %3536 = vmatprep.subr.mxu0 0.0
      %3537 = vmatpush1.msra.mxu0 0.0
      %3538 = vmatprep.subr.mxu0 0.0
      %3539 = vmatpush1.msra.mxu0 0.0
      %3540 = vmatprep.subr.mxu0 0.0
      %3541 = vmatpush1.msra.mxu0 0.0
      %3542 = vmatprep.subr.mxu0 0.0
      %3543 = vmatpush1.msra.mxu0 0.0
      %3544 = vmatprep.subr.mxu0 0.0
      %3545 = vmatpush1.msra.mxu0 0.0
      %3546 = vmatprep.subr.mxu0 0.0
      %3547 = vmatpush1.msra.mxu0 0.0
      %3548 = vmatprep.subr.mxu0 0.0
      %3549 = vmatpush1.msra.mxu0 0.0
      %3550 = vmatprep.subr.mxu0 0.0
      %3551 = vmatpush1.msra.mxu0 0.0
      %3552 = vmatprep.subr.mxu0 0.0
      %3553 = vmatpush1.msra.mxu0 0.0
      %3554 = vmatprep.subr.mxu0 0.0
      %3555 = vmatpush1.msra.mxu0 0.0
      %3556 = vmatprep.subr.mxu0 0.0
      %3557 = vmatpush1.msra.mxu0 0.0
      %3558 = vmatprep.subr.mxu0 0.0
      %3559 = vmatpush1.msra.mxu0 0.0
      %3560 = vmatprep.subr.mxu0 0.0
      %3561 = vmatpush1.msra.mxu0 0.0
      %3562 = vmatprep.subr.mxu0 0.0
      %3563 = vmatpush1.msra.mxu0 0.0
      %3564 = vmatprep.subr.mxu0 0.0
      %3565 = vmatpush1.msra.mxu0 0.0
      %3566 = vmatprep.subr.mxu0 0.0
      %3567 = vmatpush1.msra.mxu0 0.0
      %3568 = vmatprep.subr.mxu0 0.0
      %3569 = vmatpush1.msra.mxu0 0.0
      %3570 = vmatprep.subr.mxu0 0.0
      %3571 = vmatpush1.msra.mxu0 0.0
      %3572 = vmatprep.subr.mxu0 0.0
      %3573 = vmatpush1.msra.mxu0 0.0
      %3574 = vmatprep.subr.mxu0 0.0
      %3575 = vmatpush1.msra.mxu0 0.0
      %3576 = vmatprep.subr.mxu0 0.0
      %3577 = vmatpush1.msra.mxu0 0.0
      %3578 = vmatprep.subr.mxu0 0.0
      %3579 = vmatpush1.msra.mxu0 0.0
      %3580 = vmatprep.subr.mxu0 0.0
      %3581 = vmatpush1.msra.mxu0 0.0
      %3582 = vmatprep.subr.mxu0 0.0
      %3583 = vmatpush1.msra.mxu0 0.0
      %3584 = vmatprep.subr.mxu0 0.0
      %3585 = vmatpush1.msra.mxu0 0.0
      %3586 = vmatprep.subr.mxu0 0.0
      %3587 = vmatpush1.msra.mxu0 0.0
      %3588 = vmatprep.mubr.f32.mxu0 0.0
      %3589 = vmatmul.mubr.f32.gmra.mrb[0].mxu0 %v3522
      %v3590 = vpop.f32.mrb[0].mxu0
      %v3591 = vadd.f32 0.0, %v3590
      %v3592 = vpop.f32.mrb[0].mxu0
      %3593 = vdwg.mxu0
      %v3595 = vsel %vm59, %v3150, 0
      %3597 = vmatprep.subr.mxu0 0.0
      %3598 = vmatpush1.msra.mxu0 %v2853
      %3599 = vmatprep.subr.mxu0 0.0
      %3600 = vmatpush1.msra.mxu0 0.0
      %3601 = vmatprep.subr.mxu0 0.0
      %3602 = vmatpush1.msra.mxu0 0.0
      %3603 = vmatprep.subr.mxu0 0.0
      %3604 = vmatpush1.msra.mxu0 0.0
      %3605 = vmatprep.subr.mxu0 0.0
      %3606 = vmatpush1.msra.mxu0 0.0
      %3607 = vmatprep.subr.mxu0 0.0
      %3608 = vmatpush1.msra.mxu0 0.0
      %3609 = vmatprep.subr.mxu0 0.0
      %3610 = vmatpush1.msra.mxu0 0.0
      %3611 = vmatprep.subr.mxu0 0.0
      %3612 = vmatpush1.msra.mxu0 0.0
      %3613 = vmatprep.subr.mxu0 0.0
      %3614 = vmatpush1.msra.mxu0 0.0
      %3615 = vmatprep.subr.mxu0 0.0
      %3616 = vmatpush1.msra.mxu0 0.0
      %3617 = vmatprep.subr.mxu0 0.0
      %3618 = vmatpush1.msra.mxu0 0.0
      %3619 = vmatprep.subr.mxu0 0.0
      %3620 = vmatpush1.msra.mxu0 0.0
      %3621 = vmatprep.subr.mxu0 0.0
      %3622 = vmatpush1.msra.mxu0 0.0
      %3623 = vmatprep.subr.mxu0 0.0
      %3624 = vmatpush1.msra.mxu0 0.0
      %3625 = vmatprep.subr.mxu0 0.0
      %3626 = vmatpush1.msra.mxu0 0.0
      %3627 = vmatprep.subr.mxu0 0.0
      %3628 = vmatpush1.msra.mxu0 0.0
      %3629 = vmatprep.subr.mxu0 0.0
      %3630 = vmatpush1.msra.mxu0 0.0
      %3631 = vmatprep.subr.mxu0 0.0
      %3632 = vmatpush1.msra.mxu0 0.0
      %3633 = vmatprep.subr.mxu0 0.0
      %3634 = vmatpush1.msra.mxu0 0.0
      %3635 = vmatprep.subr.mxu0 0.0
      %3636 = vmatpush1.msra.mxu0 0.0
      %3637 = vmatprep.subr.mxu0 0.0
      %3638 = vmatpush1.msra.mxu0 0.0
      %3639 = vmatprep.subr.mxu0 0.0
      %3640 = vmatpush1.msra.mxu0 0.0
      %3641 = vmatprep.subr.mxu0 0.0
      %3642 = vmatpush1.msra.mxu0 0.0
      %3643 = vmatprep.subr.mxu0 0.0
      %3644 = vmatpush1.msra.mxu0 0.0
      %3645 = vmatprep.subr.mxu0 0.0
      %3646 = vmatpush1.msra.mxu0 0.0
      %3647 = vmatprep.subr.mxu0 0.0
      %3648 = vmatpush1.msra.mxu0 0.0
      %3649 = vmatprep.subr.mxu0 0.0
      %3650 = vmatpush1.msra.mxu0 0.0
      %3651 = vmatprep.subr.mxu0 0.0
      %3652 = vmatpush1.msra.mxu0 0.0
      %3653 = vmatprep.subr.mxu0 0.0
      %3654 = vmatpush1.msra.mxu0 0.0
      %3655 = vmatprep.subr.mxu0 0.0
      %3656 = vmatpush1.msra.mxu0 0.0
      %3657 = vmatprep.subr.mxu0 0.0
      %3658 = vmatpush1.msra.mxu0 0.0
      %3659 = vmatprep.subr.mxu0 0.0
      %3660 = vmatpush1.msra.mxu0 0.0
      %3661 = vmatprep.mubr.f32.mxu0 0.0
      %3662 = vmatmul.mubr.f32.gmra.mrb[0].mxu0 %v3595
      %v3663 = vpop.f32.mrb[0].mxu0
      %v3664 = vadd.f32 0.0, %v3663
      %v3665 = vpop.f32.mrb[0].mxu0
      %3666 = vdwg.mxu0
      %v3668 = vsel %vm59, %v3151, 0
      %3670 = vmatprep.subr.mxu0 0.0
      %3671 = vmatpush1.msra.mxu0 %v2854
      %3672 = vmatprep.subr.mxu0 0.0
      %3673 = vmatpush1.msra.mxu0 0.0
      %3674 = vmatprep.subr.mxu0 0.0
      %3675 = vmatpush1.msra.mxu0 0.0
      %3676 = vmatprep.subr.mxu0 0.0
      %3677 = vmatpush1.msra.mxu0 0.0
      %3678 = vmatprep.subr.mxu0 0.0
      %3679 = vmatpush1.msra.mxu0 0.0
      %3680 = vmatprep.subr.mxu0 0.0
      %3681 = vmatpush1.msra.mxu0 0.0
      %3682 = vmatprep.subr.mxu0 0.0
      %3683 = vmatpush1.msra.mxu0 0.0
      %3684 = vmatprep.subr.mxu0 0.0
      %3685 = vmatpush1.msra.mxu0 0.0
      %3686 = vmatprep.subr.mxu0 0.0
      %3687 = vmatpush1.msra.mxu0 0.0
      %3688 = vmatprep.subr.mxu0 0.0
      %3689 = vmatpush1.msra.mxu0 0.0
      %3690 = vmatprep.subr.mxu0 0.0
      %3691 = vmatpush1.msra.mxu0 0.0
      %3692 = vmatprep.subr.mxu0 0.0
      %3693 = vmatpush1.msra.mxu0 0.0
      %3694 = vmatprep.subr.mxu0 0.0
      %3695 = vmatpush1.msra.mxu0 0.0
      %3696 = vmatprep.subr.mxu0 0.0
      %3697 = vmatpush1.msra.mxu0 0.0
      %3698 = vmatprep.subr.mxu0 0.0
      %3699 = vmatpush1.msra.mxu0 0.0
      %3700 = vmatprep.subr.mxu0 0.0
      %3701 = vmatpush1.msra.mxu0 0.0
      %3702 = vmatprep.subr.mxu0 0.0
      %3703 = vmatpush1.msra.mxu0 0.0
      %3704 = vmatprep.subr.mxu0 0.0
      %3705 = vmatpush1.msra.mxu0 0.0
      %3706 = vmatprep.subr.mxu0 0.0
      %3707 = vmatpush1.msra.mxu0 0.0
      %3708 = vmatprep.subr.mxu0 0.0
      %3709 = vmatpush1.msra.mxu0 0.0
      %3710 = vmatprep.subr.mxu0 0.0
      %3711 = vmatpush1.msra.mxu0 0.0
      %3712 = vmatprep.subr.mxu0 0.0
      %3713 = vmatpush1.msra.mxu0 0.0
      %3714 = vmatprep.subr.mxu0 0.0
      %3715 = vmatpush1.msra.mxu0 0.0
      %3716 = vmatprep.subr.mxu0 0.0
      %3717 = vmatpush1.msra.mxu0 0.0
      %3718 = vmatprep.subr.mxu0 0.0
      %3719 = vmatpush1.msra.mxu0 0.0
      %3720 = vmatprep.subr.mxu0 0.0
      %3721 = vmatpush1.msra.mxu0 0.0
      %3722 = vmatprep.subr.mxu0 0.0
      %3723 = vmatpush1.msra.mxu0 0.0
      %3724 = vmatprep.subr.mxu0 0.0
      %3725 = vmatpush1.msra.mxu0 0.0
      %3726 = vmatprep.subr.mxu0 0.0
      %3727 = vmatpush1.msra.mxu0 0.0
      %3728 = vmatprep.subr.mxu0 0.0
      %3729 = vmatpush1.msra.mxu0 0.0
      %3730 = vmatprep.subr.mxu0 0.0
      %3731 = vmatpush1.msra.mxu0 0.0
      %3732 = vmatprep.subr.mxu0 0.0
      %3733 = vmatpush1.msra.mxu0 0.0
      %3734 = vmatprep.mubr.f32.mxu0 0.0
      %3735 = vmatmul.mubr.f32.gmra.mrb[0].mxu0 %v3668
      %v3736 = vpop.f32.mrb[0].mxu0
      %v3737 = vadd.f32 0.0, %v3736
      %v3738 = vpop.f32.mrb[0].mxu0
      %3739 = vdwg.mxu0
      %v3740 = vmul.f32 %v3518, 0.5
      %v3741 = vmul.f32 %v3591, 0.5
      %v3742 = vmul.f32 %v3664, 0.5
      %v3743 = vmul.f32 %v3737, 0.5
    $region47: #{tpu_custom_call.1} parent=1 // loop_footer
      %s2846 = sadd.s32 1, %s2842
    $region48: #{tpu_custom_call.1} parent=1 // loop_footer_branch
      %2841 = sbr.rel target = $region44
    $region49: #{tpu_custom_call.1} parent=1 // loop_exit
      _
    loop: start=0, step=1, limit=8
    $region50: #{tpu_custom_call.1} parent=1 // loop_pre_header
      _
    $region51: #{tpu_custom_call.1} parent=1 // loop_header
      %s3745 = sphi 0, %s3749
      %p3746 = scmp.ge.s32.totalorder %s3745, 8
      %v3750 = vphi %v2847, %v4347
      %v3751 = vphi %v2848, %v4348
      %v3752 = vphi %v2849, %v4349
      %v3753 = vphi %v2850, %v4350
      %v3754 = vphi %v54, %v4643
      %v3755 = vphi %v54, %v4644
      %v3756 = vphi %v54, %v4645
      %v3757 = vphi %v54, %v4646
    $region52: #{tpu_custom_call.1} parent=1 // loop_header_branch
      %3748 = sbr.rel (%p3746) target = $region56
    $region53: #{tpu_custom_call.1} parent=1 // loop_body
      %v3758 = vmul.f32 %v54, 3.0
      %v3760 = vsel %vm59, %v3754, 0
      %3762 = vmatprep.subr.mxu0 0.0
      %3763 = vmatpush1.msra.mxu0 %v3750
      %3764 = vmatprep.subr.mxu0 0.0
      %3765 = vmatpush1.msra.mxu0 0.0
      %3766 = vmatprep.subr.mxu0 0.0
      %3767 = vmatpush1.msra.mxu0 0.0
      %3768 = vmatprep.subr.mxu0 0.0
      %3769 = vmatpush1.msra.mxu0 0.0
      %3770 = vmatprep.subr.mxu0 0.0
      %3771 = vmatpush1.msra.mxu0 0.0
      %3772 = vmatprep.subr.mxu0 0.0
      %3773 = vmatpush1.msra.mxu0 0.0
      %3774 = vmatprep.subr.mxu0 0.0
      %3775 = vmatpush1.msra.mxu0 0.0
      %3776 = vmatprep.subr.mxu0 0.0
      %3777 = vmatpush1.msra.mxu0 0.0
      %3778 = vmatprep.subr.mxu0 0.0
      %3779 = vmatpush1.msra.mxu0 0.0
      %3780 = vmatprep.subr.mxu0 0.0
      %3781 = vmatpush1.msra.mxu0 0.0
      %3782 = vmatprep.subr.mxu0 0.0
      %3783 = vmatpush1.msra.mxu0 0.0
      %3784 = vmatprep.subr.mxu0 0.0
      %3785 = vmatpush1.msra.mxu0 0.0
      %3786 = vmatprep.subr.mxu0 0.0
      %3787 = vmatpush1.msra.mxu0 0.0
      %3788 = vmatprep.subr.mxu0 0.0
      %3789 = vmatpush1.msra.mxu0 0.0
      %3790 = vmatprep.subr.mxu0 0.0
      %3791 = vmatpush1.msra.mxu0 0.0
      %3792 = vmatprep.subr.mxu0 0.0
      %3793 = vmatpush1.msra.mxu0 0.0
      %3794 = vmatprep.subr.mxu0 0.0
      %3795 = vmatpush1.msra.mxu0 0.0
      %3796 = vmatprep.subr.mxu0 0.0
      %3797 = vmatpush1.msra.mxu0 0.0
      %3798 = vmatprep.subr.mxu0 0.0
      %3799 = vmatpush1.msra.mxu0 0.0
      %3800 = vmatprep.subr.mxu0 0.0
      %3801 = vmatpush1.msra.mxu0 0.0
      %3802 = vmatprep.subr.mxu0 0.0
      %3803 = vmatpush1.msra.mxu0 0.0
      %3804 = vmatprep.subr.mxu0 0.0
      %3805 = vmatpush1.msra.mxu0 0.0
      %3806 = vmatprep.subr.mxu0 0.0
      %3807 = vmatpush1.msra.mxu0 0.0
      %3808 = vmatprep.subr.mxu0 0.0
      %3809 = vmatpush1.msra.mxu0 0.0
      %3810 = vmatprep.subr.mxu0 0.0
      %3811 = vmatpush1.msra.mxu0 0.0
      %3812 = vmatprep.subr.mxu0 0.0
      %3813 = vmatpush1.msra.mxu0 0.0
      %3814 = vmatprep.subr.mxu0 0.0
      %3815 = vmatpush1.msra.mxu0 0.0
      %3816 = vmatprep.subr.mxu0 0.0
      %3817 = vmatpush1.msra.mxu0 0.0
      %3818 = vmatprep.subr.mxu0 0.0
      %3819 = vmatpush1.msra.mxu0 0.0
      %3820 = vmatprep.subr.mxu0 0.0
      %3821 = vmatpush1.msra.mxu0 0.0
      %3822 = vmatprep.subr.mxu0 0.0
      %3823 = vmatpush1.msra.mxu0 0.0
      %3824 = vmatprep.subr.mxu0 0.0
      %3825 = vmatpush1.msra.mxu0 0.0
      %3826 = vmatprep.mubr.f32.mxu0 0.0
      %3827 = vmatmul.mubr.f32.gmra.mrb[0].mxu0 %v3760
      %v3828 = vpop.f32.mrb[0].mxu0
      %v3829 = vadd.f32 0.0, %v3828
      %v3830 = vpop.f32.mrb[0].mxu0
      %3831 = vdwg.mxu0
      %v3833 = vsel %vm59, %v3755, 0
      %3835 = vmatprep.subr.mxu0 0.0
      %3836 = vmatpush1.msra.mxu0 %v3751
      %3837 = vmatprep.subr.mxu0 0.0
      %3838 = vmatpush1.msra.mxu0 0.0
      %3839 = vmatprep.subr.mxu0 0.0
      %3840 = vmatpush1.msra.mxu0 0.0
      %3841 = vmatprep.subr.mxu0 0.0
      %3842 = vmatpush1.msra.mxu0 0.0
      %3843 = vmatprep.subr.mxu0 0.0
      %3844 = vmatpush1.msra.mxu0 0.0
      %3845 = vmatprep.subr.mxu0 0.0
      %3846 = vmatpush1.msra.mxu0 0.0
      %3847 = vmatprep.subr.mxu0 0.0
      %3848 = vmatpush1.msra.mxu0 0.0
      %3849 = vmatprep.subr.mxu0 0.0
      %3850 = vmatpush1.msra.mxu0 0.0
      %3851 = vmatprep.subr.mxu0 0.0
      %3852 = vmatpush1.msra.mxu0 0.0
      %3853 = vmatprep.subr.mxu0 0.0
      %3854 = vmatpush1.msra.mxu0 0.0
      %3855 = vmatprep.subr.mxu0 0.0
      %3856 = vmatpush1.msra.mxu0 0.0
      %3857 = vmatprep.subr.mxu0 0.0
      %3858 = vmatpush1.msra.mxu0 0.0
      %3859 = vmatprep.subr.mxu0 0.0
      %3860 = vmatpush1.msra.mxu0 0.0
      %3861 = vmatprep.subr.mxu0 0.0
      %3862 = vmatpush1.msra.mxu0 0.0
      %3863 = vmatprep.subr.mxu0 0.0
      %3864 = vmatpush1.msra.mxu0 0.0
      %3865 = vmatprep.subr.mxu0 0.0
      %3866 = vmatpush1.msra.mxu0 0.0
      %3867 = vmatprep.subr.mxu0 0.0
      %3868 = vmatpush1.msra.mxu0 0.0
      %3869 = vmatprep.subr.mxu0 0.0
      %3870 = vmatpush1.msra.mxu0 0.0
      %3871 = vmatprep.subr.mxu0 0.0
      %3872 = vmatpush1.msra.mxu0 0.0
      %3873 = vmatprep.subr.mxu0 0.0
      %3874 = vmatpush1.msra.mxu0 0.0
      %3875 = vmatprep.subr.mxu0 0.0
      %3876 = vmatpush1.msra.mxu0 0.0
      %3877 = vmatprep.subr.mxu0 0.0
      %3878 = vmatpush1.msra.mxu0 0.0
      %3879 = vmatprep.subr.mxu0 0.0
      %3880 = vmatpush1.msra.mxu0 0.0
      %3881 = vmatprep.subr.mxu0 0.0
      %3882 = vmatpush1.msra.mxu0 0.0
      %3883 = vmatprep.subr.mxu0 0.0
      %3884 = vmatpush1.msra.mxu0 0.0
      %3885 = vmatprep.subr.mxu0 0.0
      %3886 = vmatpush1.msra.mxu0 0.0
      %3887 = vmatprep.subr.mxu0 0.0
      %3888 = vmatpush1.msra.mxu0 0.0
      %3889 = vmatprep.subr.mxu0 0.0
      %3890 = vmatpush1.msra.mxu0 0.0
      %3891 = vmatprep.subr.mxu0 0.0
      %3892 = vmatpush1.msra.mxu0 0.0
      %3893 = vmatprep.subr.mxu0 0.0
      %3894 = vmatpush1.msra.mxu0 0.0
      %3895 = vmatprep.subr.mxu0 0.0
      %3896 = vmatpush1.msra.mxu0 0.0
      %3897 = vmatprep.subr.mxu0 0.0
      %3898 = vmatpush1.msra.mxu0 0.0
      %3899 = vmatprep.mubr.f32.mxu0 0.0
      %3900 = vmatmul.mubr.f32.gmra.mrb[0].mxu0 %v3833
      %v3901 = vpop.f32.mrb[0].mxu0
      %v3902 = vadd.f32 0.0, %v3901
      %v3903 = vpop.f32.mrb[0].mxu0
      %3904 = vdwg.mxu0
      %v3906 = vsel %vm59, %v3756, 0
      %3908 = vmatprep.subr.mxu0 0.0
      %3909 = vmatpush1.msra.mxu0 %v3752
      %3910 = vmatprep.subr.mxu0 0.0
      %3911 = vmatpush1.msra.mxu0 0.0
      %3912 = vmatprep.subr.mxu0 0.0
      %3913 = vmatpush1.msra.mxu0 0.0
      %3914 = vmatprep.subr.mxu0 0.0
      %3915 = vmatpush1.msra.mxu0 0.0
      %3916 = vmatprep.subr.mxu0 0.0
      %3917 = vmatpush1.msra.mxu0 0.0
      %3918 = vmatprep.subr.mxu0 0.0
      %3919 = vmatpush1.msra.mxu0 0.0
      %3920 = vmatprep.subr.mxu0 0.0
      %3921 = vmatpush1.msra.mxu0 0.0
      %3922 = vmatprep.subr.mxu0 0.0
      %3923 = vmatpush1.msra.mxu0 0.0
      %3924 = vmatprep.subr.mxu0 0.0
      %3925 = vmatpush1.msra.mxu0 0.0
      %3926 = vmatprep.subr.mxu0 0.0
      %3927 = vmatpush1.msra.mxu0 0.0
      %3928 = vmatprep.subr.mxu0 0.0
      %3929 = vmatpush1.msra.mxu0 0.0
      %3930 = vmatprep.subr.mxu0 0.0
      %3931 = vmatpush1.msra.mxu0 0.0
      %3932 = vmatprep.subr.mxu0 0.0
      %3933 = vmatpush1.msra.mxu0 0.0
      %3934 = vmatprep.subr.mxu0 0.0
      %3935 = vmatpush1.msra.mxu0 0.0
      %3936 = vmatprep.subr.mxu0 0.0
      %3937 = vmatpush1.msra.mxu0 0.0
      %3938 = vmatprep.subr.mxu0 0.0
      %3939 = vmatpush1.msra.mxu0 0.0
      %3940 = vmatprep.subr.mxu0 0.0
      %3941 = vmatpush1.msra.mxu0 0.0
      %3942 = vmatprep.subr.mxu0 0.0
      %3943 = vmatpush1.msra.mxu0 0.0
      %3944 = vmatprep.subr.mxu0 0.0
      %3945 = vmatpush1.msra.mxu0 0.0
      %3946 = vmatprep.subr.mxu0 0.0
      %3947 = vmatpush1.msra.mxu0 0.0
      %3948 = vmatprep.subr.mxu0 0.0
      %3949 = vmatpush1.msra.mxu0 0.0
      %3950 = vmatprep.subr.mxu0 0.0
      %3951 = vmatpush1.msra.mxu0 0.0
      %3952 = vmatprep.subr.mxu0 0.0
      %3953 = vmatpush1.msra.mxu0 0.0
      %3954 = vmatprep.subr.mxu0 0.0
      %3955 = vmatpush1.msra.mxu0 0.0
      %3956 = vmatprep.subr.mxu0 0.0
      %3957 = vmatpush1.msra.mxu0 0.0
      %3958 = vmatprep.subr.mxu0 0.0
      %3959 = vmatpush1.msra.mxu0 0.0
      %3960 = vmatprep.subr.mxu0 0.0
      %3961 = vmatpush1.msra.mxu0 0.0
      %3962 = vmatprep.subr.mxu0 0.0
      %3963 = vmatpush1.msra.mxu0 0.0
      %3964 = vmatprep.subr.mxu0 0.0
      %3965 = vmatpush1.msra.mxu0 0.0
      %3966 = vmatprep.subr.mxu0 0.0
      %3967 = vmatpush1.msra.mxu0 0.0
      %3968 = vmatprep.subr.mxu0 0.0
      %3969 = vmatpush1.msra.mxu0 0.0
      %3970 = vmatprep.subr.mxu0 0.0
      %3971 = vmatpush1.msra.mxu0 0.0
      %3972 = vmatprep.mubr.f32.mxu0 0.0
      %3973 = vmatmul.mubr.f32.gmra.mrb[0].mxu0 %v3906
      %v3974 = vpop.f32.mrb[0].mxu0
      %v3975 = vadd.f32 0.0, %v3974
      %v3976 = vpop.f32.mrb[0].mxu0
      %3977 = vdwg.mxu0
      %v3979 = vsel %vm59, %v3757, 0
      %3981 = vmatprep.subr.mxu0 0.0
      %3982 = vmatpush1.msra.mxu0 %v3753
      %3983 = vmatprep.subr.mxu0 0.0
      %3984 = vmatpush1.msra.mxu0 0.0
      %3985 = vmatprep.subr.mxu0 0.0
      %3986 = vmatpush1.msra.mxu0 0.0
      %3987 = vmatprep.subr.mxu0 0.0
      %3988 = vmatpush1.msra.mxu0 0.0
      %3989 = vmatprep.subr.mxu0 0.0
      %3990 = vmatpush1.msra.mxu0 0.0
      %3991 = vmatprep.subr.mxu0 0.0
      %3992 = vmatpush1.msra.mxu0 0.0
      %3993 = vmatprep.subr.mxu0 0.0
      %3994 = vmatpush1.msra.mxu0 0.0
      %3995 = vmatprep.subr.mxu0 0.0
      %3996 = vmatpush1.msra.mxu0 0.0
      %3997 = vmatprep.subr.mxu0 0.0
      %3998 = vmatpush1.msra.mxu0 0.0
      %3999 = vmatprep.subr.mxu0 0.0
      %4000 = vmatpush1.msra.mxu0 0.0
      %4001 = vmatprep.subr.mxu0 0.0
      %4002 = vmatpush1.msra.mxu0 0.0
      %4003 = vmatprep.subr.mxu0 0.0
      %4004 = vmatpush1.msra.mxu0 0.0
      %4005 = vmatprep.subr.mxu0 0.0
      %4006 = vmatpush1.msra.mxu0 0.0
      %4007 = vmatprep.subr.mxu0 0.0
      %4008 = vmatpush1.msra.mxu0 0.0
      %4009 = vmatprep.subr.mxu0 0.0
      %4010 = vmatpush1.msra.mxu0 0.0
      %4011 = vmatprep.subr.mxu0 0.0
      %4012 = vmatpush1.msra.mxu0 0.0
      %4013 = vmatprep.subr.mxu0 0.0
      %4014 = vmatpush1.msra.mxu0 0.0
      %4015 = vmatprep.subr.mxu0 0.0
      %4016 = vmatpush1.msra.mxu0 0.0
      %4017 = vmatprep.subr.mxu0 0.0
      %4018 = vmatpush1.msra.mxu0 0.0
      %4019 = vmatprep.subr.mxu0 0.0
      %4020 = vmatpush1.msra.mxu0 0.0
      %4021 = vmatprep.subr.mxu0 0.0
      %4022 = vmatpush1.msra.mxu0 0.0
      %4023 = vmatprep.subr.mxu0 0.0
      %4024 = vmatpush1.msra.mxu0 0.0
      %4025 = vmatprep.subr.mxu0 0.0
      %4026 = vmatpush1.msra.mxu0 0.0
      %4027 = vmatprep.subr.mxu0 0.0
      %4028 = vmatpush1.msra.mxu0 0.0
      %4029 = vmatprep.subr.mxu0 0.0
      %4030 = vmatpush1.msra.mxu0 0.0
      %4031 = vmatprep.subr.mxu0 0.0
      %4032 = vmatpush1.msra.mxu0 0.0
      %4033 = vmatprep.subr.mxu0 0.0
      %4034 = vmatpush1.msra.mxu0 0.0
      %4035 = vmatprep.subr.mxu0 0.0
      %4036 = vmatpush1.msra.mxu0 0.0
      %4037 = vmatprep.subr.mxu0 0.0
      %4038 = vmatpush1.msra.mxu0 0.0
      %4039 = vmatprep.subr.mxu0 0.0
      %4040 = vmatpush1.msra.mxu0 0.0
      %4041 = vmatprep.subr.mxu0 0.0
      %4042 = vmatpush1.msra.mxu0 0.0
      %4043 = vmatprep.subr.mxu0 0.0
      %4044 = vmatpush1.msra.mxu0 0.0
      %4045 = vmatprep.mubr.f32.mxu0 0.0
      %4046 = vmatmul.mubr.f32.gmra.mrb[0].mxu0 %v3979
      %v4047 = vpop.f32.mrb[0].mxu0
      %v4048 = vadd.f32 0.0, %v4047
      %v4049 = vpop.f32.mrb[0].mxu0
      %4050 = vdwg.mxu0
      %v4051 = vsub.f32 %v3758, %v3829
      %v4052 = vsub.f32 %v3758, %v3902
      %v4053 = vsub.f32 %v3758, %v3975
      %v4054 = vsub.f32 %v3758, %v4048
      %v4056 = vsel %vm59, %v3750, 0
      %4058 = vmatprep.subr.mxu0 0.0
      %4059 = vmatpush1.msra.mxu0 %v4051
      %4060 = vmatprep.subr.mxu0 0.0
      %4061 = vmatpush1.msra.mxu0 0.0
      %4062 = vmatprep.subr.mxu0 0.0
      %4063 = vmatpush1.msra.mxu0 0.0
      %4064 = vmatprep.subr.mxu0 0.0
      %4065 = vmatpush1.msra.mxu0 0.0
      %4066 = vmatprep.subr.mxu0 0.0
      %4067 = vmatpush1.msra.mxu0 0.0
      %4068 = vmatprep.subr.mxu0 0.0
      %4069 = vmatpush1.msra.mxu0 0.0
      %4070 = vmatprep.subr.mxu0 0.0
      %4071 = vmatpush1.msra.mxu0 0.0
      %4072 = vmatprep.subr.mxu0 0.0
      %4073 = vmatpush1.msra.mxu0 0.0
      %4074 = vmatprep.subr.mxu0 0.0
      %4075 = vmatpush1.msra.mxu0 0.0
      %4076 = vmatprep.subr.mxu0 0.0
      %4077 = vmatpush1.msra.mxu0 0.0
      %4078 = vmatprep.subr.mxu0 0.0
      %4079 = vmatpush1.msra.mxu0 0.0
      %4080 = vmatprep.subr.mxu0 0.0
      %4081 = vmatpush1.msra.mxu0 0.0
      %4082 = vmatprep.subr.mxu0 0.0
      %4083 = vmatpush1.msra.mxu0 0.0
      %4084 = vmatprep.subr.mxu0 0.0
      %4085 = vmatpush1.msra.mxu0 0.0
      %4086 = vmatprep.subr.mxu0 0.0
      %4087 = vmatpush1.msra.mxu0 0.0
      %4088 = vmatprep.subr.mxu0 0.0
      %4089 = vmatpush1.msra.mxu0 0.0
      %4090 = vmatprep.subr.mxu0 0.0
      %4091 = vmatpush1.msra.mxu0 0.0
      %4092 = vmatprep.subr.mxu0 0.0
      %4093 = vmatpush1.msra.mxu0 0.0
      %4094 = vmatprep.subr.mxu0 0.0
      %4095 = vmatpush1.msra.mxu0 0.0
      %4096 = vmatprep.subr.mxu0 0.0
      %4097 = vmatpush1.msra.mxu0 0.0
      %4098 = vmatprep.subr.mxu0 0.0
      %4099 = vmatpush1.msra.mxu0 0.0
      %4100 = vmatprep.subr.mxu0 0.0
      %4101 = vmatpush1.msra.mxu0 0.0
      %4102 = vmatprep.subr.mxu0 0.0
      %4103 = vmatpush1.msra.mxu0 0.0
      %4104 = vmatprep.subr.mxu0 0.0
      %4105 = vmatpush1.msra.mxu0 0.0
      %4106 = vmatprep.subr.mxu0 0.0
      %4107 = vmatpush1.msra.mxu0 0.0
      %4108 = vmatprep.subr.mxu0 0.0
      %4109 = vmatpush1.msra.mxu0 0.0
      %4110 = vmatprep.subr.mxu0 0.0
      %4111 = vmatpush1.msra.mxu0 0.0
      %4112 = vmatprep.subr.mxu0 0.0
      %4113 = vmatpush1.msra.mxu0 0.0
      %4114 = vmatprep.subr.mxu0 0.0
      %4115 = vmatpush1.msra.mxu0 0.0
      %4116 = vmatprep.subr.mxu0 0.0
      %4117 = vmatpush1.msra.mxu0 0.0
      %4118 = vmatprep.subr.mxu0 0.0
      %4119 = vmatpush1.msra.mxu0 0.0
      %4120 = vmatprep.subr.mxu0 0.0
      %4121 = vmatpush1.msra.mxu0 0.0
      %4122 = vmatprep.mubr.f32.mxu0 0.0
      %4123 = vmatmul.mubr.f32.gmra.mrb[0].mxu0 %v4056
      %v4124 = vpop.f32.mrb[0].mxu0
      %v4125 = vadd.f32 0.0, %v4124
      %v4126 = vpop.f32.mrb[0].mxu0
      %4127 = vdwg.mxu0
      %v4129 = vsel %vm59, %v3751, 0
      %4131 = vmatprep.subr.mxu0 0.0
      %4132 = vmatpush1.msra.mxu0 %v4052
      %4133 = vmatprep.subr.mxu0 0.0
      %4134 = vmatpush1.msra.mxu0 0.0
      %4135 = vmatprep.subr.mxu0 0.0
      %4136 = vmatpush1.msra.mxu0 0.0
      %4137 = vmatprep.subr.mxu0 0.0
      %4138 = vmatpush1.msra.mxu0 0.0
      %4139 = vmatprep.subr.mxu0 0.0
      %4140 = vmatpush1.msra.mxu0 0.0
      %4141 = vmatprep.subr.mxu0 0.0
      %4142 = vmatpush1.msra.mxu0 0.0
      %4143 = vmatprep.subr.mxu0 0.0
      %4144 = vmatpush1.msra.mxu0 0.0
      %4145 = vmatprep.subr.mxu0 0.0
      %4146 = vmatpush1.msra.mxu0 0.0
      %4147 = vmatprep.subr.mxu0 0.0
      %4148 = vmatpush1.msra.mxu0 0.0
      %4149 = vmatprep.subr.mxu0 0.0
      %4150 = vmatpush1.msra.mxu0 0.0
      %4151 = vmatprep.subr.mxu0 0.0
      %4152 = vmatpush1.msra.mxu0 0.0
      %4153 = vmatprep.subr.mxu0 0.0
      %4154 = vmatpush1.msra.mxu0 0.0
      %4155 = vmatprep.subr.mxu0 0.0
      %4156 = vmatpush1.msra.mxu0 0.0
      %4157 = vmatprep.subr.mxu0 0.0
      %4158 = vmatpush1.msra.mxu0 0.0
      %4159 = vmatprep.subr.mxu0 0.0
      %4160 = vmatpush1.msra.mxu0 0.0
      %4161 = vmatprep.subr.mxu0 0.0
      %4162 = vmatpush1.msra.mxu0 0.0
      %4163 = vmatprep.subr.mxu0 0.0
      %4164 = vmatpush1.msra.mxu0 0.0
      %4165 = vmatprep.subr.mxu0 0.0
      %4166 = vmatpush1.msra.mxu0 0.0
      %4167 = vmatprep.subr.mxu0 0.0
      %4168 = vmatpush1.msra.mxu0 0.0
      %4169 = vmatprep.subr.mxu0 0.0
      %4170 = vmatpush1.msra.mxu0 0.0
      %4171 = vmatprep.subr.mxu0 0.0
      %4172 = vmatpush1.msra.mxu0 0.0
      %4173 = vmatprep.subr.mxu0 0.0
      %4174 = vmatpush1.msra.mxu0 0.0
      %4175 = vmatprep.subr.mxu0 0.0
      %4176 = vmatpush1.msra.mxu0 0.0
      %4177 = vmatprep.subr.mxu0 0.0
      %4178 = vmatpush1.msra.mxu0 0.0
      %4179 = vmatprep.subr.mxu0 0.0
      %4180 = vmatpush1.msra.mxu0 0.0
      %4181 = vmatprep.subr.mxu0 0.0
      %4182 = vmatpush1.msra.mxu0 0.0
      %4183 = vmatprep.subr.mxu0 0.0
      %4184 = vmatpush1.msra.mxu0 0.0
      %4185 = vmatprep.subr.mxu0 0.0
      %4186 = vmatpush1.msra.mxu0 0.0
      %4187 = vmatprep.subr.mxu0 0.0
      %4188 = vmatpush1.msra.mxu0 0.0
      %4189 = vmatprep.subr.mxu0 0.0
      %4190 = vmatpush1.msra.mxu0 0.0
      %4191 = vmatprep.subr.mxu0 0.0
      %4192 = vmatpush1.msra.mxu0 0.0
      %4193 = vmatprep.subr.mxu0 0.0
      %4194 = vmatpush1.msra.mxu0 0.0
      %4195 = vmatprep.mubr.f32.mxu0 0.0
      %4196 = vmatmul.mubr.f32.gmra.mrb[0].mxu0 %v4129
      %v4197 = vpop.f32.mrb[0].mxu0
      %v4198 = vadd.f32 0.0, %v4197
      %v4199 = vpop.f32.mrb[0].mxu0
      %4200 = vdwg.mxu0
      %v4202 = vsel %vm59, %v3752, 0
      %4204 = vmatprep.subr.mxu0 0.0
      %4205 = vmatpush1.msra.mxu0 %v4053
      %4206 = vmatprep.subr.mxu0 0.0
      %4207 = vmatpush1.msra.mxu0 0.0
      %4208 = vmatprep.subr.mxu0 0.0
      %4209 = vmatpush1.msra.mxu0 0.0
      %4210 = vmatprep.subr.mxu0 0.0
      %4211 = vmatpush1.msra.mxu0 0.0
      %4212 = vmatprep.subr.mxu0 0.0
      %4213 = vmatpush1.msra.mxu0 0.0
      %4214 = vmatprep.subr.mxu0 0.0
      %4215 = vmatpush1.msra.mxu0 0.0
      %4216 = vmatprep.subr.mxu0 0.0
      %4217 = vmatpush1.msra.mxu0 0.0
      %4218 = vmatprep.subr.mxu0 0.0
      %4219 = vmatpush1.msra.mxu0 0.0
      %4220 = vmatprep.subr.mxu0 0.0
      %4221 = vmatpush1.msra.mxu0 0.0
      %4222 = vmatprep.subr.mxu0 0.0
      %4223 = vmatpush1.msra.mxu0 0.0
      %4224 = vmatprep.subr.mxu0 0.0
      %4225 = vmatpush1.msra.mxu0 0.0
      %4226 = vmatprep.subr.mxu0 0.0
      %4227 = vmatpush1.msra.mxu0 0.0
      %4228 = vmatprep.subr.mxu0 0.0
      %4229 = vmatpush1.msra.mxu0 0.0
      %4230 = vmatprep.subr.mxu0 0.0
      %4231 = vmatpush1.msra.mxu0 0.0
      %4232 = vmatprep.subr.mxu0 0.0
      %4233 = vmatpush1.msra.mxu0 0.0
      %4234 = vmatprep.subr.mxu0 0.0
      %4235 = vmatpush1.msra.mxu0 0.0
      %4236 = vmatprep.subr.mxu0 0.0
      %4237 = vmatpush1.msra.mxu0 0.0
      %4238 = vmatprep.subr.mxu0 0.0
      %4239 = vmatpush1.msra.mxu0 0.0
      %4240 = vmatprep.subr.mxu0 0.0
      %4241 = vmatpush1.msra.mxu0 0.0
      %4242 = vmatprep.subr.mxu0 0.0
      %4243 = vmatpush1.msra.mxu0 0.0
      %4244 = vmatprep.subr.mxu0 0.0
      %4245 = vmatpush1.msra.mxu0 0.0
      %4246 = vmatprep.subr.mxu0 0.0
      %4247 = vmatpush1.msra.mxu0 0.0
      %4248 = vmatprep.subr.mxu0 0.0
      %4249 = vmatpush1.msra.mxu0 0.0
      %4250 = vmatprep.subr.mxu0 0.0
      %4251 = vmatpush1.msra.mxu0 0.0
      %4252 = vmatprep.subr.mxu0 0.0
      %4253 = vmatpush1.msra.mxu0 0.0
      %4254 = vmatprep.subr.mxu0 0.0
      %4255 = vmatpush1.msra.mxu0 0.0
      %4256 = vmatprep.subr.mxu0 0.0
      %4257 = vmatpush1.msra.mxu0 0.0
      %4258 = vmatprep.subr.mxu0 0.0
      %4259 = vmatpush1.msra.mxu0 0.0
      %4260 = vmatprep.subr.mxu0 0.0
      %4261 = vmatpush1.msra.mxu0 0.0
      %4262 = vmatprep.subr.mxu0 0.0
      %4263 = vmatpush1.msra.mxu0 0.0
      %4264 = vmatprep.subr.mxu0 0.0
      %4265 = vmatpush1.msra.mxu0 0.0
      %4266 = vmatprep.subr.mxu0 0.0
      %4267 = vmatpush1.msra.mxu0 0.0
      %4268 = vmatprep.mubr.f32.mxu0 0.0
      %4269 = vmatmul.mubr.f32.gmra.mrb[0].mxu0 %v4202
      %v4270 = vpop.f32.mrb[0].mxu0
      %v4271 = vadd.f32 0.0, %v4270
      %v4272 = vpop.f32.mrb[0].mxu0
      %4273 = vdwg.mxu0
      %v4275 = vsel %vm59, %v3753, 0
      %4277 = vmatprep.subr.mxu0 0.0
      %4278 = vmatpush1.msra.mxu0 %v4054
      %4279 = vmatprep.subr.mxu0 0.0
      %4280 = vmatpush1.msra.mxu0 0.0
      %4281 = vmatprep.subr.mxu0 0.0
      %4282 = vmatpush1.msra.mxu0 0.0
      %4283 = vmatprep.subr.mxu0 0.0
      %4284 = vmatpush1.msra.mxu0 0.0
      %4285 = vmatprep.subr.mxu0 0.0
      %4286 = vmatpush1.msra.mxu0 0.0
      %4287 = vmatprep.subr.mxu0 0.0
      %4288 = vmatpush1.msra.mxu0 0.0
      %4289 = vmatprep.subr.mxu0 0.0
      %4290 = vmatpush1.msra.mxu0 0.0
      %4291 = vmatprep.subr.mxu0 0.0
      %4292 = vmatpush1.msra.mxu0 0.0
      %4293 = vmatprep.subr.mxu0 0.0
      %4294 = vmatpush1.msra.mxu0 0.0
      %4295 = vmatprep.subr.mxu0 0.0
      %4296 = vmatpush1.msra.mxu0 0.0
      %4297 = vmatprep.subr.mxu0 0.0
      %4298 = vmatpush1.msra.mxu0 0.0
      %4299 = vmatprep.subr.mxu0 0.0
      %4300 = vmatpush1.msra.mxu0 0.0
      %4301 = vmatprep.subr.mxu0 0.0
      %4302 = vmatpush1.msra.mxu0 0.0
      %4303 = vmatprep.subr.mxu0 0.0
      %4304 = vmatpush1.msra.mxu0 0.0
      %4305 = vmatprep.subr.mxu0 0.0
      %4306 = vmatpush1.msra.mxu0 0.0
      %4307 = vmatprep.subr.mxu0 0.0
      %4308 = vmatpush1.msra.mxu0 0.0
      %4309 = vmatprep.subr.mxu0 0.0
      %4310 = vmatpush1.msra.mxu0 0.0
      %4311 = vmatprep.subr.mxu0 0.0
      %4312 = vmatpush1.msra.mxu0 0.0
      %4313 = vmatprep.subr.mxu0 0.0
      %4314 = vmatpush1.msra.mxu0 0.0
      %4315 = vmatprep.subr.mxu0 0.0
      %4316 = vmatpush1.msra.mxu0 0.0
      %4317 = vmatprep.subr.mxu0 0.0
      %4318 = vmatpush1.msra.mxu0 0.0
      %4319 = vmatprep.subr.mxu0 0.0
      %4320 = vmatpush1.msra.mxu0 0.0
      %4321 = vmatprep.subr.mxu0 0.0
      %4322 = vmatpush1.msra.mxu0 0.0
      %4323 = vmatprep.subr.mxu0 0.0
      %4324 = vmatpush1.msra.mxu0 0.0
      %4325 = vmatprep.subr.mxu0 0.0
      %4326 = vmatpush1.msra.mxu0 0.0
      %4327 = vmatprep.subr.mxu0 0.0
      %4328 = vmatpush1.msra.mxu0 0.0
      %4329 = vmatprep.subr.mxu0 0.0
      %4330 = vmatpush1.msra.mxu0 0.0
      %4331 = vmatprep.subr.mxu0 0.0
      %4332 = vmatpush1.msra.mxu0 0.0
      %4333 = vmatprep.subr.mxu0 0.0
      %4334 = vmatpush1.msra.mxu0 0.0
      %4335 = vmatprep.subr.mxu0 0.0
      %4336 = vmatpush1.msra.mxu0 0.0
      %4337 = vmatprep.subr.mxu0 0.0
      %4338 = vmatpush1.msra.mxu0 0.0
      %4339 = vmatprep.subr.mxu0 0.0
      %4340 = vmatpush1.msra.mxu0 0.0
      %4341 = vmatprep.mubr.f32.mxu0 0.0
      %4342 = vmatmul.mubr.f32.gmra.mrb[0].mxu0 %v4275
      %v4343 = vpop.f32.mrb[0].mxu0
      %v4344 = vadd.f32 0.0, %v4343
      %v4345 = vpop.f32.mrb[0].mxu0
      %4346 = vdwg.mxu0
      %v4347 = vmul.f32 %v4125, 0.5
      %v4348 = vmul.f32 %v4198, 0.5
      %v4349 = vmul.f32 %v4271, 0.5
      %v4350 = vmul.f32 %v4344, 0.5
      %v4352 = vsel %vm59, %v4051, 0
      %4354 = vmatprep.subr.mxu0 0.0
      %4355 = vmatpush1.msra.mxu0 %v3754
      %4356 = vmatprep.subr.mxu0 0.0
      %4357 = vmatpush1.msra.mxu0 0.0
      %4358 = vmatprep.subr.mxu0 0.0
      %4359 = vmatpush1.msra.mxu0 0.0
      %4360 = vmatprep.subr.mxu0 0.0
      %4361 = vmatpush1.msra.mxu0 0.0
      %4362 = vmatprep.subr.mxu0 0.0
      %4363 = vmatpush1.msra.mxu0 0.0
      %4364 = vmatprep.subr.mxu0 0.0
      %4365 = vmatpush1.msra.mxu0 0.0
      %4366 = vmatprep.subr.mxu0 0.0
      %4367 = vmatpush1.msra.mxu0 0.0
      %4368 = vmatprep.subr.mxu0 0.0
      %4369 = vmatpush1.msra.mxu0 0.0
      %4370 = vmatprep.subr.mxu0 0.0
      %4371 = vmatpush1.msra.mxu0 0.0
      %4372 = vmatprep.subr.mxu0 0.0
      %4373 = vmatpush1.msra.mxu0 0.0
      %4374 = vmatprep.subr.mxu0 0.0
      %4375 = vmatpush1.msra.mxu0 0.0
      %4376 = vmatprep.subr.mxu0 0.0
      %4377 = vmatpush1.msra.mxu0 0.0
      %4378 = vmatprep.subr.mxu0 0.0
      %4379 = vmatpush1.msra.mxu0 0.0
      %4380 = vmatprep.subr.mxu0 0.0
      %4381 = vmatpush1.msra.mxu0 0.0
      %4382 = vmatprep.subr.mxu0 0.0
      %4383 = vmatpush1.msra.mxu0 0.0
      %4384 = vmatprep.subr.mxu0 0.0
      %4385 = vmatpush1.msra.mxu0 0.0
      %4386 = vmatprep.subr.mxu0 0.0
      %4387 = vmatpush1.msra.mxu0 0.0
      %4388 = vmatprep.subr.mxu0 0.0
      %4389 = vmatpush1.msra.mxu0 0.0
      %4390 = vmatprep.subr.mxu0 0.0
      %4391 = vmatpush1.msra.mxu0 0.0
      %4392 = vmatprep.subr.mxu0 0.0
      %4393 = vmatpush1.msra.mxu0 0.0
      %4394 = vmatprep.subr.mxu0 0.0
      %4395 = vmatpush1.msra.mxu0 0.0
      %4396 = vmatprep.subr.mxu0 0.0
      %4397 = vmatpush1.msra.mxu0 0.0
      %4398 = vmatprep.subr.mxu0 0.0
      %4399 = vmatpush1.msra.mxu0 0.0
      %4400 = vmatprep.subr.mxu0 0.0
      %4401 = vmatpush1.msra.mxu0 0.0
      %4402 = vmatprep.subr.mxu0 0.0
      %4403 = vmatpush1.msra.mxu0 0.0
      %4404 = vmatprep.subr.mxu0 0.0
      %4405 = vmatpush1.msra.mxu0 0.0
      %4406 = vmatprep.subr.mxu0 0.0
      %4407 = vmatpush1.msra.mxu0 0.0
      %4408 = vmatprep.subr.mxu0 0.0
      %4409 = vmatpush1.msra.mxu0 0.0
      %4410 = vmatprep.subr.mxu0 0.0
      %4411 = vmatpush1.msra.mxu0 0.0
      %4412 = vmatprep.subr.mxu0 0.0
      %4413 = vmatpush1.msra.mxu0 0.0
      %4414 = vmatprep.subr.mxu0 0.0
      %4415 = vmatpush1.msra.mxu0 0.0
      %4416 = vmatprep.subr.mxu0 0.0
      %4417 = vmatpush1.msra.mxu0 0.0
      %4418 = vmatprep.mubr.f32.mxu0 0.0
      %4419 = vmatmul.mubr.f32.gmra.mrb[0].mxu0 %v4352
      %v4420 = vpop.f32.mrb[0].mxu0
      %v4421 = vadd.f32 0.0, %v4420
      %v4422 = vpop.f32.mrb[0].mxu0
      %4423 = vdwg.mxu0
      %v4425 = vsel %vm59, %v4052, 0
      %4427 = vmatprep.subr.mxu0 0.0
      %4428 = vmatpush1.msra.mxu0 %v3755
      %4429 = vmatprep.subr.mxu0 0.0
      %4430 = vmatpush1.msra.mxu0 0.0
      %4431 = vmatprep.subr.mxu0 0.0
      %4432 = vmatpush1.msra.mxu0 0.0
      %4433 = vmatprep.subr.mxu0 0.0
      %4434 = vmatpush1.msra.mxu0 0.0
      %4435 = vmatprep.subr.mxu0 0.0
      %4436 = vmatpush1.msra.mxu0 0.0
      %4437 = vmatprep.subr.mxu0 0.0
      %4438 = vmatpush1.msra.mxu0 0.0
      %4439 = vmatprep.subr.mxu0 0.0
      %4440 = vmatpush1.msra.mxu0 0.0
      %4441 = vmatprep.subr.mxu0 0.0
      %4442 = vmatpush1.msra.mxu0 0.0
      %4443 = vmatprep.subr.mxu0 0.0
      %4444 = vmatpush1.msra.mxu0 0.0
      %4445 = vmatprep.subr.mxu0 0.0
      %4446 = vmatpush1.msra.mxu0 0.0
      %4447 = vmatprep.subr.mxu0 0.0
      %4448 = vmatpush1.msra.mxu0 0.0
      %4449 = vmatprep.subr.mxu0 0.0
      %4450 = vmatpush1.msra.mxu0 0.0
      %4451 = vmatprep.subr.mxu0 0.0
      %4452 = vmatpush1.msra.mxu0 0.0
      %4453 = vmatprep.subr.mxu0 0.0
      %4454 = vmatpush1.msra.mxu0 0.0
      %4455 = vmatprep.subr.mxu0 0.0
      %4456 = vmatpush1.msra.mxu0 0.0
      %4457 = vmatprep.subr.mxu0 0.0
      %4458 = vmatpush1.msra.mxu0 0.0
      %4459 = vmatprep.subr.mxu0 0.0
      %4460 = vmatpush1.msra.mxu0 0.0
      %4461 = vmatprep.subr.mxu0 0.0
      %4462 = vmatpush1.msra.mxu0 0.0
      %4463 = vmatprep.subr.mxu0 0.0
      %4464 = vmatpush1.msra.mxu0 0.0
      %4465 = vmatprep.subr.mxu0 0.0
      %4466 = vmatpush1.msra.mxu0 0.0
      %4467 = vmatprep.subr.mxu0 0.0
      %4468 = vmatpush1.msra.mxu0 0.0
      %4469 = vmatprep.subr.mxu0 0.0
      %4470 = vmatpush1.msra.mxu0 0.0
      %4471 = vmatprep.subr.mxu0 0.0
      %4472 = vmatpush1.msra.mxu0 0.0
      %4473 = vmatprep.subr.mxu0 0.0
      %4474 = vmatpush1.msra.mxu0 0.0
      %4475 = vmatprep.subr.mxu0 0.0
      %4476 = vmatpush1.msra.mxu0 0.0
      %4477 = vmatprep.subr.mxu0 0.0
      %4478 = vmatpush1.msra.mxu0 0.0
      %4479 = vmatprep.subr.mxu0 0.0
      %4480 = vmatpush1.msra.mxu0 0.0
      %4481 = vmatprep.subr.mxu0 0.0
      %4482 = vmatpush1.msra.mxu0 0.0
      %4483 = vmatprep.subr.mxu0 0.0
      %4484 = vmatpush1.msra.mxu0 0.0
      %4485 = vmatprep.subr.mxu0 0.0
      %4486 = vmatpush1.msra.mxu0 0.0
      %4487 = vmatprep.subr.mxu0 0.0
      %4488 = vmatpush1.msra.mxu0 0.0
      %4489 = vmatprep.subr.mxu0 0.0
      %4490 = vmatpush1.msra.mxu0 0.0
      %4491 = vmatprep.mubr.f32.mxu0 0.0
      %4492 = vmatmul.mubr.f32.gmra.mrb[0].mxu0 %v4425
      %v4493 = vpop.f32.mrb[0].mxu0
      %v4494 = vadd.f32 0.0, %v4493
      %v4495 = vpop.f32.mrb[0].mxu0
      %4496 = vdwg.mxu0
      %v4498 = vsel %vm59, %v4053, 0
      %4500 = vmatprep.subr.mxu0 0.0
      %4501 = vmatpush1.msra.mxu0 %v3756
      %4502 = vmatprep.subr.mxu0 0.0
      %4503 = vmatpush1.msra.mxu0 0.0
      %4504 = vmatprep.subr.mxu0 0.0
      %4505 = vmatpush1.msra.mxu0 0.0
      %4506 = vmatprep.subr.mxu0 0.0
      %4507 = vmatpush1.msra.mxu0 0.0
      %4508 = vmatprep.subr.mxu0 0.0
      %4509 = vmatpush1.msra.mxu0 0.0
      %4510 = vmatprep.subr.mxu0 0.0
      %4511 = vmatpush1.msra.mxu0 0.0
      %4512 = vmatprep.subr.mxu0 0.0
      %4513 = vmatpush1.msra.mxu0 0.0
      %4514 = vmatprep.subr.mxu0 0.0
      %4515 = vmatpush1.msra.mxu0 0.0
      %4516 = vmatprep.subr.mxu0 0.0
      %4517 = vmatpush1.msra.mxu0 0.0
      %4518 = vmatprep.subr.mxu0 0.0
      %4519 = vmatpush1.msra.mxu0 0.0
      %4520 = vmatprep.subr.mxu0 0.0
      %4521 = vmatpush1.msra.mxu0 0.0
      %4522 = vmatprep.subr.mxu0 0.0
      %4523 = vmatpush1.msra.mxu0 0.0
      %4524 = vmatprep.subr.mxu0 0.0
      %4525 = vmatpush1.msra.mxu0 0.0
      %4526 = vmatprep.subr.mxu0 0.0
      %4527 = vmatpush1.msra.mxu0 0.0
      %4528 = vmatprep.subr.mxu0 0.0
      %4529 = vmatpush1.msra.mxu0 0.0
      %4530 = vmatprep.subr.mxu0 0.0
      %4531 = vmatpush1.msra.mxu0 0.0
      %4532 = vmatprep.subr.mxu0 0.0
      %4533 = vmatpush1.msra.mxu0 0.0
      %4534 = vmatprep.subr.mxu0 0.0
      %4535 = vmatpush1.msra.mxu0 0.0
      %4536 = vmatprep.subr.mxu0 0.0
      %4537 = vmatpush1.msra.mxu0 0.0
      %4538 = vmatprep.subr.mxu0 0.0
      %4539 = vmatpush1.msra.mxu0 0.0
      %4540 = vmatprep.subr.mxu0 0.0
      %4541 = vmatpush1.msra.mxu0 0.0
      %4542 = vmatprep.subr.mxu0 0.0
      %4543 = vmatpush1.msra.mxu0 0.0
      %4544 = vmatprep.subr.mxu0 0.0
      %4545 = vmatpush1.msra.mxu0 0.0
      %4546 = vmatprep.subr.mxu0 0.0
      %4547 = vmatpush1.msra.mxu0 0.0
      %4548 = vmatprep.subr.mxu0 0.0
      %4549 = vmatpush1.msra.mxu0 0.0
      %4550 = vmatprep.subr.mxu0 0.0
      %4551 = vmatpush1.msra.mxu0 0.0
      %4552 = vmatprep.subr.mxu0 0.0
      %4553 = vmatpush1.msra.mxu0 0.0
      %4554 = vmatprep.subr.mxu0 0.0
      %4555 = vmatpush1.msra.mxu0 0.0
      %4556 = vmatprep.subr.mxu0 0.0
      %4557 = vmatpush1.msra.mxu0 0.0
      %4558 = vmatprep.subr.mxu0 0.0
      %4559 = vmatpush1.msra.mxu0 0.0
      %4560 = vmatprep.subr.mxu0 0.0
      %4561 = vmatpush1.msra.mxu0 0.0
      %4562 = vmatprep.subr.mxu0 0.0
      %4563 = vmatpush1.msra.mxu0 0.0
      %4564 = vmatprep.mubr.f32.mxu0 0.0
      %4565 = vmatmul.mubr.f32.gmra.mrb[0].mxu0 %v4498
      %v4566 = vpop.f32.mrb[0].mxu0
      %v4567 = vadd.f32 0.0, %v4566
      %v4568 = vpop.f32.mrb[0].mxu0
      %4569 = vdwg.mxu0
      %v4571 = vsel %vm59, %v4054, 0
      %4573 = vmatprep.subr.mxu0 0.0
      %4574 = vmatpush1.msra.mxu0 %v3757
      %4575 = vmatprep.subr.mxu0 0.0
      %4576 = vmatpush1.msra.mxu0 0.0
      %4577 = vmatprep.subr.mxu0 0.0
      %4578 = vmatpush1.msra.mxu0 0.0
      %4579 = vmatprep.subr.mxu0 0.0
      %4580 = vmatpush1.msra.mxu0 0.0
      %4581 = vmatprep.subr.mxu0 0.0
      %4582 = vmatpush1.msra.mxu0 0.0
      %4583 = vmatprep.subr.mxu0 0.0
      %4584 = vmatpush1.msra.mxu0 0.0
      %4585 = vmatprep.subr.mxu0 0.0
      %4586 = vmatpush1.msra.mxu0 0.0
      %4587 = vmatprep.subr.mxu0 0.0
      %4588 = vmatpush1.msra.mxu0 0.0
      %4589 = vmatprep.subr.mxu0 0.0
      %4590 = vmatpush1.msra.mxu0 0.0
      %4591 = vmatprep.subr.mxu0 0.0
      %4592 = vmatpush1.msra.mxu0 0.0
      %4593 = vmatprep.subr.mxu0 0.0
      %4594 = vmatpush1.msra.mxu0 0.0
      %4595 = vmatprep.subr.mxu0 0.0
      %4596 = vmatpush1.msra.mxu0 0.0
      %4597 = vmatprep.subr.mxu0 0.0
      %4598 = vmatpush1.msra.mxu0 0.0
      %4599 = vmatprep.subr.mxu0 0.0
      %4600 = vmatpush1.msra.mxu0 0.0
      %4601 = vmatprep.subr.mxu0 0.0
      %4602 = vmatpush1.msra.mxu0 0.0
      %4603 = vmatprep.subr.mxu0 0.0
      %4604 = vmatpush1.msra.mxu0 0.0
      %4605 = vmatprep.subr.mxu0 0.0
      %4606 = vmatpush1.msra.mxu0 0.0
      %4607 = vmatprep.subr.mxu0 0.0
      %4608 = vmatpush1.msra.mxu0 0.0
      %4609 = vmatprep.subr.mxu0 0.0
      %4610 = vmatpush1.msra.mxu0 0.0
      %4611 = vmatprep.subr.mxu0 0.0
      %4612 = vmatpush1.msra.mxu0 0.0
      %4613 = vmatprep.subr.mxu0 0.0
      %4614 = vmatpush1.msra.mxu0 0.0
      %4615 = vmatprep.subr.mxu0 0.0
      %4616 = vmatpush1.msra.mxu0 0.0
      %4617 = vmatprep.subr.mxu0 0.0
      %4618 = vmatpush1.msra.mxu0 0.0
      %4619 = vmatprep.subr.mxu0 0.0
      %4620 = vmatpush1.msra.mxu0 0.0
      %4621 = vmatprep.subr.mxu0 0.0
      %4622 = vmatpush1.msra.mxu0 0.0
      %4623 = vmatprep.subr.mxu0 0.0
      %4624 = vmatpush1.msra.mxu0 0.0
      %4625 = vmatprep.subr.mxu0 0.0
      %4626 = vmatpush1.msra.mxu0 0.0
      %4627 = vmatprep.subr.mxu0 0.0
      %4628 = vmatpush1.msra.mxu0 0.0
      %4629 = vmatprep.subr.mxu0 0.0
      %4630 = vmatpush1.msra.mxu0 0.0
      %4631 = vmatprep.subr.mxu0 0.0
      %4632 = vmatpush1.msra.mxu0 0.0
      %4633 = vmatprep.subr.mxu0 0.0
      %4634 = vmatpush1.msra.mxu0 0.0
      %4635 = vmatprep.subr.mxu0 0.0
      %4636 = vmatpush1.msra.mxu0 0.0
      %4637 = vmatprep.mubr.f32.mxu0 0.0
      %4638 = vmatmul.mubr.f32.gmra.mrb[0].mxu0 %v4571
      %v4639 = vpop.f32.mrb[0].mxu0
      %v4640 = vadd.f32 0.0, %v4639
      %v4641 = vpop.f32.mrb[0].mxu0
      %4642 = vdwg.mxu0
      %v4643 = vmul.f32 %v4421, 0.5
      %v4644 = vmul.f32 %v4494, 0.5
      %v4645 = vmul.f32 %v4567, 0.5
      %v4646 = vmul.f32 %v4640, 0.5
    $region54: #{tpu_custom_call.1} parent=1 // loop_footer
      %s3749 = sadd.s32 1, %s3745
    $region55: #{tpu_custom_call.1} parent=1 // loop_footer_branch
      %3744 = sbr.rel target = $region51
    $region56: #{tpu_custom_call.1} parent=1 // loop_exit
      _
    loop: start=0, step=1, limit=8
    $region57: #{tpu_custom_call.1} parent=1 // loop_pre_header
      _
    $region58: #{tpu_custom_call.1} parent=1 // loop_header
      %s4648 = sphi 0, %s4652
      %p4649 = scmp.ge.s32.totalorder %s4648, 8
      %v4653 = vphi %v3750, %v5250
      %v4654 = vphi %v3751, %v5251
      %v4655 = vphi %v3752, %v5252
      %v4656 = vphi %v3753, %v5253
      %v4657 = vphi %v54, %v5546
      %v4658 = vphi %v54, %v5547
      %v4659 = vphi %v54, %v5548
      %v4660 = vphi %v54, %v5549
    $region59: #{tpu_custom_call.1} parent=1 // loop_header_branch
      %4651 = sbr.rel (%p4649) target = $region63
    $region60: #{tpu_custom_call.1} parent=1 // loop_body
      %v4661 = vmul.f32 %v54, 3.0
      %v4663 = vsel %vm59, %v4657, 0
      %4665 = vmatprep.subr.mxu0 0.0
      %4666 = vmatpush1.msra.mxu0 %v4653
      %4667 = vmatprep.subr.mxu0 0.0
      %4668 = vmatpush1.msra.mxu0 0.0
      %4669 = vmatprep.subr.mxu0 0.0
      %4670 = vmatpush1.msra.mxu0 0.0
      %4671 = vmatprep.subr.mxu0 0.0
      %4672 = vmatpush1.msra.mxu0 0.0
      %4673 = vmatprep.subr.mxu0 0.0
      %4674 = vmatpush1.msra.mxu0 0.0
      %4675 = vmatprep.subr.mxu0 0.0
      %4676 = vmatpush1.msra.mxu0 0.0
      %4677 = vmatprep.subr.mxu0 0.0
      %4678 = vmatpush1.msra.mxu0 0.0
      %4679 = vmatprep.subr.mxu0 0.0
      %4680 = vmatpush1.msra.mxu0 0.0
      %4681 = vmatprep.subr.mxu0 0.0
      %4682 = vmatpush1.msra.mxu0 0.0
      %4683 = vmatprep.subr.mxu0 0.0
      %4684 = vmatpush1.msra.mxu0 0.0
      %4685 = vmatprep.subr.mxu0 0.0
      %4686 = vmatpush1.msra.mxu0 0.0
      %4687 = vmatprep.subr.mxu0 0.0
      %4688 = vmatpush1.msra.mxu0 0.0
      %4689 = vmatprep.subr.mxu0 0.0
      %4690 = vmatpush1.msra.mxu0 0.0
      %4691 = vmatprep.subr.mxu0 0.0
      %4692 = vmatpush1.msra.mxu0 0.0
      %4693 = vmatprep.subr.mxu0 0.0
      %4694 = vmatpush1.msra.mxu0 0.0
      %4695 = vmatprep.subr.mxu0 0.0
      %4696 = vmatpush1.msra.mxu0 0.0
      %4697 = vmatprep.subr.mxu0 0.0
      %4698 = vmatpush1.msra.mxu0 0.0
      %4699 = vmatprep.subr.mxu0 0.0
      %4700 = vmatpush1.msra.mxu0 0.0
      %4701 = vmatprep.subr.mxu0 0.0
      %4702 = vmatpush1.msra.mxu0 0.0
      %4703 = vmatprep.subr.mxu0 0.0
      %4704 = vmatpush1.msra.mxu0 0.0
      %4705 = vmatprep.subr.mxu0 0.0
      %4706 = vmatpush1.msra.mxu0 0.0
      %4707 = vmatprep.subr.mxu0 0.0
      %4708 = vmatpush1.msra.mxu0 0.0
      %4709 = vmatprep.subr.mxu0 0.0
      %4710 = vmatpush1.msra.mxu0 0.0
      %4711 = vmatprep.subr.mxu0 0.0
      %4712 = vmatpush1.msra.mxu0 0.0
      %4713 = vmatprep.subr.mxu0 0.0
      %4714 = vmatpush1.msra.mxu0 0.0
      %4715 = vmatprep.subr.mxu0 0.0
      %4716 = vmatpush1.msra.mxu0 0.0
      %4717 = vmatprep.subr.mxu0 0.0
      %4718 = vmatpush1.msra.mxu0 0.0
      %4719 = vmatprep.subr.mxu0 0.0
      %4720 = vmatpush1.msra.mxu0 0.0
      %4721 = vmatprep.subr.mxu0 0.0
      %4722 = vmatpush1.msra.mxu0 0.0
      %4723 = vmatprep.subr.mxu0 0.0
      %4724 = vmatpush1.msra.mxu0 0.0
      %4725 = vmatprep.subr.mxu0 0.0
      %4726 = vmatpush1.msra.mxu0 0.0
      %4727 = vmatprep.subr.mxu0 0.0
      %4728 = vmatpush1.msra.mxu0 0.0
      %4729 = vmatprep.mubr.f32.mxu0 0.0
      %4730 = vmatmul.mubr.f32.gmra.mrb[0].mxu0 %v4663
      %v4731 = vpop.f32.mrb[0].mxu0
      %v4732 = vadd.f32 0.0, %v4731
      %v4733 = vpop.f32.mrb[0].mxu0
      %4734 = vdwg.mxu0
      %v4736 = vsel %vm59, %v4658, 0
      %4738 = vmatprep.subr.mxu0 0.0
      %4739 = vmatpush1.msra.mxu0 %v4654
      %4740 = vmatprep.subr.mxu0 0.0
      %4741 = vmatpush1.msra.mxu0 0.0
      %4742 = vmatprep.subr.mxu0 0.0
      %4743 = vmatpush1.msra.mxu0 0.0
      %4744 = vmatprep.subr.mxu0 0.0
      %4745 = vmatpush1.msra.mxu0 0.0
      %4746 = vmatprep.subr.mxu0 0.0
      %4747 = vmatpush1.msra.mxu0 0.0
      %4748 = vmatprep.subr.mxu0 0.0
      %4749 = vmatpush1.msra.mxu0 0.0
      %4750 = vmatprep.subr.mxu0 0.0
      %4751 = vmatpush1.msra.mxu0 0.0
      %4752 = vmatprep.subr.mxu0 0.0
      %4753 = vmatpush1.msra.mxu0 0.0
      %4754 = vmatprep.subr.mxu0 0.0
      %4755 = vmatpush1.msra.mxu0 0.0
      %4756 = vmatprep.subr.mxu0 0.0
      %4757 = vmatpush1.msra.mxu0 0.0
      %4758 = vmatprep.subr.mxu0 0.0
      %4759 = vmatpush1.msra.mxu0 0.0
      %4760 = vmatprep.subr.mxu0 0.0
      %4761 = vmatpush1.msra.mxu0 0.0
      %4762 = vmatprep.subr.mxu0 0.0
      %4763 = vmatpush1.msra.mxu0 0.0
      %4764 = vmatprep.subr.mxu0 0.0
      %4765 = vmatpush1.msra.mxu0 0.0
      %4766 = vmatprep.subr.mxu0 0.0
      %4767 = vmatpush1.msra.mxu0 0.0
      %4768 = vmatprep.subr.mxu0 0.0
      %4769 = vmatpush1.msra.mxu0 0.0
      %4770 = vmatprep.subr.mxu0 0.0
      %4771 = vmatpush1.msra.mxu0 0.0
      %4772 = vmatprep.subr.mxu0 0.0
      %4773 = vmatpush1.msra.mxu0 0.0
      %4774 = vmatprep.subr.mxu0 0.0
      %4775 = vmatpush1.msra.mxu0 0.0
      %4776 = vmatprep.subr.mxu0 0.0
      %4777 = vmatpush1.msra.mxu0 0.0
      %4778 = vmatprep.subr.mxu0 0.0
      %4779 = vmatpush1.msra.mxu0 0.0
      %4780 = vmatprep.subr.mxu0 0.0
      %4781 = vmatpush1.msra.mxu0 0.0
      %4782 = vmatprep.subr.mxu0 0.0
      %4783 = vmatpush1.msra.mxu0 0.0
      %4784 = vmatprep.subr.mxu0 0.0
      %4785 = vmatpush1.msra.mxu0 0.0
      %4786 = vmatprep.subr.mxu0 0.0
      %4787 = vmatpush1.msra.mxu0 0.0
      %4788 = vmatprep.subr.mxu0 0.0
      %4789 = vmatpush1.msra.mxu0 0.0
      %4790 = vmatprep.subr.mxu0 0.0
      %4791 = vmatpush1.msra.mxu0 0.0
      %4792 = vmatprep.subr.mxu0 0.0
      %4793 = vmatpush1.msra.mxu0 0.0
      %4794 = vmatprep.subr.mxu0 0.0
      %4795 = vmatpush1.msra.mxu0 0.0
      %4796 = vmatprep.subr.mxu0 0.0
      %4797 = vmatpush1.msra.mxu0 0.0
      %4798 = vmatprep.subr.mxu0 0.0
      %4799 = vmatpush1.msra.mxu0 0.0
      %4800 = vmatprep.subr.mxu0 0.0
      %4801 = vmatpush1.msra.mxu0 0.0
      %4802 = vmatprep.mubr.f32.mxu0 0.0
      %4803 = vmatmul.mubr.f32.gmra.mrb[0].mxu0 %v4736
      %v4804 = vpop.f32.mrb[0].mxu0
      %v4805 = vadd.f32 0.0, %v4804
      %v4806 = vpop.f32.mrb[0].mxu0
      %4807 = vdwg.mxu0
      %v4809 = vsel %vm59, %v4659, 0
      %4811 = vmatprep.subr.mxu0 0.0
      %4812 = vmatpush1.msra.mxu0 %v4655
      %4813 = vmatprep.subr.mxu0 0.0
      %4814 = vmatpush1.msra.mxu0 0.0
      %4815 = vmatprep.subr.mxu0 0.0
      %4816 = vmatpush1.msra.mxu0 0.0
      %4817 = vmatprep.subr.mxu0 0.0
      %4818 = vmatpush1.msra.mxu0 0.0
      %4819 = vmatprep.subr.mxu0 0.0
      %4820 = vmatpush1.msra.mxu0 0.0
      %4821 = vmatprep.subr.mxu0 0.0
      %4822 = vmatpush1.msra.mxu0 0.0
      %4823 = vmatprep.subr.mxu0 0.0
      %4824 = vmatpush1.msra.mxu0 0.0
      %4825 = vmatprep.subr.mxu0 0.0
      %4826 = vmatpush1.msra.mxu0 0.0
      %4827 = vmatprep.subr.mxu0 0.0
      %4828 = vmatpush1.msra.mxu0 0.0
      %4829 = vmatprep.subr.mxu0 0.0
      %4830 = vmatpush1.msra.mxu0 0.0
      %4831 = vmatprep.subr.mxu0 0.0
      %4832 = vmatpush1.msra.mxu0 0.0
      %4833 = vmatprep.subr.mxu0 0.0
      %4834 = vmatpush1.msra.mxu0 0.0
      %4835 = vmatprep.subr.mxu0 0.0
      %4836 = vmatpush1.msra.mxu0 0.0
      %4837 = vmatprep.subr.mxu0 0.0
      %4838 = vmatpush1.msra.mxu0 0.0
      %4839 = vmatprep.subr.mxu0 0.0
      %4840 = vmatpush1.msra.mxu0 0.0
      %4841 = vmatprep.subr.mxu0 0.0
      %4842 = vmatpush1.msra.mxu0 0.0
      %4843 = vmatprep.subr.mxu0 0.0
      %4844 = vmatpush1.msra.mxu0 0.0
      %4845 = vmatprep.subr.mxu0 0.0
      %4846 = vmatpush1.msra.mxu0 0.0
      %4847 = vmatprep.subr.mxu0 0.0
      %4848 = vmatpush1.msra.mxu0 0.0
      %4849 = vmatprep.subr.mxu0 0.0
      %4850 = vmatpush1.msra.mxu0 0.0
      %4851 = vmatprep.subr.mxu0 0.0
      %4852 = vmatpush1.msra.mxu0 0.0
      %4853 = vmatprep.subr.mxu0 0.0
      %4854 = vmatpush1.msra.mxu0 0.0
      %4855 = vmatprep.subr.mxu0 0.0
      %4856 = vmatpush1.msra.mxu0 0.0
      %4857 = vmatprep.subr.mxu0 0.0
      %4858 = vmatpush1.msra.mxu0 0.0
      %4859 = vmatprep.subr.mxu0 0.0
      %4860 = vmatpush1.msra.mxu0 0.0
      %4861 = vmatprep.subr.mxu0 0.0
      %4862 = vmatpush1.msra.mxu0 0.0
      %4863 = vmatprep.subr.mxu0 0.0
      %4864 = vmatpush1.msra.mxu0 0.0
      %4865 = vmatprep.subr.mxu0 0.0
      %4866 = vmatpush1.msra.mxu0 0.0
      %4867 = vmatprep.subr.mxu0 0.0
      %4868 = vmatpush1.msra.mxu0 0.0
      %4869 = vmatprep.subr.mxu0 0.0
      %4870 = vmatpush1.msra.mxu0 0.0
      %4871 = vmatprep.subr.mxu0 0.0
      %4872 = vmatpush1.msra.mxu0 0.0
      %4873 = vmatprep.subr.mxu0 0.0
      %4874 = vmatpush1.msra.mxu0 0.0
      %4875 = vmatprep.mubr.f32.mxu0 0.0
      %4876 = vmatmul.mubr.f32.gmra.mrb[0].mxu0 %v4809
      %v4877 = vpop.f32.mrb[0].mxu0
      %v4878 = vadd.f32 0.0, %v4877
      %v4879 = vpop.f32.mrb[0].mxu0
      %4880 = vdwg.mxu0
      %v4882 = vsel %vm59, %v4660, 0
      %4884 = vmatprep.subr.mxu0 0.0
      %4885 = vmatpush1.msra.mxu0 %v4656
      %4886 = vmatprep.subr.mxu0 0.0
      %4887 = vmatpush1.msra.mxu0 0.0
      %4888 = vmatprep.subr.mxu0 0.0
      %4889 = vmatpush1.msra.mxu0 0.0
      %4890 = vmatprep.subr.mxu0 0.0
      %4891 = vmatpush1.msra.mxu0 0.0
      %4892 = vmatprep.subr.mxu0 0.0
      %4893 = vmatpush1.msra.mxu0 0.0
      %4894 = vmatprep.subr.mxu0 0.0
      %4895 = vmatpush1.msra.mxu0 0.0
      %4896 = vmatprep.subr.mxu0 0.0
      %4897 = vmatpush1.msra.mxu0 0.0
      %4898 = vmatprep.subr.mxu0 0.0
      %4899 = vmatpush1.msra.mxu0 0.0
      %4900 = vmatprep.subr.mxu0 0.0
      %4901 = vmatpush1.msra.mxu0 0.0
      %4902 = vmatprep.subr.mxu0 0.0
      %4903 = vmatpush1.msra.mxu0 0.0
      %4904 = vmatprep.subr.mxu0 0.0
      %4905 = vmatpush1.msra.mxu0 0.0
      %4906 = vmatprep.subr.mxu0 0.0
      %4907 = vmatpush1.msra.mxu0 0.0
      %4908 = vmatprep.subr.mxu0 0.0
      %4909 = vmatpush1.msra.mxu0 0.0
      %4910 = vmatprep.subr.mxu0 0.0
      %4911 = vmatpush1.msra.mxu0 0.0
      %4912 = vmatprep.subr.mxu0 0.0
      %4913 = vmatpush1.msra.mxu0 0.0
      %4914 = vmatprep.subr.mxu0 0.0
      %4915 = vmatpush1.msra.mxu0 0.0
      %4916 = vmatprep.subr.mxu0 0.0
      %4917 = vmatpush1.msra.mxu0 0.0
      %4918 = vmatprep.subr.mxu0 0.0
      %4919 = vmatpush1.msra.mxu0 0.0
      %4920 = vmatprep.subr.mxu0 0.0
      %4921 = vmatpush1.msra.mxu0 0.0
      %4922 = vmatprep.subr.mxu0 0.0
      %4923 = vmatpush1.msra.mxu0 0.0
      %4924 = vmatprep.subr.mxu0 0.0
      %4925 = vmatpush1.msra.mxu0 0.0
      %4926 = vmatprep.subr.mxu0 0.0
      %4927 = vmatpush1.msra.mxu0 0.0
      %4928 = vmatprep.subr.mxu0 0.0
      %4929 = vmatpush1.msra.mxu0 0.0
      %4930 = vmatprep.subr.mxu0 0.0
      %4931 = vmatpush1.msra.mxu0 0.0
      %4932 = vmatprep.subr.mxu0 0.0
      %4933 = vmatpush1.msra.mxu0 0.0
      %4934 = vmatprep.subr.mxu0 0.0
      %4935 = vmatpush1.msra.mxu0 0.0
      %4936 = vmatprep.subr.mxu0 0.0
      %4937 = vmatpush1.msra.mxu0 0.0
      %4938 = vmatprep.subr.mxu0 0.0
      %4939 = vmatpush1.msra.mxu0 0.0
      %4940 = vmatprep.subr.mxu0 0.0
      %4941 = vmatpush1.msra.mxu0 0.0
      %4942 = vmatprep.subr.mxu0 0.0
      %4943 = vmatpush1.msra.mxu0 0.0
      %4944 = vmatprep.subr.mxu0 0.0
      %4945 = vmatpush1.msra.mxu0 0.0
      %4946 = vmatprep.subr.mxu0 0.0
      %4947 = vmatpush1.msra.mxu0 0.0
      %4948 = vmatprep.mubr.f32.mxu0 0.0
      %4949 = vmatmul.mubr.f32.gmra.mrb[0].mxu0 %v4882
      %v4950 = vpop.f32.mrb[0].mxu0
      %v4951 = vadd.f32 0.0, %v4950
      %v4952 = vpop.f32.mrb[0].mxu0
      %4953 = vdwg.mxu0
      %v4954 = vsub.f32 %v4661, %v4732
      %v4955 = vsub.f32 %v4661, %v4805
      %v4956 = vsub.f32 %v4661, %v4878
      %v4957 = vsub.f32 %v4661, %v4951
      %v4959 = vsel %vm59, %v4653, 0
      %4961 = vmatprep.subr.mxu0 0.0
      %4962 = vmatpush1.msra.mxu0 %v4954
      %4963 = vmatprep.subr.mxu0 0.0
      %4964 = vmatpush1.msra.mxu0 0.0
      %4965 = vmatprep.subr.mxu0 0.0
      %4966 = vmatpush1.msra.mxu0 0.0
      %4967 = vmatprep.subr.mxu0 0.0
      %4968 = vmatpush1.msra.mxu0 0.0
      %4969 = vmatprep.subr.mxu0 0.0
      %4970 = vmatpush1.msra.mxu0 0.0
      %4971 = vmatprep.subr.mxu0 0.0
      %4972 = vmatpush1.msra.mxu0 0.0
      %4973 = vmatprep.subr.mxu0 0.0
      %4974 = vmatpush1.msra.mxu0 0.0
      %4975 = vmatprep.subr.mxu0 0.0
      %4976 = vmatpush1.msra.mxu0 0.0
      %4977 = vmatprep.subr.mxu0 0.0
      %4978 = vmatpush1.msra.mxu0 0.0
      %4979 = vmatprep.subr.mxu0 0.0
      %4980 = vmatpush1.msra.mxu0 0.0
      %4981 = vmatprep.subr.mxu0 0.0
      %4982 = vmatpush1.msra.mxu0 0.0
      %4983 = vmatprep.subr.mxu0 0.0
      %4984 = vmatpush1.msra.mxu0 0.0
      %4985 = vmatprep.subr.mxu0 0.0
      %4986 = vmatpush1.msra.mxu0 0.0
      %4987 = vmatprep.subr.mxu0 0.0
      %4988 = vmatpush1.msra.mxu0 0.0
      %4989 = vmatprep.subr.mxu0 0.0
      %4990 = vmatpush1.msra.mxu0 0.0
      %4991 = vmatprep.subr.mxu0 0.0
      %4992 = vmatpush1.msra.mxu0 0.0
      %4993 = vmatprep.subr.mxu0 0.0
      %4994 = vmatpush1.msra.mxu0 0.0
      %4995 = vmatprep.subr.mxu0 0.0
      %4996 = vmatpush1.msra.mxu0 0.0
      %4997 = vmatprep.subr.mxu0 0.0
      %4998 = vmatpush1.msra.mxu0 0.0
      %4999 = vmatprep.subr.mxu0 0.0
      %5000 = vmatpush1.msra.mxu0 0.0
      %5001 = vmatprep.subr.mxu0 0.0
      %5002 = vmatpush1.msra.mxu0 0.0
      %5003 = vmatprep.subr.mxu0 0.0
      %5004 = vmatpush1.msra.mxu0 0.0
      %5005 = vmatprep.subr.mxu0 0.0
      %5006 = vmatpush1.msra.mxu0 0.0
      %5007 = vmatprep.subr.mxu0 0.0
      %5008 = vmatpush1.msra.mxu0 0.0
      %5009 = vmatprep.subr.mxu0 0.0
      %5010 = vmatpush1.msra.mxu0 0.0
      %5011 = vmatprep.subr.mxu0 0.0
      %5012 = vmatpush1.msra.mxu0 0.0
      %5013 = vmatprep.subr.mxu0 0.0
      %5014 = vmatpush1.msra.mxu0 0.0
      %5015 = vmatprep.subr.mxu0 0.0
      %5016 = vmatpush1.msra.mxu0 0.0
      %5017 = vmatprep.subr.mxu0 0.0
      %5018 = vmatpush1.msra.mxu0 0.0
      %5019 = vmatprep.subr.mxu0 0.0
      %5020 = vmatpush1.msra.mxu0 0.0
      %5021 = vmatprep.subr.mxu0 0.0
      %5022 = vmatpush1.msra.mxu0 0.0
      %5023 = vmatprep.subr.mxu0 0.0
      %5024 = vmatpush1.msra.mxu0 0.0
      %5025 = vmatprep.mubr.f32.mxu0 0.0
      %5026 = vmatmul.mubr.f32.gmra.mrb[0].mxu0 %v4959
      %v5027 = vpop.f32.mrb[0].mxu0
      %v5028 = vadd.f32 0.0, %v5027
      %v5029 = vpop.f32.mrb[0].mxu0
      %5030 = vdwg.mxu0
      %v5032 = vsel %vm59, %v4654, 0
      %5034 = vmatprep.subr.mxu0 0.0
      %5035 = vmatpush1.msra.mxu0 %v4955
      %5036 = vmatprep.subr.mxu0 0.0
      %5037 = vmatpush1.msra.mxu0 0.0
      %5038 = vmatprep.subr.mxu0 0.0
      %5039 = vmatpush1.msra.mxu0 0.0
      %5040 = vmatprep.subr.mxu0 0.0
      %5041 = vmatpush1.msra.mxu0 0.0
      %5042 = vmatprep.subr.mxu0 0.0
      %5043 = vmatpush1.msra.mxu0 0.0
      %5044 = vmatprep.subr.mxu0 0.0
      %5045 = vmatpush1.msra.mxu0 0.0
      %5046 = vmatprep.subr.mxu0 0.0
      %5047 = vmatpush1.msra.mxu0 0.0
      %5048 = vmatprep.subr.mxu0 0.0
      %5049 = vmatpush1.msra.mxu0 0.0
      %5050 = vmatprep.subr.mxu0 0.0
      %5051 = vmatpush1.msra.mxu0 0.0
      %5052 = vmatprep.subr.mxu0 0.0
      %5053 = vmatpush1.msra.mxu0 0.0
      %5054 = vmatprep.subr.mxu0 0.0
      %5055 = vmatpush1.msra.mxu0 0.0
      %5056 = vmatprep.subr.mxu0 0.0
      %5057 = vmatpush1.msra.mxu0 0.0
      %5058 = vmatprep.subr.mxu0 0.0
      %5059 = vmatpush1.msra.mxu0 0.0
      %5060 = vmatprep.subr.mxu0 0.0
      %5061 = vmatpush1.msra.mxu0 0.0
      %5062 = vmatprep.subr.mxu0 0.0
      %5063 = vmatpush1.msra.mxu0 0.0
      %5064 = vmatprep.subr.mxu0 0.0
      %5065 = vmatpush1.msra.mxu0 0.0
      %5066 = vmatprep.subr.mxu0 0.0
      %5067 = vmatpush1.msra.mxu0 0.0
      %5068 = vmatprep.subr.mxu0 0.0
      %5069 = vmatpush1.msra.mxu0 0.0
      %5070 = vmatprep.subr.mxu0 0.0
      %5071 = vmatpush1.msra.mxu0 0.0
      %5072 = vmatprep.subr.mxu0 0.0
      %5073 = vmatpush1.msra.mxu0 0.0
      %5074 = vmatprep.subr.mxu0 0.0
      %5075 = vmatpush1.msra.mxu0 0.0
      %5076 = vmatprep.subr.mxu0 0.0
      %5077 = vmatpush1.msra.mxu0 0.0
      %5078 = vmatprep.subr.mxu0 0.0
      %5079 = vmatpush1.msra.mxu0 0.0
      %5080 = vmatprep.subr.mxu0 0.0
      %5081 = vmatpush1.msra.mxu0 0.0
      %5082 = vmatprep.subr.mxu0 0.0
      %5083 = vmatpush1.msra.mxu0 0.0
      %5084 = vmatprep.subr.mxu0 0.0
      %5085 = vmatpush1.msra.mxu0 0.0
      %5086 = vmatprep.subr.mxu0 0.0
      %5087 = vmatpush1.msra.mxu0 0.0
      %5088 = vmatprep.subr.mxu0 0.0
      %5089 = vmatpush1.msra.mxu0 0.0
      %5090 = vmatprep.subr.mxu0 0.0
      %5091 = vmatpush1.msra.mxu0 0.0
      %5092 = vmatprep.subr.mxu0 0.0
      %5093 = vmatpush1.msra.mxu0 0.0
      %5094 = vmatprep.subr.mxu0 0.0
      %5095 = vmatpush1.msra.mxu0 0.0
      %5096 = vmatprep.subr.mxu0 0.0
      %5097 = vmatpush1.msra.mxu0 0.0
      %5098 = vmatprep.mubr.f32.mxu0 0.0
      %5099 = vmatmul.mubr.f32.gmra.mrb[0].mxu0 %v5032
      %v5100 = vpop.f32.mrb[0].mxu0
      %v5101 = vadd.f32 0.0, %v5100
      %v5102 = vpop.f32.mrb[0].mxu0
      %5103 = vdwg.mxu0
      %v5105 = vsel %vm59, %v4655, 0
      %5107 = vmatprep.subr.mxu0 0.0
      %5108 = vmatpush1.msra.mxu0 %v4956
      %5109 = vmatprep.subr.mxu0 0.0
      %5110 = vmatpush1.msra.mxu0 0.0
      %5111 = vmatprep.subr.mxu0 0.0
      %5112 = vmatpush1.msra.mxu0 0.0
      %5113 = vmatprep.subr.mxu0 0.0
      %5114 = vmatpush1.msra.mxu0 0.0
      %5115 = vmatprep.subr.mxu0 0.0
      %5116 = vmatpush1.msra.mxu0 0.0
      %5117 = vmatprep.subr.mxu0 0.0
      %5118 = vmatpush1.msra.mxu0 0.0
      %5119 = vmatprep.subr.mxu0 0.0
      %5120 = vmatpush1.msra.mxu0 0.0
      %5121 = vmatprep.subr.mxu0 0.0
      %5122 = vmatpush1.msra.mxu0 0.0
      %5123 = vmatprep.subr.mxu0 0.0
      %5124 = vmatpush1.msra.mxu0 0.0
      %5125 = vmatprep.subr.mxu0 0.0
      %5126 = vmatpush1.msra.mxu0 0.0
      %5127 = vmatprep.subr.mxu0 0.0
      %5128 = vmatpush1.msra.mxu0 0.0
      %5129 = vmatprep.subr.mxu0 0.0
      %5130 = vmatpush1.msra.mxu0 0.0
      %5131 = vmatprep.subr.mxu0 0.0
      %5132 = vmatpush1.msra.mxu0 0.0
      %5133 = vmatprep.subr.mxu0 0.0
      %5134 = vmatpush1.msra.mxu0 0.0
      %5135 = vmatprep.subr.mxu0 0.0
      %5136 = vmatpush1.msra.mxu0 0.0
      %5137 = vmatprep.subr.mxu0 0.0
      %5138 = vmatpush1.msra.mxu0 0.0
      %5139 = vmatprep.subr.mxu0 0.0
      %5140 = vmatpush1.msra.mxu0 0.0
      %5141 = vmatprep.subr.mxu0 0.0
      %5142 = vmatpush1.msra.mxu0 0.0
      %5143 = vmatprep.subr.mxu0 0.0
      %5144 = vmatpush1.msra.mxu0 0.0
      %5145 = vmatprep.subr.mxu0 0.0
      %5146 = vmatpush1.msra.mxu0 0.0
      %5147 = vmatprep.subr.mxu0 0.0
      %5148 = vmatpush1.msra.mxu0 0.0
      %5149 = vmatprep.subr.mxu0 0.0
      %5150 = vmatpush1.msra.mxu0 0.0
      %5151 = vmatprep.subr.mxu0 0.0
      %5152 = vmatpush1.msra.mxu0 0.0
      %5153 = vmatprep.subr.mxu0 0.0
      %5154 = vmatpush1.msra.mxu0 0.0
      %5155 = vmatprep.subr.mxu0 0.0
      %5156 = vmatpush1.msra.mxu0 0.0
      %5157 = vmatprep.subr.mxu0 0.0
      %5158 = vmatpush1.msra.mxu0 0.0
      %5159 = vmatprep.subr.mxu0 0.0
      %5160 = vmatpush1.msra.mxu0 0.0
      %5161 = vmatprep.subr.mxu0 0.0
      %5162 = vmatpush1.msra.mxu0 0.0
      %5163 = vmatprep.subr.mxu0 0.0
      %5164 = vmatpush1.msra.mxu0 0.0
      %5165 = vmatprep.subr.mxu0 0.0
      %5166 = vmatpush1.msra.mxu0 0.0
      %5167 = vmatprep.subr.mxu0 0.0
      %5168 = vmatpush1.msra.mxu0 0.0
      %5169 = vmatprep.subr.mxu0 0.0
      %5170 = vmatpush1.msra.mxu0 0.0
      %5171 = vmatprep.mubr.f32.mxu0 0.0
      %5172 = vmatmul.mubr.f32.gmra.mrb[0].mxu0 %v5105
      %v5173 = vpop.f32.mrb[0].mxu0
      %v5174 = vadd.f32 0.0, %v5173
      %v5175 = vpop.f32.mrb[0].mxu0
      %5176 = vdwg.mxu0
      %v5178 = vsel %vm59, %v4656, 0
      %5180 = vmatprep.subr.mxu0 0.0
      %5181 = vmatpush1.msra.mxu0 %v4957
      %5182 = vmatprep.subr.mxu0 0.0
      %5183 = vmatpush1.msra.mxu0 0.0
      %5184 = vmatprep.subr.mxu0 0.0
      %5185 = vmatpush1.msra.mxu0 0.0
      %5186 = vmatprep.subr.mxu0 0.0
      %5187 = vmatpush1.msra.mxu0 0.0
      %5188 = vmatprep.subr.mxu0 0.0
      %5189 = vmatpush1.msra.mxu0 0.0
      %5190 = vmatprep.subr.mxu0 0.0
      %5191 = vmatpush1.msra.mxu0 0.0
      %5192 = vmatprep.subr.mxu0 0.0
      %5193 = vmatpush1.msra.mxu0 0.0
      %5194 = vmatprep.subr.mxu0 0.0
      %5195 = vmatpush1.msra.mxu0 0.0
      %5196 = vmatprep.subr.mxu0 0.0
      %5197 = vmatpush1.msra.mxu0 0.0
      %5198 = vmatprep.subr.mxu0 0.0
      %5199 = vmatpush1.msra.mxu0 0.0
      %5200 = vmatprep.subr.mxu0 0.0
      %5201 = vmatpush1.msra.mxu0 0.0
      %5202 = vmatprep.subr.mxu0 0.0
      %5203 = vmatpush1.msra.mxu0 0.0
      %5204 = vmatprep.subr.mxu0 0.0
      %5205 = vmatpush1.msra.mxu0 0.0
      %5206 = vmatprep.subr.mxu0 0.0
      %5207 = vmatpush1.msra.mxu0 0.0
      %5208 = vmatprep.subr.mxu0 0.0
      %5209 = vmatpush1.msra.mxu0 0.0
      %5210 = vmatprep.subr.mxu0 0.0
      %5211 = vmatpush1.msra.mxu0 0.0
      %5212 = vmatprep.subr.mxu0 0.0
      %5213 = vmatpush1.msra.mxu0 0.0
      %5214 = vmatprep.subr.mxu0 0.0
      %5215 = vmatpush1.msra.mxu0 0.0
      %5216 = vmatprep.subr.mxu0 0.0
      %5217 = vmatpush1.msra.mxu0 0.0
      %5218 = vmatprep.subr.mxu0 0.0
      %5219 = vmatpush1.msra.mxu0 0.0
      %5220 = vmatprep.subr.mxu0 0.0
      %5221 = vmatpush1.msra.mxu0 0.0
      %5222 = vmatprep.subr.mxu0 0.0
      %5223 = vmatpush1.msra.mxu0 0.0
      %5224 = vmatprep.subr.mxu0 0.0
      %5225 = vmatpush1.msra.mxu0 0.0
      %5226 = vmatprep.subr.mxu0 0.0
      %5227 = vmatpush1.msra.mxu0 0.0
      %5228 = vmatprep.subr.mxu0 0.0
      %5229 = vmatpush1.msra.mxu0 0.0
      %5230 = vmatprep.subr.mxu0 0.0
      %5231 = vmatpush1.msra.mxu0 0.0
      %5232 = vmatprep.subr.mxu0 0.0
      %5233 = vmatpush1.msra.mxu0 0.0
      %5234 = vmatprep.subr.mxu0 0.0
      %5235 = vmatpush1.msra.mxu0 0.0
      %5236 = vmatprep.subr.mxu0 0.0
      %5237 = vmatpush1.msra.mxu0 0.0
      %5238 = vmatprep.subr.mxu0 0.0
      %5239 = vmatpush1.msra.mxu0 0.0
      %5240 = vmatprep.subr.mxu0 0.0
      %5241 = vmatpush1.msra.mxu0 0.0
      %5242 = vmatprep.subr.mxu0 0.0
      %5243 = vmatpush1.msra.mxu0 0.0
      %5244 = vmatprep.mubr.f32.mxu0 0.0
      %5245 = vmatmul.mubr.f32.gmra.mrb[0].mxu0 %v5178
      %v5246 = vpop.f32.mrb[0].mxu0
      %v5247 = vadd.f32 0.0, %v5246
      %v5248 = vpop.f32.mrb[0].mxu0
      %5249 = vdwg.mxu0
      %v5250 = vmul.f32 %v5028, 0.5
      %v5251 = vmul.f32 %v5101, 0.5
      %v5252 = vmul.f32 %v5174, 0.5
      %v5253 = vmul.f32 %v5247, 0.5
      %v5255 = vsel %vm59, %v4954, 0
      %5257 = vmatprep.subr.mxu0 0.0
      %5258 = vmatpush1.msra.mxu0 %v4657
      %5259 = vmatprep.subr.mxu0 0.0
      %5260 = vmatpush1.msra.mxu0 0.0
      %5261 = vmatprep.subr.mxu0 0.0
      %5262 = vmatpush1.msra.mxu0 0.0
      %5263 = vmatprep.subr.mxu0 0.0
      %5264 = vmatpush1.msra.mxu0 0.0
      %5265 = vmatprep.subr.mxu0 0.0
      %5266 = vmatpush1.msra.mxu0 0.0
      %5267 = vmatprep.subr.mxu0 0.0
      %5268 = vmatpush1.msra.mxu0 0.0
      %5269 = vmatprep.subr.mxu0 0.0
      %5270 = vmatpush1.msra.mxu0 0.0
      %5271 = vmatprep.subr.mxu0 0.0
      %5272 = vmatpush1.msra.mxu0 0.0
      %5273 = vmatprep.subr.mxu0 0.0
      %5274 = vmatpush1.msra.mxu0 0.0
      %5275 = vmatprep.subr.mxu0 0.0
      %5276 = vmatpush1.msra.mxu0 0.0
      %5277 = vmatprep.subr.mxu0 0.0
      %5278 = vmatpush1.msra.mxu0 0.0
      %5279 = vmatprep.subr.mxu0 0.0
      %5280 = vmatpush1.msra.mxu0 0.0
      %5281 = vmatprep.subr.mxu0 0.0
      %5282 = vmatpush1.msra.mxu0 0.0
      %5283 = vmatprep.subr.mxu0 0.0
      %5284 = vmatpush1.msra.mxu0 0.0
      %5285 = vmatprep.subr.mxu0 0.0
      %5286 = vmatpush1.msra.mxu0 0.0
      %5287 = vmatprep.subr.mxu0 0.0
      %5288 = vmatpush1.msra.mxu0 0.0
      %5289 = vmatprep.subr.mxu0 0.0
      %5290 = vmatpush1.msra.mxu0 0.0
      %5291 = vmatprep.subr.mxu0 0.0
      %5292 = vmatpush1.msra.mxu0 0.0
      %5293 = vmatprep.subr.mxu0 0.0
      %5294 = vmatpush1.msra.mxu0 0.0
      %5295 = vmatprep.subr.mxu0 0.0
      %5296 = vmatpush1.msra.mxu0 0.0
      %5297 = vmatprep.subr.mxu0 0.0
      %5298 = vmatpush1.msra.mxu0 0.0
      %5299 = vmatprep.subr.mxu0 0.0
      %5300 = vmatpush1.msra.mxu0 0.0
      %5301 = vmatprep.subr.mxu0 0.0
      %5302 = vmatpush1.msra.mxu0 0.0
      %5303 = vmatprep.subr.mxu0 0.0
      %5304 = vmatpush1.msra.mxu0 0.0
      %5305 = vmatprep.subr.mxu0 0.0
      %5306 = vmatpush1.msra.mxu0 0.0
      %5307 = vmatprep.subr.mxu0 0.0
      %5308 = vmatpush1.msra.mxu0 0.0
      %5309 = vmatprep.subr.mxu0 0.0
      %5310 = vmatpush1.msra.mxu0 0.0
      %5311 = vmatprep.subr.mxu0 0.0
      %5312 = vmatpush1.msra.mxu0 0.0
      %5313 = vmatprep.subr.mxu0 0.0
      %5314 = vmatpush1.msra.mxu0 0.0
      %5315 = vmatprep.subr.mxu0 0.0
      %5316 = vmatpush1.msra.mxu0 0.0
      %5317 = vmatprep.subr.mxu0 0.0
      %5318 = vmatpush1.msra.mxu0 0.0
      %5319 = vmatprep.subr.mxu0 0.0
      %5320 = vmatpush1.msra.mxu0 0.0
      %5321 = vmatprep.mubr.f32.mxu0 0.0
      %5322 = vmatmul.mubr.f32.gmra.mrb[0].mxu0 %v5255
      %v5323 = vpop.f32.mrb[0].mxu0
      %v5324 = vadd.f32 0.0, %v5323
      %v5325 = vpop.f32.mrb[0].mxu0
      %5326 = vdwg.mxu0
      %v5328 = vsel %vm59, %v4955, 0
      %5330 = vmatprep.subr.mxu0 0.0
      %5331 = vmatpush1.msra.mxu0 %v4658
      %5332 = vmatprep.subr.mxu0 0.0
      %5333 = vmatpush1.msra.mxu0 0.0
      %5334 = vmatprep.subr.mxu0 0.0
      %5335 = vmatpush1.msra.mxu0 0.0
      %5336 = vmatprep.subr.mxu0 0.0
      %5337 = vmatpush1.msra.mxu0 0.0
      %5338 = vmatprep.subr.mxu0 0.0
      %5339 = vmatpush1.msra.mxu0 0.0
      %5340 = vmatprep.subr.mxu0 0.0
      %5341 = vmatpush1.msra.mxu0 0.0
      %5342 = vmatprep.subr.mxu0 0.0
      %5343 = vmatpush1.msra.mxu0 0.0
      %5344 = vmatprep.subr.mxu0 0.0
      %5345 = vmatpush1.msra.mxu0 0.0
      %5346 = vmatprep.subr.mxu0 0.0
      %5347 = vmatpush1.msra.mxu0 0.0
      %5348 = vmatprep.subr.mxu0 0.0
      %5349 = vmatpush1.msra.mxu0 0.0
      %5350 = vmatprep.subr.mxu0 0.0
      %5351 = vmatpush1.msra.mxu0 0.0
      %5352 = vmatprep.subr.mxu0 0.0
      %5353 = vmatpush1.msra.mxu0 0.0
      %5354 = vmatprep.subr.mxu0 0.0
      %5355 = vmatpush1.msra.mxu0 0.0
      %5356 = vmatprep.subr.mxu0 0.0
      %5357 = vmatpush1.msra.mxu0 0.0
      %5358 = vmatprep.subr.mxu0 0.0
      %5359 = vmatpush1.msra.mxu0 0.0
      %5360 = vmatprep.subr.mxu0 0.0
      %5361 = vmatpush1.msra.mxu0 0.0
      %5362 = vmatprep.subr.mxu0 0.0
      %5363 = vmatpush1.msra.mxu0 0.0
      %5364 = vmatprep.subr.mxu0 0.0
      %5365 = vmatpush1.msra.mxu0 0.0
      %5366 = vmatprep.subr.mxu0 0.0
      %5367 = vmatpush1.msra.mxu0 0.0
      %5368 = vmatprep.subr.mxu0 0.0
      %5369 = vmatpush1.msra.mxu0 0.0
      %5370 = vmatprep.subr.mxu0 0.0
      %5371 = vmatpush1.msra.mxu0 0.0
      %5372 = vmatprep.subr.mxu0 0.0
      %5373 = vmatpush1.msra.mxu0 0.0
      %5374 = vmatprep.subr.mxu0 0.0
      %5375 = vmatpush1.msra.mxu0 0.0
      %5376 = vmatprep.subr.mxu0 0.0
      %5377 = vmatpush1.msra.mxu0 0.0
      %5378 = vmatprep.subr.mxu0 0.0
      %5379 = vmatpush1.msra.mxu0 0.0
      %5380 = vmatprep.subr.mxu0 0.0
      %5381 = vmatpush1.msra.mxu0 0.0
      %5382 = vmatprep.subr.mxu0 0.0
      %5383 = vmatpush1.msra.mxu0 0.0
      %5384 = vmatprep.subr.mxu0 0.0
      %5385 = vmatpush1.msra.mxu0 0.0
      %5386 = vmatprep.subr.mxu0 0.0
      %5387 = vmatpush1.msra.mxu0 0.0
      %5388 = vmatprep.subr.mxu0 0.0
      %5389 = vmatpush1.msra.mxu0 0.0
      %5390 = vmatprep.subr.mxu0 0.0
      %5391 = vmatpush1.msra.mxu0 0.0
      %5392 = vmatprep.subr.mxu0 0.0
      %5393 = vmatpush1.msra.mxu0 0.0
      %5394 = vmatprep.mubr.f32.mxu0 0.0
      %5395 = vmatmul.mubr.f32.gmra.mrb[0].mxu0 %v5328
      %v5396 = vpop.f32.mrb[0].mxu0
      %v5397 = vadd.f32 0.0, %v5396
      %v5398 = vpop.f32.mrb[0].mxu0
      %5399 = vdwg.mxu0
      %v5401 = vsel %vm59, %v4956, 0
      %5403 = vmatprep.subr.mxu0 0.0
      %5404 = vmatpush1.msra.mxu0 %v4659
      %5405 = vmatprep.subr.mxu0 0.0
      %5406 = vmatpush1.msra.mxu0 0.0
      %5407 = vmatprep.subr.mxu0 0.0
      %5408 = vmatpush1.msra.mxu0 0.0
      %5409 = vmatprep.subr.mxu0 0.0
      %5410 = vmatpush1.msra.mxu0 0.0
      %5411 = vmatprep.subr.mxu0 0.0
      %5412 = vmatpush1.msra.mxu0 0.0
      %5413 = vmatprep.subr.mxu0 0.0
      %5414 = vmatpush1.msra.mxu0 0.0
      %5415 = vmatprep.subr.mxu0 0.0
      %5416 = vmatpush1.msra.mxu0 0.0
      %5417 = vmatprep.subr.mxu0 0.0
      %5418 = vmatpush1.msra.mxu0 0.0
      %5419 = vmatprep.subr.mxu0 0.0
      %5420 = vmatpush1.msra.mxu0 0.0
      %5421 = vmatprep.subr.mxu0 0.0
      %5422 = vmatpush1.msra.mxu0 0.0
      %5423 = vmatprep.subr.mxu0 0.0
      %5424 = vmatpush1.msra.mxu0 0.0
      %5425 = vmatprep.subr.mxu0 0.0
      %5426 = vmatpush1.msra.mxu0 0.0
      %5427 = vmatprep.subr.mxu0 0.0
      %5428 = vmatpush1.msra.mxu0 0.0
      %5429 = vmatprep.subr.mxu0 0.0
      %5430 = vmatpush1.msra.mxu0 0.0
      %5431 = vmatprep.subr.mxu0 0.0
      %5432 = vmatpush1.msra.mxu0 0.0
      %5433 = vmatprep.subr.mxu0 0.0
      %5434 = vmatpush1.msra.mxu0 0.0
      %5435 = vmatprep.subr.mxu0 0.0
      %5436 = vmatpush1.msra.mxu0 0.0
      %5437 = vmatprep.subr.mxu0 0.0
      %5438 = vmatpush1.msra.mxu0 0.0
      %5439 = vmatprep.subr.mxu0 0.0
      %5440 = vmatpush1.msra.mxu0 0.0
      %5441 = vmatprep.subr.mxu0 0.0
      %5442 = vmatpush1.msra.mxu0 0.0
      %5443 = vmatprep.subr.mxu0 0.0
      %5444 = vmatpush1.msra.mxu0 0.0
      %5445 = vmatprep.subr.mxu0 0.0
      %5446 = vmatpush1.msra.mxu0 0.0
      %5447 = vmatprep.subr.mxu0 0.0
      %5448 = vmatpush1.msra.mxu0 0.0
      %5449 = vmatprep.subr.mxu0 0.0
      %5450 = vmatpush1.msra.mxu0 0.0
      %5451 = vmatprep.subr.mxu0 0.0
      %5452 = vmatpush1.msra.mxu0 0.0
      %5453 = vmatprep.subr.mxu0 0.0
      %5454 = vmatpush1.msra.mxu0 0.0
      %5455 = vmatprep.subr.mxu0 0.0
      %5456 = vmatpush1.msra.mxu0 0.0
      %5457 = vmatprep.subr.mxu0 0.0
      %5458 = vmatpush1.msra.mxu0 0.0
      %5459 = vmatprep.subr.mxu0 0.0
      %5460 = vmatpush1.msra.mxu0 0.0
      %5461 = vmatprep.subr.mxu0 0.0
      %5462 = vmatpush1.msra.mxu0 0.0
      %5463 = vmatprep.subr.mxu0 0.0
      %5464 = vmatpush1.msra.mxu0 0.0
      %5465 = vmatprep.subr.mxu0 0.0
      %5466 = vmatpush1.msra.mxu0 0.0
      %5467 = vmatprep.mubr.f32.mxu0 0.0
      %5468 = vmatmul.mubr.f32.gmra.mrb[0].mxu0 %v5401
      %v5469 = vpop.f32.mrb[0].mxu0
      %v5470 = vadd.f32 0.0, %v5469
      %v5471 = vpop.f32.mrb[0].mxu0
      %5472 = vdwg.mxu0
      %v5474 = vsel %vm59, %v4957, 0
      %5476 = vmatprep.subr.mxu0 0.0
      %5477 = vmatpush1.msra.mxu0 %v4660
      %5478 = vmatprep.subr.mxu0 0.0
      %5479 = vmatpush1.msra.mxu0 0.0
      %5480 = vmatprep.subr.mxu0 0.0
      %5481 = vmatpush1.msra.mxu0 0.0
      %5482 = vmatprep.subr.mxu0 0.0
      %5483 = vmatpush1.msra.mxu0 0.0
      %5484 = vmatprep.subr.mxu0 0.0
      %5485 = vmatpush1.msra.mxu0 0.0
      %5486 = vmatprep.subr.mxu0 0.0
      %5487 = vmatpush1.msra.mxu0 0.0
      %5488 = vmatprep.subr.mxu0 0.0
      %5489 = vmatpush1.msra.mxu0 0.0
      %5490 = vmatprep.subr.mxu0 0.0
      %5491 = vmatpush1.msra.mxu0 0.0
      %5492 = vmatprep.subr.mxu0 0.0
      %5493 = vmatpush1.msra.mxu0 0.0
      %5494 = vmatprep.subr.mxu0 0.0
      %5495 = vmatpush1.msra.mxu0 0.0
      %5496 = vmatprep.subr.mxu0 0.0
      %5497 = vmatpush1.msra.mxu0 0.0
      %5498 = vmatprep.subr.mxu0 0.0
      %5499 = vmatpush1.msra.mxu0 0.0
      %5500 = vmatprep.subr.mxu0 0.0
      %5501 = vmatpush1.msra.mxu0 0.0
      %5502 = vmatprep.subr.mxu0 0.0
      %5503 = vmatpush1.msra.mxu0 0.0
      %5504 = vmatprep.subr.mxu0 0.0
      %5505 = vmatpush1.msra.mxu0 0.0
      %5506 = vmatprep.subr.mxu0 0.0
      %5507 = vmatpush1.msra.mxu0 0.0
      %5508 = vmatprep.subr.mxu0 0.0
      %5509 = vmatpush1.msra.mxu0 0.0
      %5510 = vmatprep.subr.mxu0 0.0
      %5511 = vmatpush1.msra.mxu0 0.0
      %5512 = vmatprep.subr.mxu0 0.0
      %5513 = vmatpush1.msra.mxu0 0.0
      %5514 = vmatprep.subr.mxu0 0.0
      %5515 = vmatpush1.msra.mxu0 0.0
      %5516 = vmatprep.subr.mxu0 0.0
      %5517 = vmatpush1.msra.mxu0 0.0
      %5518 = vmatprep.subr.mxu0 0.0
      %5519 = vmatpush1.msra.mxu0 0.0
      %5520 = vmatprep.subr.mxu0 0.0
      %5521 = vmatpush1.msra.mxu0 0.0
      %5522 = vmatprep.subr.mxu0 0.0
      %5523 = vmatpush1.msra.mxu0 0.0
      %5524 = vmatprep.subr.mxu0 0.0
      %5525 = vmatpush1.msra.mxu0 0.0
      %5526 = vmatprep.subr.mxu0 0.0
      %5527 = vmatpush1.msra.mxu0 0.0
      %5528 = vmatprep.subr.mxu0 0.0
      %5529 = vmatpush1.msra.mxu0 0.0
      %5530 = vmatprep.subr.mxu0 0.0
      %5531 = vmatpush1.msra.mxu0 0.0
      %5532 = vmatprep.subr.mxu0 0.0
      %5533 = vmatpush1.msra.mxu0 0.0
      %5534 = vmatprep.subr.mxu0 0.0
      %5535 = vmatpush1.msra.mxu0 0.0
      %5536 = vmatprep.subr.mxu0 0.0
      %5537 = vmatpush1.msra.mxu0 0.0
      %5538 = vmatprep.subr.mxu0 0.0
      %5539 = vmatpush1.msra.mxu0 0.0
      %5540 = vmatprep.mubr.f32.mxu0 0.0
      %5541 = vmatmul.mubr.f32.gmra.mrb[0].mxu0 %v5474
      %v5542 = vpop.f32.mrb[0].mxu0
      %v5543 = vadd.f32 0.0, %v5542
      %v5544 = vpop.f32.mrb[0].mxu0
      %5545 = vdwg.mxu0
      %v5546 = vmul.f32 %v5324, 0.5
      %v5547 = vmul.f32 %v5397, 0.5
      %v5548 = vmul.f32 %v5470, 0.5
      %v5549 = vmul.f32 %v5543, 0.5
    $region61: #{tpu_custom_call.1} parent=1 // loop_footer
      %s4652 = sadd.s32 1, %s4648
    $region62: #{tpu_custom_call.1} parent=1 // loop_footer_branch
      %4647 = sbr.rel target = $region58
    $region63: #{tpu_custom_call.1} parent=1 // loop_exit
      _
    %v5550 = vsub.f32 %v4653, %v54
    %v5551 = vsub.f32 %v4654, %v54
    %v5552 = vsub.f32 %v4655, %v54
    %v5553 = vsub.f32 %v4656, %v54
    %v5554 = vmul.f32 %v54, -0.083333336
    %v5555 = vmul.f32 %v54, 0.09090909
    %v5557 = vsel %vm59, %v5550, 0
    %5559 = vmatprep.subr.mxu0 0.0
    %5560 = vmatpush1.msra.mxu0 %v5554
    %5561 = vmatprep.subr.mxu0 0.0
    %5562 = vmatpush1.msra.mxu0 0.0
    %5563 = vmatprep.subr.mxu0 0.0
    %5564 = vmatpush1.msra.mxu0 0.0
    %5565 = vmatprep.subr.mxu0 0.0
    %5566 = vmatpush1.msra.mxu0 0.0
    %5567 = vmatprep.subr.mxu0 0.0
    %5568 = vmatpush1.msra.mxu0 0.0
    %5569 = vmatprep.subr.mxu0 0.0
    %5570 = vmatpush1.msra.mxu0 0.0
    %5571 = vmatprep.subr.mxu0 0.0
    %5572 = vmatpush1.msra.mxu0 0.0
    %5573 = vmatprep.subr.mxu0 0.0
    %5574 = vmatpush1.msra.mxu0 0.0
    %5575 = vmatprep.subr.mxu0 0.0
    %5576 = vmatpush1.msra.mxu0 0.0
    %5577 = vmatprep.subr.mxu0 0.0
    %5578 = vmatpush1.msra.mxu0 0.0
    %5579 = vmatprep.subr.mxu0 0.0
    %5580 = vmatpush1.msra.mxu0 0.0
    %5581 = vmatprep.subr.mxu0 0.0
    %5582 = vmatpush1.msra.mxu0 0.0
    %5583 = vmatprep.subr.mxu0 0.0
    %5584 = vmatpush1.msra.mxu0 0.0
    %5585 = vmatprep.subr.mxu0 0.0
    %5586 = vmatpush1.msra.mxu0 0.0
    %5587 = vmatprep.subr.mxu0 0.0
    %5588 = vmatpush1.msra.mxu0 0.0
    %5589 = vmatprep.subr.mxu0 0.0
    %5590 = vmatpush1.msra.mxu0 0.0
    %5591 = vmatprep.subr.mxu0 0.0
    %5592 = vmatpush1.msra.mxu0 0.0
    %5593 = vmatprep.subr.mxu0 0.0
    %5594 = vmatpush1.msra.mxu0 0.0
    %5595 = vmatprep.subr.mxu0 0.0
    %5596 = vmatpush1.msra.mxu0 0.0
    %5597 = vmatprep.subr.mxu0 0.0
    %5598 = vmatpush1.msra.mxu0 0.0
    %5599 = vmatprep.subr.mxu0 0.0
    %5600 = vmatpush1.msra.mxu0 0.0
    %5601 = vmatprep.subr.mxu0 0.0
    %5602 = vmatpush1.msra.mxu0 0.0
    %5603 = vmatprep.subr.mxu0 0.0
    %5604 = vmatpush1.msra.mxu0 0.0
    %5605 = vmatprep.subr.mxu0 0.0
    %5606 = vmatpush1.msra.mxu0 0.0
    %5607 = vmatprep.subr.mxu0 0.0
    %5608 = vmatpush1.msra.mxu0 0.0
    %5609 = vmatprep.subr.mxu0 0.0
    %5610 = vmatpush1.msra.mxu0 0.0
    %5611 = vmatprep.subr.mxu0 0.0
    %5612 = vmatpush1.msra.mxu0 0.0
    %5613 = vmatprep.subr.mxu0 0.0
    %5614 = vmatpush1.msra.mxu0 0.0
    %5615 = vmatprep.subr.mxu0 0.0
    %5616 = vmatpush1.msra.mxu0 0.0
    %5617 = vmatprep.subr.mxu0 0.0
    %5618 = vmatpush1.msra.mxu0 0.0
    %5619 = vmatprep.subr.mxu0 0.0
    %5620 = vmatpush1.msra.mxu0 0.0
    %5621 = vmatprep.subr.mxu0 0.0
    %5622 = vmatpush1.msra.mxu0 0.0
    %5623 = vmatprep.mubr.f32.mxu0 0.0
    %5624 = vmatmul.mubr.f32.gmra.mrb[0].mxu0 %v5557
    %v5625 = vpop.f32.mrb[0].mxu0
    %v5626 = vadd.f32 0.0, %v5625
    %v5627 = vpop.f32.mrb[0].mxu0
    %5628 = vdwg.mxu0
    %v5630 = vsel %vm59, %v5551, 0
    %5632 = vmatprep.subr.mxu0 0.0
    %5633 = vmatpush1.msra.mxu0 %v5554
    %5634 = vmatprep.subr.mxu0 0.0
    %5635 = vmatpush1.msra.mxu0 0.0
    %5636 = vmatprep.subr.mxu0 0.0
    %5637 = vmatpush1.msra.mxu0 0.0
    %5638 = vmatprep.subr.mxu0 0.0
    %5639 = vmatpush1.msra.mxu0 0.0
    %5640 = vmatprep.subr.mxu0 0.0
    %5641 = vmatpush1.msra.mxu0 0.0
    %5642 = vmatprep.subr.mxu0 0.0
    %5643 = vmatpush1.msra.mxu0 0.0
    %5644 = vmatprep.subr.mxu0 0.0
    %5645 = vmatpush1.msra.mxu0 0.0
    %5646 = vmatprep.subr.mxu0 0.0
    %5647 = vmatpush1.msra.mxu0 0.0
    %5648 = vmatprep.subr.mxu0 0.0
    %5649 = vmatpush1.msra.mxu0 0.0
    %5650 = vmatprep.subr.mxu0 0.0
    %5651 = vmatpush1.msra.mxu0 0.0
    %5652 = vmatprep.subr.mxu0 0.0
    %5653 = vmatpush1.msra.mxu0 0.0
    %5654 = vmatprep.subr.mxu0 0.0
    %5655 = vmatpush1.msra.mxu0 0.0
    %5656 = vmatprep.subr.mxu0 0.0
    %5657 = vmatpush1.msra.mxu0 0.0
    %5658 = vmatprep.subr.mxu0 0.0
    %5659 = vmatpush1.msra.mxu0 0.0
    %5660 = vmatprep.subr.mxu0 0.0
    %5661 = vmatpush1.msra.mxu0 0.0
    %5662 = vmatprep.subr.mxu0 0.0
    %5663 = vmatpush1.msra.mxu0 0.0
    %5664 = vmatprep.subr.mxu0 0.0
    %5665 = vmatpush1.msra.mxu0 0.0
    %5666 = vmatprep.subr.mxu0 0.0
    %5667 = vmatpush1.msra.mxu0 0.0
    %5668 = vmatprep.subr.mxu0 0.0
    %5669 = vmatpush1.msra.mxu0 0.0
    %5670 = vmatprep.subr.mxu0 0.0
    %5671 = vmatpush1.msra.mxu0 0.0
    %5672 = vmatprep.subr.mxu0 0.0
    %5673 = vmatpush1.msra.mxu0 0.0
    %5674 = vmatprep.subr.mxu0 0.0
    %5675 = vmatpush1.msra.mxu0 0.0
    %5676 = vmatprep.subr.mxu0 0.0
    %5677 = vmatpush1.msra.mxu0 0.0
    %5678 = vmatprep.subr.mxu0 0.0
    %5679 = vmatpush1.msra.mxu0 0.0
    %5680 = vmatprep.subr.mxu0 0.0
    %5681 = vmatpush1.msra.mxu0 0.0
    %5682 = vmatprep.subr.mxu0 0.0
    %5683 = vmatpush1.msra.mxu0 0.0
    %5684 = vmatprep.subr.mxu0 0.0
    %5685 = vmatpush1.msra.mxu0 0.0
    %5686 = vmatprep.subr.mxu0 0.0
    %5687 = vmatpush1.msra.mxu0 0.0
    %5688 = vmatprep.subr.mxu0 0.0
    %5689 = vmatpush1.msra.mxu0 0.0
    %5690 = vmatprep.subr.mxu0 0.0
    %5691 = vmatpush1.msra.mxu0 0.0
    %5692 = vmatprep.subr.mxu0 0.0
    %5693 = vmatpush1.msra.mxu0 0.0
    %5694 = vmatprep.subr.mxu0 0.0
    %5695 = vmatpush1.msra.mxu0 0.0
    %5696 = vmatprep.mubr.f32.mxu0 0.0
    %5697 = vmatmul.mubr.f32.gmra.mrb[0].mxu0 %v5630
    %v5698 = vpop.f32.mrb[0].mxu0
    %v5699 = vadd.f32 0.0, %v5698
    %v5700 = vpop.f32.mrb[0].mxu0
    %5701 = vdwg.mxu0
    %v5703 = vsel %vm59, %v5552, 0
    %5705 = vmatprep.subr.mxu0 0.0
    %5706 = vmatpush1.msra.mxu0 %v5554
    %5707 = vmatprep.subr.mxu0 0.0
    %5708 = vmatpush1.msra.mxu0 0.0
    %5709 = vmatprep.subr.mxu0 0.0
    %5710 = vmatpush1.msra.mxu0 0.0
    %5711 = vmatprep.subr.mxu0 0.0
    %5712 = vmatpush1.msra.mxu0 0.0
    %5713 = vmatprep.subr.mxu0 0.0
    %5714 = vmatpush1.msra.mxu0 0.0
    %5715 = vmatprep.subr.mxu0 0.0
    %5716 = vmatpush1.msra.mxu0 0.0
    %5717 = vmatprep.subr.mxu0 0.0
    %5718 = vmatpush1.msra.mxu0 0.0
    %5719 = vmatprep.subr.mxu0 0.0
    %5720 = vmatpush1.msra.mxu0 0.0
    %5721 = vmatprep.subr.mxu0 0.0
    %5722 = vmatpush1.msra.mxu0 0.0
    %5723 = vmatprep.subr.mxu0 0.0
    %5724 = vmatpush1.msra.mxu0 0.0
    %5725 = vmatprep.subr.mxu0 0.0
    %5726 = vmatpush1.msra.mxu0 0.0
    %5727 = vmatprep.subr.mxu0 0.0
    %5728 = vmatpush1.msra.mxu0 0.0
    %5729 = vmatprep.subr.mxu0 0.0
    %5730 = vmatpush1.msra.mxu0 0.0
    %5731 = vmatprep.subr.mxu0 0.0
    %5732 = vmatpush1.msra.mxu0 0.0
    %5733 = vmatprep.subr.mxu0 0.0
    %5734 = vmatpush1.msra.mxu0 0.0
    %5735 = vmatprep.subr.mxu0 0.0
    %5736 = vmatpush1.msra.mxu0 0.0
    %5737 = vmatprep.subr.mxu0 0.0
    %5738 = vmatpush1.msra.mxu0 0.0
    %5739 = vmatprep.subr.mxu0 0.0
    %5740 = vmatpush1.msra.mxu0 0.0
    %5741 = vmatprep.subr.mxu0 0.0
    %5742 = vmatpush1.msra.mxu0 0.0
    %5743 = vmatprep.subr.mxu0 0.0
    %5744 = vmatpush1.msra.mxu0 0.0
    %5745 = vmatprep.subr.mxu0 0.0
    %5746 = vmatpush1.msra.mxu0 0.0
    %5747 = vmatprep.subr.mxu0 0.0
    %5748 = vmatpush1.msra.mxu0 0.0
    %5749 = vmatprep.subr.mxu0 0.0
    %5750 = vmatpush1.msra.mxu0 0.0
    %5751 = vmatprep.subr.mxu0 0.0
    %5752 = vmatpush1.msra.mxu0 0.0
    %5753 = vmatprep.subr.mxu0 0.0
    %5754 = vmatpush1.msra.mxu0 0.0
    %5755 = vmatprep.subr.mxu0 0.0
    %5756 = vmatpush1.msra.mxu0 0.0
    %5757 = vmatprep.subr.mxu0 0.0
    %5758 = vmatpush1.msra.mxu0 0.0
    %5759 = vmatprep.subr.mxu0 0.0
    %5760 = vmatpush1.msra.mxu0 0.0
    %5761 = vmatprep.subr.mxu0 0.0
    %5762 = vmatpush1.msra.mxu0 0.0
    %5763 = vmatprep.subr.mxu0 0.0
    %5764 = vmatpush1.msra.mxu0 0.0
    %5765 = vmatprep.subr.mxu0 0.0
    %5766 = vmatpush1.msra.mxu0 0.0
    %5767 = vmatprep.subr.mxu0 0.0
    %5768 = vmatpush1.msra.mxu0 0.0
    %5769 = vmatprep.mubr.f32.mxu0 0.0
    %5770 = vmatmul.mubr.f32.gmra.mrb[0].mxu0 %v5703
    %v5771 = vpop.f32.mrb[0].mxu0
    %v5772 = vadd.f32 0.0, %v5771
    %v5773 = vpop.f32.mrb[0].mxu0
    %5774 = vdwg.mxu0
    %v5776 = vsel %vm59, %v5553, 0
    %5778 = vmatprep.subr.mxu0 0.0
    %5779 = vmatpush1.msra.mxu0 %v5554
    %5780 = vmatprep.subr.mxu0 0.0
    %5781 = vmatpush1.msra.mxu0 0.0
    %5782 = vmatprep.subr.mxu0 0.0
    %5783 = vmatpush1.msra.mxu0 0.0
    %5784 = vmatprep.subr.mxu0 0.0
    %5785 = vmatpush1.msra.mxu0 0.0
    %5786 = vmatprep.subr.mxu0 0.0
    %5787 = vmatpush1.msra.mxu0 0.0
    %5788 = vmatprep.subr.mxu0 0.0
    %5789 = vmatpush1.msra.mxu0 0.0
    %5790 = vmatprep.subr.mxu0 0.0
    %5791 = vmatpush1.msra.mxu0 0.0
    %5792 = vmatprep.subr.mxu0 0.0
    %5793 = vmatpush1.msra.mxu0 0.0
    %5794 = vmatprep.subr.mxu0 0.0
    %5795 = vmatpush1.msra.mxu0 0.0
    %5796 = vmatprep.subr.mxu0 0.0
    %5797 = vmatpush1.msra.mxu0 0.0
    %5798 = vmatprep.subr.mxu0 0.0
    %5799 = vmatpush1.msra.mxu0 0.0
    %5800 = vmatprep.subr.mxu0 0.0
    %5801 = vmatpush1.msra.mxu0 0.0
    %5802 = vmatprep.subr.mxu0 0.0
    %5803 = vmatpush1.msra.mxu0 0.0
    %5804 = vmatprep.subr.mxu0 0.0
    %5805 = vmatpush1.msra.mxu0 0.0
    %5806 = vmatprep.subr.mxu0 0.0
    %5807 = vmatpush1.msra.mxu0 0.0
    %5808 = vmatprep.subr.mxu0 0.0
    %5809 = vmatpush1.msra.mxu0 0.0
    %5810 = vmatprep.subr.mxu0 0.0
    %5811 = vmatpush1.msra.mxu0 0.0
    %5812 = vmatprep.subr.mxu0 0.0
    %5813 = vmatpush1.msra.mxu0 0.0
    %5814 = vmatprep.subr.mxu0 0.0
    %5815 = vmatpush1.msra.mxu0 0.0
    %5816 = vmatprep.subr.mxu0 0.0
    %5817 = vmatpush1.msra.mxu0 0.0
    %5818 = vmatprep.subr.mxu0 0.0
    %5819 = vmatpush1.msra.mxu0 0.0
    %5820 = vmatprep.subr.mxu0 0.0
    %5821 = vmatpush1.msra.mxu0 0.0
    %5822 = vmatprep.subr.mxu0 0.0
    %5823 = vmatpush1.msra.mxu0 0.0
    %5824 = vmatprep.subr.mxu0 0.0
    %5825 = vmatpush1.msra.mxu0 0.0
    %5826 = vmatprep.subr.mxu0 0.0
    %5827 = vmatpush1.msra.mxu0 0.0
    %5828 = vmatprep.subr.mxu0 0.0
    %5829 = vmatpush1.msra.mxu0 0.0
    %5830 = vmatprep.subr.mxu0 0.0
    %5831 = vmatpush1.msra.mxu0 0.0
    %5832 = vmatprep.subr.mxu0 0.0
    %5833 = vmatpush1.msra.mxu0 0.0
    %5834 = vmatprep.subr.mxu0 0.0
    %5835 = vmatpush1.msra.mxu0 0.0
    %5836 = vmatprep.subr.mxu0 0.0
    %5837 = vmatpush1.msra.mxu0 0.0
    %5838 = vmatprep.subr.mxu0 0.0
    %5839 = vmatpush1.msra.mxu0 0.0
    %5840 = vmatprep.subr.mxu0 0.0
    %5841 = vmatpush1.msra.mxu0 0.0
    %5842 = vmatprep.mubr.f32.mxu0 0.0
    %5843 = vmatmul.mubr.f32.gmra.mrb[0].mxu0 %v5776
    %v5844 = vpop.f32.mrb[0].mxu0
    %v5845 = vadd.f32 0.0, %v5844
    %v5846 = vpop.f32.mrb[0].mxu0
    %5847 = vdwg.mxu0
    %v5848 = vadd.f32 %v5555, %v5626
    %v5849 = vadd.f32 %v5555, %v5699
    %v5850 = vadd.f32 %v5555, %v5772
    %v5851 = vadd.f32 %v5555, %v5845
    %v5852 = vmul.f32 %v54, -0.1
    %5853 = vmatprep.subr.mxu0 0.0
    %5854 = vmatpush1.msra.mxu0 %v5848
    %5855 = vmatprep.subr.mxu0 0.0
    %5856 = vmatpush1.msra.mxu0 0.0
    %5857 = vmatprep.subr.mxu0 0.0
    %5858 = vmatpush1.msra.mxu0 0.0
    %5859 = vmatprep.subr.mxu0 0.0
    %5860 = vmatpush1.msra.mxu0 0.0
    %5861 = vmatprep.subr.mxu0 0.0
    %5862 = vmatpush1.msra.mxu0 0.0
    %5863 = vmatprep.subr.mxu0 0.0
    %5864 = vmatpush1.msra.mxu0 0.0
    %5865 = vmatprep.subr.mxu0 0.0
    %5866 = vmatpush1.msra.mxu0 0.0
    %5867 = vmatprep.subr.mxu0 0.0
    %5868 = vmatpush1.msra.mxu0 0.0
    %5869 = vmatprep.subr.mxu0 0.0
    %5870 = vmatpush1.msra.mxu0 0.0
    %5871 = vmatprep.subr.mxu0 0.0
    %5872 = vmatpush1.msra.mxu0 0.0
    %5873 = vmatprep.subr.mxu0 0.0
    %5874 = vmatpush1.msra.mxu0 0.0
    %5875 = vmatprep.subr.mxu0 0.0
    %5876 = vmatpush1.msra.mxu0 0.0
    %5877 = vmatprep.subr.mxu0 0.0
    %5878 = vmatpush1.msra.mxu0 0.0
    %5879 = vmatprep.subr.mxu0 0.0
    %5880 = vmatpush1.msra.mxu0 0.0
    %5881 = vmatprep.subr.mxu0 0.0
    %5882 = vmatpush1.msra.mxu0 0.0
    %5883 = vmatprep.subr.mxu0 0.0
    %5884 = vmatpush1.msra.mxu0 0.0
    %5885 = vmatprep.subr.mxu0 0.0
    %5886 = vmatpush1.msra.mxu0 0.0
    %5887 = vmatprep.subr.mxu0 0.0
    %5888 = vmatpush1.msra.mxu0 0.0
    %5889 = vmatprep.subr.mxu0 0.0
    %5890 = vmatpush1.msra.mxu0 0.0
    %5891 = vmatprep.subr.mxu0 0.0
    %5892 = vmatpush1.msra.mxu0 0.0
    %5893 = vmatprep.subr.mxu0 0.0
    %5894 = vmatpush1.msra.mxu0 0.0
    %5895 = vmatprep.subr.mxu0 0.0
    %5896 = vmatpush1.msra.mxu0 0.0
    %5897 = vmatprep.subr.mxu0 0.0
    %5898 = vmatpush1.msra.mxu0 0.0
    %5899 = vmatprep.subr.mxu0 0.0
    %5900 = vmatpush1.msra.mxu0 0.0
    %5901 = vmatprep.subr.mxu0 0.0
    %5902 = vmatpush1.msra.mxu0 0.0
    %5903 = vmatprep.subr.mxu0 0.0
    %5904 = vmatpush1.msra.mxu0 0.0
    %5905 = vmatprep.subr.mxu0 0.0
    %5906 = vmatpush1.msra.mxu0 0.0
    %5907 = vmatprep.subr.mxu0 0.0
    %5908 = vmatpush1.msra.mxu0 0.0
    %5909 = vmatprep.subr.mxu0 0.0
    %5910 = vmatpush1.msra.mxu0 0.0
    %5911 = vmatprep.subr.mxu0 0.0
    %5912 = vmatpush1.msra.mxu0 0.0
    %5913 = vmatprep.subr.mxu0 0.0
    %5914 = vmatpush1.msra.mxu0 0.0
    %5915 = vmatprep.subr.mxu0 0.0
    %5916 = vmatpush1.msra.mxu0 0.0
    %5917 = vmatprep.mubr.f32.mxu0 0.0
    %5918 = vmatmul.mubr.f32.gmra.mrb[0].mxu0 %v5557
    %v5919 = vpop.f32.mrb[0].mxu0
    %v5920 = vadd.f32 0.0, %v5919
    %v5921 = vpop.f32.mrb[0].mxu0
    %5922 = vdwg.mxu0
    %5923 = vmatprep.subr.mxu0 0.0
    %5924 = vmatpush1.msra.mxu0 %v5849
    %5925 = vmatprep.subr.mxu0 0.0
    %5926 = vmatpush1.msra.mxu0 0.0
    %5927 = vmatprep.subr.mxu0 0.0
    %5928 = vmatpush1.msra.mxu0 0.0
    %5929 = vmatprep.subr.mxu0 0.0
    %5930 = vmatpush1.msra.mxu0 0.0
    %5931 = vmatprep.subr.mxu0 0.0
    %5932 = vmatpush1.msra.mxu0 0.0
    %5933 = vmatprep.subr.mxu0 0.0
    %5934 = vmatpush1.msra.mxu0 0.0
    %5935 = vmatprep.subr.mxu0 0.0
    %5936 = vmatpush1.msra.mxu0 0.0
    %5937 = vmatprep.subr.mxu0 0.0
    %5938 = vmatpush1.msra.mxu0 0.0
    %5939 = vmatprep.subr.mxu0 0.0
    %5940 = vmatpush1.msra.mxu0 0.0
    %5941 = vmatprep.subr.mxu0 0.0
    %5942 = vmatpush1.msra.mxu0 0.0
    %5943 = vmatprep.subr.mxu0 0.0
    %5944 = vmatpush1.msra.mxu0 0.0
    %5945 = vmatprep.subr.mxu0 0.0
    %5946 = vmatpush1.msra.mxu0 0.0
    %5947 = vmatprep.subr.mxu0 0.0
    %5948 = vmatpush1.msra.mxu0 0.0
    %5949 = vmatprep.subr.mxu0 0.0
    %5950 = vmatpush1.msra.mxu0 0.0
    %5951 = vmatprep.subr.mxu0 0.0
    %5952 = vmatpush1.msra.mxu0 0.0
    %5953 = vmatprep.subr.mxu0 0.0
    %5954 = vmatpush1.msra.mxu0 0.0
    %5955 = vmatprep.subr.mxu0 0.0
    %5956 = vmatpush1.msra.mxu0 0.0
    %5957 = vmatprep.subr.mxu0 0.0
    %5958 = vmatpush1.msra.mxu0 0.0
    %5959 = vmatprep.subr.mxu0 0.0
    %5960 = vmatpush1.msra.mxu0 0.0
    %5961 = vmatprep.subr.mxu0 0.0
    %5962 = vmatpush1.msra.mxu0 0.0
    %5963 = vmatprep.subr.mxu0 0.0
    %5964 = vmatpush1.msra.mxu0 0.0
    %5965 = vmatprep.subr.mxu0 0.0
    %5966 = vmatpush1.msra.mxu0 0.0
    %5967 = vmatprep.subr.mxu0 0.0
    %5968 = vmatpush1.msra.mxu0 0.0
    %5969 = vmatprep.subr.mxu0 0.0
    %5970 = vmatpush1.msra.mxu0 0.0
    %5971 = vmatprep.subr.mxu0 0.0
    %5972 = vmatpush1.msra.mxu0 0.0
    %5973 = vmatprep.subr.mxu0 0.0
    %5974 = vmatpush1.msra.mxu0 0.0
    %5975 = vmatprep.subr.mxu0 0.0
    %5976 = vmatpush1.msra.mxu0 0.0
    %5977 = vmatprep.subr.mxu0 0.0
    %5978 = vmatpush1.msra.mxu0 0.0
    %5979 = vmatprep.subr.mxu0 0.0
    %5980 = vmatpush1.msra.mxu0 0.0
    %5981 = vmatprep.subr.mxu0 0.0
    %5982 = vmatpush1.msra.mxu0 0.0
    %5983 = vmatprep.subr.mxu0 0.0
    %5984 = vmatpush1.msra.mxu0 0.0
    %5985 = vmatprep.subr.mxu0 0.0
    %5986 = vmatpush1.msra.mxu0 0.0
    %5987 = vmatprep.mubr.f32.mxu0 0.0
    %5988 = vmatmul.mubr.f32.gmra.mrb[0].mxu0 %v5630
    %v5989 = vpop.f32.mrb[0].mxu0
    %v5990 = vadd.f32 0.0, %v5989
    %v5991 = vpop.f32.mrb[0].mxu0
    %5992 = vdwg.mxu0
    %5993 = vmatprep.subr.mxu0 0.0
    %5994 = vmatpush1.msra.mxu0 %v5850
    %5995 = vmatprep.subr.mxu0 0.0
    %5996 = vmatpush1.msra.mxu0 0.0
    %5997 = vmatprep.subr.mxu0 0.0
    %5998 = vmatpush1.msra.mxu0 0.0
    %5999 = vmatprep.subr.mxu0 0.0
    %6000 = vmatpush1.msra.mxu0 0.0
    %6001 = vmatprep.subr.mxu0 0.0
    %6002 = vmatpush1.msra.mxu0 0.0
    %6003 = vmatprep.subr.mxu0 0.0
    %6004 = vmatpush1.msra.mxu0 0.0
    %6005 = vmatprep.subr.mxu0 0.0
    %6006 = vmatpush1.msra.mxu0 0.0
    %6007 = vmatprep.subr.mxu0 0.0
    %6008 = vmatpush1.msra.mxu0 0.0
    %6009 = vmatprep.subr.mxu0 0.0
    %6010 = vmatpush1.msra.mxu0 0.0
    %6011 = vmatprep.subr.mxu0 0.0
    %6012 = vmatpush1.msra.mxu0 0.0
    %6013 = vmatprep.subr.mxu0 0.0
    %6014 = vmatpush1.msra.mxu0 0.0
    %6015 = vmatprep.subr.mxu0 0.0
    %6016 = vmatpush1.msra.mxu0 0.0
    %6017 = vmatprep.subr.mxu0 0.0
    %6018 = vmatpush1.msra.mxu0 0.0
    %6019 = vmatprep.subr.mxu0 0.0
    %6020 = vmatpush1.msra.mxu0 0.0
    %6021 = vmatprep.subr.mxu0 0.0
    %6022 = vmatpush1.msra.mxu0 0.0
    %6023 = vmatprep.subr.mxu0 0.0
    %6024 = vmatpush1.msra.mxu0 0.0
    %6025 = vmatprep.subr.mxu0 0.0
    %6026 = vmatpush1.msra.mxu0 0.0
    %6027 = vmatprep.subr.mxu0 0.0
    %6028 = vmatpush1.msra.mxu0 0.0
    %6029 = vmatprep.subr.mxu0 0.0
    %6030 = vmatpush1.msra.mxu0 0.0
    %6031 = vmatprep.subr.mxu0 0.0
    %6032 = vmatpush1.msra.mxu0 0.0
    %6033 = vmatprep.subr.mxu0 0.0
    %6034 = vmatpush1.msra.mxu0 0.0
    %6035 = vmatprep.subr.mxu0 0.0
    %6036 = vmatpush1.msra.mxu0 0.0
    %6037 = vmatprep.subr.mxu0 0.0
    %6038 = vmatpush1.msra.mxu0 0.0
    %6039 = vmatprep.subr.mxu0 0.0
    %6040 = vmatpush1.msra.mxu0 0.0
    %6041 = vmatprep.subr.mxu0 0.0
    %6042 = vmatpush1.msra.mxu0 0.0
    %6043 = vmatprep.subr.mxu0 0.0
    %6044 = vmatpush1.msra.mxu0 0.0
    %6045 = vmatprep.subr.mxu0 0.0
    %6046 = vmatpush1.msra.mxu0 0.0
    %6047 = vmatprep.subr.mxu0 0.0
    %6048 = vmatpush1.msra.mxu0 0.0
    %6049 = vmatprep.subr.mxu0 0.0
    %6050 = vmatpush1.msra.mxu0 0.0
    %6051 = vmatprep.subr.mxu0 0.0
    %6052 = vmatpush1.msra.mxu0 0.0
    %6053 = vmatprep.subr.mxu0 0.0
    %6054 = vmatpush1.msra.mxu0 0.0
    %6055 = vmatprep.subr.mxu0 0.0
    %6056 = vmatpush1.msra.mxu0 0.0
    %6057 = vmatprep.mubr.f32.mxu0 0.0
    %6058 = vmatmul.mubr.f32.gmra.mrb[0].mxu0 %v5703
    %v6059 = vpop.f32.mrb[0].mxu0
    %v6060 = vadd.f32 0.0, %v6059
    %v6061 = vpop.f32.mrb[0].mxu0
    %6062 = vdwg.mxu0
    %6063 = vmatprep.subr.mxu0 0.0
    %6064 = vmatpush1.msra.mxu0 %v5851
    %6065 = vmatprep.subr.mxu0 0.0
    %6066 = vmatpush1.msra.mxu0 0.0
    %6067 = vmatprep.subr.mxu0 0.0
    %6068 = vmatpush1.msra.mxu0 0.0
    %6069 = vmatprep.subr.mxu0 0.0
    %6070 = vmatpush1.msra.mxu0 0.0
    %6071 = vmatprep.subr.mxu0 0.0
    %6072 = vmatpush1.msra.mxu0 0.0
    %6073 = vmatprep.subr.mxu0 0.0
    %6074 = vmatpush1.msra.mxu0 0.0
    %6075 = vmatprep.subr.mxu0 0.0
    %6076 = vmatpush1.msra.mxu0 0.0
    %6077 = vmatprep.subr.mxu0 0.0
    %6078 = vmatpush1.msra.mxu0 0.0
    %6079 = vmatprep.subr.mxu0 0.0
    %6080 = vmatpush1.msra.mxu0 0.0
    %6081 = vmatprep.subr.mxu0 0.0
    %6082 = vmatpush1.msra.mxu0 0.0
    %6083 = vmatprep.subr.mxu0 0.0
    %6084 = vmatpush1.msra.mxu0 0.0
    %6085 = vmatprep.subr.mxu0 0.0
    %6086 = vmatpush1.msra.mxu0 0.0
    %6087 = vmatprep.subr.mxu0 0.0
    %6088 = vmatpush1.msra.mxu0 0.0
    %6089 = vmatprep.subr.mxu0 0.0
    %6090 = vmatpush1.msra.mxu0 0.0
    %6091 = vmatprep.subr.mxu0 0.0
    %6092 = vmatpush1.msra.mxu0 0.0
    %6093 = vmatprep.subr.mxu0 0.0
    %6094 = vmatpush1.msra.mxu0 0.0
    %6095 = vmatprep.subr.mxu0 0.0
    %6096 = vmatpush1.msra.mxu0 0.0
    %6097 = vmatprep.subr.mxu0 0.0
    %6098 = vmatpush1.msra.mxu0 0.0
    %6099 = vmatprep.subr.mxu0 0.0
    %6100 = vmatpush1.msra.mxu0 0.0
    %6101 = vmatprep.subr.mxu0 0.0
    %6102 = vmatpush1.msra.mxu0 0.0
    %6103 = vmatprep.subr.mxu0 0.0
    %6104 = vmatpush1.msra.mxu0 0.0
    %6105 = vmatprep.subr.mxu0 0.0
    %6106 = vmatpush1.msra.mxu0 0.0
    %6107 = vmatprep.subr.mxu0 0.0
    %6108 = vmatpush1.msra.mxu0 0.0
    %6109 = vmatprep.subr.mxu0 0.0
    %6110 = vmatpush1.msra.mxu0 0.0
    %6111 = vmatprep.subr.mxu0 0.0
    %6112 = vmatpush1.msra.mxu0 0.0
    %6113 = vmatprep.subr.mxu0 0.0
    %6114 = vmatpush1.msra.mxu0 0.0
    %6115 = vmatprep.subr.mxu0 0.0
    %6116 = vmatpush1.msra.mxu0 0.0
    %6117 = vmatprep.subr.mxu0 0.0
    %6118 = vmatpush1.msra.mxu0 0.0
    %6119 = vmatprep.subr.mxu0 0.0
    %6120 = vmatpush1.msra.mxu0 0.0
    %6121 = vmatprep.subr.mxu0 0.0
    %6122 = vmatpush1.msra.mxu0 0.0
    %6123 = vmatprep.subr.mxu0 0.0
    %6124 = vmatpush1.msra.mxu0 0.0
    %6125 = vmatprep.subr.mxu0 0.0
    %6126 = vmatpush1.msra.mxu0 0.0
    %6127 = vmatprep.mubr.f32.mxu0 0.0
    %6128 = vmatmul.mubr.f32.gmra.mrb[0].mxu0 %v5776
    %v6129 = vpop.f32.mrb[0].mxu0
    %v6130 = vadd.f32 0.0, %v6129
    %v6131 = vpop.f32.mrb[0].mxu0
    %6132 = vdwg.mxu0
    %v6133 = vadd.f32 %v5852, %v5920
    %v6134 = vadd.f32 %v5852, %v5990
    %v6135 = vadd.f32 %v5852, %v6060
    %v6136 = vadd.f32 %v5852, %v6130
    %v6137 = vmul.f32 %v54, 0.11111111
    %6138 = vmatprep.subr.mxu0 0.0
    %6139 = vmatpush1.msra.mxu0 %v6133
    %6140 = vmatprep.subr.mxu0 0.0
    %6141 = vmatpush1.msra.mxu0 0.0
    %6142 = vmatprep.subr.mxu0 0.0
    %6143 = vmatpush1.msra.mxu0 0.0
    %6144 = vmatprep.subr.mxu0 0.0
    %6145 = vmatpush1.msra.mxu0 0.0
    %6146 = vmatprep.subr.mxu0 0.0
    %6147 = vmatpush1.msra.mxu0 0.0
    %6148 = vmatprep.subr.mxu0 0.0
    %6149 = vmatpush1.msra.mxu0 0.0
    %6150 = vmatprep.subr.mxu0 0.0
    %6151 = vmatpush1.msra.mxu0 0.0
    %6152 = vmatprep.subr.mxu0 0.0
    %6153 = vmatpush1.msra.mxu0 0.0
    %6154 = vmatprep.subr.mxu0 0.0
    %6155 = vmatpush1.msra.mxu0 0.0
    %6156 = vmatprep.subr.mxu0 0.0
    %6157 = vmatpush1.msra.mxu0 0.0
    %6158 = vmatprep.subr.mxu0 0.0
    %6159 = vmatpush1.msra.mxu0 0.0
    %6160 = vmatprep.subr.mxu0 0.0
    %6161 = vmatpush1.msra.mxu0 0.0
    %6162 = vmatprep.subr.mxu0 0.0
    %6163 = vmatpush1.msra.mxu0 0.0
    %6164 = vmatprep.subr.mxu0 0.0
    %6165 = vmatpush1.msra.mxu0 0.0
    %6166 = vmatprep.subr.mxu0 0.0
    %6167 = vmatpush1.msra.mxu0 0.0
    %6168 = vmatprep.subr.mxu0 0.0
    %6169 = vmatpush1.msra.mxu0 0.0
    %6170 = vmatprep.subr.mxu0 0.0
    %6171 = vmatpush1.msra.mxu0 0.0
    %6172 = vmatprep.subr.mxu0 0.0
    %6173 = vmatpush1.msra.mxu0 0.0
    %6174 = vmatprep.subr.mxu0 0.0
    %6175 = vmatpush1.msra.mxu0 0.0
    %6176 = vmatprep.subr.mxu0 0.0
    %6177 = vmatpush1.msra.mxu0 0.0
    %6178 = vmatprep.subr.mxu0 0.0
    %6179 = vmatpush1.msra.mxu0 0.0
    %6180 = vmatprep.subr.mxu0 0.0
    %6181 = vmatpush1.msra.mxu0 0.0
    %6182 = vmatprep.subr.mxu0 0.0
    %6183 = vmatpush1.msra.mxu0 0.0
    %6184 = vmatprep.subr.mxu0 0.0
    %6185 = vmatpush1.msra.mxu0 0.0
    %6186 = vmatprep.subr.mxu0 0.0
    %6187 = vmatpush1.msra.mxu0 0.0
    %6188 = vmatprep.subr.mxu0 0.0
    %6189 = vmatpush1.msra.mxu0 0.0
    %6190 = vmatprep.subr.mxu0 0.0
    %6191 = vmatpush1.msra.mxu0 0.0
    %6192 = vmatprep.subr.mxu0 0.0
    %6193 = vmatpush1.msra.mxu0 0.0
    %6194 = vmatprep.subr.mxu0 0.0
    %6195 = vmatpush1.msra.mxu0 0.0
    %6196 = vmatprep.subr.mxu0 0.0
    %6197 = vmatpush1.msra.mxu0 0.0
    %6198 = vmatprep.subr.mxu0 0.0
    %6199 = vmatpush1.msra.mxu0 0.0
    %6200 = vmatprep.subr.mxu0 0.0
    %6201 = vmatpush1.msra.mxu0 0.0
    %6202 = vmatprep.mubr.f32.mxu0 0.0
    %6203 = vmatmul.mubr.f32.gmra.mrb[0].mxu0 %v5557
    %v6204 = vpop.f32.mrb[0].mxu0
    %v6205 = vadd.f32 0.0, %v6204
    %v6206 = vpop.f32.mrb[0].mxu0
    %6207 = vdwg.mxu0
    %6208 = vmatprep.subr.mxu0 0.0
    %6209 = vmatpush1.msra.mxu0 %v6134
    %6210 = vmatprep.subr.mxu0 0.0
    %6211 = vmatpush1.msra.mxu0 0.0
    %6212 = vmatprep.subr.mxu0 0.0
    %6213 = vmatpush1.msra.mxu0 0.0
    %6214 = vmatprep.subr.mxu0 0.0
    %6215 = vmatpush1.msra.mxu0 0.0
    %6216 = vmatprep.subr.mxu0 0.0
    %6217 = vmatpush1.msra.mxu0 0.0
    %6218 = vmatprep.subr.mxu0 0.0
    %6219 = vmatpush1.msra.mxu0 0.0
    %6220 = vmatprep.subr.mxu0 0.0
    %6221 = vmatpush1.msra.mxu0 0.0
    %6222 = vmatprep.subr.mxu0 0.0
    %6223 = vmatpush1.msra.mxu0 0.0
    %6224 = vmatprep.subr.mxu0 0.0
    %6225 = vmatpush1.msra.mxu0 0.0
    %6226 = vmatprep.subr.mxu0 0.0
    %6227 = vmatpush1.msra.mxu0 0.0
    %6228 = vmatprep.subr.mxu0 0.0
    %6229 = vmatpush1.msra.mxu0 0.0
    %6230 = vmatprep.subr.mxu0 0.0
    %6231 = vmatpush1.msra.mxu0 0.0
    %6232 = vmatprep.subr.mxu0 0.0
    %6233 = vmatpush1.msra.mxu0 0.0
    %6234 = vmatprep.subr.mxu0 0.0
    %6235 = vmatpush1.msra.mxu0 0.0
    %6236 = vmatprep.subr.mxu0 0.0
    %6237 = vmatpush1.msra.mxu0 0.0
    %6238 = vmatprep.subr.mxu0 0.0
    %6239 = vmatpush1.msra.mxu0 0.0
    %6240 = vmatprep.subr.mxu0 0.0
    %6241 = vmatpush1.msra.mxu0 0.0
    %6242 = vmatprep.subr.mxu0 0.0
    %6243 = vmatpush1.msra.mxu0 0.0
    %6244 = vmatprep.subr.mxu0 0.0
    %6245 = vmatpush1.msra.mxu0 0.0
    %6246 = vmatprep.subr.mxu0 0.0
    %6247 = vmatpush1.msra.mxu0 0.0
    %6248 = vmatprep.subr.mxu0 0.0
    %6249 = vmatpush1.msra.mxu0 0.0
    %6250 = vmatprep.subr.mxu0 0.0
    %6251 = vmatpush1.msra.mxu0 0.0
    %6252 = vmatprep.subr.mxu0 0.0
    %6253 = vmatpush1.msra.mxu0 0.0
    %6254 = vmatprep.subr.mxu0 0.0
    %6255 = vmatpush1.msra.mxu0 0.0
    %6256 = vmatprep.subr.mxu0 0.0
    %6257 = vmatpush1.msra.mxu0 0.0
    %6258 = vmatprep.subr.mxu0 0.0
    %6259 = vmatpush1.msra.mxu0 0.0
    %6260 = vmatprep.subr.mxu0 0.0
    %6261 = vmatpush1.msra.mxu0 0.0
    %6262 = vmatprep.subr.mxu0 0.0
    %6263 = vmatpush1.msra.mxu0 0.0
    %6264 = vmatprep.subr.mxu0 0.0
    %6265 = vmatpush1.msra.mxu0 0.0
    %6266 = vmatprep.subr.mxu0 0.0
    %6267 = vmatpush1.msra.mxu0 0.0
    %6268 = vmatprep.subr.mxu0 0.0
    %6269 = vmatpush1.msra.mxu0 0.0
    %6270 = vmatprep.subr.mxu0 0.0
    %6271 = vmatpush1.msra.mxu0 0.0
    %6272 = vmatprep.mubr.f32.mxu0 0.0
    %6273 = vmatmul.mubr.f32.gmra.mrb[0].mxu0 %v5630
    %v6274 = vpop.f32.mrb[0].mxu0
    %v6275 = vadd.f32 0.0, %v6274
    %v6276 = vpop.f32.mrb[0].mxu0
    %6277 = vdwg.mxu0
    %6278 = vmatprep.subr.mxu0 0.0
    %6279 = vmatpush1.msra.mxu0 %v6135
    %6280 = vmatprep.subr.mxu0 0.0
    %6281 = vmatpush1.msra.mxu0 0.0
    %6282 = vmatprep.subr.mxu0 0.0
    %6283 = vmatpush1.msra.mxu0 0.0
    %6284 = vmatprep.subr.mxu0 0.0
    %6285 = vmatpush1.msra.mxu0 0.0
    %6286 = vmatprep.subr.mxu0 0.0
    %6287 = vmatpush1.msra.mxu0 0.0
    %6288 = vmatprep.subr.mxu0 0.0
    %6289 = vmatpush1.msra.mxu0 0.0
    %6290 = vmatprep.subr.mxu0 0.0
    %6291 = vmatpush1.msra.mxu0 0.0
    %6292 = vmatprep.subr.mxu0 0.0
    %6293 = vmatpush1.msra.mxu0 0.0
    %6294 = vmatprep.subr.mxu0 0.0
    %6295 = vmatpush1.msra.mxu0 0.0
    %6296 = vmatprep.subr.mxu0 0.0
    %6297 = vmatpush1.msra.mxu0 0.0
    %6298 = vmatprep.subr.mxu0 0.0
    %6299 = vmatpush1.msra.mxu0 0.0
    %6300 = vmatprep.subr.mxu0 0.0
    %6301 = vmatpush1.msra.mxu0 0.0
    %6302 = vmatprep.subr.mxu0 0.0
    %6303 = vmatpush1.msra.mxu0 0.0
    %6304 = vmatprep.subr.mxu0 0.0
    %6305 = vmatpush1.msra.mxu0 0.0
    %6306 = vmatprep.subr.mxu0 0.0
    %6307 = vmatpush1.msra.mxu0 0.0
    %6308 = vmatprep.subr.mxu0 0.0
    %6309 = vmatpush1.msra.mxu0 0.0
    %6310 = vmatprep.subr.mxu0 0.0
    %6311 = vmatpush1.msra.mxu0 0.0
    %6312 = vmatprep.subr.mxu0 0.0
    %6313 = vmatpush1.msra.mxu0 0.0
    %6314 = vmatprep.subr.mxu0 0.0
    %6315 = vmatpush1.msra.mxu0 0.0
    %6316 = vmatprep.subr.mxu0 0.0
    %6317 = vmatpush1.msra.mxu0 0.0
    %6318 = vmatprep.subr.mxu0 0.0
    %6319 = vmatpush1.msra.mxu0 0.0
    %6320 = vmatprep.subr.mxu0 0.0
    %6321 = vmatpush1.msra.mxu0 0.0
    %6322 = vmatprep.subr.mxu0 0.0
    %6323 = vmatpush1.msra.mxu0 0.0
    %6324 = vmatprep.subr.mxu0 0.0
    %6325 = vmatpush1.msra.mxu0 0.0
    %6326 = vmatprep.subr.mxu0 0.0
    %6327 = vmatpush1.msra.mxu0 0.0
    %6328 = vmatprep.subr.mxu0 0.0
    %6329 = vmatpush1.msra.mxu0 0.0
    %6330 = vmatprep.subr.mxu0 0.0
    %6331 = vmatpush1.msra.mxu0 0.0
    %6332 = vmatprep.subr.mxu0 0.0
    %6333 = vmatpush1.msra.mxu0 0.0
    %6334 = vmatprep.subr.mxu0 0.0
    %6335 = vmatpush1.msra.mxu0 0.0
    %6336 = vmatprep.subr.mxu0 0.0
    %6337 = vmatpush1.msra.mxu0 0.0
    %6338 = vmatprep.subr.mxu0 0.0
    %6339 = vmatpush1.msra.mxu0 0.0
    %6340 = vmatprep.subr.mxu0 0.0
    %6341 = vmatpush1.msra.mxu0 0.0
    %6342 = vmatprep.mubr.f32.mxu0 0.0
    %6343 = vmatmul.mubr.f32.gmra.mrb[0].mxu0 %v5703
    %v6344 = vpop.f32.mrb[0].mxu0
    %v6345 = vadd.f32 0.0, %v6344
    %v6346 = vpop.f32.mrb[0].mxu0
    %6347 = vdwg.mxu0
    %6348 = vmatprep.subr.mxu0 0.0
    %6349 = vmatpush1.msra.mxu0 %v6136
    %6350 = vmatprep.subr.mxu0 0.0
    %6351 = vmatpush1.msra.mxu0 0.0
    %6352 = vmatprep.subr.mxu0 0.0
    %6353 = vmatpush1.msra.mxu0 0.0
    %6354 = vmatprep.subr.mxu0 0.0
    %6355 = vmatpush1.msra.mxu0 0.0
    %6356 = vmatprep.subr.mxu0 0.0
    %6357 = vmatpush1.msra.mxu0 0.0
    %6358 = vmatprep.subr.mxu0 0.0
    %6359 = vmatpush1.msra.mxu0 0.0
    %6360 = vmatprep.subr.mxu0 0.0
    %6361 = vmatpush1.msra.mxu0 0.0
    %6362 = vmatprep.subr.mxu0 0.0
    %6363 = vmatpush1.msra.mxu0 0.0
    %6364 = vmatprep.subr.mxu0 0.0
    %6365 = vmatpush1.msra.mxu0 0.0
    %6366 = vmatprep.subr.mxu0 0.0
    %6367 = vmatpush1.msra.mxu0 0.0
    %6368 = vmatprep.subr.mxu0 0.0
    %6369 = vmatpush1.msra.mxu0 0.0
    %6370 = vmatprep.subr.mxu0 0.0
    %6371 = vmatpush1.msra.mxu0 0.0
    %6372 = vmatprep.subr.mxu0 0.0
    %6373 = vmatpush1.msra.mxu0 0.0
    %6374 = vmatprep.subr.mxu0 0.0
    %6375 = vmatpush1.msra.mxu0 0.0
    %6376 = vmatprep.subr.mxu0 0.0
    %6377 = vmatpush1.msra.mxu0 0.0
    %6378 = vmatprep.subr.mxu0 0.0
    %6379 = vmatpush1.msra.mxu0 0.0
    %6380 = vmatprep.subr.mxu0 0.0
    %6381 = vmatpush1.msra.mxu0 0.0
    %6382 = vmatprep.subr.mxu0 0.0
    %6383 = vmatpush1.msra.mxu0 0.0
    %6384 = vmatprep.subr.mxu0 0.0
    %6385 = vmatpush1.msra.mxu0 0.0
    %6386 = vmatprep.subr.mxu0 0.0
    %6387 = vmatpush1.msra.mxu0 0.0
    %6388 = vmatprep.subr.mxu0 0.0
    %6389 = vmatpush1.msra.mxu0 0.0
    %6390 = vmatprep.subr.mxu0 0.0
    %6391 = vmatpush1.msra.mxu0 0.0
    %6392 = vmatprep.subr.mxu0 0.0
    %6393 = vmatpush1.msra.mxu0 0.0
    %6394 = vmatprep.subr.mxu0 0.0
    %6395 = vmatpush1.msra.mxu0 0.0
    %6396 = vmatprep.subr.mxu0 0.0
    %6397 = vmatpush1.msra.mxu0 0.0
    %6398 = vmatprep.subr.mxu0 0.0
    %6399 = vmatpush1.msra.mxu0 0.0
    %6400 = vmatprep.subr.mxu0 0.0
    %6401 = vmatpush1.msra.mxu0 0.0
    %6402 = vmatprep.subr.mxu0 0.0
    %6403 = vmatpush1.msra.mxu0 0.0
    %6404 = vmatprep.subr.mxu0 0.0
    %6405 = vmatpush1.msra.mxu0 0.0
    %6406 = vmatprep.subr.mxu0 0.0
    %6407 = vmatpush1.msra.mxu0 0.0
    %6408 = vmatprep.subr.mxu0 0.0
    %6409 = vmatpush1.msra.mxu0 0.0
    %6410 = vmatprep.subr.mxu0 0.0
    %6411 = vmatpush1.msra.mxu0 0.0
    %6412 = vmatprep.mubr.f32.mxu0 0.0
    %6413 = vmatmul.mubr.f32.gmra.mrb[0].mxu0 %v5776
    %v6414 = vpop.f32.mrb[0].mxu0
    %v6415 = vadd.f32 0.0, %v6414
    %v6416 = vpop.f32.mrb[0].mxu0
    %6417 = vdwg.mxu0
    %v6418 = vadd.f32 %v6137, %v6205
    %v6419 = vadd.f32 %v6137, %v6275
    %v6420 = vadd.f32 %v6137, %v6345
    %v6421 = vadd.f32 %v6137, %v6415
    %v6422 = vmul.f32 %v54, -0.125
    %6423 = vmatprep.subr.mxu0 0.0
    %6424 = vmatpush1.msra.mxu0 %v6418
    %6425 = vmatprep.subr.mxu0 0.0
    %6426 = vmatpush1.msra.mxu0 0.0
    %6427 = vmatprep.subr.mxu0 0.0
    %6428 = vmatpush1.msra.mxu0 0.0
    %6429 = vmatprep.subr.mxu0 0.0
    %6430 = vmatpush1.msra.mxu0 0.0
    %6431 = vmatprep.subr.mxu0 0.0
    %6432 = vmatpush1.msra.mxu0 0.0
    %6433 = vmatprep.subr.mxu0 0.0
    %6434 = vmatpush1.msra.mxu0 0.0
    %6435 = vmatprep.subr.mxu0 0.0
    %6436 = vmatpush1.msra.mxu0 0.0
    %6437 = vmatprep.subr.mxu0 0.0
    %6438 = vmatpush1.msra.mxu0 0.0
    %6439 = vmatprep.subr.mxu0 0.0
    %6440 = vmatpush1.msra.mxu0 0.0
    %6441 = vmatprep.subr.mxu0 0.0
    %6442 = vmatpush1.msra.mxu0 0.0
    %6443 = vmatprep.subr.mxu0 0.0
    %6444 = vmatpush1.msra.mxu0 0.0
    %6445 = vmatprep.subr.mxu0 0.0
    %6446 = vmatpush1.msra.mxu0 0.0
    %6447 = vmatprep.subr.mxu0 0.0
    %6448 = vmatpush1.msra.mxu0 0.0
    %6449 = vmatprep.subr.mxu0 0.0
    %6450 = vmatpush1.msra.mxu0 0.0
    %6451 = vmatprep.subr.mxu0 0.0
    %6452 = vmatpush1.msra.mxu0 0.0
    %6453 = vmatprep.subr.mxu0 0.0
    %6454 = vmatpush1.msra.mxu0 0.0
    %6455 = vmatprep.subr.mxu0 0.0
    %6456 = vmatpush1.msra.mxu0 0.0
    %6457 = vmatprep.subr.mxu0 0.0
    %6458 = vmatpush1.msra.mxu0 0.0
    %6459 = vmatprep.subr.mxu0 0.0
    %6460 = vmatpush1.msra.mxu0 0.0
    %6461 = vmatprep.subr.mxu0 0.0
    %6462 = vmatpush1.msra.mxu0 0.0
    %6463 = vmatprep.subr.mxu0 0.0
    %6464 = vmatpush1.msra.mxu0 0.0
    %6465 = vmatprep.subr.mxu0 0.0
    %6466 = vmatpush1.msra.mxu0 0.0
    %6467 = vmatprep.subr.mxu0 0.0
    %6468 = vmatpush1.msra.mxu0 0.0
    %6469 = vmatprep.subr.mxu0 0.0
    %6470 = vmatpush1.msra.mxu0 0.0
    %6471 = vmatprep.subr.mxu0 0.0
    %6472 = vmatpush1.msra.mxu0 0.0
    %6473 = vmatprep.subr.mxu0 0.0
    %6474 = vmatpush1.msra.mxu0 0.0
    %6475 = vmatprep.subr.mxu0 0.0
    %6476 = vmatpush1.msra.mxu0 0.0
    %6477 = vmatprep.subr.mxu0 0.0
    %6478 = vmatpush1.msra.mxu0 0.0
    %6479 = vmatprep.subr.mxu0 0.0
    %6480 = vmatpush1.msra.mxu0 0.0
    %6481 = vmatprep.subr.mxu0 0.0
    %6482 = vmatpush1.msra.mxu0 0.0
    %6483 = vmatprep.subr.mxu0 0.0
    %6484 = vmatpush1.msra.mxu0 0.0
    %6485 = vmatprep.subr.mxu0 0.0
    %6486 = vmatpush1.msra.mxu0 0.0
    %6487 = vmatprep.mubr.f32.mxu0 0.0
    %6488 = vmatmul.mubr.f32.gmra.mrb[0].mxu0 %v5557
    %v6489 = vpop.f32.mrb[0].mxu0
    %v6490 = vadd.f32 0.0, %v6489
    %v6491 = vpop.f32.mrb[0].mxu0
    %6492 = vdwg.mxu0
    %6493 = vmatprep.subr.mxu0 0.0
    %6494 = vmatpush1.msra.mxu0 %v6419
    %6495 = vmatprep.subr.mxu0 0.0
    %6496 = vmatpush1.msra.mxu0 0.0
    %6497 = vmatprep.subr.mxu0 0.0
    %6498 = vmatpush1.msra.mxu0 0.0
    %6499 = vmatprep.subr.mxu0 0.0
    %6500 = vmatpush1.msra.mxu0 0.0
    %6501 = vmatprep.subr.mxu0 0.0
    %6502 = vmatpush1.msra.mxu0 0.0
    %6503 = vmatprep.subr.mxu0 0.0
    %6504 = vmatpush1.msra.mxu0 0.0
    %6505 = vmatprep.subr.mxu0 0.0
    %6506 = vmatpush1.msra.mxu0 0.0
    %6507 = vmatprep.subr.mxu0 0.0
    %6508 = vmatpush1.msra.mxu0 0.0
    %6509 = vmatprep.subr.mxu0 0.0
    %6510 = vmatpush1.msra.mxu0 0.0
    %6511 = vmatprep.subr.mxu0 0.0
    %6512 = vmatpush1.msra.mxu0 0.0
    %6513 = vmatprep.subr.mxu0 0.0
    %6514 = vmatpush1.msra.mxu0 0.0
    %6515 = vmatprep.subr.mxu0 0.0
    %6516 = vmatpush1.msra.mxu0 0.0
    %6517 = vmatprep.subr.mxu0 0.0
    %6518 = vmatpush1.msra.mxu0 0.0
    %6519 = vmatprep.subr.mxu0 0.0
    %6520 = vmatpush1.msra.mxu0 0.0
    %6521 = vmatprep.subr.mxu0 0.0
    %6522 = vmatpush1.msra.mxu0 0.0
    %6523 = vmatprep.subr.mxu0 0.0
    %6524 = vmatpush1.msra.mxu0 0.0
    %6525 = vmatprep.subr.mxu0 0.0
    %6526 = vmatpush1.msra.mxu0 0.0
    %6527 = vmatprep.subr.mxu0 0.0
    %6528 = vmatpush1.msra.mxu0 0.0
    %6529 = vmatprep.subr.mxu0 0.0
    %6530 = vmatpush1.msra.mxu0 0.0
    %6531 = vmatprep.subr.mxu0 0.0
    %6532 = vmatpush1.msra.mxu0 0.0
    %6533 = vmatprep.subr.mxu0 0.0
    %6534 = vmatpush1.msra.mxu0 0.0
    %6535 = vmatprep.subr.mxu0 0.0
    %6536 = vmatpush1.msra.mxu0 0.0
    %6537 = vmatprep.subr.mxu0 0.0
    %6538 = vmatpush1.msra.mxu0 0.0
    %6539 = vmatprep.subr.mxu0 0.0
    %6540 = vmatpush1.msra.mxu0 0.0
    %6541 = vmatprep.subr.mxu0 0.0
    %6542 = vmatpush1.msra.mxu0 0.0
    %6543 = vmatprep.subr.mxu0 0.0
    %6544 = vmatpush1.msra.mxu0 0.0
    %6545 = vmatprep.subr.mxu0 0.0
    %6546 = vmatpush1.msra.mxu0 0.0
    %6547 = vmatprep.subr.mxu0 0.0
    %6548 = vmatpush1.msra.mxu0 0.0
    %6549 = vmatprep.subr.mxu0 0.0
    %6550 = vmatpush1.msra.mxu0 0.0
    %6551 = vmatprep.subr.mxu0 0.0
    %6552 = vmatpush1.msra.mxu0 0.0
    %6553 = vmatprep.subr.mxu0 0.0
    %6554 = vmatpush1.msra.mxu0 0.0
    %6555 = vmatprep.subr.mxu0 0.0
    %6556 = vmatpush1.msra.mxu0 0.0
    %6557 = vmatprep.mubr.f32.mxu0 0.0
    %6558 = vmatmul.mubr.f32.gmra.mrb[0].mxu0 %v5630
    %v6559 = vpop.f32.mrb[0].mxu0
    %v6560 = vadd.f32 0.0, %v6559
    %v6561 = vpop.f32.mrb[0].mxu0
    %6562 = vdwg.mxu0
    %6563 = vmatprep.subr.mxu0 0.0
    %6564 = vmatpush1.msra.mxu0 %v6420
    %6565 = vmatprep.subr.mxu0 0.0
    %6566 = vmatpush1.msra.mxu0 0.0
    %6567 = vmatprep.subr.mxu0 0.0
    %6568 = vmatpush1.msra.mxu0 0.0
    %6569 = vmatprep.subr.mxu0 0.0
    %6570 = vmatpush1.msra.mxu0 0.0
    %6571 = vmatprep.subr.mxu0 0.0
    %6572 = vmatpush1.msra.mxu0 0.0
    %6573 = vmatprep.subr.mxu0 0.0
    %6574 = vmatpush1.msra.mxu0 0.0
    %6575 = vmatprep.subr.mxu0 0.0
    %6576 = vmatpush1.msra.mxu0 0.0
    %6577 = vmatprep.subr.mxu0 0.0
    %6578 = vmatpush1.msra.mxu0 0.0
    %6579 = vmatprep.subr.mxu0 0.0
    %6580 = vmatpush1.msra.mxu0 0.0
    %6581 = vmatprep.subr.mxu0 0.0
    %6582 = vmatpush1.msra.mxu0 0.0
    %6583 = vmatprep.subr.mxu0 0.0
    %6584 = vmatpush1.msra.mxu0 0.0
    %6585 = vmatprep.subr.mxu0 0.0
    %6586 = vmatpush1.msra.mxu0 0.0
    %6587 = vmatprep.subr.mxu0 0.0
    %6588 = vmatpush1.msra.mxu0 0.0
    %6589 = vmatprep.subr.mxu0 0.0
    %6590 = vmatpush1.msra.mxu0 0.0
    %6591 = vmatprep.subr.mxu0 0.0
    %6592 = vmatpush1.msra.mxu0 0.0
    %6593 = vmatprep.subr.mxu0 0.0
    %6594 = vmatpush1.msra.mxu0 0.0
    %6595 = vmatprep.subr.mxu0 0.0
    %6596 = vmatpush1.msra.mxu0 0.0
    %6597 = vmatprep.subr.mxu0 0.0
    %6598 = vmatpush1.msra.mxu0 0.0
    %6599 = vmatprep.subr.mxu0 0.0
    %6600 = vmatpush1.msra.mxu0 0.0
    %6601 = vmatprep.subr.mxu0 0.0
    %6602 = vmatpush1.msra.mxu0 0.0
    %6603 = vmatprep.subr.mxu0 0.0
    %6604 = vmatpush1.msra.mxu0 0.0
    %6605 = vmatprep.subr.mxu0 0.0
    %6606 = vmatpush1.msra.mxu0 0.0
    %6607 = vmatprep.subr.mxu0 0.0
    %6608 = vmatpush1.msra.mxu0 0.0
    %6609 = vmatprep.subr.mxu0 0.0
    %6610 = vmatpush1.msra.mxu0 0.0
    %6611 = vmatprep.subr.mxu0 0.0
    %6612 = vmatpush1.msra.mxu0 0.0
    %6613 = vmatprep.subr.mxu0 0.0
    %6614 = vmatpush1.msra.mxu0 0.0
    %6615 = vmatprep.subr.mxu0 0.0
    %6616 = vmatpush1.msra.mxu0 0.0
    %6617 = vmatprep.subr.mxu0 0.0
    %6618 = vmatpush1.msra.mxu0 0.0
    %6619 = vmatprep.subr.mxu0 0.0
    %6620 = vmatpush1.msra.mxu0 0.0
    %6621 = vmatprep.subr.mxu0 0.0
    %6622 = vmatpush1.msra.mxu0 0.0
    %6623 = vmatprep.subr.mxu0 0.0
    %6624 = vmatpush1.msra.mxu0 0.0
    %6625 = vmatprep.subr.mxu0 0.0
    %6626 = vmatpush1.msra.mxu0 0.0
    %6627 = vmatprep.mubr.f32.mxu0 0.0
    %6628 = vmatmul.mubr.f32.gmra.mrb[0].mxu0 %v5703
    %v6629 = vpop.f32.mrb[0].mxu0
    %v6630 = vadd.f32 0.0, %v6629
    %v6631 = vpop.f32.mrb[0].mxu0
    %6632 = vdwg.mxu0
    %6633 = vmatprep.subr.mxu0 0.0
    %6634 = vmatpush1.msra.mxu0 %v6421
    %6635 = vmatprep.subr.mxu0 0.0
    %6636 = vmatpush1.msra.mxu0 0.0
    %6637 = vmatprep.subr.mxu0 0.0
    %6638 = vmatpush1.msra.mxu0 0.0
    %6639 = vmatprep.subr.mxu0 0.0
    %6640 = vmatpush1.msra.mxu0 0.0
    %6641 = vmatprep.subr.mxu0 0.0
    %6642 = vmatpush1.msra.mxu0 0.0
    %6643 = vmatprep.subr.mxu0 0.0
    %6644 = vmatpush1.msra.mxu0 0.0
    %6645 = vmatprep.subr.mxu0 0.0
    %6646 = vmatpush1.msra.mxu0 0.0
    %6647 = vmatprep.subr.mxu0 0.0
    %6648 = vmatpush1.msra.mxu0 0.0
    %6649 = vmatprep.subr.mxu0 0.0
    %6650 = vmatpush1.msra.mxu0 0.0
    %6651 = vmatprep.subr.mxu0 0.0
    %6652 = vmatpush1.msra.mxu0 0.0
    %6653 = vmatprep.subr.mxu0 0.0
    %6654 = vmatpush1.msra.mxu0 0.0
    %6655 = vmatprep.subr.mxu0 0.0
    %6656 = vmatpush1.msra.mxu0 0.0
    %6657 = vmatprep.subr.mxu0 0.0
    %6658 = vmatpush1.msra.mxu0 0.0
    %6659 = vmatprep.subr.mxu0 0.0
    %6660 = vmatpush1.msra.mxu0 0.0
    %6661 = vmatprep.subr.mxu0 0.0
    %6662 = vmatpush1.msra.mxu0 0.0
    %6663 = vmatprep.subr.mxu0 0.0
    %6664 = vmatpush1.msra.mxu0 0.0
    %6665 = vmatprep.subr.mxu0 0.0
    %6666 = vmatpush1.msra.mxu0 0.0
    %6667 = vmatprep.subr.mxu0 0.0
    %6668 = vmatpush1.msra.mxu0 0.0
    %6669 = vmatprep.subr.mxu0 0.0
    %6670 = vmatpush1.msra.mxu0 0.0
    %6671 = vmatprep.subr.mxu0 0.0
    %6672 = vmatpush1.msra.mxu0 0.0
    %6673 = vmatprep.subr.mxu0 0.0
    %6674 = vmatpush1.msra.mxu0 0.0
    %6675 = vmatprep.subr.mxu0 0.0
    %6676 = vmatpush1.msra.mxu0 0.0
    %6677 = vmatprep.subr.mxu0 0.0
    %6678 = vmatpush1.msra.mxu0 0.0
    %6679 = vmatprep.subr.mxu0 0.0
    %6680 = vmatpush1.msra.mxu0 0.0
    %6681 = vmatprep.subr.mxu0 0.0
    %6682 = vmatpush1.msra.mxu0 0.0
    %6683 = vmatprep.subr.mxu0 0.0
    %6684 = vmatpush1.msra.mxu0 0.0
    %6685 = vmatprep.subr.mxu0 0.0
    %6686 = vmatpush1.msra.mxu0 0.0
    %6687 = vmatprep.subr.mxu0 0.0
    %6688 = vmatpush1.msra.mxu0 0.0
    %6689 = vmatprep.subr.mxu0 0.0
    %6690 = vmatpush1.msra.mxu0 0.0
    %6691 = vmatprep.subr.mxu0 0.0
    %6692 = vmatpush1.msra.mxu0 0.0
    %6693 = vmatprep.subr.mxu0 0.0
    %6694 = vmatpush1.msra.mxu0 0.0
    %6695 = vmatprep.subr.mxu0 0.0
    %6696 = vmatpush1.msra.mxu0 0.0
    %6697 = vmatprep.mubr.f32.mxu0 0.0
    %6698 = vmatmul.mubr.f32.gmra.mrb[0].mxu0 %v5776
    %v6699 = vpop.f32.mrb[0].mxu0
    %v6700 = vadd.f32 0.0, %v6699
    %v6701 = vpop.f32.mrb[0].mxu0
    %6702 = vdwg.mxu0
    %v6703 = vadd.f32 %v6422, %v6490
    %v6704 = vadd.f32 %v6422, %v6560
    %v6705 = vadd.f32 %v6422, %v6630
    %v6706 = vadd.f32 %v6422, %v6700
    %v6707 = vmul.f32 %v54, 0.14285715
    %6708 = vmatprep.subr.mxu0 0.0
    %6709 = vmatpush1.msra.mxu0 %v6703
    %6710 = vmatprep.subr.mxu0 0.0
    %6711 = vmatpush1.msra.mxu0 0.0
    %6712 = vmatprep.subr.mxu0 0.0
    %6713 = vmatpush1.msra.mxu0 0.0
    %6714 = vmatprep.subr.mxu0 0.0
    %6715 = vmatpush1.msra.mxu0 0.0
    %6716 = vmatprep.subr.mxu0 0.0
    %6717 = vmatpush1.msra.mxu0 0.0
    %6718 = vmatprep.subr.mxu0 0.0
    %6719 = vmatpush1.msra.mxu0 0.0
    %6720 = vmatprep.subr.mxu0 0.0
    %6721 = vmatpush1.msra.mxu0 0.0
    %6722 = vmatprep.subr.mxu0 0.0
    %6723 = vmatpush1.msra.mxu0 0.0
    %6724 = vmatprep.subr.mxu0 0.0
    %6725 = vmatpush1.msra.mxu0 0.0
    %6726 = vmatprep.subr.mxu0 0.0
    %6727 = vmatpush1.msra.mxu0 0.0
    %6728 = vmatprep.subr.mxu0 0.0
    %6729 = vmatpush1.msra.mxu0 0.0
    %6730 = vmatprep.subr.mxu0 0.0
    %6731 = vmatpush1.msra.mxu0 0.0
    %6732 = vmatprep.subr.mxu0 0.0
    %6733 = vmatpush1.msra.mxu0 0.0
    %6734 = vmatprep.subr.mxu0 0.0
    %6735 = vmatpush1.msra.mxu0 0.0
    %6736 = vmatprep.subr.mxu0 0.0
    %6737 = vmatpush1.msra.mxu0 0.0
    %6738 = vmatprep.subr.mxu0 0.0
    %6739 = vmatpush1.msra.mxu0 0.0
    %6740 = vmatprep.subr.mxu0 0.0
    %6741 = vmatpush1.msra.mxu0 0.0
    %6742 = vmatprep.subr.mxu0 0.0
    %6743 = vmatpush1.msra.mxu0 0.0
    %6744 = vmatprep.subr.mxu0 0.0
    %6745 = vmatpush1.msra.mxu0 0.0
    %6746 = vmatprep.subr.mxu0 0.0
    %6747 = vmatpush1.msra.mxu0 0.0
    %6748 = vmatprep.subr.mxu0 0.0
    %6749 = vmatpush1.msra.mxu0 0.0
    %6750 = vmatprep.subr.mxu0 0.0
    %6751 = vmatpush1.msra.mxu0 0.0
    %6752 = vmatprep.subr.mxu0 0.0
    %6753 = vmatpush1.msra.mxu0 0.0
    %6754 = vmatprep.subr.mxu0 0.0
    %6755 = vmatpush1.msra.mxu0 0.0
    %6756 = vmatprep.subr.mxu0 0.0
    %6757 = vmatpush1.msra.mxu0 0.0
    %6758 = vmatprep.subr.mxu0 0.0
    %6759 = vmatpush1.msra.mxu0 0.0
    %6760 = vmatprep.subr.mxu0 0.0
    %6761 = vmatpush1.msra.mxu0 0.0
    %6762 = vmatprep.subr.mxu0 0.0
    %6763 = vmatpush1.msra.mxu0 0.0
    %6764 = vmatprep.subr.mxu0 0.0
    %6765 = vmatpush1.msra.mxu0 0.0
    %6766 = vmatprep.subr.mxu0 0.0
    %6767 = vmatpush1.msra.mxu0 0.0
    %6768 = vmatprep.subr.mxu0 0.0
    %6769 = vmatpush1.msra.mxu0 0.0
    %6770 = vmatprep.subr.mxu0 0.0
    %6771 = vmatpush1.msra.mxu0 0.0
    %6772 = vmatprep.mubr.f32.mxu0 0.0
    %6773 = vmatmul.mubr.f32.gmra.mrb[0].mxu0 %v5557
    %v6774 = vpop.f32.mrb[0].mxu0
    %v6775 = vadd.f32 0.0, %v6774
    %v6776 = vpop.f32.mrb[0].mxu0
    %6777 = vdwg.mxu0
    %6778 = vmatprep.subr.mxu0 0.0
    %6779 = vmatpush1.msra.mxu0 %v6704
    %6780 = vmatprep.subr.mxu0 0.0
    %6781 = vmatpush1.msra.mxu0 0.0
    %6782 = vmatprep.subr.mxu0 0.0
    %6783 = vmatpush1.msra.mxu0 0.0
    %6784 = vmatprep.subr.mxu0 0.0
    %6785 = vmatpush1.msra.mxu0 0.0
    %6786 = vmatprep.subr.mxu0 0.0
    %6787 = vmatpush1.msra.mxu0 0.0
    %6788 = vmatprep.subr.mxu0 0.0
    %6789 = vmatpush1.msra.mxu0 0.0
    %6790 = vmatprep.subr.mxu0 0.0
    %6791 = vmatpush1.msra.mxu0 0.0
    %6792 = vmatprep.subr.mxu0 0.0
    %6793 = vmatpush1.msra.mxu0 0.0
    %6794 = vmatprep.subr.mxu0 0.0
    %6795 = vmatpush1.msra.mxu0 0.0
    %6796 = vmatprep.subr.mxu0 0.0
    %6797 = vmatpush1.msra.mxu0 0.0
    %6798 = vmatprep.subr.mxu0 0.0
    %6799 = vmatpush1.msra.mxu0 0.0
    %6800 = vmatprep.subr.mxu0 0.0
    %6801 = vmatpush1.msra.mxu0 0.0
    %6802 = vmatprep.subr.mxu0 0.0
    %6803 = vmatpush1.msra.mxu0 0.0
    %6804 = vmatprep.subr.mxu0 0.0
    %6805 = vmatpush1.msra.mxu0 0.0
    %6806 = vmatprep.subr.mxu0 0.0
    %6807 = vmatpush1.msra.mxu0 0.0
    %6808 = vmatprep.subr.mxu0 0.0
    %6809 = vmatpush1.msra.mxu0 0.0
    %6810 = vmatprep.subr.mxu0 0.0
    %6811 = vmatpush1.msra.mxu0 0.0
    %6812 = vmatprep.subr.mxu0 0.0
    %6813 = vmatpush1.msra.mxu0 0.0
    %6814 = vmatprep.subr.mxu0 0.0
    %6815 = vmatpush1.msra.mxu0 0.0
    %6816 = vmatprep.subr.mxu0 0.0
    %6817 = vmatpush1.msra.mxu0 0.0
    %6818 = vmatprep.subr.mxu0 0.0
    %6819 = vmatpush1.msra.mxu0 0.0
    %6820 = vmatprep.subr.mxu0 0.0
    %6821 = vmatpush1.msra.mxu0 0.0
    %6822 = vmatprep.subr.mxu0 0.0
    %6823 = vmatpush1.msra.mxu0 0.0
    %6824 = vmatprep.subr.mxu0 0.0
    %6825 = vmatpush1.msra.mxu0 0.0
    %6826 = vmatprep.subr.mxu0 0.0
    %6827 = vmatpush1.msra.mxu0 0.0
    %6828 = vmatprep.subr.mxu0 0.0
    %6829 = vmatpush1.msra.mxu0 0.0
    %6830 = vmatprep.subr.mxu0 0.0
    %6831 = vmatpush1.msra.mxu0 0.0
    %6832 = vmatprep.subr.mxu0 0.0
    %6833 = vmatpush1.msra.mxu0 0.0
    %6834 = vmatprep.subr.mxu0 0.0
    %6835 = vmatpush1.msra.mxu0 0.0
    %6836 = vmatprep.subr.mxu0 0.0
    %6837 = vmatpush1.msra.mxu0 0.0
    %6838 = vmatprep.subr.mxu0 0.0
    %6839 = vmatpush1.msra.mxu0 0.0
    %6840 = vmatprep.subr.mxu0 0.0
    %6841 = vmatpush1.msra.mxu0 0.0
    %6842 = vmatprep.mubr.f32.mxu0 0.0
    %6843 = vmatmul.mubr.f32.gmra.mrb[0].mxu0 %v5630
    %v6844 = vpop.f32.mrb[0].mxu0
    %v6845 = vadd.f32 0.0, %v6844
    %v6846 = vpop.f32.mrb[0].mxu0
    %6847 = vdwg.mxu0
    %6848 = vmatprep.subr.mxu0 0.0
    %6849 = vmatpush1.msra.mxu0 %v6705
    %6850 = vmatprep.subr.mxu0 0.0
    %6851 = vmatpush1.msra.mxu0 0.0
    %6852 = vmatprep.subr.mxu0 0.0
    %6853 = vmatpush1.msra.mxu0 0.0
    %6854 = vmatprep.subr.mxu0 0.0
    %6855 = vmatpush1.msra.mxu0 0.0
    %6856 = vmatprep.subr.mxu0 0.0
    %6857 = vmatpush1.msra.mxu0 0.0
    %6858 = vmatprep.subr.mxu0 0.0
    %6859 = vmatpush1.msra.mxu0 0.0
    %6860 = vmatprep.subr.mxu0 0.0
    %6861 = vmatpush1.msra.mxu0 0.0
    %6862 = vmatprep.subr.mxu0 0.0
    %6863 = vmatpush1.msra.mxu0 0.0
    %6864 = vmatprep.subr.mxu0 0.0
    %6865 = vmatpush1.msra.mxu0 0.0
    %6866 = vmatprep.subr.mxu0 0.0
    %6867 = vmatpush1.msra.mxu0 0.0
    %6868 = vmatprep.subr.mxu0 0.0
    %6869 = vmatpush1.msra.mxu0 0.0
    %6870 = vmatprep.subr.mxu0 0.0
    %6871 = vmatpush1.msra.mxu0 0.0
    %6872 = vmatprep.subr.mxu0 0.0
    %6873 = vmatpush1.msra.mxu0 0.0
    %6874 = vmatprep.subr.mxu0 0.0
    %6875 = vmatpush1.msra.mxu0 0.0
    %6876 = vmatprep.subr.mxu0 0.0
    %6877 = vmatpush1.msra.mxu0 0.0
    %6878 = vmatprep.subr.mxu0 0.0
    %6879 = vmatpush1.msra.mxu0 0.0
    %6880 = vmatprep.subr.mxu0 0.0
    %6881 = vmatpush1.msra.mxu0 0.0
    %6882 = vmatprep.subr.mxu0 0.0
    %6883 = vmatpush1.msra.mxu0 0.0
    %6884 = vmatprep.subr.mxu0 0.0
    %6885 = vmatpush1.msra.mxu0 0.0
    %6886 = vmatprep.subr.mxu0 0.0
    %6887 = vmatpush1.msra.mxu0 0.0
    %6888 = vmatprep.subr.mxu0 0.0
    %6889 = vmatpush1.msra.mxu0 0.0
    %6890 = vmatprep.subr.mxu0 0.0
    %6891 = vmatpush1.msra.mxu0 0.0
    %6892 = vmatprep.subr.mxu0 0.0
    %6893 = vmatpush1.msra.mxu0 0.0
    %6894 = vmatprep.subr.mxu0 0.0
    %6895 = vmatpush1.msra.mxu0 0.0
    %6896 = vmatprep.subr.mxu0 0.0
    %6897 = vmatpush1.msra.mxu0 0.0
    %6898 = vmatprep.subr.mxu0 0.0
    %6899 = vmatpush1.msra.mxu0 0.0
    %6900 = vmatprep.subr.mxu0 0.0
    %6901 = vmatpush1.msra.mxu0 0.0
    %6902 = vmatprep.subr.mxu0 0.0
    %6903 = vmatpush1.msra.mxu0 0.0
    %6904 = vmatprep.subr.mxu0 0.0
    %6905 = vmatpush1.msra.mxu0 0.0
    %6906 = vmatprep.subr.mxu0 0.0
    %6907 = vmatpush1.msra.mxu0 0.0
    %6908 = vmatprep.subr.mxu0 0.0
    %6909 = vmatpush1.msra.mxu0 0.0
    %6910 = vmatprep.subr.mxu0 0.0
    %6911 = vmatpush1.msra.mxu0 0.0
    %6912 = vmatprep.mubr.f32.mxu0 0.0
    %6913 = vmatmul.mubr.f32.gmra.mrb[0].mxu0 %v5703
    %v6914 = vpop.f32.mrb[0].mxu0
    %v6915 = vadd.f32 0.0, %v6914
    %v6916 = vpop.f32.mrb[0].mxu0
    %6917 = vdwg.mxu0
    %6918 = vmatprep.subr.mxu0 0.0
    %6919 = vmatpush1.msra.mxu0 %v6706
    %6920 = vmatprep.subr.mxu0 0.0
    %6921 = vmatpush1.msra.mxu0 0.0
    %6922 = vmatprep.subr.mxu0 0.0
    %6923 = vmatpush1.msra.mxu0 0.0
    %6924 = vmatprep.subr.mxu0 0.0
    %6925 = vmatpush1.msra.mxu0 0.0
    %6926 = vmatprep.subr.mxu0 0.0
    %6927 = vmatpush1.msra.mxu0 0.0
    %6928 = vmatprep.subr.mxu0 0.0
    %6929 = vmatpush1.msra.mxu0 0.0
    %6930 = vmatprep.subr.mxu0 0.0
    %6931 = vmatpush1.msra.mxu0 0.0
    %6932 = vmatprep.subr.mxu0 0.0
    %6933 = vmatpush1.msra.mxu0 0.0
    %6934 = vmatprep.subr.mxu0 0.0
    %6935 = vmatpush1.msra.mxu0 0.0
    %6936 = vmatprep.subr.mxu0 0.0
    %6937 = vmatpush1.msra.mxu0 0.0
    %6938 = vmatprep.subr.mxu0 0.0
    %6939 = vmatpush1.msra.mxu0 0.0
    %6940 = vmatprep.subr.mxu0 0.0
    %6941 = vmatpush1.msra.mxu0 0.0
    %6942 = vmatprep.subr.mxu0 0.0
    %6943 = vmatpush1.msra.mxu0 0.0
    %6944 = vmatprep.subr.mxu0 0.0
    %6945 = vmatpush1.msra.mxu0 0.0
    %6946 = vmatprep.subr.mxu0 0.0
    %6947 = vmatpush1.msra.mxu0 0.0
    %6948 = vmatprep.subr.mxu0 0.0
    %6949 = vmatpush1.msra.mxu0 0.0
    %6950 = vmatprep.subr.mxu0 0.0
    %6951 = vmatpush1.msra.mxu0 0.0
    %6952 = vmatprep.subr.mxu0 0.0
    %6953 = vmatpush1.msra.mxu0 0.0
    %6954 = vmatprep.subr.mxu0 0.0
    %6955 = vmatpush1.msra.mxu0 0.0
    %6956 = vmatprep.subr.mxu0 0.0
    %6957 = vmatpush1.msra.mxu0 0.0
    %6958 = vmatprep.subr.mxu0 0.0
    %6959 = vmatpush1.msra.mxu0 0.0
    %6960 = vmatprep.subr.mxu0 0.0
    %6961 = vmatpush1.msra.mxu0 0.0
    %6962 = vmatprep.subr.mxu0 0.0
    %6963 = vmatpush1.msra.mxu0 0.0
    %6964 = vmatprep.subr.mxu0 0.0
    %6965 = vmatpush1.msra.mxu0 0.0
    %6966 = vmatprep.subr.mxu0 0.0
    %6967 = vmatpush1.msra.mxu0 0.0
    %6968 = vmatprep.subr.mxu0 0.0
    %6969 = vmatpush1.msra.mxu0 0.0
    %6970 = vmatprep.subr.mxu0 0.0
    %6971 = vmatpush1.msra.mxu0 0.0
    %6972 = vmatprep.subr.mxu0 0.0
    %6973 = vmatpush1.msra.mxu0 0.0
    %6974 = vmatprep.subr.mxu0 0.0
    %6975 = vmatpush1.msra.mxu0 0.0
    %6976 = vmatprep.subr.mxu0 0.0
    %6977 = vmatpush1.msra.mxu0 0.0
    %6978 = vmatprep.subr.mxu0 0.0
    %6979 = vmatpush1.msra.mxu0 0.0
    %6980 = vmatprep.subr.mxu0 0.0
    %6981 = vmatpush1.msra.mxu0 0.0
    %6982 = vmatprep.mubr.f32.mxu0 0.0
    %6983 = vmatmul.mubr.f32.gmra.mrb[0].mxu0 %v5776
    %v6984 = vpop.f32.mrb[0].mxu0
    %v6985 = vadd.f32 0.0, %v6984
    %v6986 = vpop.f32.mrb[0].mxu0
    %6987 = vdwg.mxu0
    %v6988 = vadd.f32 %v6707, %v6775
    %v6989 = vadd.f32 %v6707, %v6845
    %v6990 = vadd.f32 %v6707, %v6915
    %v6991 = vadd.f32 %v6707, %v6985
    %v6992 = vmul.f32 %v54, -0.16666667
    %6993 = vmatprep.subr.mxu0 0.0
    %6994 = vmatpush1.msra.mxu0 %v6988
    %6995 = vmatprep.subr.mxu0 0.0
    %6996 = vmatpush1.msra.mxu0 0.0
    %6997 = vmatprep.subr.mxu0 0.0
    %6998 = vmatpush1.msra.mxu0 0.0
    %6999 = vmatprep.subr.mxu0 0.0
    %7000 = vmatpush1.msra.mxu0 0.0
    %7001 = vmatprep.subr.mxu0 0.0
    %7002 = vmatpush1.msra.mxu0 0.0
    %7003 = vmatprep.subr.mxu0 0.0
    %7004 = vmatpush1.msra.mxu0 0.0
    %7005 = vmatprep.subr.mxu0 0.0
    %7006 = vmatpush1.msra.mxu0 0.0
    %7007 = vmatprep.subr.mxu0 0.0
    %7008 = vmatpush1.msra.mxu0 0.0
    %7009 = vmatprep.subr.mxu0 0.0
    %7010 = vmatpush1.msra.mxu0 0.0
    %7011 = vmatprep.subr.mxu0 0.0
    %7012 = vmatpush1.msra.mxu0 0.0
    %7013 = vmatprep.subr.mxu0 0.0
    %7014 = vmatpush1.msra.mxu0 0.0
    %7015 = vmatprep.subr.mxu0 0.0
    %7016 = vmatpush1.msra.mxu0 0.0
    %7017 = vmatprep.subr.mxu0 0.0
    %7018 = vmatpush1.msra.mxu0 0.0
    %7019 = vmatprep.subr.mxu0 0.0
    %7020 = vmatpush1.msra.mxu0 0.0
    %7021 = vmatprep.subr.mxu0 0.0
    %7022 = vmatpush1.msra.mxu0 0.0
    %7023 = vmatprep.subr.mxu0 0.0
    %7024 = vmatpush1.msra.mxu0 0.0
    %7025 = vmatprep.subr.mxu0 0.0
    %7026 = vmatpush1.msra.mxu0 0.0
    %7027 = vmatprep.subr.mxu0 0.0
    %7028 = vmatpush1.msra.mxu0 0.0
    %7029 = vmatprep.subr.mxu0 0.0
    %7030 = vmatpush1.msra.mxu0 0.0
    %7031 = vmatprep.subr.mxu0 0.0
    %7032 = vmatpush1.msra.mxu0 0.0
    %7033 = vmatprep.subr.mxu0 0.0
    %7034 = vmatpush1.msra.mxu0 0.0
    %7035 = vmatprep.subr.mxu0 0.0
    %7036 = vmatpush1.msra.mxu0 0.0
    %7037 = vmatprep.subr.mxu0 0.0
    %7038 = vmatpush1.msra.mxu0 0.0
    %7039 = vmatprep.subr.mxu0 0.0
    %7040 = vmatpush1.msra.mxu0 0.0
    %7041 = vmatprep.subr.mxu0 0.0
    %7042 = vmatpush1.msra.mxu0 0.0
    %7043 = vmatprep.subr.mxu0 0.0
    %7044 = vmatpush1.msra.mxu0 0.0
    %7045 = vmatprep.subr.mxu0 0.0
    %7046 = vmatpush1.msra.mxu0 0.0
    %7047 = vmatprep.subr.mxu0 0.0
    %7048 = vmatpush1.msra.mxu0 0.0
    %7049 = vmatprep.subr.mxu0 0.0
    %7050 = vmatpush1.msra.mxu0 0.0
    %7051 = vmatprep.subr.mxu0 0.0
    %7052 = vmatpush1.msra.mxu0 0.0
    %7053 = vmatprep.subr.mxu0 0.0
    %7054 = vmatpush1.msra.mxu0 0.0
    %7055 = vmatprep.subr.mxu0 0.0
    %7056 = vmatpush1.msra.mxu0 0.0
    %7057 = vmatprep.mubr.f32.mxu0 0.0
    %7058 = vmatmul.mubr.f32.gmra.mrb[0].mxu0 %v5557
    %v7059 = vpop.f32.mrb[0].mxu0
    %v7060 = vadd.f32 0.0, %v7059
    %v7061 = vpop.f32.mrb[0].mxu0
    %7062 = vdwg.mxu0
    %7063 = vmatprep.subr.mxu0 0.0
    %7064 = vmatpush1.msra.mxu0 %v6989
    %7065 = vmatprep.subr.mxu0 0.0
    %7066 = vmatpush1.msra.mxu0 0.0
    %7067 = vmatprep.subr.mxu0 0.0
    %7068 = vmatpush1.msra.mxu0 0.0
    %7069 = vmatprep.subr.mxu0 0.0
    %7070 = vmatpush1.msra.mxu0 0.0
    %7071 = vmatprep.subr.mxu0 0.0
    %7072 = vmatpush1.msra.mxu0 0.0
    %7073 = vmatprep.subr.mxu0 0.0
    %7074 = vmatpush1.msra.mxu0 0.0
    %7075 = vmatprep.subr.mxu0 0.0
    %7076 = vmatpush1.msra.mxu0 0.0
    %7077 = vmatprep.subr.mxu0 0.0
    %7078 = vmatpush1.msra.mxu0 0.0
    %7079 = vmatprep.subr.mxu0 0.0
    %7080 = vmatpush1.msra.mxu0 0.0
    %7081 = vmatprep.subr.mxu0 0.0
    %7082 = vmatpush1.msra.mxu0 0.0
    %7083 = vmatprep.subr.mxu0 0.0
    %7084 = vmatpush1.msra.mxu0 0.0
    %7085 = vmatprep.subr.mxu0 0.0
    %7086 = vmatpush1.msra.mxu0 0.0
    %7087 = vmatprep.subr.mxu0 0.0
    %7088 = vmatpush1.msra.mxu0 0.0
    %7089 = vmatprep.subr.mxu0 0.0
    %7090 = vmatpush1.msra.mxu0 0.0
    %7091 = vmatprep.subr.mxu0 0.0
    %7092 = vmatpush1.msra.mxu0 0.0
    %7093 = vmatprep.subr.mxu0 0.0
    %7094 = vmatpush1.msra.mxu0 0.0
    %7095 = vmatprep.subr.mxu0 0.0
    %7096 = vmatpush1.msra.mxu0 0.0
    %7097 = vmatprep.subr.mxu0 0.0
    %7098 = vmatpush1.msra.mxu0 0.0
    %7099 = vmatprep.subr.mxu0 0.0
    %7100 = vmatpush1.msra.mxu0 0.0
    %7101 = vmatprep.subr.mxu0 0.0
    %7102 = vmatpush1.msra.mxu0 0.0
    %7103 = vmatprep.subr.mxu0 0.0
    %7104 = vmatpush1.msra.mxu0 0.0
    %7105 = vmatprep.subr.mxu0 0.0
    %7106 = vmatpush1.msra.mxu0 0.0
    %7107 = vmatprep.subr.mxu0 0.0
    %7108 = vmatpush1.msra.mxu0 0.0
    %7109 = vmatprep.subr.mxu0 0.0
    %7110 = vmatpush1.msra.mxu0 0.0
    %7111 = vmatprep.subr.mxu0 0.0
    %7112 = vmatpush1.msra.mxu0 0.0
    %7113 = vmatprep.subr.mxu0 0.0
    %7114 = vmatpush1.msra.mxu0 0.0
    %7115 = vmatprep.subr.mxu0 0.0
    %7116 = vmatpush1.msra.mxu0 0.0
    %7117 = vmatprep.subr.mxu0 0.0
    %7118 = vmatpush1.msra.mxu0 0.0
    %7119 = vmatprep.subr.mxu0 0.0
    %7120 = vmatpush1.msra.mxu0 0.0
    %7121 = vmatprep.subr.mxu0 0.0
    %7122 = vmatpush1.msra.mxu0 0.0
    %7123 = vmatprep.subr.mxu0 0.0
    %7124 = vmatpush1.msra.mxu0 0.0
    %7125 = vmatprep.subr.mxu0 0.0
    %7126 = vmatpush1.msra.mxu0 0.0
    %7127 = vmatprep.mubr.f32.mxu0 0.0
    %7128 = vmatmul.mubr.f32.gmra.mrb[0].mxu0 %v5630
    %v7129 = vpop.f32.mrb[0].mxu0
    %v7130 = vadd.f32 0.0, %v7129
    %v7131 = vpop.f32.mrb[0].mxu0
    %7132 = vdwg.mxu0
    %7133 = vmatprep.subr.mxu0 0.0
    %7134 = vmatpush1.msra.mxu0 %v6990
    %7135 = vmatprep.subr.mxu0 0.0
    %7136 = vmatpush1.msra.mxu0 0.0
    %7137 = vmatprep.subr.mxu0 0.0
    %7138 = vmatpush1.msra.mxu0 0.0
    %7139 = vmatprep.subr.mxu0 0.0
    %7140 = vmatpush1.msra.mxu0 0.0
    %7141 = vmatprep.subr.mxu0 0.0
    %7142 = vmatpush1.msra.mxu0 0.0
    %7143 = vmatprep.subr.mxu0 0.0
    %7144 = vmatpush1.msra.mxu0 0.0
    %7145 = vmatprep.subr.mxu0 0.0
    %7146 = vmatpush1.msra.mxu0 0.0
    %7147 = vmatprep.subr.mxu0 0.0
    %7148 = vmatpush1.msra.mxu0 0.0
    %7149 = vmatprep.subr.mxu0 0.0
    %7150 = vmatpush1.msra.mxu0 0.0
    %7151 = vmatprep.subr.mxu0 0.0
    %7152 = vmatpush1.msra.mxu0 0.0
    %7153 = vmatprep.subr.mxu0 0.0
    %7154 = vmatpush1.msra.mxu0 0.0
    %7155 = vmatprep.subr.mxu0 0.0
    %7156 = vmatpush1.msra.mxu0 0.0
    %7157 = vmatprep.subr.mxu0 0.0
    %7158 = vmatpush1.msra.mxu0 0.0
    %7159 = vmatprep.subr.mxu0 0.0
    %7160 = vmatpush1.msra.mxu0 0.0
    %7161 = vmatprep.subr.mxu0 0.0
    %7162 = vmatpush1.msra.mxu0 0.0
    %7163 = vmatprep.subr.mxu0 0.0
    %7164 = vmatpush1.msra.mxu0 0.0
    %7165 = vmatprep.subr.mxu0 0.0
    %7166 = vmatpush1.msra.mxu0 0.0
    %7167 = vmatprep.subr.mxu0 0.0
    %7168 = vmatpush1.msra.mxu0 0.0
    %7169 = vmatprep.subr.mxu0 0.0
    %7170 = vmatpush1.msra.mxu0 0.0
    %7171 = vmatprep.subr.mxu0 0.0
    %7172 = vmatpush1.msra.mxu0 0.0
    %7173 = vmatprep.subr.mxu0 0.0
    %7174 = vmatpush1.msra.mxu0 0.0
    %7175 = vmatprep.subr.mxu0 0.0
    %7176 = vmatpush1.msra.mxu0 0.0
    %7177 = vmatprep.subr.mxu0 0.0
    %7178 = vmatpush1.msra.mxu0 0.0
    %7179 = vmatprep.subr.mxu0 0.0
    %7180 = vmatpush1.msra.mxu0 0.0
    %7181 = vmatprep.subr.mxu0 0.0
    %7182 = vmatpush1.msra.mxu0 0.0
    %7183 = vmatprep.subr.mxu0 0.0
    %7184 = vmatpush1.msra.mxu0 0.0
    %7185 = vmatprep.subr.mxu0 0.0
    %7186 = vmatpush1.msra.mxu0 0.0
    %7187 = vmatprep.subr.mxu0 0.0
    %7188 = vmatpush1.msra.mxu0 0.0
    %7189 = vmatprep.subr.mxu0 0.0
    %7190 = vmatpush1.msra.mxu0 0.0
    %7191 = vmatprep.subr.mxu0 0.0
    %7192 = vmatpush1.msra.mxu0 0.0
    %7193 = vmatprep.subr.mxu0 0.0
    %7194 = vmatpush1.msra.mxu0 0.0
    %7195 = vmatprep.subr.mxu0 0.0
    %7196 = vmatpush1.msra.mxu0 0.0
    %7197 = vmatprep.mubr.f32.mxu0 0.0
    %7198 = vmatmul.mubr.f32.gmra.mrb[0].mxu0 %v5703
    %v7199 = vpop.f32.mrb[0].mxu0
    %v7200 = vadd.f32 0.0, %v7199
    %v7201 = vpop.f32.mrb[0].mxu0
    %7202 = vdwg.mxu0
    %7203 = vmatprep.subr.mxu0 0.0
    %7204 = vmatpush1.msra.mxu0 %v6991
    %7205 = vmatprep.subr.mxu0 0.0
    %7206 = vmatpush1.msra.mxu0 0.0
    %7207 = vmatprep.subr.mxu0 0.0
    %7208 = vmatpush1.msra.mxu0 0.0
    %7209 = vmatprep.subr.mxu0 0.0
    %7210 = vmatpush1.msra.mxu0 0.0
    %7211 = vmatprep.subr.mxu0 0.0
    %7212 = vmatpush1.msra.mxu0 0.0
    %7213 = vmatprep.subr.mxu0 0.0
    %7214 = vmatpush1.msra.mxu0 0.0
    %7215 = vmatprep.subr.mxu0 0.0
    %7216 = vmatpush1.msra.mxu0 0.0
    %7217 = vmatprep.subr.mxu0 0.0
    %7218 = vmatpush1.msra.mxu0 0.0
    %7219 = vmatprep.subr.mxu0 0.0
    %7220 = vmatpush1.msra.mxu0 0.0
    %7221 = vmatprep.subr.mxu0 0.0
    %7222 = vmatpush1.msra.mxu0 0.0
    %7223 = vmatprep.subr.mxu0 0.0
    %7224 = vmatpush1.msra.mxu0 0.0
    %7225 = vmatprep.subr.mxu0 0.0
    %7226 = vmatpush1.msra.mxu0 0.0
    %7227 = vmatprep.subr.mxu0 0.0
    %7228 = vmatpush1.msra.mxu0 0.0
    %7229 = vmatprep.subr.mxu0 0.0
    %7230 = vmatpush1.msra.mxu0 0.0
    %7231 = vmatprep.subr.mxu0 0.0
    %7232 = vmatpush1.msra.mxu0 0.0
    %7233 = vmatprep.subr.mxu0 0.0
    %7234 = vmatpush1.msra.mxu0 0.0
    %7235 = vmatprep.subr.mxu0 0.0
    %7236 = vmatpush1.msra.mxu0 0.0
    %7237 = vmatprep.subr.mxu0 0.0
    %7238 = vmatpush1.msra.mxu0 0.0
    %7239 = vmatprep.subr.mxu0 0.0
    %7240 = vmatpush1.msra.mxu0 0.0
    %7241 = vmatprep.subr.mxu0 0.0
    %7242 = vmatpush1.msra.mxu0 0.0
    %7243 = vmatprep.subr.mxu0 0.0
    %7244 = vmatpush1.msra.mxu0 0.0
    %7245 = vmatprep.subr.mxu0 0.0
    %7246 = vmatpush1.msra.mxu0 0.0
    %7247 = vmatprep.subr.mxu0 0.0
    %7248 = vmatpush1.msra.mxu0 0.0
    %7249 = vmatprep.subr.mxu0 0.0
    %7250 = vmatpush1.msra.mxu0 0.0
    %7251 = vmatprep.subr.mxu0 0.0
    %7252 = vmatpush1.msra.mxu0 0.0
    %7253 = vmatprep.subr.mxu0 0.0
    %7254 = vmatpush1.msra.mxu0 0.0
    %7255 = vmatprep.subr.mxu0 0.0
    %7256 = vmatpush1.msra.mxu0 0.0
    %7257 = vmatprep.subr.mxu0 0.0
    %7258 = vmatpush1.msra.mxu0 0.0
    %7259 = vmatprep.subr.mxu0 0.0
    %7260 = vmatpush1.msra.mxu0 0.0
    %7261 = vmatprep.subr.mxu0 0.0
    %7262 = vmatpush1.msra.mxu0 0.0
    %7263 = vmatprep.subr.mxu0 0.0
    %7264 = vmatpush1.msra.mxu0 0.0
    %7265 = vmatprep.subr.mxu0 0.0
    %7266 = vmatpush1.msra.mxu0 0.0
    %7267 = vmatprep.mubr.f32.mxu0 0.0
    %7268 = vmatmul.mubr.f32.gmra.mrb[0].mxu0 %v5776
    %v7269 = vpop.f32.mrb[0].mxu0
    %v7270 = vadd.f32 0.0, %v7269
    %v7271 = vpop.f32.mrb[0].mxu0
    %7272 = vdwg.mxu0
    %v7273 = vadd.f32 %v6992, %v7060
    %v7274 = vadd.f32 %v6992, %v7130
    %v7275 = vadd.f32 %v6992, %v7200
    %v7276 = vadd.f32 %v6992, %v7270
    %v7277 = vmul.f32 %v54, 0.2
    %7278 = vmatprep.subr.mxu0 0.0
    %7279 = vmatpush1.msra.mxu0 %v7273
    %7280 = vmatprep.subr.mxu0 0.0
    %7281 = vmatpush1.msra.mxu0 0.0
    %7282 = vmatprep.subr.mxu0 0.0
    %7283 = vmatpush1.msra.mxu0 0.0
    %7284 = vmatprep.subr.mxu0 0.0
    %7285 = vmatpush1.msra.mxu0 0.0
    %7286 = vmatprep.subr.mxu0 0.0
    %7287 = vmatpush1.msra.mxu0 0.0
    %7288 = vmatprep.subr.mxu0 0.0
    %7289 = vmatpush1.msra.mxu0 0.0
    %7290 = vmatprep.subr.mxu0 0.0
    %7291 = vmatpush1.msra.mxu0 0.0
    %7292 = vmatprep.subr.mxu0 0.0
    %7293 = vmatpush1.msra.mxu0 0.0
    %7294 = vmatprep.subr.mxu0 0.0
    %7295 = vmatpush1.msra.mxu0 0.0
    %7296 = vmatprep.subr.mxu0 0.0
    %7297 = vmatpush1.msra.mxu0 0.0
    %7298 = vmatprep.subr.mxu0 0.0
    %7299 = vmatpush1.msra.mxu0 0.0
    %7300 = vmatprep.subr.mxu0 0.0
    %7301 = vmatpush1.msra.mxu0 0.0
    %7302 = vmatprep.subr.mxu0 0.0
    %7303 = vmatpush1.msra.mxu0 0.0
    %7304 = vmatprep.subr.mxu0 0.0
    %7305 = vmatpush1.msra.mxu0 0.0
    %7306 = vmatprep.subr.mxu0 0.0
    %7307 = vmatpush1.msra.mxu0 0.0
    %7308 = vmatprep.subr.mxu0 0.0
    %7309 = vmatpush1.msra.mxu0 0.0
    %7310 = vmatprep.subr.mxu0 0.0
    %7311 = vmatpush1.msra.mxu0 0.0
    %7312 = vmatprep.subr.mxu0 0.0
    %7313 = vmatpush1.msra.mxu0 0.0
    %7314 = vmatprep.subr.mxu0 0.0
    %7315 = vmatpush1.msra.mxu0 0.0
    %7316 = vmatprep.subr.mxu0 0.0
    %7317 = vmatpush1.msra.mxu0 0.0
    %7318 = vmatprep.subr.mxu0 0.0
    %7319 = vmatpush1.msra.mxu0 0.0
    %7320 = vmatprep.subr.mxu0 0.0
    %7321 = vmatpush1.msra.mxu0 0.0
    %7322 = vmatprep.subr.mxu0 0.0
    %7323 = vmatpush1.msra.mxu0 0.0
    %7324 = vmatprep.subr.mxu0 0.0
    %7325 = vmatpush1.msra.mxu0 0.0
    %7326 = vmatprep.subr.mxu0 0.0
    %7327 = vmatpush1.msra.mxu0 0.0
    %7328 = vmatprep.subr.mxu0 0.0
    %7329 = vmatpush1.msra.mxu0 0.0
    %7330 = vmatprep.subr.mxu0 0.0
    %7331 = vmatpush1.msra.mxu0 0.0
    %7332 = vmatprep.subr.mxu0 0.0
    %7333 = vmatpush1.msra.mxu0 0.0
    %7334 = vmatprep.subr.mxu0 0.0
    %7335 = vmatpush1.msra.mxu0 0.0
    %7336 = vmatprep.subr.mxu0 0.0
    %7337 = vmatpush1.msra.mxu0 0.0
    %7338 = vmatprep.subr.mxu0 0.0
    %7339 = vmatpush1.msra.mxu0 0.0
    %7340 = vmatprep.subr.mxu0 0.0
    %7341 = vmatpush1.msra.mxu0 0.0
    %7342 = vmatprep.mubr.f32.mxu0 0.0
    %7343 = vmatmul.mubr.f32.gmra.mrb[0].mxu0 %v5557
    %v7344 = vpop.f32.mrb[0].mxu0
    %v7345 = vadd.f32 0.0, %v7344
    %v7346 = vpop.f32.mrb[0].mxu0
    %7347 = vdwg.mxu0
    %7348 = vmatprep.subr.mxu0 0.0
    %7349 = vmatpush1.msra.mxu0 %v7274
    %7350 = vmatprep.subr.mxu0 0.0
    %7351 = vmatpush1.msra.mxu0 0.0
    %7352 = vmatprep.subr.mxu0 0.0
    %7353 = vmatpush1.msra.mxu0 0.0
    %7354 = vmatprep.subr.mxu0 0.0
    %7355 = vmatpush1.msra.mxu0 0.0
    %7356 = vmatprep.subr.mxu0 0.0
    %7357 = vmatpush1.msra.mxu0 0.0
    %7358 = vmatprep.subr.mxu0 0.0
    %7359 = vmatpush1.msra.mxu0 0.0
    %7360 = vmatprep.subr.mxu0 0.0
    %7361 = vmatpush1.msra.mxu0 0.0
    %7362 = vmatprep.subr.mxu0 0.0
    %7363 = vmatpush1.msra.mxu0 0.0
    %7364 = vmatprep.subr.mxu0 0.0
    %7365 = vmatpush1.msra.mxu0 0.0
    %7366 = vmatprep.subr.mxu0 0.0
    %7367 = vmatpush1.msra.mxu0 0.0
    %7368 = vmatprep.subr.mxu0 0.0
    %7369 = vmatpush1.msra.mxu0 0.0
    %7370 = vmatprep.subr.mxu0 0.0
    %7371 = vmatpush1.msra.mxu0 0.0
    %7372 = vmatprep.subr.mxu0 0.0
    %7373 = vmatpush1.msra.mxu0 0.0
    %7374 = vmatprep.subr.mxu0 0.0
    %7375 = vmatpush1.msra.mxu0 0.0
    %7376 = vmatprep.subr.mxu0 0.0
    %7377 = vmatpush1.msra.mxu0 0.0
    %7378 = vmatprep.subr.mxu0 0.0
    %7379 = vmatpush1.msra.mxu0 0.0
    %7380 = vmatprep.subr.mxu0 0.0
    %7381 = vmatpush1.msra.mxu0 0.0
    %7382 = vmatprep.subr.mxu0 0.0
    %7383 = vmatpush1.msra.mxu0 0.0
    %7384 = vmatprep.subr.mxu0 0.0
    %7385 = vmatpush1.msra.mxu0 0.0
    %7386 = vmatprep.subr.mxu0 0.0
    %7387 = vmatpush1.msra.mxu0 0.0
    %7388 = vmatprep.subr.mxu0 0.0
    %7389 = vmatpush1.msra.mxu0 0.0
    %7390 = vmatprep.subr.mxu0 0.0
    %7391 = vmatpush1.msra.mxu0 0.0
    %7392 = vmatprep.subr.mxu0 0.0
    %7393 = vmatpush1.msra.mxu0 0.0
    %7394 = vmatprep.subr.mxu0 0.0
    %7395 = vmatpush1.msra.mxu0 0.0
    %7396 = vmatprep.subr.mxu0 0.0
    %7397 = vmatpush1.msra.mxu0 0.0
    %7398 = vmatprep.subr.mxu0 0.0
    %7399 = vmatpush1.msra.mxu0 0.0
    %7400 = vmatprep.subr.mxu0 0.0
    %7401 = vmatpush1.msra.mxu0 0.0
    %7402 = vmatprep.subr.mxu0 0.0
    %7403 = vmatpush1.msra.mxu0 0.0
    %7404 = vmatprep.subr.mxu0 0.0
    %7405 = vmatpush1.msra.mxu0 0.0
    %7406 = vmatprep.subr.mxu0 0.0
    %7407 = vmatpush1.msra.mxu0 0.0
    %7408 = vmatprep.subr.mxu0 0.0
    %7409 = vmatpush1.msra.mxu0 0.0
    %7410 = vmatprep.subr.mxu0 0.0
    %7411 = vmatpush1.msra.mxu0 0.0
    %7412 = vmatprep.mubr.f32.mxu0 0.0
    %7413 = vmatmul.mubr.f32.gmra.mrb[0].mxu0 %v5630
    %v7414 = vpop.f32.mrb[0].mxu0
    %v7415 = vadd.f32 0.0, %v7414
    %v7416 = vpop.f32.mrb[0].mxu0
    %7417 = vdwg.mxu0
    %7418 = vmatprep.subr.mxu0 0.0
    %7419 = vmatpush1.msra.mxu0 %v7275
    %7420 = vmatprep.subr.mxu0 0.0
    %7421 = vmatpush1.msra.mxu0 0.0
    %7422 = vmatprep.subr.mxu0 0.0
    %7423 = vmatpush1.msra.mxu0 0.0
    %7424 = vmatprep.subr.mxu0 0.0
    %7425 = vmatpush1.msra.mxu0 0.0
    %7426 = vmatprep.subr.mxu0 0.0
    %7427 = vmatpush1.msra.mxu0 0.0
    %7428 = vmatprep.subr.mxu0 0.0
    %7429 = vmatpush1.msra.mxu0 0.0
    %7430 = vmatprep.subr.mxu0 0.0
    %7431 = vmatpush1.msra.mxu0 0.0
    %7432 = vmatprep.subr.mxu0 0.0
    %7433 = vmatpush1.msra.mxu0 0.0
    %7434 = vmatprep.subr.mxu0 0.0
    %7435 = vmatpush1.msra.mxu0 0.0
    %7436 = vmatprep.subr.mxu0 0.0
    %7437 = vmatpush1.msra.mxu0 0.0
    %7438 = vmatprep.subr.mxu0 0.0
    %7439 = vmatpush1.msra.mxu0 0.0
    %7440 = vmatprep.subr.mxu0 0.0
    %7441 = vmatpush1.msra.mxu0 0.0
    %7442 = vmatprep.subr.mxu0 0.0
    %7443 = vmatpush1.msra.mxu0 0.0
    %7444 = vmatprep.subr.mxu0 0.0
    %7445 = vmatpush1.msra.mxu0 0.0
    %7446 = vmatprep.subr.mxu0 0.0
    %7447 = vmatpush1.msra.mxu0 0.0
    %7448 = vmatprep.subr.mxu0 0.0
    %7449 = vmatpush1.msra.mxu0 0.0
    %7450 = vmatprep.subr.mxu0 0.0
    %7451 = vmatpush1.msra.mxu0 0.0
    %7452 = vmatprep.subr.mxu0 0.0
    %7453 = vmatpush1.msra.mxu0 0.0
    %7454 = vmatprep.subr.mxu0 0.0
    %7455 = vmatpush1.msra.mxu0 0.0
    %7456 = vmatprep.subr.mxu0 0.0
    %7457 = vmatpush1.msra.mxu0 0.0
    %7458 = vmatprep.subr.mxu0 0.0
    %7459 = vmatpush1.msra.mxu0 0.0
    %7460 = vmatprep.subr.mxu0 0.0
    %7461 = vmatpush1.msra.mxu0 0.0
    %7462 = vmatprep.subr.mxu0 0.0
    %7463 = vmatpush1.msra.mxu0 0.0
    %7464 = vmatprep.subr.mxu0 0.0
    %7465 = vmatpush1.msra.mxu0 0.0
    %7466 = vmatprep.subr.mxu0 0.0
    %7467 = vmatpush1.msra.mxu0 0.0
    %7468 = vmatprep.subr.mxu0 0.0
    %7469 = vmatpush1.msra.mxu0 0.0
    %7470 = vmatprep.subr.mxu0 0.0
    %7471 = vmatpush1.msra.mxu0 0.0
    %7472 = vmatprep.subr.mxu0 0.0
    %7473 = vmatpush1.msra.mxu0 0.0
    %7474 = vmatprep.subr.mxu0 0.0
    %7475 = vmatpush1.msra.mxu0 0.0
    %7476 = vmatprep.subr.mxu0 0.0
    %7477 = vmatpush1.msra.mxu0 0.0
    %7478 = vmatprep.subr.mxu0 0.0
    %7479 = vmatpush1.msra.mxu0 0.0
    %7480 = vmatprep.subr.mxu0 0.0
    %7481 = vmatpush1.msra.mxu0 0.0
    %7482 = vmatprep.mubr.f32.mxu0 0.0
    %7483 = vmatmul.mubr.f32.gmra.mrb[0].mxu0 %v5703
    %v7484 = vpop.f32.mrb[0].mxu0
    %v7485 = vadd.f32 0.0, %v7484
    %v7486 = vpop.f32.mrb[0].mxu0
    %7487 = vdwg.mxu0
    %7488 = vmatprep.subr.mxu0 0.0
    %7489 = vmatpush1.msra.mxu0 %v7276
    %7490 = vmatprep.subr.mxu0 0.0
    %7491 = vmatpush1.msra.mxu0 0.0
    %7492 = vmatprep.subr.mxu0 0.0
    %7493 = vmatpush1.msra.mxu0 0.0
    %7494 = vmatprep.subr.mxu0 0.0
    %7495 = vmatpush1.msra.mxu0 0.0
    %7496 = vmatprep.subr.mxu0 0.0
    %7497 = vmatpush1.msra.mxu0 0.0
    %7498 = vmatprep.subr.mxu0 0.0
    %7499 = vmatpush1.msra.mxu0 0.0
    %7500 = vmatprep.subr.mxu0 0.0
    %7501 = vmatpush1.msra.mxu0 0.0
    %7502 = vmatprep.subr.mxu0 0.0
    %7503 = vmatpush1.msra.mxu0 0.0
    %7504 = vmatprep.subr.mxu0 0.0
    %7505 = vmatpush1.msra.mxu0 0.0
    %7506 = vmatprep.subr.mxu0 0.0
    %7507 = vmatpush1.msra.mxu0 0.0
    %7508 = vmatprep.subr.mxu0 0.0
    %7509 = vmatpush1.msra.mxu0 0.0
    %7510 = vmatprep.subr.mxu0 0.0
    %7511 = vmatpush1.msra.mxu0 0.0
    %7512 = vmatprep.subr.mxu0 0.0
    %7513 = vmatpush1.msra.mxu0 0.0
    %7514 = vmatprep.subr.mxu0 0.0
    %7515 = vmatpush1.msra.mxu0 0.0
    %7516 = vmatprep.subr.mxu0 0.0
    %7517 = vmatpush1.msra.mxu0 0.0
    %7518 = vmatprep.subr.mxu0 0.0
    %7519 = vmatpush1.msra.mxu0 0.0
    %7520 = vmatprep.subr.mxu0 0.0
    %7521 = vmatpush1.msra.mxu0 0.0
    %7522 = vmatprep.subr.mxu0 0.0
    %7523 = vmatpush1.msra.mxu0 0.0
    %7524 = vmatprep.subr.mxu0 0.0
    %7525 = vmatpush1.msra.mxu0 0.0
    %7526 = vmatprep.subr.mxu0 0.0
    %7527 = vmatpush1.msra.mxu0 0.0
    %7528 = vmatprep.subr.mxu0 0.0
    %7529 = vmatpush1.msra.mxu0 0.0
    %7530 = vmatprep.subr.mxu0 0.0
    %7531 = vmatpush1.msra.mxu0 0.0
    %7532 = vmatprep.subr.mxu0 0.0
    %7533 = vmatpush1.msra.mxu0 0.0
    %7534 = vmatprep.subr.mxu0 0.0
    %7535 = vmatpush1.msra.mxu0 0.0
    %7536 = vmatprep.subr.mxu0 0.0
    %7537 = vmatpush1.msra.mxu0 0.0
    %7538 = vmatprep.subr.mxu0 0.0
    %7539 = vmatpush1.msra.mxu0 0.0
    %7540 = vmatprep.subr.mxu0 0.0
    %7541 = vmatpush1.msra.mxu0 0.0
    %7542 = vmatprep.subr.mxu0 0.0
    %7543 = vmatpush1.msra.mxu0 0.0
    %7544 = vmatprep.subr.mxu0 0.0
    %7545 = vmatpush1.msra.mxu0 0.0
    %7546 = vmatprep.subr.mxu0 0.0
    %7547 = vmatpush1.msra.mxu0 0.0
    %7548 = vmatprep.subr.mxu0 0.0
    %7549 = vmatpush1.msra.mxu0 0.0
    %7550 = vmatprep.subr.mxu0 0.0
    %7551 = vmatpush1.msra.mxu0 0.0
    %7552 = vmatprep.mubr.f32.mxu0 0.0
    %7553 = vmatmul.mubr.f32.gmra.mrb[0].mxu0 %v5776
    %v7554 = vpop.f32.mrb[0].mxu0
    %v7555 = vadd.f32 0.0, %v7554
    %v7556 = vpop.f32.mrb[0].mxu0
    %7557 = vdwg.mxu0
    %v7558 = vadd.f32 %v7277, %v7345
    %v7559 = vadd.f32 %v7277, %v7415
    %v7560 = vadd.f32 %v7277, %v7485
    %v7561 = vadd.f32 %v7277, %v7555
    %v7562 = vmul.f32 %v54, -0.25
    %7563 = vmatprep.subr.mxu0 0.0
    %7564 = vmatpush1.msra.mxu0 %v7558
    %7565 = vmatprep.subr.mxu0 0.0
    %7566 = vmatpush1.msra.mxu0 0.0
    %7567 = vmatprep.subr.mxu0 0.0
    %7568 = vmatpush1.msra.mxu0 0.0
    %7569 = vmatprep.subr.mxu0 0.0
    %7570 = vmatpush1.msra.mxu0 0.0
    %7571 = vmatprep.subr.mxu0 0.0
    %7572 = vmatpush1.msra.mxu0 0.0
    %7573 = vmatprep.subr.mxu0 0.0
    %7574 = vmatpush1.msra.mxu0 0.0
    %7575 = vmatprep.subr.mxu0 0.0
    %7576 = vmatpush1.msra.mxu0 0.0
    %7577 = vmatprep.subr.mxu0 0.0
    %7578 = vmatpush1.msra.mxu0 0.0
    %7579 = vmatprep.subr.mxu0 0.0
    %7580 = vmatpush1.msra.mxu0 0.0
    %7581 = vmatprep.subr.mxu0 0.0
    %7582 = vmatpush1.msra.mxu0 0.0
    %7583 = vmatprep.subr.mxu0 0.0
    %7584 = vmatpush1.msra.mxu0 0.0
    %7585 = vmatprep.subr.mxu0 0.0
    %7586 = vmatpush1.msra.mxu0 0.0
    %7587 = vmatprep.subr.mxu0 0.0
    %7588 = vmatpush1.msra.mxu0 0.0
    %7589 = vmatprep.subr.mxu0 0.0
    %7590 = vmatpush1.msra.mxu0 0.0
    %7591 = vmatprep.subr.mxu0 0.0
    %7592 = vmatpush1.msra.mxu0 0.0
    %7593 = vmatprep.subr.mxu0 0.0
    %7594 = vmatpush1.msra.mxu0 0.0
    %7595 = vmatprep.subr.mxu0 0.0
    %7596 = vmatpush1.msra.mxu0 0.0
    %7597 = vmatprep.subr.mxu0 0.0
    %7598 = vmatpush1.msra.mxu0 0.0
    %7599 = vmatprep.subr.mxu0 0.0
    %7600 = vmatpush1.msra.mxu0 0.0
    %7601 = vmatprep.subr.mxu0 0.0
    %7602 = vmatpush1.msra.mxu0 0.0
    %7603 = vmatprep.subr.mxu0 0.0
    %7604 = vmatpush1.msra.mxu0 0.0
    %7605 = vmatprep.subr.mxu0 0.0
    %7606 = vmatpush1.msra.mxu0 0.0
    %7607 = vmatprep.subr.mxu0 0.0
    %7608 = vmatpush1.msra.mxu0 0.0
    %7609 = vmatprep.subr.mxu0 0.0
    %7610 = vmatpush1.msra.mxu0 0.0
    %7611 = vmatprep.subr.mxu0 0.0
    %7612 = vmatpush1.msra.mxu0 0.0
    %7613 = vmatprep.subr.mxu0 0.0
    %7614 = vmatpush1.msra.mxu0 0.0
    %7615 = vmatprep.subr.mxu0 0.0
    %7616 = vmatpush1.msra.mxu0 0.0
    %7617 = vmatprep.subr.mxu0 0.0
    %7618 = vmatpush1.msra.mxu0 0.0
    %7619 = vmatprep.subr.mxu0 0.0
    %7620 = vmatpush1.msra.mxu0 0.0
    %7621 = vmatprep.subr.mxu0 0.0
    %7622 = vmatpush1.msra.mxu0 0.0
    %7623 = vmatprep.subr.mxu0 0.0
    %7624 = vmatpush1.msra.mxu0 0.0
    %7625 = vmatprep.subr.mxu0 0.0
    %7626 = vmatpush1.msra.mxu0 0.0
    %7627 = vmatprep.mubr.f32.mxu0 0.0
    %7628 = vmatmul.mubr.f32.gmra.mrb[0].mxu0 %v5557
    %v7629 = vpop.f32.mrb[0].mxu0
    %v7630 = vadd.f32 0.0, %v7629
    %v7631 = vpop.f32.mrb[0].mxu0
    %7632 = vdwg.mxu0
    %7633 = vmatprep.subr.mxu0 0.0
    %7634 = vmatpush1.msra.mxu0 %v7559
    %7635 = vmatprep.subr.mxu0 0.0
    %7636 = vmatpush1.msra.mxu0 0.0
    %7637 = vmatprep.subr.mxu0 0.0
    %7638 = vmatpush1.msra.mxu0 0.0
    %7639 = vmatprep.subr.mxu0 0.0
    %7640 = vmatpush1.msra.mxu0 0.0
    %7641 = vmatprep.subr.mxu0 0.0
    %7642 = vmatpush1.msra.mxu0 0.0
    %7643 = vmatprep.subr.mxu0 0.0
    %7644 = vmatpush1.msra.mxu0 0.0
    %7645 = vmatprep.subr.mxu0 0.0
    %7646 = vmatpush1.msra.mxu0 0.0
    %7647 = vmatprep.subr.mxu0 0.0
    %7648 = vmatpush1.msra.mxu0 0.0
    %7649 = vmatprep.subr.mxu0 0.0
    %7650 = vmatpush1.msra.mxu0 0.0
    %7651 = vmatprep.subr.mxu0 0.0
    %7652 = vmatpush1.msra.mxu0 0.0
    %7653 = vmatprep.subr.mxu0 0.0
    %7654 = vmatpush1.msra.mxu0 0.0
    %7655 = vmatprep.subr.mxu0 0.0
    %7656 = vmatpush1.msra.mxu0 0.0
    %7657 = vmatprep.subr.mxu0 0.0
    %7658 = vmatpush1.msra.mxu0 0.0
    %7659 = vmatprep.subr.mxu0 0.0
    %7660 = vmatpush1.msra.mxu0 0.0
    %7661 = vmatprep.subr.mxu0 0.0
    %7662 = vmatpush1.msra.mxu0 0.0
    %7663 = vmatprep.subr.mxu0 0.0
    %7664 = vmatpush1.msra.mxu0 0.0
    %7665 = vmatprep.subr.mxu0 0.0
    %7666 = vmatpush1.msra.mxu0 0.0
    %7667 = vmatprep.subr.mxu0 0.0
    %7668 = vmatpush1.msra.mxu0 0.0
    %7669 = vmatprep.subr.mxu0 0.0
    %7670 = vmatpush1.msra.mxu0 0.0
    %7671 = vmatprep.subr.mxu0 0.0
    %7672 = vmatpush1.msra.mxu0 0.0
    %7673 = vmatprep.subr.mxu0 0.0
    %7674 = vmatpush1.msra.mxu0 0.0
    %7675 = vmatprep.subr.mxu0 0.0
    %7676 = vmatpush1.msra.mxu0 0.0
    %7677 = vmatprep.subr.mxu0 0.0
    %7678 = vmatpush1.msra.mxu0 0.0
    %7679 = vmatprep.subr.mxu0 0.0
    %7680 = vmatpush1.msra.mxu0 0.0
    %7681 = vmatprep.subr.mxu0 0.0
    %7682 = vmatpush1.msra.mxu0 0.0
    %7683 = vmatprep.subr.mxu0 0.0
    %7684 = vmatpush1.msra.mxu0 0.0
    %7685 = vmatprep.subr.mxu0 0.0
    %7686 = vmatpush1.msra.mxu0 0.0
    %7687 = vmatprep.subr.mxu0 0.0
    %7688 = vmatpush1.msra.mxu0 0.0
    %7689 = vmatprep.subr.mxu0 0.0
    %7690 = vmatpush1.msra.mxu0 0.0
    %7691 = vmatprep.subr.mxu0 0.0
    %7692 = vmatpush1.msra.mxu0 0.0
    %7693 = vmatprep.subr.mxu0 0.0
    %7694 = vmatpush1.msra.mxu0 0.0
    %7695 = vmatprep.subr.mxu0 0.0
    %7696 = vmatpush1.msra.mxu0 0.0
    %7697 = vmatprep.mubr.f32.mxu0 0.0
    %7698 = vmatmul.mubr.f32.gmra.mrb[0].mxu0 %v5630
    %v7699 = vpop.f32.mrb[0].mxu0
    %v7700 = vadd.f32 0.0, %v7699
    %v7701 = vpop.f32.mrb[0].mxu0
    %7702 = vdwg.mxu0
    %7703 = vmatprep.subr.mxu0 0.0
    %7704 = vmatpush1.msra.mxu0 %v7560
    %7705 = vmatprep.subr.mxu0 0.0
    %7706 = vmatpush1.msra.mxu0 0.0
    %7707 = vmatprep.subr.mxu0 0.0
    %7708 = vmatpush1.msra.mxu0 0.0
    %7709 = vmatprep.subr.mxu0 0.0
    %7710 = vmatpush1.msra.mxu0 0.0
    %7711 = vmatprep.subr.mxu0 0.0
    %7712 = vmatpush1.msra.mxu0 0.0
    %7713 = vmatprep.subr.mxu0 0.0
    %7714 = vmatpush1.msra.mxu0 0.0
    %7715 = vmatprep.subr.mxu0 0.0
    %7716 = vmatpush1.msra.mxu0 0.0
    %7717 = vmatprep.subr.mxu0 0.0
    %7718 = vmatpush1.msra.mxu0 0.0
    %7719 = vmatprep.subr.mxu0 0.0
    %7720 = vmatpush1.msra.mxu0 0.0
    %7721 = vmatprep.subr.mxu0 0.0
    %7722 = vmatpush1.msra.mxu0 0.0
    %7723 = vmatprep.subr.mxu0 0.0
    %7724 = vmatpush1.msra.mxu0 0.0
    %7725 = vmatprep.subr.mxu0 0.0
    %7726 = vmatpush1.msra.mxu0 0.0
    %7727 = vmatprep.subr.mxu0 0.0
    %7728 = vmatpush1.msra.mxu0 0.0
    %7729 = vmatprep.subr.mxu0 0.0
    %7730 = vmatpush1.msra.mxu0 0.0
    %7731 = vmatprep.subr.mxu0 0.0
    %7732 = vmatpush1.msra.mxu0 0.0
    %7733 = vmatprep.subr.mxu0 0.0
    %7734 = vmatpush1.msra.mxu0 0.0
    %7735 = vmatprep.subr.mxu0 0.0
    %7736 = vmatpush1.msra.mxu0 0.0
    %7737 = vmatprep.subr.mxu0 0.0
    %7738 = vmatpush1.msra.mxu0 0.0
    %7739 = vmatprep.subr.mxu0 0.0
    %7740 = vmatpush1.msra.mxu0 0.0
    %7741 = vmatprep.subr.mxu0 0.0
    %7742 = vmatpush1.msra.mxu0 0.0
    %7743 = vmatprep.subr.mxu0 0.0
    %7744 = vmatpush1.msra.mxu0 0.0
    %7745 = vmatprep.subr.mxu0 0.0
    %7746 = vmatpush1.msra.mxu0 0.0
    %7747 = vmatprep.subr.mxu0 0.0
    %7748 = vmatpush1.msra.mxu0 0.0
    %7749 = vmatprep.subr.mxu0 0.0
    %7750 = vmatpush1.msra.mxu0 0.0
    %7751 = vmatprep.subr.mxu0 0.0
    %7752 = vmatpush1.msra.mxu0 0.0
    %7753 = vmatprep.subr.mxu0 0.0
    %7754 = vmatpush1.msra.mxu0 0.0
    %7755 = vmatprep.subr.mxu0 0.0
    %7756 = vmatpush1.msra.mxu0 0.0
    %7757 = vmatprep.subr.mxu0 0.0
    %7758 = vmatpush1.msra.mxu0 0.0
    %7759 = vmatprep.subr.mxu0 0.0
    %7760 = vmatpush1.msra.mxu0 0.0
    %7761 = vmatprep.subr.mxu0 0.0
    %7762 = vmatpush1.msra.mxu0 0.0
    %7763 = vmatprep.subr.mxu0 0.0
    %7764 = vmatpush1.msra.mxu0 0.0
    %7765 = vmatprep.subr.mxu0 0.0
    %7766 = vmatpush1.msra.mxu0 0.0
    %7767 = vmatprep.mubr.f32.mxu0 0.0
    %7768 = vmatmul.mubr.f32.gmra.mrb[0].mxu0 %v5703
    %v7769 = vpop.f32.mrb[0].mxu0
    %v7770 = vadd.f32 0.0, %v7769
    %v7771 = vpop.f32.mrb[0].mxu0
    %7772 = vdwg.mxu0
    %7773 = vmatprep.subr.mxu0 0.0
    %7774 = vmatpush1.msra.mxu0 %v7561
    %7775 = vmatprep.subr.mxu0 0.0
    %7776 = vmatpush1.msra.mxu0 0.0
    %7777 = vmatprep.subr.mxu0 0.0
    %7778 = vmatpush1.msra.mxu0 0.0
    %7779 = vmatprep.subr.mxu0 0.0
    %7780 = vmatpush1.msra.mxu0 0.0
    %7781 = vmatprep.subr.mxu0 0.0
    %7782 = vmatpush1.msra.mxu0 0.0
    %7783 = vmatprep.subr.mxu0 0.0
    %7784 = vmatpush1.msra.mxu0 0.0
    %7785 = vmatprep.subr.mxu0 0.0
    %7786 = vmatpush1.msra.mxu0 0.0
    %7787 = vmatprep.subr.mxu0 0.0
    %7788 = vmatpush1.msra.mxu0 0.0
    %7789 = vmatprep.subr.mxu0 0.0
    %7790 = vmatpush1.msra.mxu0 0.0
    %7791 = vmatprep.subr.mxu0 0.0
    %7792 = vmatpush1.msra.mxu0 0.0
    %7793 = vmatprep.subr.mxu0 0.0
    %7794 = vmatpush1.msra.mxu0 0.0
    %7795 = vmatprep.subr.mxu0 0.0
    %7796 = vmatpush1.msra.mxu0 0.0
    %7797 = vmatprep.subr.mxu0 0.0
    %7798 = vmatpush1.msra.mxu0 0.0
    %7799 = vmatprep.subr.mxu0 0.0
    %7800 = vmatpush1.msra.mxu0 0.0
    %7801 = vmatprep.subr.mxu0 0.0
    %7802 = vmatpush1.msra.mxu0 0.0
    %7803 = vmatprep.subr.mxu0 0.0
    %7804 = vmatpush1.msra.mxu0 0.0
    %7805 = vmatprep.subr.mxu0 0.0
    %7806 = vmatpush1.msra.mxu0 0.0
    %7807 = vmatprep.subr.mxu0 0.0
    %7808 = vmatpush1.msra.mxu0 0.0
    %7809 = vmatprep.subr.mxu0 0.0
    %7810 = vmatpush1.msra.mxu0 0.0
    %7811 = vmatprep.subr.mxu0 0.0
    %7812 = vmatpush1.msra.mxu0 0.0
    %7813 = vmatprep.subr.mxu0 0.0
    %7814 = vmatpush1.msra.mxu0 0.0
    %7815 = vmatprep.subr.mxu0 0.0
    %7816 = vmatpush1.msra.mxu0 0.0
    %7817 = vmatprep.subr.mxu0 0.0
    %7818 = vmatpush1.msra.mxu0 0.0
    %7819 = vmatprep.subr.mxu0 0.0
    %7820 = vmatpush1.msra.mxu0 0.0
    %7821 = vmatprep.subr.mxu0 0.0
    %7822 = vmatpush1.msra.mxu0 0.0
    %7823 = vmatprep.subr.mxu0 0.0
    %7824 = vmatpush1.msra.mxu0 0.0
    %7825 = vmatprep.subr.mxu0 0.0
    %7826 = vmatpush1.msra.mxu0 0.0
    %7827 = vmatprep.subr.mxu0 0.0
    %7828 = vmatpush1.msra.mxu0 0.0
    %7829 = vmatprep.subr.mxu0 0.0
    %7830 = vmatpush1.msra.mxu0 0.0
    %7831 = vmatprep.subr.mxu0 0.0
    %7832 = vmatpush1.msra.mxu0 0.0
    %7833 = vmatprep.subr.mxu0 0.0
    %7834 = vmatpush1.msra.mxu0 0.0
    %7835 = vmatprep.subr.mxu0 0.0
    %7836 = vmatpush1.msra.mxu0 0.0
    %7837 = vmatprep.mubr.f32.mxu0 0.0
    %7838 = vmatmul.mubr.f32.gmra.mrb[0].mxu0 %v5776
    %v7839 = vpop.f32.mrb[0].mxu0
    %v7840 = vadd.f32 0.0, %v7839
    %v7841 = vpop.f32.mrb[0].mxu0
    %7842 = vdwg.mxu0
    %v7843 = vadd.f32 %v7562, %v7630
    %v7844 = vadd.f32 %v7562, %v7700
    %v7845 = vadd.f32 %v7562, %v7770
    %v7846 = vadd.f32 %v7562, %v7840
    %v7847 = vmul.f32 %v54, 0.33333334
    %7848 = vmatprep.subr.mxu0 0.0
    %7849 = vmatpush1.msra.mxu0 %v7843
    %7850 = vmatprep.subr.mxu0 0.0
    %7851 = vmatpush1.msra.mxu0 0.0
    %7852 = vmatprep.subr.mxu0 0.0
    %7853 = vmatpush1.msra.mxu0 0.0
    %7854 = vmatprep.subr.mxu0 0.0
    %7855 = vmatpush1.msra.mxu0 0.0
    %7856 = vmatprep.subr.mxu0 0.0
    %7857 = vmatpush1.msra.mxu0 0.0
    %7858 = vmatprep.subr.mxu0 0.0
    %7859 = vmatpush1.msra.mxu0 0.0
    %7860 = vmatprep.subr.mxu0 0.0
    %7861 = vmatpush1.msra.mxu0 0.0
    %7862 = vmatprep.subr.mxu0 0.0
    %7863 = vmatpush1.msra.mxu0 0.0
    %7864 = vmatprep.subr.mxu0 0.0
    %7865 = vmatpush1.msra.mxu0 0.0
    %7866 = vmatprep.subr.mxu0 0.0
    %7867 = vmatpush1.msra.mxu0 0.0
    %7868 = vmatprep.subr.mxu0 0.0
    %7869 = vmatpush1.msra.mxu0 0.0
    %7870 = vmatprep.subr.mxu0 0.0
    %7871 = vmatpush1.msra.mxu0 0.0
    %7872 = vmatprep.subr.mxu0 0.0
    %7873 = vmatpush1.msra.mxu0 0.0
    %7874 = vmatprep.subr.mxu0 0.0
    %7875 = vmatpush1.msra.mxu0 0.0
    %7876 = vmatprep.subr.mxu0 0.0
    %7877 = vmatpush1.msra.mxu0 0.0
    %7878 = vmatprep.subr.mxu0 0.0
    %7879 = vmatpush1.msra.mxu0 0.0
    %7880 = vmatprep.subr.mxu0 0.0
    %7881 = vmatpush1.msra.mxu0 0.0
    %7882 = vmatprep.subr.mxu0 0.0
    %7883 = vmatpush1.msra.mxu0 0.0
    %7884 = vmatprep.subr.mxu0 0.0
    %7885 = vmatpush1.msra.mxu0 0.0
    %7886 = vmatprep.subr.mxu0 0.0
    %7887 = vmatpush1.msra.mxu0 0.0
    %7888 = vmatprep.subr.mxu0 0.0
    %7889 = vmatpush1.msra.mxu0 0.0
    %7890 = vmatprep.subr.mxu0 0.0
    %7891 = vmatpush1.msra.mxu0 0.0
    %7892 = vmatprep.subr.mxu0 0.0
    %7893 = vmatpush1.msra.mxu0 0.0
    %7894 = vmatprep.subr.mxu0 0.0
    %7895 = vmatpush1.msra.mxu0 0.0
    %7896 = vmatprep.subr.mxu0 0.0
    %7897 = vmatpush1.msra.mxu0 0.0
    %7898 = vmatprep.subr.mxu0 0.0
    %7899 = vmatpush1.msra.mxu0 0.0
    %7900 = vmatprep.subr.mxu0 0.0
    %7901 = vmatpush1.msra.mxu0 0.0
    %7902 = vmatprep.subr.mxu0 0.0
    %7903 = vmatpush1.msra.mxu0 0.0
    %7904 = vmatprep.subr.mxu0 0.0
    %7905 = vmatpush1.msra.mxu0 0.0
    %7906 = vmatprep.subr.mxu0 0.0
    %7907 = vmatpush1.msra.mxu0 0.0
    %7908 = vmatprep.subr.mxu0 0.0
    %7909 = vmatpush1.msra.mxu0 0.0
    %7910 = vmatprep.subr.mxu0 0.0
    %7911 = vmatpush1.msra.mxu0 0.0
    %7912 = vmatprep.mubr.f32.mxu0 0.0
    %7913 = vmatmul.mubr.f32.gmra.mrb[0].mxu0 %v5557
    %v7914 = vpop.f32.mrb[0].mxu0
    %v7915 = vadd.f32 0.0, %v7914
    %v7916 = vpop.f32.mrb[0].mxu0
    %7917 = vdwg.mxu0
    %7918 = vmatprep.subr.mxu0 0.0
    %7919 = vmatpush1.msra.mxu0 %v7844
    %7920 = vmatprep.subr.mxu0 0.0
    %7921 = vmatpush1.msra.mxu0 0.0
    %7922 = vmatprep.subr.mxu0 0.0
    %7923 = vmatpush1.msra.mxu0 0.0
    %7924 = vmatprep.subr.mxu0 0.0
    %7925 = vmatpush1.msra.mxu0 0.0
    %7926 = vmatprep.subr.mxu0 0.0
    %7927 = vmatpush1.msra.mxu0 0.0
    %7928 = vmatprep.subr.mxu0 0.0
    %7929 = vmatpush1.msra.mxu0 0.0
    %7930 = vmatprep.subr.mxu0 0.0
    %7931 = vmatpush1.msra.mxu0 0.0
    %7932 = vmatprep.subr.mxu0 0.0
    %7933 = vmatpush1.msra.mxu0 0.0
    %7934 = vmatprep.subr.mxu0 0.0
    %7935 = vmatpush1.msra.mxu0 0.0
    %7936 = vmatprep.subr.mxu0 0.0
    %7937 = vmatpush1.msra.mxu0 0.0
    %7938 = vmatprep.subr.mxu0 0.0
    %7939 = vmatpush1.msra.mxu0 0.0
    %7940 = vmatprep.subr.mxu0 0.0
    %7941 = vmatpush1.msra.mxu0 0.0
    %7942 = vmatprep.subr.mxu0 0.0
    %7943 = vmatpush1.msra.mxu0 0.0
    %7944 = vmatprep.subr.mxu0 0.0
    %7945 = vmatpush1.msra.mxu0 0.0
    %7946 = vmatprep.subr.mxu0 0.0
    %7947 = vmatpush1.msra.mxu0 0.0
    %7948 = vmatprep.subr.mxu0 0.0
    %7949 = vmatpush1.msra.mxu0 0.0
    %7950 = vmatprep.subr.mxu0 0.0
    %7951 = vmatpush1.msra.mxu0 0.0
    %7952 = vmatprep.subr.mxu0 0.0
    %7953 = vmatpush1.msra.mxu0 0.0
    %7954 = vmatprep.subr.mxu0 0.0
    %7955 = vmatpush1.msra.mxu0 0.0
    %7956 = vmatprep.subr.mxu0 0.0
    %7957 = vmatpush1.msra.mxu0 0.0
    %7958 = vmatprep.subr.mxu0 0.0
    %7959 = vmatpush1.msra.mxu0 0.0
    %7960 = vmatprep.subr.mxu0 0.0
    %7961 = vmatpush1.msra.mxu0 0.0
    %7962 = vmatprep.subr.mxu0 0.0
    %7963 = vmatpush1.msra.mxu0 0.0
    %7964 = vmatprep.subr.mxu0 0.0
    %7965 = vmatpush1.msra.mxu0 0.0
    %7966 = vmatprep.subr.mxu0 0.0
    %7967 = vmatpush1.msra.mxu0 0.0
    %7968 = vmatprep.subr.mxu0 0.0
    %7969 = vmatpush1.msra.mxu0 0.0
    %7970 = vmatprep.subr.mxu0 0.0
    %7971 = vmatpush1.msra.mxu0 0.0
    %7972 = vmatprep.subr.mxu0 0.0
    %7973 = vmatpush1.msra.mxu0 0.0
    %7974 = vmatprep.subr.mxu0 0.0
    %7975 = vmatpush1.msra.mxu0 0.0
    %7976 = vmatprep.subr.mxu0 0.0
    %7977 = vmatpush1.msra.mxu0 0.0
    %7978 = vmatprep.subr.mxu0 0.0
    %7979 = vmatpush1.msra.mxu0 0.0
    %7980 = vmatprep.subr.mxu0 0.0
    %7981 = vmatpush1.msra.mxu0 0.0
    %7982 = vmatprep.mubr.f32.mxu0 0.0
    %7983 = vmatmul.mubr.f32.gmra.mrb[0].mxu0 %v5630
    %v7984 = vpop.f32.mrb[0].mxu0
    %v7985 = vadd.f32 0.0, %v7984
    %v7986 = vpop.f32.mrb[0].mxu0
    %7987 = vdwg.mxu0
    %7988 = vmatprep.subr.mxu0 0.0
    %7989 = vmatpush1.msra.mxu0 %v7845
    %7990 = vmatprep.subr.mxu0 0.0
    %7991 = vmatpush1.msra.mxu0 0.0
    %7992 = vmatprep.subr.mxu0 0.0
    %7993 = vmatpush1.msra.mxu0 0.0
    %7994 = vmatprep.subr.mxu0 0.0
    %7995 = vmatpush1.msra.mxu0 0.0
    %7996 = vmatprep.subr.mxu0 0.0
    %7997 = vmatpush1.msra.mxu0 0.0
    %7998 = vmatprep.subr.mxu0 0.0
    %7999 = vmatpush1.msra.mxu0 0.0
    %8000 = vmatprep.subr.mxu0 0.0
    %8001 = vmatpush1.msra.mxu0 0.0
    %8002 = vmatprep.subr.mxu0 0.0
    %8003 = vmatpush1.msra.mxu0 0.0
    %8004 = vmatprep.subr.mxu0 0.0
    %8005 = vmatpush1.msra.mxu0 0.0
    %8006 = vmatprep.subr.mxu0 0.0
    %8007 = vmatpush1.msra.mxu0 0.0
    %8008 = vmatprep.subr.mxu0 0.0
    %8009 = vmatpush1.msra.mxu0 0.0
    %8010 = vmatprep.subr.mxu0 0.0
    %8011 = vmatpush1.msra.mxu0 0.0
    %8012 = vmatprep.subr.mxu0 0.0
    %8013 = vmatpush1.msra.mxu0 0.0
    %8014 = vmatprep.subr.mxu0 0.0
    %8015 = vmatpush1.msra.mxu0 0.0
    %8016 = vmatprep.subr.mxu0 0.0
    %8017 = vmatpush1.msra.mxu0 0.0
    %8018 = vmatprep.subr.mxu0 0.0
    %8019 = vmatpush1.msra.mxu0 0.0
    %8020 = vmatprep.subr.mxu0 0.0
    %8021 = vmatpush1.msra.mxu0 0.0
    %8022 = vmatprep.subr.mxu0 0.0
    %8023 = vmatpush1.msra.mxu0 0.0
    %8024 = vmatprep.subr.mxu0 0.0
    %8025 = vmatpush1.msra.mxu0 0.0
    %8026 = vmatprep.subr.mxu0 0.0
    %8027 = vmatpush1.msra.mxu0 0.0
    %8028 = vmatprep.subr.mxu0 0.0
    %8029 = vmatpush1.msra.mxu0 0.0
    %8030 = vmatprep.subr.mxu0 0.0
    %8031 = vmatpush1.msra.mxu0 0.0
    %8032 = vmatprep.subr.mxu0 0.0
    %8033 = vmatpush1.msra.mxu0 0.0
    %8034 = vmatprep.subr.mxu0 0.0
    %8035 = vmatpush1.msra.mxu0 0.0
    %8036 = vmatprep.subr.mxu0 0.0
    %8037 = vmatpush1.msra.mxu0 0.0
    %8038 = vmatprep.subr.mxu0 0.0
    %8039 = vmatpush1.msra.mxu0 0.0
    %8040 = vmatprep.subr.mxu0 0.0
    %8041 = vmatpush1.msra.mxu0 0.0
    %8042 = vmatprep.subr.mxu0 0.0
    %8043 = vmatpush1.msra.mxu0 0.0
    %8044 = vmatprep.subr.mxu0 0.0
    %8045 = vmatpush1.msra.mxu0 0.0
    %8046 = vmatprep.subr.mxu0 0.0
    %8047 = vmatpush1.msra.mxu0 0.0
    %8048 = vmatprep.subr.mxu0 0.0
    %8049 = vmatpush1.msra.mxu0 0.0
    %8050 = vmatprep.subr.mxu0 0.0
    %8051 = vmatpush1.msra.mxu0 0.0
    %8052 = vmatprep.mubr.f32.mxu0 0.0
    %8053 = vmatmul.mubr.f32.gmra.mrb[0].mxu0 %v5703
    %v8054 = vpop.f32.mrb[0].mxu0
    %v8055 = vadd.f32 0.0, %v8054
    %v8056 = vpop.f32.mrb[0].mxu0
    %8057 = vdwg.mxu0
    %8058 = vmatprep.subr.mxu0 0.0
    %8059 = vmatpush1.msra.mxu0 %v7846
    %8060 = vmatprep.subr.mxu0 0.0
    %8061 = vmatpush1.msra.mxu0 0.0
    %8062 = vmatprep.subr.mxu0 0.0
    %8063 = vmatpush1.msra.mxu0 0.0
    %8064 = vmatprep.subr.mxu0 0.0
    %8065 = vmatpush1.msra.mxu0 0.0
    %8066 = vmatprep.subr.mxu0 0.0
    %8067 = vmatpush1.msra.mxu0 0.0
    %8068 = vmatprep.subr.mxu0 0.0
    %8069 = vmatpush1.msra.mxu0 0.0
    %8070 = vmatprep.subr.mxu0 0.0
    %8071 = vmatpush1.msra.mxu0 0.0
    %8072 = vmatprep.subr.mxu0 0.0
    %8073 = vmatpush1.msra.mxu0 0.0
    %8074 = vmatprep.subr.mxu0 0.0
    %8075 = vmatpush1.msra.mxu0 0.0
    %8076 = vmatprep.subr.mxu0 0.0
    %8077 = vmatpush1.msra.mxu0 0.0
    %8078 = vmatprep.subr.mxu0 0.0
    %8079 = vmatpush1.msra.mxu0 0.0
    %8080 = vmatprep.subr.mxu0 0.0
    %8081 = vmatpush1.msra.mxu0 0.0
    %8082 = vmatprep.subr.mxu0 0.0
    %8083 = vmatpush1.msra.mxu0 0.0
    %8084 = vmatprep.subr.mxu0 0.0
    %8085 = vmatpush1.msra.mxu0 0.0
    %8086 = vmatprep.subr.mxu0 0.0
    %8087 = vmatpush1.msra.mxu0 0.0
    %8088 = vmatprep.subr.mxu0 0.0
    %8089 = vmatpush1.msra.mxu0 0.0
    %8090 = vmatprep.subr.mxu0 0.0
    %8091 = vmatpush1.msra.mxu0 0.0
    %8092 = vmatprep.subr.mxu0 0.0
    %8093 = vmatpush1.msra.mxu0 0.0
    %8094 = vmatprep.subr.mxu0 0.0
    %8095 = vmatpush1.msra.mxu0 0.0
    %8096 = vmatprep.subr.mxu0 0.0
    %8097 = vmatpush1.msra.mxu0 0.0
    %8098 = vmatprep.subr.mxu0 0.0
    %8099 = vmatpush1.msra.mxu0 0.0
    %8100 = vmatprep.subr.mxu0 0.0
    %8101 = vmatpush1.msra.mxu0 0.0
    %8102 = vmatprep.subr.mxu0 0.0
    %8103 = vmatpush1.msra.mxu0 0.0
    %8104 = vmatprep.subr.mxu0 0.0
    %8105 = vmatpush1.msra.mxu0 0.0
    %8106 = vmatprep.subr.mxu0 0.0
    %8107 = vmatpush1.msra.mxu0 0.0
    %8108 = vmatprep.subr.mxu0 0.0
    %8109 = vmatpush1.msra.mxu0 0.0
    %8110 = vmatprep.subr.mxu0 0.0
    %8111 = vmatpush1.msra.mxu0 0.0
    %8112 = vmatprep.subr.mxu0 0.0
    %8113 = vmatpush1.msra.mxu0 0.0
    %8114 = vmatprep.subr.mxu0 0.0
    %8115 = vmatpush1.msra.mxu0 0.0
    %8116 = vmatprep.subr.mxu0 0.0
    %8117 = vmatpush1.msra.mxu0 0.0
    %8118 = vmatprep.subr.mxu0 0.0
    %8119 = vmatpush1.msra.mxu0 0.0
    %8120 = vmatprep.subr.mxu0 0.0
    %8121 = vmatpush1.msra.mxu0 0.0
    %8122 = vmatprep.mubr.f32.mxu0 0.0
    %8123 = vmatmul.mubr.f32.gmra.mrb[0].mxu0 %v5776
    %v8124 = vpop.f32.mrb[0].mxu0
    %v8125 = vadd.f32 0.0, %v8124
    %v8126 = vpop.f32.mrb[0].mxu0
    %8127 = vdwg.mxu0
    %v8128 = vadd.f32 %v7847, %v7915
    %v8129 = vadd.f32 %v7847, %v7985
    %v8130 = vadd.f32 %v7847, %v8055
    %v8131 = vadd.f32 %v7847, %v8125
    %v8132 = vmul.f32 %v54, -0.5
    %8133 = vmatprep.subr.mxu0 0.0
    %8134 = vmatpush1.msra.mxu0 %v8128
    %8135 = vmatprep.subr.mxu0 0.0
    %8136 = vmatpush1.msra.mxu0 0.0
    %8137 = vmatprep.subr.mxu0 0.0
    %8138 = vmatpush1.msra.mxu0 0.0
    %8139 = vmatprep.subr.mxu0 0.0
    %8140 = vmatpush1.msra.mxu0 0.0
    %8141 = vmatprep.subr.mxu0 0.0
    %8142 = vmatpush1.msra.mxu0 0.0
    %8143 = vmatprep.subr.mxu0 0.0
    %8144 = vmatpush1.msra.mxu0 0.0
    %8145 = vmatprep.subr.mxu0 0.0
    %8146 = vmatpush1.msra.mxu0 0.0
    %8147 = vmatprep.subr.mxu0 0.0
    %8148 = vmatpush1.msra.mxu0 0.0
    %8149 = vmatprep.subr.mxu0 0.0
    %8150 = vmatpush1.msra.mxu0 0.0
    %8151 = vmatprep.subr.mxu0 0.0
    %8152 = vmatpush1.msra.mxu0 0.0
    %8153 = vmatprep.subr.mxu0 0.0
    %8154 = vmatpush1.msra.mxu0 0.0
    %8155 = vmatprep.subr.mxu0 0.0
    %8156 = vmatpush1.msra.mxu0 0.0
    %8157 = vmatprep.subr.mxu0 0.0
    %8158 = vmatpush1.msra.mxu0 0.0
    %8159 = vmatprep.subr.mxu0 0.0
    %8160 = vmatpush1.msra.mxu0 0.0
    %8161 = vmatprep.subr.mxu0 0.0
    %8162 = vmatpush1.msra.mxu0 0.0
    %8163 = vmatprep.subr.mxu0 0.0
    %8164 = vmatpush1.msra.mxu0 0.0
    %8165 = vmatprep.subr.mxu0 0.0
    %8166 = vmatpush1.msra.mxu0 0.0
    %8167 = vmatprep.subr.mxu0 0.0
    %8168 = vmatpush1.msra.mxu0 0.0
    %8169 = vmatprep.subr.mxu0 0.0
    %8170 = vmatpush1.msra.mxu0 0.0
    %8171 = vmatprep.subr.mxu0 0.0
    %8172 = vmatpush1.msra.mxu0 0.0
    %8173 = vmatprep.subr.mxu0 0.0
    %8174 = vmatpush1.msra.mxu0 0.0
    %8175 = vmatprep.subr.mxu0 0.0
    %8176 = vmatpush1.msra.mxu0 0.0
    %8177 = vmatprep.subr.mxu0 0.0
    %8178 = vmatpush1.msra.mxu0 0.0
    %8179 = vmatprep.subr.mxu0 0.0
    %8180 = vmatpush1.msra.mxu0 0.0
    %8181 = vmatprep.subr.mxu0 0.0
    %8182 = vmatpush1.msra.mxu0 0.0
    %8183 = vmatprep.subr.mxu0 0.0
    %8184 = vmatpush1.msra.mxu0 0.0
    %8185 = vmatprep.subr.mxu0 0.0
    %8186 = vmatpush1.msra.mxu0 0.0
    %8187 = vmatprep.subr.mxu0 0.0
    %8188 = vmatpush1.msra.mxu0 0.0
    %8189 = vmatprep.subr.mxu0 0.0
    %8190 = vmatpush1.msra.mxu0 0.0
    %8191 = vmatprep.subr.mxu0 0.0
    %8192 = vmatpush1.msra.mxu0 0.0
    %8193 = vmatprep.subr.mxu0 0.0
    %8194 = vmatpush1.msra.mxu0 0.0
    %8195 = vmatprep.subr.mxu0 0.0
    %8196 = vmatpush1.msra.mxu0 0.0
    %8197 = vmatprep.mubr.f32.mxu0 0.0
    %8198 = vmatmul.mubr.f32.gmra.mrb[0].mxu0 %v5557
    %v8199 = vpop.f32.mrb[0].mxu0
    %v8200 = vadd.f32 0.0, %v8199
    %v8201 = vpop.f32.mrb[0].mxu0
    %8202 = vdwg.mxu0
    %8203 = vmatprep.subr.mxu0 0.0
    %8204 = vmatpush1.msra.mxu0 %v8129
    %8205 = vmatprep.subr.mxu0 0.0
    %8206 = vmatpush1.msra.mxu0 0.0
    %8207 = vmatprep.subr.mxu0 0.0
    %8208 = vmatpush1.msra.mxu0 0.0
    %8209 = vmatprep.subr.mxu0 0.0
    %8210 = vmatpush1.msra.mxu0 0.0
    %8211 = vmatprep.subr.mxu0 0.0
    %8212 = vmatpush1.msra.mxu0 0.0
    %8213 = vmatprep.subr.mxu0 0.0
    %8214 = vmatpush1.msra.mxu0 0.0
    %8215 = vmatprep.subr.mxu0 0.0
    %8216 = vmatpush1.msra.mxu0 0.0
    %8217 = vmatprep.subr.mxu0 0.0
    %8218 = vmatpush1.msra.mxu0 0.0
    %8219 = vmatprep.subr.mxu0 0.0
    %8220 = vmatpush1.msra.mxu0 0.0
    %8221 = vmatprep.subr.mxu0 0.0
    %8222 = vmatpush1.msra.mxu0 0.0
    %8223 = vmatprep.subr.mxu0 0.0
    %8224 = vmatpush1.msra.mxu0 0.0
    %8225 = vmatprep.subr.mxu0 0.0
    %8226 = vmatpush1.msra.mxu0 0.0
    %8227 = vmatprep.subr.mxu0 0.0
    %8228 = vmatpush1.msra.mxu0 0.0
    %8229 = vmatprep.subr.mxu0 0.0
    %8230 = vmatpush1.msra.mxu0 0.0
    %8231 = vmatprep.subr.mxu0 0.0
    %8232 = vmatpush1.msra.mxu0 0.0
    %8233 = vmatprep.subr.mxu0 0.0
    %8234 = vmatpush1.msra.mxu0 0.0
    %8235 = vmatprep.subr.mxu0 0.0
    %8236 = vmatpush1.msra.mxu0 0.0
    %8237 = vmatprep.subr.mxu0 0.0
    %8238 = vmatpush1.msra.mxu0 0.0
    %8239 = vmatprep.subr.mxu0 0.0
    %8240 = vmatpush1.msra.mxu0 0.0
    %8241 = vmatprep.subr.mxu0 0.0
    %8242 = vmatpush1.msra.mxu0 0.0
    %8243 = vmatprep.subr.mxu0 0.0
    %8244 = vmatpush1.msra.mxu0 0.0
    %8245 = vmatprep.subr.mxu0 0.0
    %8246 = vmatpush1.msra.mxu0 0.0
    %8247 = vmatprep.subr.mxu0 0.0
    %8248 = vmatpush1.msra.mxu0 0.0
    %8249 = vmatprep.subr.mxu0 0.0
    %8250 = vmatpush1.msra.mxu0 0.0
    %8251 = vmatprep.subr.mxu0 0.0
    %8252 = vmatpush1.msra.mxu0 0.0
    %8253 = vmatprep.subr.mxu0 0.0
    %8254 = vmatpush1.msra.mxu0 0.0
    %8255 = vmatprep.subr.mxu0 0.0
    %8256 = vmatpush1.msra.mxu0 0.0
    %8257 = vmatprep.subr.mxu0 0.0
    %8258 = vmatpush1.msra.mxu0 0.0
    %8259 = vmatprep.subr.mxu0 0.0
    %8260 = vmatpush1.msra.mxu0 0.0
    %8261 = vmatprep.subr.mxu0 0.0
    %8262 = vmatpush1.msra.mxu0 0.0
    %8263 = vmatprep.subr.mxu0 0.0
    %8264 = vmatpush1.msra.mxu0 0.0
    %8265 = vmatprep.subr.mxu0 0.0
    %8266 = vmatpush1.msra.mxu0 0.0
    %8267 = vmatprep.mubr.f32.mxu0 0.0
    %8268 = vmatmul.mubr.f32.gmra.mrb[0].mxu0 %v5630
    %v8269 = vpop.f32.mrb[0].mxu0
    %v8270 = vadd.f32 0.0, %v8269
    %v8271 = vpop.f32.mrb[0].mxu0
    %8272 = vdwg.mxu0
    %8273 = vmatprep.subr.mxu0 0.0
    %8274 = vmatpush1.msra.mxu0 %v8130
    %8275 = vmatprep.subr.mxu0 0.0
    %8276 = vmatpush1.msra.mxu0 0.0
    %8277 = vmatprep.subr.mxu0 0.0
    %8278 = vmatpush1.msra.mxu0 0.0
    %8279 = vmatprep.subr.mxu0 0.0
    %8280 = vmatpush1.msra.mxu0 0.0
    %8281 = vmatprep.subr.mxu0 0.0
    %8282 = vmatpush1.msra.mxu0 0.0
    %8283 = vmatprep.subr.mxu0 0.0
    %8284 = vmatpush1.msra.mxu0 0.0
    %8285 = vmatprep.subr.mxu0 0.0
    %8286 = vmatpush1.msra.mxu0 0.0
    %8287 = vmatprep.subr.mxu0 0.0
    %8288 = vmatpush1.msra.mxu0 0.0
    %8289 = vmatprep.subr.mxu0 0.0
    %8290 = vmatpush1.msra.mxu0 0.0
    %8291 = vmatprep.subr.mxu0 0.0
    %8292 = vmatpush1.msra.mxu0 0.0
    %8293 = vmatprep.subr.mxu0 0.0
    %8294 = vmatpush1.msra.mxu0 0.0
    %8295 = vmatprep.subr.mxu0 0.0
    %8296 = vmatpush1.msra.mxu0 0.0
    %8297 = vmatprep.subr.mxu0 0.0
    %8298 = vmatpush1.msra.mxu0 0.0
    %8299 = vmatprep.subr.mxu0 0.0
    %8300 = vmatpush1.msra.mxu0 0.0
    %8301 = vmatprep.subr.mxu0 0.0
    %8302 = vmatpush1.msra.mxu0 0.0
    %8303 = vmatprep.subr.mxu0 0.0
    %8304 = vmatpush1.msra.mxu0 0.0
    %8305 = vmatprep.subr.mxu0 0.0
    %8306 = vmatpush1.msra.mxu0 0.0
    %8307 = vmatprep.subr.mxu0 0.0
    %8308 = vmatpush1.msra.mxu0 0.0
    %8309 = vmatprep.subr.mxu0 0.0
    %8310 = vmatpush1.msra.mxu0 0.0
    %8311 = vmatprep.subr.mxu0 0.0
    %8312 = vmatpush1.msra.mxu0 0.0
    %8313 = vmatprep.subr.mxu0 0.0
    %8314 = vmatpush1.msra.mxu0 0.0
    %8315 = vmatprep.subr.mxu0 0.0
    %8316 = vmatpush1.msra.mxu0 0.0
    %8317 = vmatprep.subr.mxu0 0.0
    %8318 = vmatpush1.msra.mxu0 0.0
    %8319 = vmatprep.subr.mxu0 0.0
    %8320 = vmatpush1.msra.mxu0 0.0
    %8321 = vmatprep.subr.mxu0 0.0
    %8322 = vmatpush1.msra.mxu0 0.0
    %8323 = vmatprep.subr.mxu0 0.0
    %8324 = vmatpush1.msra.mxu0 0.0
    %8325 = vmatprep.subr.mxu0 0.0
    %8326 = vmatpush1.msra.mxu0 0.0
    %8327 = vmatprep.subr.mxu0 0.0
    %8328 = vmatpush1.msra.mxu0 0.0
    %8329 = vmatprep.subr.mxu0 0.0
    %8330 = vmatpush1.msra.mxu0 0.0
    %8331 = vmatprep.subr.mxu0 0.0
    %8332 = vmatpush1.msra.mxu0 0.0
    %8333 = vmatprep.subr.mxu0 0.0
    %8334 = vmatpush1.msra.mxu0 0.0
    %8335 = vmatprep.subr.mxu0 0.0
    %8336 = vmatpush1.msra.mxu0 0.0
    %8337 = vmatprep.mubr.f32.mxu0 0.0
    %8338 = vmatmul.mubr.f32.gmra.mrb[0].mxu0 %v5703
    %v8339 = vpop.f32.mrb[0].mxu0
    %v8340 = vadd.f32 0.0, %v8339
    %v8341 = vpop.f32.mrb[0].mxu0
    %8342 = vdwg.mxu0
    %8343 = vmatprep.subr.mxu0 0.0
    %8344 = vmatpush1.msra.mxu0 %v8131
    %8345 = vmatprep.subr.mxu0 0.0
    %8346 = vmatpush1.msra.mxu0 0.0
    %8347 = vmatprep.subr.mxu0 0.0
    %8348 = vmatpush1.msra.mxu0 0.0
    %8349 = vmatprep.subr.mxu0 0.0
    %8350 = vmatpush1.msra.mxu0 0.0
    %8351 = vmatprep.subr.mxu0 0.0
    %8352 = vmatpush1.msra.mxu0 0.0
    %8353 = vmatprep.subr.mxu0 0.0
    %8354 = vmatpush1.msra.mxu0 0.0
    %8355 = vmatprep.subr.mxu0 0.0
    %8356 = vmatpush1.msra.mxu0 0.0
    %8357 = vmatprep.subr.mxu0 0.0
    %8358 = vmatpush1.msra.mxu0 0.0
    %8359 = vmatprep.subr.mxu0 0.0
    %8360 = vmatpush1.msra.mxu0 0.0
    %8361 = vmatprep.subr.mxu0 0.0
    %8362 = vmatpush1.msra.mxu0 0.0
    %8363 = vmatprep.subr.mxu0 0.0
    %8364 = vmatpush1.msra.mxu0 0.0
    %8365 = vmatprep.subr.mxu0 0.0
    %8366 = vmatpush1.msra.mxu0 0.0
    %8367 = vmatprep.subr.mxu0 0.0
    %8368 = vmatpush1.msra.mxu0 0.0
    %8369 = vmatprep.subr.mxu0 0.0
    %8370 = vmatpush1.msra.mxu0 0.0
    %8371 = vmatprep.subr.mxu0 0.0
    %8372 = vmatpush1.msra.mxu0 0.0
    %8373 = vmatprep.subr.mxu0 0.0
    %8374 = vmatpush1.msra.mxu0 0.0
    %8375 = vmatprep.subr.mxu0 0.0
    %8376 = vmatpush1.msra.mxu0 0.0
    %8377 = vmatprep.subr.mxu0 0.0
    %8378 = vmatpush1.msra.mxu0 0.0
    %8379 = vmatprep.subr.mxu0 0.0
    %8380 = vmatpush1.msra.mxu0 0.0
    %8381 = vmatprep.subr.mxu0 0.0
    %8382 = vmatpush1.msra.mxu0 0.0
    %8383 = vmatprep.subr.mxu0 0.0
    %8384 = vmatpush1.msra.mxu0 0.0
    %8385 = vmatprep.subr.mxu0 0.0
    %8386 = vmatpush1.msra.mxu0 0.0
    %8387 = vmatprep.subr.mxu0 0.0
    %8388 = vmatpush1.msra.mxu0 0.0
    %8389 = vmatprep.subr.mxu0 0.0
    %8390 = vmatpush1.msra.mxu0 0.0
    %8391 = vmatprep.subr.mxu0 0.0
    %8392 = vmatpush1.msra.mxu0 0.0
    %8393 = vmatprep.subr.mxu0 0.0
    %8394 = vmatpush1.msra.mxu0 0.0
    %8395 = vmatprep.subr.mxu0 0.0
    %8396 = vmatpush1.msra.mxu0 0.0
    %8397 = vmatprep.subr.mxu0 0.0
    %8398 = vmatpush1.msra.mxu0 0.0
    %8399 = vmatprep.subr.mxu0 0.0
    %8400 = vmatpush1.msra.mxu0 0.0
    %8401 = vmatprep.subr.mxu0 0.0
    %8402 = vmatpush1.msra.mxu0 0.0
    %8403 = vmatprep.subr.mxu0 0.0
    %8404 = vmatpush1.msra.mxu0 0.0
    %8405 = vmatprep.subr.mxu0 0.0
    %8406 = vmatpush1.msra.mxu0 0.0
    %8407 = vmatprep.mubr.f32.mxu0 0.0
    %8408 = vmatmul.mubr.f32.gmra.mrb[0].mxu0 %v5776
    %v8409 = vpop.f32.mrb[0].mxu0
    %v8410 = vadd.f32 0.0, %v8409
    %v8411 = vpop.f32.mrb[0].mxu0
    %8412 = vdwg.mxu0
    %v8413 = vadd.f32 %v8132, %v8200
    %v8414 = vadd.f32 %v8132, %v8270
    %v8415 = vadd.f32 %v8132, %v8340
    %v8416 = vadd.f32 %v8132, %v8410
    %8417 = vmatprep.subr.mxu0 0.0
    %8418 = vmatpush1.msra.mxu0 %v8413
    %8419 = vmatprep.subr.mxu0 0.0
    %8420 = vmatpush1.msra.mxu0 0.0
    %8421 = vmatprep.subr.mxu0 0.0
    %8422 = vmatpush1.msra.mxu0 0.0
    %8423 = vmatprep.subr.mxu0 0.0
    %8424 = vmatpush1.msra.mxu0 0.0
    %8425 = vmatprep.subr.mxu0 0.0
    %8426 = vmatpush1.msra.mxu0 0.0
    %8427 = vmatprep.subr.mxu0 0.0
    %8428 = vmatpush1.msra.mxu0 0.0
    %8429 = vmatprep.subr.mxu0 0.0
    %8430 = vmatpush1.msra.mxu0 0.0
    %8431 = vmatprep.subr.mxu0 0.0
    %8432 = vmatpush1.msra.mxu0 0.0
    %8433 = vmatprep.subr.mxu0 0.0
    %8434 = vmatpush1.msra.mxu0 0.0
    %8435 = vmatprep.subr.mxu0 0.0
    %8436 = vmatpush1.msra.mxu0 0.0
    %8437 = vmatprep.subr.mxu0 0.0
    %8438 = vmatpush1.msra.mxu0 0.0
    %8439 = vmatprep.subr.mxu0 0.0
    %8440 = vmatpush1.msra.mxu0 0.0
    %8441 = vmatprep.subr.mxu0 0.0
    %8442 = vmatpush1.msra.mxu0 0.0
    %8443 = vmatprep.subr.mxu0 0.0
    %8444 = vmatpush1.msra.mxu0 0.0
    %8445 = vmatprep.subr.mxu0 0.0
    %8446 = vmatpush1.msra.mxu0 0.0
    %8447 = vmatprep.subr.mxu0 0.0
    %8448 = vmatpush1.msra.mxu0 0.0
    %8449 = vmatprep.subr.mxu0 0.0
    %8450 = vmatpush1.msra.mxu0 0.0
    %8451 = vmatprep.subr.mxu0 0.0
    %8452 = vmatpush1.msra.mxu0 0.0
    %8453 = vmatprep.subr.mxu0 0.0
    %8454 = vmatpush1.msra.mxu0 0.0
    %8455 = vmatprep.subr.mxu0 0.0
    %8456 = vmatpush1.msra.mxu0 0.0
    %8457 = vmatprep.subr.mxu0 0.0
    %8458 = vmatpush1.msra.mxu0 0.0
    %8459 = vmatprep.subr.mxu0 0.0
    %8460 = vmatpush1.msra.mxu0 0.0
    %8461 = vmatprep.subr.mxu0 0.0
    %8462 = vmatpush1.msra.mxu0 0.0
    %8463 = vmatprep.subr.mxu0 0.0
    %8464 = vmatpush1.msra.mxu0 0.0
    %8465 = vmatprep.subr.mxu0 0.0
    %8466 = vmatpush1.msra.mxu0 0.0
    %8467 = vmatprep.subr.mxu0 0.0
    %8468 = vmatpush1.msra.mxu0 0.0
    %8469 = vmatprep.subr.mxu0 0.0
    %8470 = vmatpush1.msra.mxu0 0.0
    %8471 = vmatprep.subr.mxu0 0.0
    %8472 = vmatpush1.msra.mxu0 0.0
    %8473 = vmatprep.subr.mxu0 0.0
    %8474 = vmatpush1.msra.mxu0 0.0
    %8475 = vmatprep.subr.mxu0 0.0
    %8476 = vmatpush1.msra.mxu0 0.0
    %8477 = vmatprep.subr.mxu0 0.0
    %8478 = vmatpush1.msra.mxu0 0.0
    %8479 = vmatprep.subr.mxu0 0.0
    %8480 = vmatpush1.msra.mxu0 0.0
    %8481 = vmatprep.mubr.f32.mxu0 0.0
    %8482 = vmatmul.mubr.f32.gmra.mrb[0].mxu0 %v5557
    %v8483 = vpop.f32.mrb[0].mxu0
    %v8484 = vadd.f32 0.0, %v8483
    %v8485 = vpop.f32.mrb[0].mxu0
    %8486 = vdwg.mxu0
    %8487 = vmatprep.subr.mxu0 0.0
    %8488 = vmatpush1.msra.mxu0 %v8414
    %8489 = vmatprep.subr.mxu0 0.0
    %8490 = vmatpush1.msra.mxu0 0.0
    %8491 = vmatprep.subr.mxu0 0.0
    %8492 = vmatpush1.msra.mxu0 0.0
    %8493 = vmatprep.subr.mxu0 0.0
    %8494 = vmatpush1.msra.mxu0 0.0
    %8495 = vmatprep.subr.mxu0 0.0
    %8496 = vmatpush1.msra.mxu0 0.0
    %8497 = vmatprep.subr.mxu0 0.0
    %8498 = vmatpush1.msra.mxu0 0.0
    %8499 = vmatprep.subr.mxu0 0.0
    %8500 = vmatpush1.msra.mxu0 0.0
    %8501 = vmatprep.subr.mxu0 0.0
    %8502 = vmatpush1.msra.mxu0 0.0
    %8503 = vmatprep.subr.mxu0 0.0
    %8504 = vmatpush1.msra.mxu0 0.0
    %8505 = vmatprep.subr.mxu0 0.0
    %8506 = vmatpush1.msra.mxu0 0.0
    %8507 = vmatprep.subr.mxu0 0.0
    %8508 = vmatpush1.msra.mxu0 0.0
    %8509 = vmatprep.subr.mxu0 0.0
    %8510 = vmatpush1.msra.mxu0 0.0
    %8511 = vmatprep.subr.mxu0 0.0
    %8512 = vmatpush1.msra.mxu0 0.0
    %8513 = vmatprep.subr.mxu0 0.0
    %8514 = vmatpush1.msra.mxu0 0.0
    %8515 = vmatprep.subr.mxu0 0.0
    %8516 = vmatpush1.msra.mxu0 0.0
    %8517 = vmatprep.subr.mxu0 0.0
    %8518 = vmatpush1.msra.mxu0 0.0
    %8519 = vmatprep.subr.mxu0 0.0
    %8520 = vmatpush1.msra.mxu0 0.0
    %8521 = vmatprep.subr.mxu0 0.0
    %8522 = vmatpush1.msra.mxu0 0.0
    %8523 = vmatprep.subr.mxu0 0.0
    %8524 = vmatpush1.msra.mxu0 0.0
    %8525 = vmatprep.subr.mxu0 0.0
    %8526 = vmatpush1.msra.mxu0 0.0
    %8527 = vmatprep.subr.mxu0 0.0
    %8528 = vmatpush1.msra.mxu0 0.0
    %8529 = vmatprep.subr.mxu0 0.0
    %8530 = vmatpush1.msra.mxu0 0.0
    %8531 = vmatprep.subr.mxu0 0.0
    %8532 = vmatpush1.msra.mxu0 0.0
    %8533 = vmatprep.subr.mxu0 0.0
    %8534 = vmatpush1.msra.mxu0 0.0
    %8535 = vmatprep.subr.mxu0 0.0
    %8536 = vmatpush1.msra.mxu0 0.0
    %8537 = vmatprep.subr.mxu0 0.0
    %8538 = vmatpush1.msra.mxu0 0.0
    %8539 = vmatprep.subr.mxu0 0.0
    %8540 = vmatpush1.msra.mxu0 0.0
    %8541 = vmatprep.subr.mxu0 0.0
    %8542 = vmatpush1.msra.mxu0 0.0
    %8543 = vmatprep.subr.mxu0 0.0
    %8544 = vmatpush1.msra.mxu0 0.0
    %8545 = vmatprep.subr.mxu0 0.0
    %8546 = vmatpush1.msra.mxu0 0.0
    %8547 = vmatprep.subr.mxu0 0.0
    %8548 = vmatpush1.msra.mxu0 0.0
    %8549 = vmatprep.subr.mxu0 0.0
    %8550 = vmatpush1.msra.mxu0 0.0
    %8551 = vmatprep.mubr.f32.mxu0 0.0
    %8552 = vmatmul.mubr.f32.gmra.mrb[0].mxu0 %v5630
    %v8553 = vpop.f32.mrb[0].mxu0
    %v8554 = vadd.f32 0.0, %v8553
    %v8555 = vpop.f32.mrb[0].mxu0
    %8556 = vdwg.mxu0
    %8557 = vmatprep.subr.mxu0 0.0
    %8558 = vmatpush1.msra.mxu0 %v8415
    %8559 = vmatprep.subr.mxu0 0.0
    %8560 = vmatpush1.msra.mxu0 0.0
    %8561 = vmatprep.subr.mxu0 0.0
    %8562 = vmatpush1.msra.mxu0 0.0
    %8563 = vmatprep.subr.mxu0 0.0
    %8564 = vmatpush1.msra.mxu0 0.0
    %8565 = vmatprep.subr.mxu0 0.0
    %8566 = vmatpush1.msra.mxu0 0.0
    %8567 = vmatprep.subr.mxu0 0.0
    %8568 = vmatpush1.msra.mxu0 0.0
    %8569 = vmatprep.subr.mxu0 0.0
    %8570 = vmatpush1.msra.mxu0 0.0
    %8571 = vmatprep.subr.mxu0 0.0
    %8572 = vmatpush1.msra.mxu0 0.0
    %8573 = vmatprep.subr.mxu0 0.0
    %8574 = vmatpush1.msra.mxu0 0.0
    %8575 = vmatprep.subr.mxu0 0.0
    %8576 = vmatpush1.msra.mxu0 0.0
    %8577 = vmatprep.subr.mxu0 0.0
    %8578 = vmatpush1.msra.mxu0 0.0
    %8579 = vmatprep.subr.mxu0 0.0
    %8580 = vmatpush1.msra.mxu0 0.0
    %8581 = vmatprep.subr.mxu0 0.0
    %8582 = vmatpush1.msra.mxu0 0.0
    %8583 = vmatprep.subr.mxu0 0.0
    %8584 = vmatpush1.msra.mxu0 0.0
    %8585 = vmatprep.subr.mxu0 0.0
    %8586 = vmatpush1.msra.mxu0 0.0
    %8587 = vmatprep.subr.mxu0 0.0
    %8588 = vmatpush1.msra.mxu0 0.0
    %8589 = vmatprep.subr.mxu0 0.0
    %8590 = vmatpush1.msra.mxu0 0.0
    %8591 = vmatprep.subr.mxu0 0.0
    %8592 = vmatpush1.msra.mxu0 0.0
    %8593 = vmatprep.subr.mxu0 0.0
    %8594 = vmatpush1.msra.mxu0 0.0
    %8595 = vmatprep.subr.mxu0 0.0
    %8596 = vmatpush1.msra.mxu0 0.0
    %8597 = vmatprep.subr.mxu0 0.0
    %8598 = vmatpush1.msra.mxu0 0.0
    %8599 = vmatprep.subr.mxu0 0.0
    %8600 = vmatpush1.msra.mxu0 0.0
    %8601 = vmatprep.subr.mxu0 0.0
    %8602 = vmatpush1.msra.mxu0 0.0
    %8603 = vmatprep.subr.mxu0 0.0
    %8604 = vmatpush1.msra.mxu0 0.0
    %8605 = vmatprep.subr.mxu0 0.0
    %8606 = vmatpush1.msra.mxu0 0.0
    %8607 = vmatprep.subr.mxu0 0.0
    %8608 = vmatpush1.msra.mxu0 0.0
    %8609 = vmatprep.subr.mxu0 0.0
    %8610 = vmatpush1.msra.mxu0 0.0
    %8611 = vmatprep.subr.mxu0 0.0
    %8612 = vmatpush1.msra.mxu0 0.0
    %8613 = vmatprep.subr.mxu0 0.0
    %8614 = vmatpush1.msra.mxu0 0.0
    %8615 = vmatprep.subr.mxu0 0.0
    %8616 = vmatpush1.msra.mxu0 0.0
    %8617 = vmatprep.subr.mxu0 0.0
    %8618 = vmatpush1.msra.mxu0 0.0
    %8619 = vmatprep.subr.mxu0 0.0
    %8620 = vmatpush1.msra.mxu0 0.0
    %8621 = vmatprep.mubr.f32.mxu0 0.0
    %8622 = vmatmul.mubr.f32.gmra.mrb[0].mxu0 %v5703
    %v8623 = vpop.f32.mrb[0].mxu0
    %v8624 = vadd.f32 0.0, %v8623
    %v8625 = vpop.f32.mrb[0].mxu0
    %8626 = vdwg.mxu0
    %8627 = vmatprep.subr.mxu0 0.0
    %8628 = vmatpush1.msra.mxu0 %v8416
    %8629 = vmatprep.subr.mxu0 0.0
    %8630 = vmatpush1.msra.mxu0 0.0
    %8631 = vmatprep.subr.mxu0 0.0
    %8632 = vmatpush1.msra.mxu0 0.0
    %8633 = vmatprep.subr.mxu0 0.0
    %8634 = vmatpush1.msra.mxu0 0.0
    %8635 = vmatprep.subr.mxu0 0.0
    %8636 = vmatpush1.msra.mxu0 0.0
    %8637 = vmatprep.subr.mxu0 0.0
    %8638 = vmatpush1.msra.mxu0 0.0
    %8639 = vmatprep.subr.mxu0 0.0
    %8640 = vmatpush1.msra.mxu0 0.0
    %8641 = vmatprep.subr.mxu0 0.0
    %8642 = vmatpush1.msra.mxu0 0.0
    %8643 = vmatprep.subr.mxu0 0.0
    %8644 = vmatpush1.msra.mxu0 0.0
    %8645 = vmatprep.subr.mxu0 0.0
    %8646 = vmatpush1.msra.mxu0 0.0
    %8647 = vmatprep.subr.mxu0 0.0
    %8648 = vmatpush1.msra.mxu0 0.0
    %8649 = vmatprep.subr.mxu0 0.0
    %8650 = vmatpush1.msra.mxu0 0.0
    %8651 = vmatprep.subr.mxu0 0.0
    %8652 = vmatpush1.msra.mxu0 0.0
    %8653 = vmatprep.subr.mxu0 0.0
    %8654 = vmatpush1.msra.mxu0 0.0
    %8655 = vmatprep.subr.mxu0 0.0
    %8656 = vmatpush1.msra.mxu0 0.0
    %8657 = vmatprep.subr.mxu0 0.0
    %8658 = vmatpush1.msra.mxu0 0.0
    %8659 = vmatprep.subr.mxu0 0.0
    %8660 = vmatpush1.msra.mxu0 0.0
    %8661 = vmatprep.subr.mxu0 0.0
    %8662 = vmatpush1.msra.mxu0 0.0
    %8663 = vmatprep.subr.mxu0 0.0
    %8664 = vmatpush1.msra.mxu0 0.0
    %8665 = vmatprep.subr.mxu0 0.0
    %8666 = vmatpush1.msra.mxu0 0.0
    %8667 = vmatprep.subr.mxu0 0.0
    %8668 = vmatpush1.msra.mxu0 0.0
    %8669 = vmatprep.subr.mxu0 0.0
    %8670 = vmatpush1.msra.mxu0 0.0
    %8671 = vmatprep.subr.mxu0 0.0
    %8672 = vmatpush1.msra.mxu0 0.0
    %8673 = vmatprep.subr.mxu0 0.0
    %8674 = vmatpush1.msra.mxu0 0.0
    %8675 = vmatprep.subr.mxu0 0.0
    %8676 = vmatpush1.msra.mxu0 0.0
    %8677 = vmatprep.subr.mxu0 0.0
    %8678 = vmatpush1.msra.mxu0 0.0
    %8679 = vmatprep.subr.mxu0 0.0
    %8680 = vmatpush1.msra.mxu0 0.0
    %8681 = vmatprep.subr.mxu0 0.0
    %8682 = vmatpush1.msra.mxu0 0.0
    %8683 = vmatprep.subr.mxu0 0.0
    %8684 = vmatpush1.msra.mxu0 0.0
    %8685 = vmatprep.subr.mxu0 0.0
    %8686 = vmatpush1.msra.mxu0 0.0
    %8687 = vmatprep.subr.mxu0 0.0
    %8688 = vmatpush1.msra.mxu0 0.0
    %8689 = vmatprep.subr.mxu0 0.0
    %8690 = vmatpush1.msra.mxu0 0.0
    %8691 = vmatprep.mubr.f32.mxu0 0.0
    %8692 = vmatmul.mubr.f32.gmra.mrb[0].mxu0 %v5776
    %v8693 = vpop.f32.mrb[0].mxu0
    %v8694 = vadd.f32 0.0, %v8693
    %v8695 = vpop.f32.mrb[0].mxu0
    %8696 = vdwg.mxu0
    %v8697 = vadd.f32 %v54, %v8484
    %v8698 = vadd.f32 %v54, %v8554
    %v8699 = vadd.f32 %v54, %v8624
    %v8700 = vadd.f32 %v54, %v8694
    %8701 = vmatprep.subr.mxu0 0.0
    %8702 = vmatpush1.msra.mxu0 %v8697
    %8703 = vmatprep.subr.mxu0 0.0
    %8704 = vmatpush1.msra.mxu0 0.0
    %8705 = vmatprep.subr.mxu0 0.0
    %8706 = vmatpush1.msra.mxu0 0.0
    %8707 = vmatprep.subr.mxu0 0.0
    %8708 = vmatpush1.msra.mxu0 0.0
    %8709 = vmatprep.subr.mxu0 0.0
    %8710 = vmatpush1.msra.mxu0 0.0
    %8711 = vmatprep.subr.mxu0 0.0
    %8712 = vmatpush1.msra.mxu0 0.0
    %8713 = vmatprep.subr.mxu0 0.0
    %8714 = vmatpush1.msra.mxu0 0.0
    %8715 = vmatprep.subr.mxu0 0.0
    %8716 = vmatpush1.msra.mxu0 0.0
    %8717 = vmatprep.subr.mxu0 0.0
    %8718 = vmatpush1.msra.mxu0 0.0
    %8719 = vmatprep.subr.mxu0 0.0
    %8720 = vmatpush1.msra.mxu0 0.0
    %8721 = vmatprep.subr.mxu0 0.0
    %8722 = vmatpush1.msra.mxu0 0.0
    %8723 = vmatprep.subr.mxu0 0.0
    %8724 = vmatpush1.msra.mxu0 0.0
    %8725 = vmatprep.subr.mxu0 0.0
    %8726 = vmatpush1.msra.mxu0 0.0
    %8727 = vmatprep.subr.mxu0 0.0
    %8728 = vmatpush1.msra.mxu0 0.0
    %8729 = vmatprep.subr.mxu0 0.0
    %8730 = vmatpush1.msra.mxu0 0.0
    %8731 = vmatprep.subr.mxu0 0.0
    %8732 = vmatpush1.msra.mxu0 0.0
    %8733 = vmatprep.subr.mxu0 0.0
    %8734 = vmatpush1.msra.mxu0 0.0
    %8735 = vmatprep.subr.mxu0 0.0
    %8736 = vmatpush1.msra.mxu0 0.0
    %8737 = vmatprep.subr.mxu0 0.0
    %8738 = vmatpush1.msra.mxu0 0.0
    %8739 = vmatprep.subr.mxu0 0.0
    %8740 = vmatpush1.msra.mxu0 0.0
    %8741 = vmatprep.subr.mxu0 0.0
    %8742 = vmatpush1.msra.mxu0 0.0
    %8743 = vmatprep.subr.mxu0 0.0
    %8744 = vmatpush1.msra.mxu0 0.0
    %8745 = vmatprep.subr.mxu0 0.0
    %8746 = vmatpush1.msra.mxu0 0.0
    %8747 = vmatprep.subr.mxu0 0.0
    %8748 = vmatpush1.msra.mxu0 0.0
    %8749 = vmatprep.subr.mxu0 0.0
    %8750 = vmatpush1.msra.mxu0 0.0
    %8751 = vmatprep.subr.mxu0 0.0
    %8752 = vmatpush1.msra.mxu0 0.0
    %8753 = vmatprep.subr.mxu0 0.0
    %8754 = vmatpush1.msra.mxu0 0.0
    %8755 = vmatprep.subr.mxu0 0.0
    %8756 = vmatpush1.msra.mxu0 0.0
    %8757 = vmatprep.subr.mxu0 0.0
    %8758 = vmatpush1.msra.mxu0 0.0
    %8759 = vmatprep.subr.mxu0 0.0
    %8760 = vmatpush1.msra.mxu0 0.0
    %8761 = vmatprep.subr.mxu0 0.0
    %8762 = vmatpush1.msra.mxu0 0.0
    %8763 = vmatprep.subr.mxu0 0.0
    %8764 = vmatpush1.msra.mxu0 0.0
    %8765 = vmatprep.mubr.f32.mxu0 0.0
    %8766 = vmatmul.mubr.f32.gmra.mrb[0].mxu0 %v5557
    %v8767 = vpop.f32.mrb[0].mxu0
    %v8768 = vadd.f32 0.0, %v8767
    %v8769 = vpop.f32.mrb[0].mxu0
    %8770 = vdwg.mxu0
    %8771 = vmatprep.subr.mxu0 0.0
    %8772 = vmatpush1.msra.mxu0 %v8698
    %8773 = vmatprep.subr.mxu0 0.0
    %8774 = vmatpush1.msra.mxu0 0.0
    %8775 = vmatprep.subr.mxu0 0.0
    %8776 = vmatpush1.msra.mxu0 0.0
    %8777 = vmatprep.subr.mxu0 0.0
    %8778 = vmatpush1.msra.mxu0 0.0
    %8779 = vmatprep.subr.mxu0 0.0
    %8780 = vmatpush1.msra.mxu0 0.0
    %8781 = vmatprep.subr.mxu0 0.0
    %8782 = vmatpush1.msra.mxu0 0.0
    %8783 = vmatprep.subr.mxu0 0.0
    %8784 = vmatpush1.msra.mxu0 0.0
    %8785 = vmatprep.subr.mxu0 0.0
    %8786 = vmatpush1.msra.mxu0 0.0
    %8787 = vmatprep.subr.mxu0 0.0
    %8788 = vmatpush1.msra.mxu0 0.0
    %8789 = vmatprep.subr.mxu0 0.0
    %8790 = vmatpush1.msra.mxu0 0.0
    %8791 = vmatprep.subr.mxu0 0.0
    %8792 = vmatpush1.msra.mxu0 0.0
    %8793 = vmatprep.subr.mxu0 0.0
    %8794 = vmatpush1.msra.mxu0 0.0
    %8795 = vmatprep.subr.mxu0 0.0
    %8796 = vmatpush1.msra.mxu0 0.0
    %8797 = vmatprep.subr.mxu0 0.0
    %8798 = vmatpush1.msra.mxu0 0.0
    %8799 = vmatprep.subr.mxu0 0.0
    %8800 = vmatpush1.msra.mxu0 0.0
    %8801 = vmatprep.subr.mxu0 0.0
    %8802 = vmatpush1.msra.mxu0 0.0
    %8803 = vmatprep.subr.mxu0 0.0
    %8804 = vmatpush1.msra.mxu0 0.0
    %8805 = vmatprep.subr.mxu0 0.0
    %8806 = vmatpush1.msra.mxu0 0.0
    %8807 = vmatprep.subr.mxu0 0.0
    %8808 = vmatpush1.msra.mxu0 0.0
    %8809 = vmatprep.subr.mxu0 0.0
    %8810 = vmatpush1.msra.mxu0 0.0
    %8811 = vmatprep.subr.mxu0 0.0
    %8812 = vmatpush1.msra.mxu0 0.0
    %8813 = vmatprep.subr.mxu0 0.0
    %8814 = vmatpush1.msra.mxu0 0.0
    %8815 = vmatprep.subr.mxu0 0.0
    %8816 = vmatpush1.msra.mxu0 0.0
    %8817 = vmatprep.subr.mxu0 0.0
    %8818 = vmatpush1.msra.mxu0 0.0
    %8819 = vmatprep.subr.mxu0 0.0
    %8820 = vmatpush1.msra.mxu0 0.0
    %8821 = vmatprep.subr.mxu0 0.0
    %8822 = vmatpush1.msra.mxu0 0.0
    %8823 = vmatprep.subr.mxu0 0.0
    %8824 = vmatpush1.msra.mxu0 0.0
    %8825 = vmatprep.subr.mxu0 0.0
    %8826 = vmatpush1.msra.mxu0 0.0
    %8827 = vmatprep.subr.mxu0 0.0
    %8828 = vmatpush1.msra.mxu0 0.0
    %8829 = vmatprep.subr.mxu0 0.0
    %8830 = vmatpush1.msra.mxu0 0.0
    %8831 = vmatprep.subr.mxu0 0.0
    %8832 = vmatpush1.msra.mxu0 0.0
    %8833 = vmatprep.subr.mxu0 0.0
    %8834 = vmatpush1.msra.mxu0 0.0
    %8835 = vmatprep.mubr.f32.mxu0 0.0
    %8836 = vmatmul.mubr.f32.gmra.mrb[0].mxu0 %v5630
    %v8837 = vpop.f32.mrb[0].mxu0
    %v8838 = vadd.f32 0.0, %v8837
    %v8839 = vpop.f32.mrb[0].mxu0
    %8840 = vdwg.mxu0
    %8841 = vmatprep.subr.mxu0 0.0
    %8842 = vmatpush1.msra.mxu0 %v8699
    %8843 = vmatprep.subr.mxu0 0.0
    %8844 = vmatpush1.msra.mxu0 0.0
    %8845 = vmatprep.subr.mxu0 0.0
    %8846 = vmatpush1.msra.mxu0 0.0
    %8847 = vmatprep.subr.mxu0 0.0
    %8848 = vmatpush1.msra.mxu0 0.0
    %8849 = vmatprep.subr.mxu0 0.0
    %8850 = vmatpush1.msra.mxu0 0.0
    %8851 = vmatprep.subr.mxu0 0.0
    %8852 = vmatpush1.msra.mxu0 0.0
    %8853 = vmatprep.subr.mxu0 0.0
    %8854 = vmatpush1.msra.mxu0 0.0
    %8855 = vmatprep.subr.mxu0 0.0
    %8856 = vmatpush1.msra.mxu0 0.0
    %8857 = vmatprep.subr.mxu0 0.0
    %8858 = vmatpush1.msra.mxu0 0.0
    %8859 = vmatprep.subr.mxu0 0.0
    %8860 = vmatpush1.msra.mxu0 0.0
    %8861 = vmatprep.subr.mxu0 0.0
    %8862 = vmatpush1.msra.mxu0 0.0
    %8863 = vmatprep.subr.mxu0 0.0
    %8864 = vmatpush1.msra.mxu0 0.0
    %8865 = vmatprep.subr.mxu0 0.0
    %8866 = vmatpush1.msra.mxu0 0.0
    %8867 = vmatprep.subr.mxu0 0.0
    %8868 = vmatpush1.msra.mxu0 0.0
    %8869 = vmatprep.subr.mxu0 0.0
    %8870 = vmatpush1.msra.mxu0 0.0
    %8871 = vmatprep.subr.mxu0 0.0
    %8872 = vmatpush1.msra.mxu0 0.0
    %8873 = vmatprep.subr.mxu0 0.0
    %8874 = vmatpush1.msra.mxu0 0.0
    %8875 = vmatprep.subr.mxu0 0.0
    %8876 = vmatpush1.msra.mxu0 0.0
    %8877 = vmatprep.subr.mxu0 0.0
    %8878 = vmatpush1.msra.mxu0 0.0
    %8879 = vmatprep.subr.mxu0 0.0
    %8880 = vmatpush1.msra.mxu0 0.0
    %8881 = vmatprep.subr.mxu0 0.0
    %8882 = vmatpush1.msra.mxu0 0.0
    %8883 = vmatprep.subr.mxu0 0.0
    %8884 = vmatpush1.msra.mxu0 0.0
    %8885 = vmatprep.subr.mxu0 0.0
    %8886 = vmatpush1.msra.mxu0 0.0
    %8887 = vmatprep.subr.mxu0 0.0
    %8888 = vmatpush1.msra.mxu0 0.0
    %8889 = vmatprep.subr.mxu0 0.0
    %8890 = vmatpush1.msra.mxu0 0.0
    %8891 = vmatprep.subr.mxu0 0.0
    %8892 = vmatpush1.msra.mxu0 0.0
    %8893 = vmatprep.subr.mxu0 0.0
    %8894 = vmatpush1.msra.mxu0 0.0
    %8895 = vmatprep.subr.mxu0 0.0
    %8896 = vmatpush1.msra.mxu0 0.0
    %8897 = vmatprep.subr.mxu0 0.0
    %8898 = vmatpush1.msra.mxu0 0.0
    %8899 = vmatprep.subr.mxu0 0.0
    %8900 = vmatpush1.msra.mxu0 0.0
    %8901 = vmatprep.subr.mxu0 0.0
    %8902 = vmatpush1.msra.mxu0 0.0
    %8903 = vmatprep.subr.mxu0 0.0
    %8904 = vmatpush1.msra.mxu0 0.0
    %8905 = vmatprep.mubr.f32.mxu0 0.0
    %8906 = vmatmul.mubr.f32.gmra.mrb[0].mxu0 %v5703
    %v8907 = vpop.f32.mrb[0].mxu0
    %v8908 = vadd.f32 0.0, %v8907
    %v8909 = vpop.f32.mrb[0].mxu0
    %8910 = vdwg.mxu0
    %8911 = vmatprep.subr.mxu0 0.0
    %8912 = vmatpush1.msra.mxu0 %v8700
    %8913 = vmatprep.subr.mxu0 0.0
    %8914 = vmatpush1.msra.mxu0 0.0
    %8915 = vmatprep.subr.mxu0 0.0
    %8916 = vmatpush1.msra.mxu0 0.0
    %8917 = vmatprep.subr.mxu0 0.0
    %8918 = vmatpush1.msra.mxu0 0.0
    %8919 = vmatprep.subr.mxu0 0.0
    %8920 = vmatpush1.msra.mxu0 0.0
    %8921 = vmatprep.subr.mxu0 0.0
    %8922 = vmatpush1.msra.mxu0 0.0
    %8923 = vmatprep.subr.mxu0 0.0
    %8924 = vmatpush1.msra.mxu0 0.0
    %8925 = vmatprep.subr.mxu0 0.0
    %8926 = vmatpush1.msra.mxu0 0.0
    %8927 = vmatprep.subr.mxu0 0.0
    %8928 = vmatpush1.msra.mxu0 0.0
    %8929 = vmatprep.subr.mxu0 0.0
    %8930 = vmatpush1.msra.mxu0 0.0
    %8931 = vmatprep.subr.mxu0 0.0
    %8932 = vmatpush1.msra.mxu0 0.0
    %8933 = vmatprep.subr.mxu0 0.0
    %8934 = vmatpush1.msra.mxu0 0.0
    %8935 = vmatprep.subr.mxu0 0.0
    %8936 = vmatpush1.msra.mxu0 0.0
    %8937 = vmatprep.subr.mxu0 0.0
    %8938 = vmatpush1.msra.mxu0 0.0
    %8939 = vmatprep.subr.mxu0 0.0
    %8940 = vmatpush1.msra.mxu0 0.0
    %8941 = vmatprep.subr.mxu0 0.0
    %8942 = vmatpush1.msra.mxu0 0.0
    %8943 = vmatprep.subr.mxu0 0.0
    %8944 = vmatpush1.msra.mxu0 0.0
    %8945 = vmatprep.subr.mxu0 0.0
    %8946 = vmatpush1.msra.mxu0 0.0
    %8947 = vmatprep.subr.mxu0 0.0
    %8948 = vmatpush1.msra.mxu0 0.0
    %8949 = vmatprep.subr.mxu0 0.0
    %8950 = vmatpush1.msra.mxu0 0.0
    %8951 = vmatprep.subr.mxu0 0.0
    %8952 = vmatpush1.msra.mxu0 0.0
    %8953 = vmatprep.subr.mxu0 0.0
    %8954 = vmatpush1.msra.mxu0 0.0
    %8955 = vmatprep.subr.mxu0 0.0
    %8956 = vmatpush1.msra.mxu0 0.0
    %8957 = vmatprep.subr.mxu0 0.0
    %8958 = vmatpush1.msra.mxu0 0.0
    %8959 = vmatprep.subr.mxu0 0.0
    %8960 = vmatpush1.msra.mxu0 0.0
    %8961 = vmatprep.subr.mxu0 0.0
    %8962 = vmatpush1.msra.mxu0 0.0
    %8963 = vmatprep.subr.mxu0 0.0
    %8964 = vmatpush1.msra.mxu0 0.0
    %8965 = vmatprep.subr.mxu0 0.0
    %8966 = vmatpush1.msra.mxu0 0.0
    %8967 = vmatprep.subr.mxu0 0.0
    %8968 = vmatpush1.msra.mxu0 0.0
    %8969 = vmatprep.subr.mxu0 0.0
    %8970 = vmatpush1.msra.mxu0 0.0
    %8971 = vmatprep.subr.mxu0 0.0
    %8972 = vmatpush1.msra.mxu0 0.0
    %8973 = vmatprep.subr.mxu0 0.0
    %8974 = vmatpush1.msra.mxu0 0.0
    %8975 = vmatprep.mubr.f32.mxu0 0.0
    %8976 = vmatmul.mubr.f32.gmra.mrb[0].mxu0 %v5776
    %v8977 = vpop.f32.mrb[0].mxu0
    %v8978 = vadd.f32 0.0, %v8977
    %v8979 = vpop.f32.mrb[0].mxu0
    %8980 = vdwg.mxu0
    %v8981 = vmul.f32 %v8768, 64.0
    %v8982 = vmul.f32 %v8838, 64.0
    %v8983 = vmul.f32 %v8908, 64.0
    %v8984 = vmul.f32 %v8978, 64.0
    %v8985 = vlog2.pop %v102
    %v8986 = vmul.f32 %v8985, 0.6931472
    %v8987 = vlog2.pop %v109
    %v8988 = vmul.f32 %v8987, 0.6931472
    %v8989 = vlog2.pop %v116
    %v8990 = vmul.f32 %v8989, 0.6931472
    %v8991 = vlog2.pop %v123
    %v8992 = vmul.f32 %v8991, 0.6931472
    %v8993 = vmul.f32 %v8986, %v54
    %v8994 = vmul.f32 %v8988, %v54
    %v8995 = vmul.f32 %v8990, %v54
    %v8996 = vmul.f32 %v8992, %v54
    %v8997 = vadd.f32 %v8981, %v8993
    %v8998 = vadd.f32 %v8982, %v8994
    %v8999 = vadd.f32 %v8983, %v8995
    %v9000 = vadd.f32 %v8984, %v8996
    %9001 = vst.msk [vmem:[#allocation2] sm:$0xff] %vm59, %v8997
    %9002 = vst.msk [vmem:[#allocation2 + $0x8] sm:$0xff] %vm59, %v8998
    %9003 = vst.msk [vmem:[#allocation2 + $0x10] sm:$0xff] %vm59, %v8999
    %9004 = vst.msk [vmem:[#allocation2 + $0x18] sm:$0xff] %vm59, %v9000
    %v9005 = vld [vmem:[#allocation2] sm:$0x1]
    %v9006 = vld [vmem:[#allocation2 + $0x8] sm:$0x1]
    %v9007 = vld [vmem:[#allocation2 + $0x10] sm:$0x1]
    %v9008 = vld [vmem:[#allocation2 + $0x18] sm:$0x1]
    %v9009 = vld [vmem:[#allocation6] sm:$0xff]
    %v9010 = vld [vmem:[#allocation2 + $0x1] sm:$0x1]
    %v9011 = vld [vmem:[#allocation2 + $0x9] sm:$0x1]
    %v9012 = vld [vmem:[#allocation2 + $0x11] sm:$0x1]
    %v9013 = vld [vmem:[#allocation2 + $0x19] sm:$0x1]
    %s9014 = scalar_lea.vmem [#allocation6], 8
    %v9015 = vld [vmem:[%s9014] sm:$0xff]
    %v9020 = vrot.slane %v9011, 7
    %vm9021 = vcmask 1041409
    %v9022 = vsel %vm9021, %v9020, %v9010
    %v9023 = vrot.slane %v9012, 6
    %vm9024 = vcmask 1042434
    %v9025 = vsel %vm9024, %v9023, %v9022
    %v9026 = vrot.slane %v9013, 5
    %vm9027 = vcmask 1043459
    %v9028 = vsel %vm9027, %v9026, %v9025
    %v9029 = vsel %vm59, %v9028, 0
    %9031 = vmatprep.subr.mxu0 0.0
    %9032 = vmatpush1.msra.mxu0 %v9015
    %9033 = vmatprep.subr.mxu0 0.0
    %9034 = vmatpush1.msra.mxu0 0.0
    %9035 = vmatprep.subr.mxu0 0.0
    %9036 = vmatpush1.msra.mxu0 0.0
    %9037 = vmatprep.subr.mxu0 0.0
    %9038 = vmatpush1.msra.mxu0 0.0
    %9039 = vmatprep.subr.mxu0 0.0
    %9040 = vmatpush1.msra.mxu0 0.0
    %9041 = vmatprep.subr.mxu0 0.0
    %9042 = vmatpush1.msra.mxu0 0.0
    %9043 = vmatprep.subr.mxu0 0.0
    %9044 = vmatpush1.msra.mxu0 0.0
    %9045 = vmatprep.subr.mxu0 0.0
    %9046 = vmatpush1.msra.mxu0 0.0
    %9047 = vmatprep.subr.mxu0 0.0
    %9048 = vmatpush1.msra.mxu0 0.0
    %9049 = vmatprep.subr.mxu0 0.0
    %9050 = vmatpush1.msra.mxu0 0.0
    %9051 = vmatprep.subr.mxu0 0.0
    %9052 = vmatpush1.msra.mxu0 0.0
    %9053 = vmatprep.subr.mxu0 0.0
    %9054 = vmatpush1.msra.mxu0 0.0
    %9055 = vmatprep.subr.mxu0 0.0
    %9056 = vmatpush1.msra.mxu0 0.0
    %9057 = vmatprep.subr.mxu0 0.0
    %9058 = vmatpush1.msra.mxu0 0.0
    %9059 = vmatprep.subr.mxu0 0.0
    %9060 = vmatpush1.msra.mxu0 0.0
    %9061 = vmatprep.subr.mxu0 0.0
    %9062 = vmatpush1.msra.mxu0 0.0
    %9063 = vmatprep.subr.mxu0 0.0
    %9064 = vmatpush1.msra.mxu0 0.0
    %9065 = vmatprep.subr.mxu0 0.0
    %9066 = vmatpush1.msra.mxu0 0.0
    %9067 = vmatprep.subr.mxu0 0.0
    %9068 = vmatpush1.msra.mxu0 0.0
    %9069 = vmatprep.subr.mxu0 0.0
    %9070 = vmatpush1.msra.mxu0 0.0
    %9071 = vmatprep.subr.mxu0 0.0
    %9072 = vmatpush1.msra.mxu0 0.0
    %9073 = vmatprep.subr.mxu0 0.0
    %9074 = vmatpush1.msra.mxu0 0.0
    %9075 = vmatprep.subr.mxu0 0.0
    %9076 = vmatpush1.msra.mxu0 0.0
    %9077 = vmatprep.subr.mxu0 0.0
    %9078 = vmatpush1.msra.mxu0 0.0
    %9079 = vmatprep.subr.mxu0 0.0
    %9080 = vmatpush1.msra.mxu0 0.0
    %9081 = vmatprep.subr.mxu0 0.0
    %9082 = vmatpush1.msra.mxu0 0.0
    %9083 = vmatprep.subr.mxu0 0.0
    %9084 = vmatpush1.msra.mxu0 0.0
    %9085 = vmatprep.subr.mxu0 0.0
    %9086 = vmatpush1.msra.mxu0 0.0
    %9087 = vmatprep.subr.mxu0 0.0
    %9088 = vmatpush1.msra.mxu0 0.0
    %9089 = vmatprep.subr.mxu0 0.0
    %9090 = vmatpush1.msra.mxu0 0.0
    %9091 = vmatprep.subr.mxu0 0.0
    %9092 = vmatpush1.msra.mxu0 0.0
    %9093 = vmatprep.subr.mxu0 0.0
    %9094 = vmatpush1.msra.mxu0 0.0
    %9095 = vmatprep.mubr.f32.mxu0 0.0
    %9096 = vmatmul.mubr.f32.gmra.mrb[0].mxu0 %v9029
    %v9097 = vpop.f32.mrb[0].mxu0
    %v9098 = vadd.f32 0.0, %v9097
    %v9099 = vpop.f32.mrb[0].mxu0
    %9100 = vdwg.mxu0
    %v9105 = vrot.slane %v9006, 7
    %v9106 = vsel %vm9021, %v9105, %v9005
    %v9107 = vrot.slane %v9007, 6
    %v9108 = vsel %vm9024, %v9107, %v9106
    %v9109 = vrot.slane %v9008, 5
    %v9110 = vsel %vm9027, %v9109, %v9108
    %v9111 = vsel %vm59, %v9110, 0
    %9113 = vmatprep.subr.mxu0 0.0
    %9114 = vmatpush1.msra.mxu0 %v9009
    %9115 = vmatprep.subr.mxu0 0.0
    %9116 = vmatpush1.msra.mxu0 0.0
    %9117 = vmatprep.subr.mxu0 0.0
    %9118 = vmatpush1.msra.mxu0 0.0
    %9119 = vmatprep.subr.mxu0 0.0
    %9120 = vmatpush1.msra.mxu0 0.0
    %9121 = vmatprep.subr.mxu0 0.0
    %9122 = vmatpush1.msra.mxu0 0.0
    %9123 = vmatprep.subr.mxu0 0.0
    %9124 = vmatpush1.msra.mxu0 0.0
    %9125 = vmatprep.subr.mxu0 0.0
    %9126 = vmatpush1.msra.mxu0 0.0
    %9127 = vmatprep.subr.mxu0 0.0
    %9128 = vmatpush1.msra.mxu0 0.0
    %9129 = vmatprep.subr.mxu0 0.0
    %9130 = vmatpush1.msra.mxu0 0.0
    %9131 = vmatprep.subr.mxu0 0.0
    %9132 = vmatpush1.msra.mxu0 0.0
    %9133 = vmatprep.subr.mxu0 0.0
    %9134 = vmatpush1.msra.mxu0 0.0
    %9135 = vmatprep.subr.mxu0 0.0
    %9136 = vmatpush1.msra.mxu0 0.0
    %9137 = vmatprep.subr.mxu0 0.0
    %9138 = vmatpush1.msra.mxu0 0.0
    %9139 = vmatprep.subr.mxu0 0.0
    %9140 = vmatpush1.msra.mxu0 0.0
    %9141 = vmatprep.subr.mxu0 0.0
    %9142 = vmatpush1.msra.mxu0 0.0
    %9143 = vmatprep.subr.mxu0 0.0
    %9144 = vmatpush1.msra.mxu0 0.0
    %9145 = vmatprep.subr.mxu0 0.0
    %9146 = vmatpush1.msra.mxu0 0.0
    %9147 = vmatprep.subr.mxu0 0.0
    %9148 = vmatpush1.msra.mxu0 0.0
    %9149 = vmatprep.subr.mxu0 0.0
    %9150 = vmatpush1.msra.mxu0 0.0
    %9151 = vmatprep.subr.mxu0 0.0
    %9152 = vmatpush1.msra.mxu0 0.0
    %9153 = vmatprep.subr.mxu0 0.0
    %9154 = vmatpush1.msra.mxu0 0.0
    %9155 = vmatprep.subr.mxu0 0.0
    %9156 = vmatpush1.msra.mxu0 0.0
    %9157 = vmatprep.subr.mxu0 0.0
    %9158 = vmatpush1.msra.mxu0 0.0
    %9159 = vmatprep.subr.mxu0 0.0
    %9160 = vmatpush1.msra.mxu0 0.0
    %9161 = vmatprep.subr.mxu0 0.0
    %9162 = vmatpush1.msra.mxu0 0.0
    %9163 = vmatprep.subr.mxu0 0.0
    %9164 = vmatpush1.msra.mxu0 0.0
    %9165 = vmatprep.subr.mxu0 0.0
    %9166 = vmatpush1.msra.mxu0 0.0
    %9167 = vmatprep.subr.mxu0 0.0
    %9168 = vmatpush1.msra.mxu0 0.0
    %9169 = vmatprep.subr.mxu0 0.0
    %9170 = vmatpush1.msra.mxu0 0.0
    %9171 = vmatprep.subr.mxu0 0.0
    %9172 = vmatpush1.msra.mxu0 0.0
    %9173 = vmatprep.subr.mxu0 0.0
    %9174 = vmatpush1.msra.mxu0 0.0
    %9175 = vmatprep.subr.mxu0 0.0
    %9176 = vmatpush1.msra.mxu0 0.0
    %9177 = vmatprep.mubr.f32.mxu0 0.0
    %9178 = vmatmul.mubr.f32.gmra.mrb[0].mxu0 %v9111
    %v9179 = vpop.f32.mrb[0].mxu0
    %v9180 = vadd.f32 %v9098, %v9179
    %v9181 = vpop.f32.mrb[0].mxu0
    %9182 = vdwg.mxu0
    %v9183 = vld [vmem:[#allocation2 + $0x2] sm:$0x1]
    %v9184 = vld [vmem:[#allocation2 + $0xa] sm:$0x1]
    %v9185 = vld [vmem:[#allocation2 + $0x12] sm:$0x1]
    %v9186 = vld [vmem:[#allocation2 + $0x1a] sm:$0x1]
    %s9187 = scalar_lea.vmem [#allocation6], 16
    %v9188 = vld [vmem:[%s9187] sm:$0xff]
    %v9193 = vrot.slane %v9184, 7
    %v9194 = vsel %vm9021, %v9193, %v9183
    %v9195 = vrot.slane %v9185, 6
    %v9196 = vsel %vm9024, %v9195, %v9194
    %v9197 = vrot.slane %v9186, 5
    %v9198 = vsel %vm9027, %v9197, %v9196
    %v9199 = vsel %vm59, %v9198, 0
    %9201 = vmatprep.subr.mxu0 0.0
    %9202 = vmatpush1.msra.mxu0 %v9188
    %9203 = vmatprep.subr.mxu0 0.0
    %9204 = vmatpush1.msra.mxu0 0.0
    %9205 = vmatprep.subr.mxu0 0.0
    %9206 = vmatpush1.msra.mxu0 0.0
    %9207 = vmatprep.subr.mxu0 0.0
    %9208 = vmatpush1.msra.mxu0 0.0
    %9209 = vmatprep.subr.mxu0 0.0
    %9210 = vmatpush1.msra.mxu0 0.0
    %9211 = vmatprep.subr.mxu0 0.0
    %9212 = vmatpush1.msra.mxu0 0.0
    %9213 = vmatprep.subr.mxu0 0.0
    %9214 = vmatpush1.msra.mxu0 0.0
    %9215 = vmatprep.subr.mxu0 0.0
    %9216 = vmatpush1.msra.mxu0 0.0
    %9217 = vmatprep.subr.mxu0 0.0
    %9218 = vmatpush1.msra.mxu0 0.0
    %9219 = vmatprep.subr.mxu0 0.0
    %9220 = vmatpush1.msra.mxu0 0.0
    %9221 = vmatprep.subr.mxu0 0.0
    %9222 = vmatpush1.msra.mxu0 0.0
    %9223 = vmatprep.subr.mxu0 0.0
    %9224 = vmatpush1.msra.mxu0 0.0
    %9225 = vmatprep.subr.mxu0 0.0
    %9226 = vmatpush1.msra.mxu0 0.0
    %9227 = vmatprep.subr.mxu0 0.0
    %9228 = vmatpush1.msra.mxu0 0.0
    %9229 = vmatprep.subr.mxu0 0.0
    %9230 = vmatpush1.msra.mxu0 0.0
    %9231 = vmatprep.subr.mxu0 0.0
    %9232 = vmatpush1.msra.mxu0 0.0
    %9233 = vmatprep.subr.mxu0 0.0
    %9234 = vmatpush1.msra.mxu0 0.0
    %9235 = vmatprep.subr.mxu0 0.0
    %9236 = vmatpush1.msra.mxu0 0.0
    %9237 = vmatprep.subr.mxu0 0.0
    %9238 = vmatpush1.msra.mxu0 0.0
    %9239 = vmatprep.subr.mxu0 0.0
    %9240 = vmatpush1.msra.mxu0 0.0
    %9241 = vmatprep.subr.mxu0 0.0
    %9242 = vmatpush1.msra.mxu0 0.0
    %9243 = vmatprep.subr.mxu0 0.0
    %9244 = vmatpush1.msra.mxu0 0.0
    %9245 = vmatprep.subr.mxu0 0.0
    %9246 = vmatpush1.msra.mxu0 0.0
    %9247 = vmatprep.subr.mxu0 0.0
    %9248 = vmatpush1.msra.mxu0 0.0
    %9249 = vmatprep.subr.mxu0 0.0
    %9250 = vmatpush1.msra.mxu0 0.0
    %9251 = vmatprep.subr.mxu0 0.0
    %9252 = vmatpush1.msra.mxu0 0.0
    %9253 = vmatprep.subr.mxu0 0.0
    %9254 = vmatpush1.msra.mxu0 0.0
    %9255 = vmatprep.subr.mxu0 0.0
    %9256 = vmatpush1.msra.mxu0 0.0
    %9257 = vmatprep.subr.mxu0 0.0
    %9258 = vmatpush1.msra.mxu0 0.0
    %9259 = vmatprep.subr.mxu0 0.0
    %9260 = vmatpush1.msra.mxu0 0.0
    %9261 = vmatprep.subr.mxu0 0.0
    %9262 = vmatpush1.msra.mxu0 0.0
    %9263 = vmatprep.subr.mxu0 0.0
    %9264 = vmatpush1.msra.mxu0 0.0
    %9265 = vmatprep.mubr.f32.mxu0 0.0
    %9266 = vmatmul.mubr.f32.gmra.mrb[0].mxu0 %v9199
    %v9267 = vpop.f32.mrb[0].mxu0
    %v9268 = vadd.f32 0.0, %v9267
    %v9269 = vpop.f32.mrb[0].mxu0
    %9270 = vdwg.mxu0
    %v9271 = vadd.f32 %v9180, %v9268
    %v9272 = vld [vmem:[#allocation2 + $0x3] sm:$0x1]
    %v9273 = vld [vmem:[#allocation2 + $0xb] sm:$0x1]
    %v9274 = vld [vmem:[#allocation2 + $0x13] sm:$0x1]
    %v9275 = vld [vmem:[#allocation2 + $0x1b] sm:$0x1]
    %s9276 = scalar_lea.vmem [#allocation6], 24
    %v9277 = vld [vmem:[%s9276] sm:$0xff]
    %v9282 = vrot.slane %v9273, 7
    %v9283 = vsel %vm9021, %v9282, %v9272
    %v9284 = vrot.slane %v9274, 6
    %v9285 = vsel %vm9024, %v9284, %v9283
    %v9286 = vrot.slane %v9275, 5
    %v9287 = vsel %vm9027, %v9286, %v9285
    %v9288 = vsel %vm59, %v9287, 0
    %9290 = vmatprep.subr.mxu0 0.0
    %9291 = vmatpush1.msra.mxu0 %v9277
    %9292 = vmatprep.subr.mxu0 0.0
    %9293 = vmatpush1.msra.mxu0 0.0
    %9294 = vmatprep.subr.mxu0 0.0
    %9295 = vmatpush1.msra.mxu0 0.0
    %9296 = vmatprep.subr.mxu0 0.0
    %9297 = vmatpush1.msra.mxu0 0.0
    %9298 = vmatprep.subr.mxu0 0.0
    %9299 = vmatpush1.msra.mxu0 0.0
    %9300 = vmatprep.subr.mxu0 0.0
    %9301 = vmatpush1.msra.mxu0 0.0
    %9302 = vmatprep.subr.mxu0 0.0
    %9303 = vmatpush1.msra.mxu0 0.0
    %9304 = vmatprep.subr.mxu0 0.0
    %9305 = vmatpush1.msra.mxu0 0.0
    %9306 = vmatprep.subr.mxu0 0.0
    %9307 = vmatpush1.msra.mxu0 0.0
    %9308 = vmatprep.subr.mxu0 0.0
    %9309 = vmatpush1.msra.mxu0 0.0
    %9310 = vmatprep.subr.mxu0 0.0
    %9311 = vmatpush1.msra.mxu0 0.0
    %9312 = vmatprep.subr.mxu0 0.0
    %9313 = vmatpush1.msra.mxu0 0.0
    %9314 = vmatprep.subr.mxu0 0.0
    %9315 = vmatpush1.msra.mxu0 0.0
    %9316 = vmatprep.subr.mxu0 0.0
    %9317 = vmatpush1.msra.mxu0 0.0
    %9318 = vmatprep.subr.mxu0 0.0
    %9319 = vmatpush1.msra.mxu0 0.0
    %9320 = vmatprep.subr.mxu0 0.0
    %9321 = vmatpush1.msra.mxu0 0.0
    %9322 = vmatprep.subr.mxu0 0.0
    %9323 = vmatpush1.msra.mxu0 0.0
    %9324 = vmatprep.subr.mxu0 0.0
    %9325 = vmatpush1.msra.mxu0 0.0
    %9326 = vmatprep.subr.mxu0 0.0
    %9327 = vmatpush1.msra.mxu0 0.0
    %9328 = vmatprep.subr.mxu0 0.0
    %9329 = vmatpush1.msra.mxu0 0.0
    %9330 = vmatprep.subr.mxu0 0.0
    %9331 = vmatpush1.msra.mxu0 0.0
    %9332 = vmatprep.subr.mxu0 0.0
    %9333 = vmatpush1.msra.mxu0 0.0
    %9334 = vmatprep.subr.mxu0 0.0
    %9335 = vmatpush1.msra.mxu0 0.0
    %9336 = vmatprep.subr.mxu0 0.0
    %9337 = vmatpush1.msra.mxu0 0.0
    %9338 = vmatprep.subr.mxu0 0.0
    %9339 = vmatpush1.msra.mxu0 0.0
    %9340 = vmatprep.subr.mxu0 0.0
    %9341 = vmatpush1.msra.mxu0 0.0
    %9342 = vmatprep.subr.mxu0 0.0
    %9343 = vmatpush1.msra.mxu0 0.0
    %9344 = vmatprep.subr.mxu0 0.0
    %9345 = vmatpush1.msra.mxu0 0.0
    %9346 = vmatprep.subr.mxu0 0.0
    %9347 = vmatpush1.msra.mxu0 0.0
    %9348 = vmatprep.subr.mxu0 0.0
    %9349 = vmatpush1.msra.mxu0 0.0
    %9350 = vmatprep.subr.mxu0 0.0
    %9351 = vmatpush1.msra.mxu0 0.0
    %9352 = vmatprep.subr.mxu0 0.0
    %9353 = vmatpush1.msra.mxu0 0.0
    %9354 = vmatprep.mubr.f32.mxu0 0.0
    %9355 = vmatmul.mubr.f32.gmra.mrb[0].mxu0 %v9288
    %v9356 = vpop.f32.mrb[0].mxu0
    %v9357 = vadd.f32 0.0, %v9356
    %v9358 = vpop.f32.mrb[0].mxu0
    %9359 = vdwg.mxu0
    %v9360 = vadd.f32 %v9271, %v9357
    %v9361 = vld [vmem:[#allocation2 + $0x4] sm:$0x1]
    %v9362 = vld [vmem:[#allocation2 + $0xc] sm:$0x1]
    %v9363 = vld [vmem:[#allocation2 + $0x14] sm:$0x1]
    %v9364 = vld [vmem:[#allocation2 + $0x1c] sm:$0x1]
    %s9365 = scalar_lea.vmem [#allocation6], 32
    %v9366 = vld [vmem:[%s9365] sm:$0xff]
    %v9371 = vrot.slane %v9362, 7
    %v9372 = vsel %vm9021, %v9371, %v9361
    %v9373 = vrot.slane %v9363, 6
    %v9374 = vsel %vm9024, %v9373, %v9372
    %v9375 = vrot.slane %v9364, 5
    %v9376 = vsel %vm9027, %v9375, %v9374
    %v9377 = vsel %vm59, %v9376, 0
    %9379 = vmatprep.subr.mxu0 0.0
    %9380 = vmatpush1.msra.mxu0 %v9366
    %9381 = vmatprep.subr.mxu0 0.0
    %9382 = vmatpush1.msra.mxu0 0.0
    %9383 = vmatprep.subr.mxu0 0.0
    %9384 = vmatpush1.msra.mxu0 0.0
    %9385 = vmatprep.subr.mxu0 0.0
    %9386 = vmatpush1.msra.mxu0 0.0
    %9387 = vmatprep.subr.mxu0 0.0
    %9388 = vmatpush1.msra.mxu0 0.0
    %9389 = vmatprep.subr.mxu0 0.0
    %9390 = vmatpush1.msra.mxu0 0.0
    %9391 = vmatprep.subr.mxu0 0.0
    %9392 = vmatpush1.msra.mxu0 0.0
    %9393 = vmatprep.subr.mxu0 0.0
    %9394 = vmatpush1.msra.mxu0 0.0
    %9395 = vmatprep.subr.mxu0 0.0
    %9396 = vmatpush1.msra.mxu0 0.0
    %9397 = vmatprep.subr.mxu0 0.0
    %9398 = vmatpush1.msra.mxu0 0.0
    %9399 = vmatprep.subr.mxu0 0.0
    %9400 = vmatpush1.msra.mxu0 0.0
    %9401 = vmatprep.subr.mxu0 0.0
    %9402 = vmatpush1.msra.mxu0 0.0
    %9403 = vmatprep.subr.mxu0 0.0
    %9404 = vmatpush1.msra.mxu0 0.0
    %9405 = vmatprep.subr.mxu0 0.0
    %9406 = vmatpush1.msra.mxu0 0.0
    %9407 = vmatprep.subr.mxu0 0.0
    %9408 = vmatpush1.msra.mxu0 0.0
    %9409 = vmatprep.subr.mxu0 0.0
    %9410 = vmatpush1.msra.mxu0 0.0
    %9411 = vmatprep.subr.mxu0 0.0
    %9412 = vmatpush1.msra.mxu0 0.0
    %9413 = vmatprep.subr.mxu0 0.0
    %9414 = vmatpush1.msra.mxu0 0.0
    %9415 = vmatprep.subr.mxu0 0.0
    %9416 = vmatpush1.msra.mxu0 0.0
    %9417 = vmatprep.subr.mxu0 0.0
    %9418 = vmatpush1.msra.mxu0 0.0
    %9419 = vmatprep.subr.mxu0 0.0
    %9420 = vmatpush1.msra.mxu0 0.0
    %9421 = vmatprep.subr.mxu0 0.0
    %9422 = vmatpush1.msra.mxu0 0.0
    %9423 = vmatprep.subr.mxu0 0.0
    %9424 = vmatpush1.msra.mxu0 0.0
    %9425 = vmatprep.subr.mxu0 0.0
    %9426 = vmatpush1.msra.mxu0 0.0
    %9427 = vmatprep.subr.mxu0 0.0
    %9428 = vmatpush1.msra.mxu0 0.0
    %9429 = vmatprep.subr.mxu0 0.0
    %9430 = vmatpush1.msra.mxu0 0.0
    %9431 = vmatprep.subr.mxu0 0.0
    %9432 = vmatpush1.msra.mxu0 0.0
    %9433 = vmatprep.subr.mxu0 0.0
    %9434 = vmatpush1.msra.mxu0 0.0
    %9435 = vmatprep.subr.mxu0 0.0
    %9436 = vmatpush1.msra.mxu0 0.0
    %9437 = vmatprep.subr.mxu0 0.0
    %9438 = vmatpush1.msra.mxu0 0.0
    %9439 = vmatprep.subr.mxu0 0.0
    %9440 = vmatpush1.msra.mxu0 0.0
    %9441 = vmatprep.subr.mxu0 0.0
    %9442 = vmatpush1.msra.mxu0 0.0
    %9443 = vmatprep.mubr.f32.mxu0 0.0
    %9444 = vmatmul.mubr.f32.gmra.mrb[0].mxu0 %v9377
    %v9445 = vpop.f32.mrb[0].mxu0
    %v9446 = vadd.f32 0.0, %v9445
    %v9447 = vpop.f32.mrb[0].mxu0
    %9448 = vdwg.mxu0
    %v9449 = vadd.f32 %v9360, %v9446
    %v9450 = vld [vmem:[#allocation2 + $0x5] sm:$0x1]
    %v9451 = vld [vmem:[#allocation2 + $0xd] sm:$0x1]
    %v9452 = vld [vmem:[#allocation2 + $0x15] sm:$0x1]
    %v9453 = vld [vmem:[#allocation2 + $0x1d] sm:$0x1]
    %s9454 = scalar_lea.vmem [#allocation6], 40
    %v9455 = vld [vmem:[%s9454] sm:$0xff]
    %v9460 = vrot.slane %v9451, 7
    %v9461 = vsel %vm9021, %v9460, %v9450
    %v9462 = vrot.slane %v9452, 6
    %v9463 = vsel %vm9024, %v9462, %v9461
    %v9464 = vrot.slane %v9453, 5
    %v9465 = vsel %vm9027, %v9464, %v9463
    %v9466 = vsel %vm59, %v9465, 0
    %9468 = vmatprep.subr.mxu0 0.0
    %9469 = vmatpush1.msra.mxu0 %v9455
    %9470 = vmatprep.subr.mxu0 0.0
    %9471 = vmatpush1.msra.mxu0 0.0
    %9472 = vmatprep.subr.mxu0 0.0
    %9473 = vmatpush1.msra.mxu0 0.0
    %9474 = vmatprep.subr.mxu0 0.0
    %9475 = vmatpush1.msra.mxu0 0.0
    %9476 = vmatprep.subr.mxu0 0.0
    %9477 = vmatpush1.msra.mxu0 0.0
    %9478 = vmatprep.subr.mxu0 0.0
    %9479 = vmatpush1.msra.mxu0 0.0
    %9480 = vmatprep.subr.mxu0 0.0
    %9481 = vmatpush1.msra.mxu0 0.0
    %9482 = vmatprep.subr.mxu0 0.0
    %9483 = vmatpush1.msra.mxu0 0.0
    %9484 = vmatprep.subr.mxu0 0.0
    %9485 = vmatpush1.msra.mxu0 0.0
    %9486 = vmatprep.subr.mxu0 0.0
    %9487 = vmatpush1.msra.mxu0 0.0
    %9488 = vmatprep.subr.mxu0 0.0
    %9489 = vmatpush1.msra.mxu0 0.0
    %9490 = vmatprep.subr.mxu0 0.0
    %9491 = vmatpush1.msra.mxu0 0.0
    %9492 = vmatprep.subr.mxu0 0.0
    %9493 = vmatpush1.msra.mxu0 0.0
    %9494 = vmatprep.subr.mxu0 0.0
    %9495 = vmatpush1.msra.mxu0 0.0
    %9496 = vmatprep.subr.mxu0 0.0
    %9497 = vmatpush1.msra.mxu0 0.0
    %9498 = vmatprep.subr.mxu0 0.0
    %9499 = vmatpush1.msra.mxu0 0.0
    %9500 = vmatprep.subr.mxu0 0.0
    %9501 = vmatpush1.msra.mxu0 0.0
    %9502 = vmatprep.subr.mxu0 0.0
    %9503 = vmatpush1.msra.mxu0 0.0
    %9504 = vmatprep.subr.mxu0 0.0
    %9505 = vmatpush1.msra.mxu0 0.0
    %9506 = vmatprep.subr.mxu0 0.0
    %9507 = vmatpush1.msra.mxu0 0.0
    %9508 = vmatprep.subr.mxu0 0.0
    %9509 = vmatpush1.msra.mxu0 0.0
    %9510 = vmatprep.subr.mxu0 0.0
    %9511 = vmatpush1.msra.mxu0 0.0
    %9512 = vmatprep.subr.mxu0 0.0
    %9513 = vmatpush1.msra.mxu0 0.0
    %9514 = vmatprep.subr.mxu0 0.0
    %9515 = vmatpush1.msra.mxu0 0.0
    %9516 = vmatprep.subr.mxu0 0.0
    %9517 = vmatpush1.msra.mxu0 0.0
    %9518 = vmatprep.subr.mxu0 0.0
    %9519 = vmatpush1.msra.mxu0 0.0
    %9520 = vmatprep.subr.mxu0 0.0
    %9521 = vmatpush1.msra.mxu0 0.0
    %9522 = vmatprep.subr.mxu0 0.0
    %9523 = vmatpush1.msra.mxu0 0.0
    %9524 = vmatprep.subr.mxu0 0.0
    %9525 = vmatpush1.msra.mxu0 0.0
    %9526 = vmatprep.subr.mxu0 0.0
    %9527 = vmatpush1.msra.mxu0 0.0
    %9528 = vmatprep.subr.mxu0 0.0
    %9529 = vmatpush1.msra.mxu0 0.0
    %9530 = vmatprep.subr.mxu0 0.0
    %9531 = vmatpush1.msra.mxu0 0.0
    %9532 = vmatprep.mubr.f32.mxu0 0.0
    %9533 = vmatmul.mubr.f32.gmra.mrb[0].mxu0 %v9466
    %v9534 = vpop.f32.mrb[0].mxu0
    %v9535 = vadd.f32 0.0, %v9534
    %v9536 = vpop.f32.mrb[0].mxu0
    %9537 = vdwg.mxu0
    %v9538 = vadd.f32 %v9449, %v9535
    %v9539 = vld [vmem:[#allocation2 + $0x6] sm:$0x1]
    %v9540 = vld [vmem:[#allocation2 + $0xe] sm:$0x1]
    %v9541 = vld [vmem:[#allocation2 + $0x16] sm:$0x1]
    %v9542 = vld [vmem:[#allocation2 + $0x1e] sm:$0x1]
    %s9543 = scalar_lea.vmem [#allocation6], 48
    %v9544 = vld [vmem:[%s9543] sm:$0xff]
    %v9549 = vrot.slane %v9540, 7
    %v9550 = vsel %vm9021, %v9549, %v9539
    %v9551 = vrot.slane %v9541, 6
    %v9552 = vsel %vm9024, %v9551, %v9550
    %v9553 = vrot.slane %v9542, 5
    %v9554 = vsel %vm9027, %v9553, %v9552
    %v9555 = vsel %vm59, %v9554, 0
    %9557 = vmatprep.subr.mxu0 0.0
    %9558 = vmatpush1.msra.mxu0 %v9544
    %9559 = vmatprep.subr.mxu0 0.0
    %9560 = vmatpush1.msra.mxu0 0.0
    %9561 = vmatprep.subr.mxu0 0.0
    %9562 = vmatpush1.msra.mxu0 0.0
    %9563 = vmatprep.subr.mxu0 0.0
    %9564 = vmatpush1.msra.mxu0 0.0
    %9565 = vmatprep.subr.mxu0 0.0
    %9566 = vmatpush1.msra.mxu0 0.0
    %9567 = vmatprep.subr.mxu0 0.0
    %9568 = vmatpush1.msra.mxu0 0.0
    %9569 = vmatprep.subr.mxu0 0.0
    %9570 = vmatpush1.msra.mxu0 0.0
    %9571 = vmatprep.subr.mxu0 0.0
    %9572 = vmatpush1.msra.mxu0 0.0
    %9573 = vmatprep.subr.mxu0 0.0
    %9574 = vmatpush1.msra.mxu0 0.0
    %9575 = vmatprep.subr.mxu0 0.0
    %9576 = vmatpush1.msra.mxu0 0.0
    %9577 = vmatprep.subr.mxu0 0.0
    %9578 = vmatpush1.msra.mxu0 0.0
    %9579 = vmatprep.subr.mxu0 0.0
    %9580 = vmatpush1.msra.mxu0 0.0
    %9581 = vmatprep.subr.mxu0 0.0
    %9582 = vmatpush1.msra.mxu0 0.0
    %9583 = vmatprep.subr.mxu0 0.0
    %9584 = vmatpush1.msra.mxu0 0.0
    %9585 = vmatprep.subr.mxu0 0.0
    %9586 = vmatpush1.msra.mxu0 0.0
    %9587 = vmatprep.subr.mxu0 0.0
    %9588 = vmatpush1.msra.mxu0 0.0
    %9589 = vmatprep.subr.mxu0 0.0
    %9590 = vmatpush1.msra.mxu0 0.0
    %9591 = vmatprep.subr.mxu0 0.0
    %9592 = vmatpush1.msra.mxu0 0.0
    %9593 = vmatprep.subr.mxu0 0.0
    %9594 = vmatpush1.msra.mxu0 0.0
    %9595 = vmatprep.subr.mxu0 0.0
    %9596 = vmatpush1.msra.mxu0 0.0
    %9597 = vmatprep.subr.mxu0 0.0
    %9598 = vmatpush1.msra.mxu0 0.0
    %9599 = vmatprep.subr.mxu0 0.0
    %9600 = vmatpush1.msra.mxu0 0.0
    %9601 = vmatprep.subr.mxu0 0.0
    %9602 = vmatpush1.msra.mxu0 0.0
    %9603 = vmatprep.subr.mxu0 0.0
    %9604 = vmatpush1.msra.mxu0 0.0
    %9605 = vmatprep.subr.mxu0 0.0
    %9606 = vmatpush1.msra.mxu0 0.0
    %9607 = vmatprep.subr.mxu0 0.0
    %9608 = vmatpush1.msra.mxu0 0.0
    %9609 = vmatprep.subr.mxu0 0.0
    %9610 = vmatpush1.msra.mxu0 0.0
    %9611 = vmatprep.subr.mxu0 0.0
    %9612 = vmatpush1.msra.mxu0 0.0
    %9613 = vmatprep.subr.mxu0 0.0
    %9614 = vmatpush1.msra.mxu0 0.0
    %9615 = vmatprep.subr.mxu0 0.0
    %9616 = vmatpush1.msra.mxu0 0.0
    %9617 = vmatprep.subr.mxu0 0.0
    %9618 = vmatpush1.msra.mxu0 0.0
    %9619 = vmatprep.subr.mxu0 0.0
    %9620 = vmatpush1.msra.mxu0 0.0
    %9621 = vmatprep.mubr.f32.mxu0 0.0
    %9622 = vmatmul.mubr.f32.gmra.mrb[0].mxu0 %v9555
    %v9623 = vpop.f32.mrb[0].mxu0
    %v9624 = vadd.f32 0.0, %v9623
    %v9625 = vpop.f32.mrb[0].mxu0
    %9626 = vdwg.mxu0
    %v9627 = vadd.f32 %v9538, %v9624
    %v9628 = vld [vmem:[#allocation2 + $0x7] sm:$0x1]
    %v9629 = vld [vmem:[#allocation2 + $0xf] sm:$0x1]
    %v9630 = vld [vmem:[#allocation2 + $0x17] sm:$0x1]
    %v9631 = vld [vmem:[#allocation2 + $0x1f] sm:$0x1]
    %s9632 = scalar_lea.vmem [#allocation6], 56
    %v9633 = vld [vmem:[%s9632] sm:$0xff]
    %v9638 = vrot.slane %v9629, 7
    %v9639 = vsel %vm9021, %v9638, %v9628
    %v9640 = vrot.slane %v9630, 6
    %v9641 = vsel %vm9024, %v9640, %v9639
    %v9642 = vrot.slane %v9631, 5
    %v9643 = vsel %vm9027, %v9642, %v9641
    %v9644 = vsel %vm59, %v9643, 0
    %9646 = vmatprep.subr.mxu0 0.0
    %9647 = vmatpush1.msra.mxu0 %v9633
    %9648 = vmatprep.subr.mxu0 0.0
    %9649 = vmatpush1.msra.mxu0 0.0
    %9650 = vmatprep.subr.mxu0 0.0
    %9651 = vmatpush1.msra.mxu0 0.0
    %9652 = vmatprep.subr.mxu0 0.0
    %9653 = vmatpush1.msra.mxu0 0.0
    %9654 = vmatprep.subr.mxu0 0.0
    %9655 = vmatpush1.msra.mxu0 0.0
    %9656 = vmatprep.subr.mxu0 0.0
    %9657 = vmatpush1.msra.mxu0 0.0
    %9658 = vmatprep.subr.mxu0 0.0
    %9659 = vmatpush1.msra.mxu0 0.0
    %9660 = vmatprep.subr.mxu0 0.0
    %9661 = vmatpush1.msra.mxu0 0.0
    %9662 = vmatprep.subr.mxu0 0.0
    %9663 = vmatpush1.msra.mxu0 0.0
    %9664 = vmatprep.subr.mxu0 0.0
    %9665 = vmatpush1.msra.mxu0 0.0
    %9666 = vmatprep.subr.mxu0 0.0
    %9667 = vmatpush1.msra.mxu0 0.0
    %9668 = vmatprep.subr.mxu0 0.0
    %9669 = vmatpush1.msra.mxu0 0.0
    %9670 = vmatprep.subr.mxu0 0.0
    %9671 = vmatpush1.msra.mxu0 0.0
    %9672 = vmatprep.subr.mxu0 0.0
    %9673 = vmatpush1.msra.mxu0 0.0
    %9674 = vmatprep.subr.mxu0 0.0
    %9675 = vmatpush1.msra.mxu0 0.0
    %9676 = vmatprep.subr.mxu0 0.0
    %9677 = vmatpush1.msra.mxu0 0.0
    %9678 = vmatprep.subr.mxu0 0.0
    %9679 = vmatpush1.msra.mxu0 0.0
    %9680 = vmatprep.subr.mxu0 0.0
    %9681 = vmatpush1.msra.mxu0 0.0
    %9682 = vmatprep.subr.mxu0 0.0
    %9683 = vmatpush1.msra.mxu0 0.0
    %9684 = vmatprep.subr.mxu0 0.0
    %9685 = vmatpush1.msra.mxu0 0.0
    %9686 = vmatprep.subr.mxu0 0.0
    %9687 = vmatpush1.msra.mxu0 0.0
    %9688 = vmatprep.subr.mxu0 0.0
    %9689 = vmatpush1.msra.mxu0 0.0
    %9690 = vmatprep.subr.mxu0 0.0
    %9691 = vmatpush1.msra.mxu0 0.0
    %9692 = vmatprep.subr.mxu0 0.0
    %9693 = vmatpush1.msra.mxu0 0.0
    %9694 = vmatprep.subr.mxu0 0.0
    %9695 = vmatpush1.msra.mxu0 0.0
    %9696 = vmatprep.subr.mxu0 0.0
    %9697 = vmatpush1.msra.mxu0 0.0
    %9698 = vmatprep.subr.mxu0 0.0
    %9699 = vmatpush1.msra.mxu0 0.0
    %9700 = vmatprep.subr.mxu0 0.0
    %9701 = vmatpush1.msra.mxu0 0.0
    %9702 = vmatprep.subr.mxu0 0.0
    %9703 = vmatpush1.msra.mxu0 0.0
    %9704 = vmatprep.subr.mxu0 0.0
    %9705 = vmatpush1.msra.mxu0 0.0
    %9706 = vmatprep.subr.mxu0 0.0
    %9707 = vmatpush1.msra.mxu0 0.0
    %9708 = vmatprep.subr.mxu0 0.0
    %9709 = vmatpush1.msra.mxu0 0.0
    %9710 = vmatprep.mubr.f32.mxu0 0.0
    %9711 = vmatmul.mubr.f32.gmra.mrb[0].mxu0 %v9644
    %v9712 = vpop.f32.mrb[0].mxu0
    %v9713 = vadd.f32 0.0, %v9712
    %v9714 = vpop.f32.mrb[0].mxu0
    %9715 = vdwg.mxu0
    %v9716 = vadd.f32 %v9627, %v9713
    %v9718 = vlaneseq
    %v9719 = vshrl.u32 %v9718, 7
    %v9720 = vsub.s32 0, %v9719
    %v9721 = vrot.slane %v47, %v9720
    %v9723 = vadd.f32 %v9716, %v9721
    %vm9724 = vcmask 125952
    %v9725 = vsel %vm9724, %v9723, -inf
    %9726 = vmax.xlane.f32.xlu0 %v9725
    %v9727 = vpop.xlane.xlu0 %9726
    %v9728 = vsub.f32 %v9723, %v9727
    %v9729 = vmul.f32 %v9728, 1.442695
    %v9730 = vpow.pop %v9729
    %v9731 = vsel %vm9724, %v9730, 0.0
    %9732 = vadd.xlane.f32.xlu0 %v9731
    %v9733 = vpop.xlane.xlu0 %9732
    %v9734 = vrcp.pop %v9733
    %v9735 = vmul.f32 %v9730, %v9734
    %9736 = vst.msk [vmem:[#allocation8] sm:$0xf] %vm9724, %v9735
    // Predicated region
    $region64: #{tpu_custom_call.1} parent=1 // pred_check
      _
    $region65: #{tpu_custom_call.1} parent=1 // pred_check_branch
      %9738 = sbr.rel (0) target = $region67
    $region66: #{tpu_custom_call.1} parent=1 // pred_region
      %s9740 = ssub.s32 64, 64
      %9741 = vsyncadd [#allocation5], %s9740
      %s9743 = sshll.u32 [#allocation8], 4
      %s9744 = int_to_ptr.vmem [resolvable:$true] %s9743
      %9746 = dma.vmem_to_hbm [thread:$0]  %s9744, 64, %s3, [#allocation5]
    $region67: #{tpu_custom_call.1} parent=1 // pred_fallthru
      _
    // Predicated region
    $region68: #{tpu_custom_call.1} parent=1 // pred_check
      _
    $region69: #{tpu_custom_call.1} parent=1 // pred_check_branch
      %9748 = sbr.rel (0) target = $region71
    $region70: #{tpu_custom_call.1} parent=1 // pred_region
      %9749 = dma.done [#allocation5], 64
    $region71: #{tpu_custom_call.1} parent=1 // pred_fallthru
      _
    %9750 = vsyncpa [#allocation4], 1
    %9751 = vsyncpa [#allocation7], 1
    %9752 = vsyncpa [#allocation5], 1

</llo_original>
